<compile_context>
chip_gen: v7x
topology: tpu7x:2x2x1
jax: 0.10.0
libtpu: 0.0.40
codegen_flags: <defaults>
</compile_context>

<pallas_src>
import numpy as np

import jax
import jax.numpy as jnp
from jax.experimental import pallas as pl
from jax.experimental.pallas import tpu as pltpu

LEAKY_SLOPE = 0.01   # nn.LeakyReLU default
BN_EPS = 1e-5
_CDT = jnp.bfloat16  # MXU operand / VMEM-intermediate dtype


# --------------------------------------------------------------------------
# Fused UpBlock kernel (one grid step == one batch element)
# --------------------------------------------------------------------------
def _make_upblock_kernel(D, H, W, Ci, Co):
    Dt, Ht = 2 * D, 2 * H
    WCi, WCo = W * Ci, W * Co

    def conv_bt(pad_ref, d_starts, h_starts, D_, H_, w_ref):
        """K-blocked block-Toeplitz conv: one MXU GEMM per kd-plane, f32 accumulate.

        pad_ref : (Dp, Hp, W*Cin) bf16 VMEM scratch with zero halos.
        w_ref   : (len(d_starts), len(h_starts)*W*Cin, N_cols) bf16 weight.
        Returns (D_*H_, N_cols) f32.
        """
        m = D_ * H_
        acc = None
        for ai, a in enumerate(d_starts):
            cols = [pad_ref[a:a + D_, b:b + H_, :].reshape(m, -1)
                    for b in h_starts]
            slab = cols[0] if len(cols) == 1 else jnp.concatenate(cols, axis=-1)
            part = jnp.dot(slab, w_ref[ai], preferred_element_type=jnp.float32)
            acc = part if acc is None else acc + part
        return acc

    def bn_lrelu(y, sc_ref, bi_ref, i):
        y = y * sc_ref[i:i + 1, :] + bi_ref[i:i + 1, :]        # folded BN (f32)
        return jnp.where(y > 0, y, LEAKY_SLOPE * y)            # LeakyReLU

    def zero_halos(padA, padB, padC):
        # Halo-only init.  Interiors are fully overwritten every grid step, so
        # only the 1-voxel borders need zeroing; done every step (a few KB) to
        # stay correct when the batch grid is split across TensorCores.
        padA[0:1, :, :] = jnp.zeros((1, H + 2, WCi), padA.dtype)
        padA[D + 1:D + 2, :, :] = jnp.zeros((1, H + 2, WCi), padA.dtype)
        padA[:, 0:1, :] = jnp.zeros((D + 2, 1, WCi), padA.dtype)
        padA[:, H + 1:H + 2, :] = jnp.zeros((D + 2, 1, WCi), padA.dtype)
        padB[D:D + 1, :, :] = jnp.zeros((1, H + 1, WCo), padB.dtype)
        padB[:, H:H + 1, :] = jnp.zeros((D + 1, 1, WCo), padB.dtype)
        padC[0:1, :, :] = jnp.zeros((1, Ht + 2, WCo), padC.dtype)
        padC[Dt + 1:Dt + 2, :, :] = jnp.zeros((1, Ht + 2, WCo), padC.dtype)
        padC[:, 0:1, :] = jnp.zeros((Dt + 2, 1, WCo), padC.dtype)
        padC[:, Ht + 1:Ht + 2, :] = jnp.zeros((Dt + 2, 1, WCo), padC.dtype)

    def kernel(x_ref, skip_ref, w0_ref, wup_ref, w1_ref, w2_ref, w3_ref,
               sc_ref, bi_ref, o_ref, padA, padB, padC):
        zero_halos(padA, padB, padC)

        # ----- stage 0: conv3x3x3 (Ci->Co) + BN + LeakyReLU -----------------
        padA[1:1 + D, 1:1 + H, :] = x_ref[0]                    # bf16, lane-packed
        h0 = bn_lrelu(conv_bt(padA, (0, 1, 2), (0, 1, 2), D, H, w0_ref),
                      sc_ref, bi_ref, 0)                        # (D*H, W*Co) f32

        # ----- stage 1: transposed conv3x3x3, stride (2,2,1): 4-phase GEMM --
        padB[0:D, 0:H, :] = h0.reshape(D, H, WCo).astype(padB.dtype)
        up = conv_bt(padB, (0, 1), (0, 1), D, H, wup_ref)       # (D*H, 4*W*Co) f32
        # phase p = dd*2 + hh lands at high-res voxel (2d+dd, 2h+hh, w)
        ph = [up[:, p * WCo:(p + 1) * WCo].reshape(D, H, WCo) for p in range(4)]
        row0 = jnp.stack([ph[0], ph[1]], axis=2).reshape(D, Ht, WCo)   # dd = 0
        row1 = jnp.stack([ph[2], ph[3]], axis=2).reshape(D, Ht, WCo)   # dd = 1
        up_full = jnp.stack([row0, row1], axis=1).reshape(Dt, Ht, WCo)
        up_full = up_full + skip_ref[0].astype(jnp.float32)     # out.feats += skip

        # ----- stages 2..4: conv_x3 (shared padded VMEM scratch) ------------
        padC[1:1 + Dt, 1:1 + Ht, :] = up_full.astype(padC.dtype)
        h1 = bn_lrelu(conv_bt(padC, (1,), (0, 1, 2), Dt, Ht, w1_ref),
                      sc_ref, bi_ref, 1)                        # conv1x3x3
        padC[1:1 + Dt, 1:1 + Ht, :] = h1.reshape(Dt, Ht, WCo).astype(padC.dtype)
        h2 = bn_lrelu(conv_bt(padC, (0, 1, 2), (1,), Dt, Ht, w2_ref),
                      sc_ref, bi_ref, 2)                        # conv3x1x3
        padC[1:1 + Dt, 1:1 + Ht, :] = h2.reshape(Dt, Ht, WCo).astype(padC.dtype)
        h3 = bn_lrelu(conv_bt(padC, (0, 1, 2), (0, 1, 2), Dt, Ht, w3_ref),
                      sc_ref, bi_ref, 3)                        # conv3x3x3

        o_ref[0] = h3.reshape(Dt, Ht, WCo).astype(o_ref.dtype)  # 128-lane dense store

    return kernel


# --------------------------------------------------------------------------
# Host-side weight folding: block-Toeplitz GEMM matrices, BN folding
# --------------------------------------------------------------------------
def _bt_conv_weight(w, W):
    """'same' conv weight (KD,KH,3,Ci,Co) -> block-Toeplitz (KD, KH*W*Ci, W*Co).

    Rows ordered (kh, w_in, ci), columns (w_out, co); block (w_in, w_out) holds
    w[.., w_in - w_out + 1, ..] when that W-tap is in range (zero otherwise),
    which also encodes the W zero-padding.
    """
    KD, KH, KW, Ci, Co = w.shape
    wi = np.arange(W)[:, None]
    wo = np.arange(W)[None, :]
    c = wi - wo + 1                                        # W-tap index
    mask = ((c >= 0) & (c < KW)).astype(np.float32)        # (W, W)
    bt = w[:, :, np.clip(c, 0, KW - 1)]                    # (KD, KH, wi, wo, Ci, Co)
    bt = bt * mask[None, None, :, :, None, None]
    bt = bt.transpose(0, 1, 2, 4, 3, 5)                    # (KD, KH, wi, Ci, wo, Co)
    return bt.reshape(KD, KH * W * Ci, W * Co)


def _bt_up_weight(w, W):
    """Transposed conv3x3x3, stride (2,2,1) -> phase block-Toeplitz (2, 2*W*Ci, 4*W*Co).

    Outer dim = D tap di in {0,1}; rows (hi, w_in, ci); columns (dd, hh, w_out, co).
    D/H kernel index kd = dd + 1 - 2*di (zero block when out of range), W kernel
    index kw = w_out - w_in + 1 (standard stride-1 transposed conv, pad 1).
    """
    Ci, Co = w.shape[3], w.shape[4]
    par = np.arange(2)
    kd = par[None, :] + 1 - 2 * par[:, None]               # (di, dd) == (hi, hh)
    kd_mask = ((kd >= 0) & (kd <= 2)).astype(np.float32)
    kd_idx = np.clip(kd, 0, 2)
    wi = np.arange(W)[:, None]
    wo = np.arange(W)[None, :]
    kw = wo - wi + 1
    kw_mask = ((kw >= 0) & (kw <= 2)).astype(np.float32)
    kw_idx = np.clip(kw, 0, 2)
    g = w[kd_idx[:, :, None, None, None, None],
          kd_idx[None, None, :, :, None, None],
          kw_idx[None, None, None, None, :, :]]            # (di,dd,hi,hh,wi,wo,Ci,Co)
    m = (kd_mask[:, :, None, None, None, None]
         * kd_mask[None, None, :, :, None, None]
         * kw_mask[None, None, None, None, :, :])
    g = g * m[..., None, None]
    g = g.transpose(0, 2, 4, 6, 1, 3, 5, 7)                # (di, hi, wi, Ci, dd, hh, wo, Co)
    return g.reshape(2, 2 * W * Ci, 4 * W * Co)


def _fold_bn(bn):
    gamma, beta, mean, var = bn
    scale = gamma / jnp.sqrt(var + BN_EPS)
    return scale, beta - mean * scale


def _pick_vmem_limit():
    # v5e/v6e: 128 MiB VMEM per TensorCore; v7x: 64 MiB.  Use ~3/4 of the real
    # capacity (capped) so big tiles are allowed on v5e/v6e without OOMing v7x.
    try:
        cap = pltpu.get_tpu_info().vmem_capacity_bytes
    except Exception:
        cap = 64 * 1024 * 1024
    return int(min(cap * 3 // 4, 100 * 1024 * 1024))


# --------------------------------------------------------------------------
# Wrapper: lane packing, weight/BN folding, pallas_call setup
# --------------------------------------------------------------------------
def upblock_forward(params, x, skip, *, height_up=False):
    if height_up:
        # TODO(synk): stride (2,2,2) needs an 8-phase transposed-conv decomposition.
        raise NotImplementedError("height_up=True not implemented")

    p = params
    N, D, H, W, Ci = x.shape
    Dt, Ht, Wt = skip.shape[1:4]
    Co = p["w0"].shape[-1]
    assert (Dt, Ht, Wt) == (2 * D, 2 * H, W)
    WCi, WCo = W * Ci, W * Co

    # Block-Toeplitz GEMM weights, bf16 operands (f32 accumulation in-kernel).
    w0bt = _bt_conv_weight(p["w0"], W).astype(_CDT)     # (3, 3*W*Ci, W*Co)
    wupbt = _bt_up_weight(p["w_up"], W).astype(_CDT)    # (2, 2*W*Co, 4*W*Co)
    w1bt = _bt_conv_weight(p["w1"], W).astype(_CDT)     # (1, 3*W*Co, W*Co)
    w2bt = _bt_conv_weight(p["w2"], W).astype(_CDT)     # (3, 1*W*Co, W*Co)
    w3bt = _bt_conv_weight(p["w3"], W).astype(_CDT)     # (3, 3*W*Co, W*Co)

    sb = [_fold_bn(p[k]) for k in ("bn0", "bn1", "bn2", "bn3")]
    scales = jnp.tile(jnp.stack([s for s, _ in sb], 0), (1, W)).astype(jnp.float32)  # (4, W*Co)
    biases = jnp.tile(jnp.stack([b for _, b in sb], 0), (1, W)).astype(jnp.float32)  # (4, W*Co)

    # Lane-packed, bf16 activations (W*C on the 128-lane axis).
    x_p = x.reshape(N, D, H, WCi).astype(_CDT)
    skip_p = skip.reshape(N, Dt, Ht, WCo).astype(_CDT)

    def full_spec(arr):
        nd = arr.ndim
        return pl.BlockSpec(arr.shape, lambda n, _nd=nd: (0,) * _nd)

    kernel = _make_upblock_kernel(D, H, W, Ci, Co)

    out = pl.pallas_call(
        kernel,
        out_shape=jax.ShapeDtypeStruct((N, Dt, Ht, WCo), jnp.float32),
        grid=(N,),
        in_specs=[
            pl.BlockSpec((1, D, H, WCi), lambda n: (n, 0, 0, 0)),      # x
            pl.BlockSpec((1, Dt, Ht, WCo), lambda n: (n, 0, 0, 0)),    # skip (bf16)
            full_spec(w0bt), full_spec(wupbt), full_spec(w1bt),
            full_spec(w2bt), full_spec(w3bt),
            full_spec(scales), full_spec(biases),
        ],
        out_specs=pl.BlockSpec((1, Dt, Ht, WCo), lambda n: (n, 0, 0, 0)),
        scratch_shapes=[
            pltpu.VMEM((D + 2, H + 2, WCi), _CDT),     # conv0 D/H halo buffer
            pltpu.VMEM((D + 1, H + 1, WCo), _CDT),     # transposed-conv input (high-end halos)
            pltpu.VMEM((Dt + 2, Ht + 2, WCo), _CDT),   # shared conv_x3 halo buffer
        ],
        compiler_params=pltpu.CompilerParams(
            dimension_semantics=("parallel",),         # megacore/v7x: one batch elem per TC
            vmem_limit_bytes=_pick_vmem_limit(),
        ),
    )(x_p, skip_p, w0bt, wupbt, w1bt, w2bt, w3bt, scales, biases)

    return out.reshape(N, Dt, Ht, Wt, Co)


# --------------------------------------------------------------------------
# Pure-JAX reference (dilated transposed-conv formulation) for validation
# --------------------------------------------------------------------------
def upblock_reference(params, x, skip):
    p = params

    def conv(xin, w, pads):
        xp = jnp.pad(xin, ((0, 0), (pads[0], pads[0]), (pads[1], pads[1]),
                           (pads[2], pads[2]), (0, 0)))
        kd, kh, kw, _, co = w.shape
        _, Dp, Hp, Wp, _ = xp.shape
        D_, H_, W_ = Dp - kd + 1, Hp - kh + 1, Wp - kw + 1
        out = jnp.zeros(xin.shape[:1] + (D_, H_, W_, co), jnp.float32)
        for a in range(kd):
            for b in range(kh):
                for c in range(kw):
                    out = out + jnp.einsum(
                        "ndhwi,io->ndhwo",
                        xp[:, a:a + D_, b:b + H_, c:c + W_, :], w[a, b, c])
        return out

    def bn_act(y, bn):
        gamma, beta, mean, var = bn
        s = gamma / jnp.sqrt(var + BN_EPS)
        y = y * s + (beta - mean * s)
        return jnp.where(y > 0, y, LEAKY_SLOPE * y)

    h = bn_act(conv(x, p["w0"], (1, 1, 1)), p["bn0"])
    N, D, H, W, C = h.shape
    Dt, Ht, Wt = skip.shape[1:4]
    dil = jnp.zeros((N, Dt, Ht, Wt, C), h.dtype).at[:, ::2, ::2, :, :].set(h)
    up = conv(dil, p["w_up"][::-1, ::-1, ::-1], (1, 1, 1)) + skip
    h = bn_act(conv(up, p["w1"], (0, 1, 1)), p["bn1"])
    h = bn_act(conv(h, p["w2"], (1, 0, 1)), p["bn2"])
    h = bn_act(conv(h, p["w3"], (1, 1, 1)), p["bn3"])
    return h


# --------------------------------------------------------------------------
# Parameter init (deterministic, synthetic)
# --------------------------------------------------------------------------
def _conv_w(key, kd, kh, kw, ci, co):
    fan_in = kd * kh * kw * ci
    return (jax.random.normal(key, (kd, kh, kw, ci, co), jnp.float32)
            / jnp.sqrt(jnp.float32(fan_in)))


def _bn_params(key, c):
    k1, k2, k3, k4 = jax.random.split(key, 4)
    gamma = 1.0 + 0.1 * jax.random.normal(k1, (c,), jnp.float32)
    beta = 0.1 * jax.random.normal(k2, (c,), jnp.float32)
    mean = 0.1 * jax.random.normal(k3, (c,), jnp.float32)
    var = jnp.abs(jax.random.normal(k4, (c,), jnp.float32)) + 0.5
    return gamma, beta, mean, var


def init_upblock_params(key, in_channels, out_channels):
    ks = jax.random.split(key, 9)
    return {
        "w0":   _conv_w(ks[0], 3, 3, 3, in_channels, out_channels),   # conv3x3x3
        "bn0":  _bn_params(ks[1], out_channels),
        "w_up": _conv_w(ks[2], 3, 3, 3, out_channels, out_channels),  # transposed
        "w1":   _conv_w(ks[3], 1, 3, 3, out_channels, out_channels),  # conv1x3x3
        "bn1":  _bn_params(ks[4], out_channels),
        "w2":   _conv_w(ks[5], 3, 1, 3, out_channels, out_channels),  # conv3x1x3
        "bn2":  _bn_params(ks[6], out_channels),
        "w3":   _conv_w(ks[7], 3, 3, 3, out_channels, out_channels),  # conv3x3x3
        "bn3":  _bn_params(ks[8], out_channels),
    }


if __name__ == "__main__":
    key = jax.random.PRNGKey(0)
    k_param, k_x, k_skip = jax.random.split(key, 3)

    N = 2
    IN_C, OUT_C = 32, 16
    D, H, W = 4, 4, 8                        # low-res input volume (W*OUT_C = 128 lanes)
    Dt, Ht, Wt = 2 * D, 2 * H, W             # skip / output volume (stride 2,2,1)

    params = init_upblock_params(k_param, IN_C, OUT_C)
    x = jax.random.normal(k_x, (N, D, H, W, IN_C), jnp.float32)
    skip = jax.random.normal(k_skip, (N, Dt, Ht, Wt, OUT_C), jnp.float32)

    out = jax.jit(upblock_forward)(params, x, skip)
    jax.block_until_ready(out)
    assert out.shape == (N, Dt, Ht, Wt, OUT_C)

    ref = upblock_reference(params, x, skip)
    rel = jnp.linalg.norm(out - ref) / jnp.linalg.norm(ref)
    assert float(rel) < 5e-2, f"relative error too high: {float(rel)}"

    print("KERNEL_OK")
</pallas_src>

<mosaic_0001>
module attributes {stable_mosaic.version = 11 : i64} {
  func.func @kernel(%arg0: i32, %arg1: memref<1x4x4x256xbf16, #tpu.memory_space<vmem>>, %arg2: memref<1x8x8x128xbf16, #tpu.memory_space<vmem>>, %arg3: memref<3x768x128xbf16, #tpu.memory_space<vmem>>, %arg4: memref<2x256x512xbf16, #tpu.memory_space<vmem>>, %arg5: memref<1x384x128xbf16, #tpu.memory_space<vmem>>, %arg6: memref<3x128x128xbf16, #tpu.memory_space<vmem>>, %arg7: memref<3x384x128xbf16, #tpu.memory_space<vmem>>, %arg8: memref<4x128xf32, #tpu.memory_space<vmem>>, %arg9: memref<4x128xf32, #tpu.memory_space<vmem>>, %arg10: memref<1x8x8x128xf32, #tpu.memory_space<vmem>>, %arg11: memref<6x6x256xbf16, #tpu.memory_space<vmem>>, %arg12: memref<5x5x128xbf16, #tpu.memory_space<vmem>>, %arg13: memref<10x10x128xbf16, #tpu.memory_space<vmem>>) attributes {dimension_semantics = [#tpu.dimension_semantics<parallel>], iteration_bounds = array<i64: 2>, scalar_prefetch = 0 : i64, scratch_operands = 3 : i64, tpu.core_type = #tpu.core_type<tc>, window_params = [{transform_indices = @transform_0, window_bounds = array<i64: 1, 4, 4, 256>}, {transform_indices = @transform_1, window_bounds = array<i64: 1, 8, 8, 128>}, {pipeline_mode = #tpu.pipeline_mode<synchronous>, transform_indices = @transform_2, window_bounds = array<i64: 3, 768, 128>}, {pipeline_mode = #tpu.pipeline_mode<synchronous>, transform_indices = @transform_3, window_bounds = array<i64: 2, 256, 512>}, {pipeline_mode = #tpu.pipeline_mode<synchronous>, transform_indices = @transform_4, window_bounds = array<i64: 1, 384, 128>}, {pipeline_mode = #tpu.pipeline_mode<synchronous>, transform_indices = @transform_5, window_bounds = array<i64: 3, 128, 128>}, {pipeline_mode = #tpu.pipeline_mode<synchronous>, transform_indices = @transform_6, window_bounds = array<i64: 3, 384, 128>}, {pipeline_mode = #tpu.pipeline_mode<synchronous>, transform_indices = @transform_7, window_bounds = array<i64: 4, 128>}, {pipeline_mode = #tpu.pipeline_mode<synchronous>, transform_indices = @transform_8, window_bounds = array<i64: 4, 128>}, {transform_indices = @transform_9, window_bounds = array<i64: 1, 8, 8, 128>}]} {
    %cst = arith.constant 0.000000e+00 : bf16
    %0 = vector.broadcast %cst : bf16 to vector<1x6x256xbf16>
    %c0 = arith.constant 0 : index
    %c0_0 = arith.constant 0 : index
    %c0_1 = arith.constant 0 : index
    %1 = vector.load %arg11[%c0, %c0_0, %c0_1] : memref<6x6x256xbf16, #tpu.memory_space<vmem>>, vector<1x6x256xbf16>
    tpu.vector_store %arg11[%c0, %c0_0, %c0_1], %0 {strides = array<i32>} : memref<6x6x256xbf16, #tpu.memory_space<vmem>>, vector<1x6x256xbf16>,
    %cst_2 = arith.constant 0.000000e+00 : bf16
    %2 = vector.broadcast %cst_2 : bf16 to vector<1x6x256xbf16>
    %c5 = arith.constant 5 : index
    %c0_3 = arith.constant 0 : index
    %c0_4 = arith.constant 0 : index
    %3 = vector.load %arg11[%c5, %c0_3, %c0_4] : memref<6x6x256xbf16, #tpu.memory_space<vmem>>, vector<1x6x256xbf16>
    tpu.vector_store %arg11[%c5, %c0_3, %c0_4], %2 {strides = array<i32>} : memref<6x6x256xbf16, #tpu.memory_space<vmem>>, vector<1x6x256xbf16>,
    %cst_5 = arith.constant 0.000000e+00 : bf16
    %4 = vector.broadcast %cst_5 : bf16 to vector<6x1x256xbf16>
    %c0_6 = arith.constant 0 : index
    %c0_7 = arith.constant 0 : index
    %c0_8 = arith.constant 0 : index
    %5 = vector.load %arg11[%c0_6, %c0_7, %c0_8] : memref<6x6x256xbf16, #tpu.memory_space<vmem>>, vector<6x1x256xbf16>
    tpu.vector_store %arg11[%c0_6, %c0_7, %c0_8], %4 {strides = array<i32>} : memref<6x6x256xbf16, #tpu.memory_space<vmem>>, vector<6x1x256xbf16>,
    %cst_9 = arith.constant 0.000000e+00 : bf16
    %6 = vector.broadcast %cst_9 : bf16 to vector<6x1x256xbf16>
    %c0_10 = arith.constant 0 : index
    %c5_11 = arith.constant 5 : index
    %c0_12 = arith.constant 0 : index
    %7 = vector.load %arg11[%c0_10, %c5_11, %c0_12] : memref<6x6x256xbf16, #tpu.memory_space<vmem>>, vector<6x1x256xbf16>
    tpu.vector_store %arg11[%c0_10, %c5_11, %c0_12], %6 {strides = array<i32>} : memref<6x6x256xbf16, #tpu.memory_space<vmem>>, vector<6x1x256xbf16>,
    %cst_13 = arith.constant 0.000000e+00 : bf16
    %8 = vector.broadcast %cst_13 : bf16 to vector<1x5x128xbf16>
    %c4 = arith.constant 4 : index
    %c0_14 = arith.constant 0 : index
    %c0_15 = arith.constant 0 : index
    %9 = vector.load %arg12[%c4, %c0_14, %c0_15] : memref<5x5x128xbf16, #tpu.memory_space<vmem>>, vector<1x5x128xbf16>
    tpu.vector_store %arg12[%c4, %c0_14, %c0_15], %8 {strides = array<i32>} : memref<5x5x128xbf16, #tpu.memory_space<vmem>>, vector<1x5x128xbf16>,
    %cst_16 = arith.constant 0.000000e+00 : bf16
    %10 = vector.broadcast %cst_16 : bf16 to vector<5x1x128xbf16>
    %c0_17 = arith.constant 0 : index
    %c4_18 = arith.constant 4 : index
    %c0_19 = arith.constant 0 : index
    %11 = vector.load %arg12[%c0_17, %c4_18, %c0_19] : memref<5x5x128xbf16, #tpu.memory_space<vmem>>, vector<5x1x128xbf16>
    tpu.vector_store %arg12[%c0_17, %c4_18, %c0_19], %10 {strides = array<i32>} : memref<5x5x128xbf16, #tpu.memory_space<vmem>>, vector<5x1x128xbf16>,
    %cst_20 = arith.constant 0.000000e+00 : bf16
    %12 = vector.broadcast %cst_20 : bf16 to vector<1x10x128xbf16>
    %c0_21 = arith.constant 0 : index
    %c0_22 = arith.constant 0 : index
    %c0_23 = arith.constant 0 : index
    %13 = vector.load %arg13[%c0_21, %c0_22, %c0_23] : memref<10x10x128xbf16, #tpu.memory_space<vmem>>, vector<1x10x128xbf16>
    tpu.vector_store %arg13[%c0_21, %c0_22, %c0_23], %12 {strides = array<i32>} : memref<10x10x128xbf16, #tpu.memory_space<vmem>>, vector<1x10x128xbf16>,
    %cst_24 = arith.constant 0.000000e+00 : bf16
    %14 = vector.broadcast %cst_24 : bf16 to vector<1x10x128xbf16>
    %c9 = arith.constant 9 : index
    %c0_25 = arith.constant 0 : index
    %c0_26 = arith.constant 0 : index
    %15 = vector.load %arg13[%c9, %c0_25, %c0_26] : memref<10x10x128xbf16, #tpu.memory_space<vmem>>, vector<1x10x128xbf16>
    tpu.vector_store %arg13[%c9, %c0_25, %c0_26], %14 {strides = array<i32>} : memref<10x10x128xbf16, #tpu.memory_space<vmem>>, vector<1x10x128xbf16>,
    %cst_27 = arith.constant 0.000000e+00 : bf16
    %16 = vector.broadcast %cst_27 : bf16 to vector<10x1x128xbf16>
    %c0_28 = arith.constant 0 : index
    %c0_29 = arith.constant 0 : index
    %c0_30 = arith.constant 0 : index
    %17 = vector.load %arg13[%c0_28, %c0_29, %c0_30] : memref<10x10x128xbf16, #tpu.memory_space<vmem>>, vector<10x1x128xbf16>
    tpu.vector_store %arg13[%c0_28, %c0_29, %c0_30], %16 {strides = array<i32>} : memref<10x10x128xbf16, #tpu.memory_space<vmem>>, vector<10x1x128xbf16>,
    %cst_31 = arith.constant 0.000000e+00 : bf16
    %18 = vector.broadcast %cst_31 : bf16 to vector<10x1x128xbf16>
    %c0_32 = arith.constant 0 : index
    %c9_33 = arith.constant 9 : index
    %c0_34 = arith.constant 0 : index
    %19 = vector.load %arg13[%c0_32, %c9_33, %c0_34] : memref<10x10x128xbf16, #tpu.memory_space<vmem>>, vector<10x1x128xbf16>
    tpu.vector_store %arg13[%c0_32, %c9_33, %c0_34], %18 {strides = array<i32>} : memref<10x10x128xbf16, #tpu.memory_space<vmem>>, vector<10x1x128xbf16>,
    %c0_35 = arith.constant 0 : index
    %c0_36 = arith.constant 0 : index
    %c0_37 = arith.constant 0 : index
    %c0_38 = arith.constant 0 : index
    %20 = vector.load %arg1[%c0_35, %c0_36, %c0_37, %c0_38] : memref<1x4x4x256xbf16, #tpu.memory_space<vmem>>, vector<1x4x4x256xbf16>
    %21 = vector.shape_cast %20 : vector<1x4x4x256xbf16> to vector<4x4x256xbf16>
    %c1 = arith.constant 1 : index
    %c1_39 = arith.constant 1 : index
    %c0_40 = arith.constant 0 : index
    %22 = vector.load %arg11[%c1, %c1_39, %c0_40] : memref<6x6x256xbf16, #tpu.memory_space<vmem>>, vector<4x4x256xbf16>
    tpu.vector_store %arg11[%c1, %c1_39, %c0_40], %21 {strides = array<i32>} : memref<6x6x256xbf16, #tpu.memory_space<vmem>>, vector<4x4x256xbf16>,
    %c0_41 = arith.constant 0 : index
    %c0_42 = arith.constant 0 : index
    %c0_43 = arith.constant 0 : index
    %23 = vector.load %arg11[%c0_41, %c0_42, %c0_43] : memref<6x6x256xbf16, #tpu.memory_space<vmem>>, vector<4x4x256xbf16>
    %24 = vector.shape_cast %23 : vector<4x4x256xbf16> to vector<16x256xbf16>
    %c0_44 = arith.constant 0 : index
    %c1_45 = arith.constant 1 : index
    %c0_46 = arith.constant 0 : index
    %25 = vector.load %arg11[%c0_44, %c1_45, %c0_46] : memref<6x6x256xbf16, #tpu.memory_space<vmem>>, vector<4x4x256xbf16>
    %26 = vector.shape_cast %25 : vector<4x4x256xbf16> to vector<16x256xbf16>
    %c0_47 = arith.constant 0 : index
    %c2 = arith.constant 2 : index
    %c0_48 = arith.constant 0 : index
    %27 = vector.load %arg11[%c0_47, %c2, %c0_48] : memref<6x6x256xbf16, #tpu.memory_space<vmem>>, vector<4x4x256xbf16>
    %28 = vector.shape_cast %27 : vector<4x4x256xbf16> to vector<16x256xbf16>
    %29 = tpu.concatenate %24, %26, %28 in 1 : vector<16x256xbf16>, vector<16x256xbf16>, vector<16x256xbf16> -> vector<16x768xbf16>
    %c0_49 = arith.constant 0 : index
    %c0_50 = arith.constant 0 : index
    %c0_51 = arith.constant 0 : index
    %30 = vector.load %arg3[%c0_49, %c0_50, %c0_51] : memref<3x768x128xbf16, #tpu.memory_space<vmem>>, vector<1x768x128xbf16>
    %31 = vector.shape_cast %30 : vector<1x768x128xbf16> to vector<768x128xbf16>
    %cst_52 = arith.constant dense<0.000000e+00> : vector<16x128xf32>
    %32 = tpu.matmul %29, %31, %cst_52 {dimension_numbers = #tpu.dot_dimension_numbers<[1], [0], [0], [1], [0, 0, 1, 1], [], []>} : vector<16x768xbf16>, vector<768x128xbf16>, vector<16x128xf32> -> vector<16x128xf32>
    %c1_53 = arith.constant 1 : index
    %c0_54 = arith.constant 0 : index
    %c0_55 = arith.constant 0 : index
    %33 = vector.load %arg11[%c1_53, %c0_54, %c0_55] : memref<6x6x256xbf16, #tpu.memory_space<vmem>>, vector<4x4x256xbf16>
    %34 = vector.shape_cast %33 : vector<4x4x256xbf16> to vector<16x256xbf16>
    %c1_56 = arith.constant 1 : index
    %c1_57 = arith.constant 1 : index
    %c0_58 = arith.constant 0 : index
    %35 = vector.load %arg11[%c1_56, %c1_57, %c0_58] : memref<6x6x256xbf16, #tpu.memory_space<vmem>>, vector<4x4x256xbf16>
    %36 = vector.shape_cast %35 : vector<4x4x256xbf16> to vector<16x256xbf16>
    %c1_59 = arith.constant 1 : index
    %c2_60 = arith.constant 2 : index
    %c0_61 = arith.constant 0 : index
    %37 = vector.load %arg11[%c1_59, %c2_60, %c0_61] : memref<6x6x256xbf16, #tpu.memory_space<vmem>>, vector<4x4x256xbf16>
    %38 = vector.shape_cast %37 : vector<4x4x256xbf16> to vector<16x256xbf16>
    %39 = tpu.concatenate %34, %36, %38 in 1 : vector<16x256xbf16>, vector<16x256xbf16>, vector<16x256xbf16> -> vector<16x768xbf16>
    %c1_62 = arith.constant 1 : index
    %c0_63 = arith.constant 0 : index
    %c0_64 = arith.constant 0 : index
    %40 = vector.load %arg3[%c1_62, %c0_63, %c0_64] : memref<3x768x128xbf16, #tpu.memory_space<vmem>>, vector<1x768x128xbf16>
    %41 = vector.shape_cast %40 : vector<1x768x128xbf16> to vector<768x128xbf16>
    %cst_65 = arith.constant dense<0.000000e+00> : vector<16x128xf32>
    %42 = tpu.matmul %39, %41, %cst_65 {dimension_numbers = #tpu.dot_dimension_numbers<[1], [0], [0], [1], [0, 0, 1, 1], [], []>} : vector<16x768xbf16>, vector<768x128xbf16>, vector<16x128xf32> -> vector<16x128xf32>
    %43 = arith.addf %32, %42 : vector<16x128xf32>
    %c2_66 = arith.constant 2 : index
    %c0_67 = arith.constant 0 : index
    %c0_68 = arith.constant 0 : index
    %44 = vector.load %arg11[%c2_66, %c0_67, %c0_68] : memref<6x6x256xbf16, #tpu.memory_space<vmem>>, vector<4x4x256xbf16>
    %45 = vector.shape_cast %44 : vector<4x4x256xbf16> to vector<16x256xbf16>
    %c2_69 = arith.constant 2 : index
    %c1_70 = arith.constant 1 : index
    %c0_71 = arith.constant 0 : index
    %46 = vector.load %arg11[%c2_69, %c1_70, %c0_71] : memref<6x6x256xbf16, #tpu.memory_space<vmem>>, vector<4x4x256xbf16>
    %47 = vector.shape_cast %46 : vector<4x4x256xbf16> to vector<16x256xbf16>
    %c2_72 = arith.constant 2 : index
    %c2_73 = arith.constant 2 : index
    %c0_74 = arith.constant 0 : index
    %48 = vector.load %arg11[%c2_72, %c2_73, %c0_74] : memref<6x6x256xbf16, #tpu.memory_space<vmem>>, vector<4x4x256xbf16>
    %49 = vector.shape_cast %48 : vector<4x4x256xbf16> to vector<16x256xbf16>
    %50 = tpu.concatenate %45, %47, %49 in 1 : vector<16x256xbf16>, vector<16x256xbf16>, vector<16x256xbf16> -> vector<16x768xbf16>
    %c2_75 = arith.constant 2 : index
    %c0_76 = arith.constant 0 : index
    %c0_77 = arith.constant 0 : index
    %51 = vector.load %arg3[%c2_75, %c0_76, %c0_77] : memref<3x768x128xbf16, #tpu.memory_space<vmem>>, vector<1x768x128xbf16>
    %52 = vector.shape_cast %51 : vector<1x768x128xbf16> to vector<768x128xbf16>
    %cst_78 = arith.constant dense<0.000000e+00> : vector<16x128xf32>
    %53 = tpu.matmul %50, %52, %cst_78 {dimension_numbers = #tpu.dot_dimension_numbers<[1], [0], [0], [1], [0, 0, 1, 1], [], []>} : vector<16x768xbf16>, vector<768x128xbf16>, vector<16x128xf32> -> vector<16x128xf32>
    %54 = arith.addf %43, %53 : vector<16x128xf32>
    %c0_79 = arith.constant 0 : index
    %c0_80 = arith.constant 0 : index
    %55 = vector.load %arg8[%c0_79, %c0_80] : memref<4x128xf32, #tpu.memory_space<vmem>>, vector<1x128xf32>
    %56 = vector.broadcast %55 : vector<1x128xf32> to vector<16x128xf32>
    %57 = arith.mulf %54, %56 : vector<16x128xf32>
    %c0_81 = arith.constant 0 : index
    %c0_82 = arith.constant 0 : index
    %58 = vector.load %arg9[%c0_81, %c0_82] : memref<4x128xf32, #tpu.memory_space<vmem>>, vector<1x128xf32>
    %59 = vector.broadcast %58 : vector<1x128xf32> to vector<16x128xf32>
    %60 = arith.addf %57, %59 : vector<16x128xf32>
    %cst_83 = arith.constant 0.000000e+00 : f32
    %61 = vector.broadcast %cst_83 : f32 to vector<16x128xf32>
    %62 = arith.cmpf ogt, %60, %61 : vector<16x128xf32>
    %cst_84 = arith.constant 0.00999999977 : f32
    %63 = vector.broadcast %cst_84 : f32 to vector<16x128xf32>
    %64 = arith.mulf %63, %60 : vector<16x128xf32>
    %65 = arith.select %62, %60, %64 : vector<16x128xi1>, vector<16x128xf32>
    %66 = vector.shape_cast %65 : vector<16x128xf32> to vector<4x4x128xf32>
    %67 = arith.truncf %66 : vector<4x4x128xf32> to vector<4x4x128xbf16>
    %c0_85 = arith.constant 0 : index
    %c0_86 = arith.constant 0 : index
    %c0_87 = arith.constant 0 : index
    %68 = vector.load %arg12[%c0_85, %c0_86, %c0_87] : memref<5x5x128xbf16, #tpu.memory_space<vmem>>, vector<4x4x128xbf16>
    tpu.vector_store %arg12[%c0_85, %c0_86, %c0_87], %67 {strides = array<i32>} : memref<5x5x128xbf16, #tpu.memory_space<vmem>>, vector<4x4x128xbf16>,
    %c0_88 = arith.constant 0 : index
    %c0_89 = arith.constant 0 : index
    %c0_90 = arith.constant 0 : index
    %69 = vector.load %arg12[%c0_88, %c0_89, %c0_90] : memref<5x5x128xbf16, #tpu.memory_space<vmem>>, vector<4x4x128xbf16>
    %70 = vector.shape_cast %69 : vector<4x4x128xbf16> to vector<16x128xbf16>
    %c0_91 = arith.constant 0 : index
    %c1_92 = arith.constant 1 : index
    %c0_93 = arith.constant 0 : index
    %71 = vector.load %arg12[%c0_91, %c1_92, %c0_93] : memref<5x5x128xbf16, #tpu.memory_space<vmem>>, vector<4x4x128xbf16>
    %72 = vector.shape_cast %71 : vector<4x4x128xbf16> to vector<16x128xbf16>
    %73 = tpu.concatenate %70, %72 in 1 : vector<16x128xbf16>, vector<16x128xbf16> -> vector<16x256xbf16>
    %c0_94 = arith.constant 0 : index
    %c0_95 = arith.constant 0 : index
    %c0_96 = arith.constant 0 : index
    %74 = vector.load %arg4[%c0_94, %c0_95, %c0_96] : memref<2x256x512xbf16, #tpu.memory_space<vmem>>, vector<1x256x512xbf16>
    %75 = vector.shape_cast %74 : vector<1x256x512xbf16> to vector<256x512xbf16>
    %cst_97 = arith.constant dense<0.000000e+00> : vector<16x512xf32>
    %76 = tpu.matmul %73, %75, %cst_97 {dimension_numbers = #tpu.dot_dimension_numbers<[1], [0], [0], [1], [0, 0, 1, 1], [], []>} : vector<16x256xbf16>, vector<256x512xbf16>, vector<16x512xf32> -> vector<16x512xf32>
    %c1_98 = arith.constant 1 : index
    %c0_99 = arith.constant 0 : index
    %c0_100 = arith.constant 0 : index
    %77 = vector.load %arg12[%c1_98, %c0_99, %c0_100] : memref<5x5x128xbf16, #tpu.memory_space<vmem>>, vector<4x4x128xbf16>
    %78 = vector.shape_cast %77 : vector<4x4x128xbf16> to vector<16x128xbf16>
    %c1_101 = arith.constant 1 : index
    %c1_102 = arith.constant 1 : index
    %c0_103 = arith.constant 0 : index
    %79 = vector.load %arg12[%c1_101, %c1_102, %c0_103] : memref<5x5x128xbf16, #tpu.memory_space<vmem>>, vector<4x4x128xbf16>
    %80 = vector.shape_cast %79 : vector<4x4x128xbf16> to vector<16x128xbf16>
    %81 = tpu.concatenate %78, %80 in 1 : vector<16x128xbf16>, vector<16x128xbf16> -> vector<16x256xbf16>
    %c1_104 = arith.constant 1 : index
    %c0_105 = arith.constant 0 : index
    %c0_106 = arith.constant 0 : index
    %82 = vector.load %arg4[%c1_104, %c0_105, %c0_106] : memref<2x256x512xbf16, #tpu.memory_space<vmem>>, vector<1x256x512xbf16>
    %83 = vector.shape_cast %82 : vector<1x256x512xbf16> to vector<256x512xbf16>
    %cst_107 = arith.constant dense<0.000000e+00> : vector<16x512xf32>
    %84 = tpu.matmul %81, %83, %cst_107 {dimension_numbers = #tpu.dot_dimension_numbers<[1], [0], [0], [1], [0, 0, 1, 1], [], []>} : vector<16x256xbf16>, vector<256x512xbf16>, vector<16x512xf32> -> vector<16x512xf32>
    %85 = arith.addf %76, %84 : vector<16x512xf32>
    %86 = vector.extract_strided_slice %85 {offsets = [0, 0], sizes = [16, 128], strides = [1, 1]} : vector<16x512xf32> to vector<16x128xf32>
    %87 = vector.shape_cast %86 : vector<16x128xf32> to vector<4x4x128xf32>
    %88 = vector.extract_strided_slice %85 {offsets = [0, 128], sizes = [16, 128], strides = [1, 1]} : vector<16x512xf32> to vector<16x128xf32>
    %89 = vector.shape_cast %88 : vector<16x128xf32> to vector<4x4x128xf32>
    %90 = vector.extract_strided_slice %85 {offsets = [0, 256], sizes = [16, 128], strides = [1, 1]} : vector<16x512xf32> to vector<16x128xf32>
    %91 = vector.shape_cast %90 : vector<16x128xf32> to vector<4x4x128xf32>
    %92 = vector.extract_strided_slice %85 {offsets = [0, 384], sizes = [16, 128], strides = [1, 1]} : vector<16x512xf32> to vector<16x128xf32>
    %93 = vector.shape_cast %92 : vector<16x128xf32> to vector<4x4x128xf32>
    %94 = vector.shape_cast %87 : vector<4x4x128xf32> to vector<4x4x1x128xf32>
    %95 = vector.shape_cast %89 : vector<4x4x128xf32> to vector<4x4x1x128xf32>
    %96 = tpu.concatenate %94, %95 in 2 : vector<4x4x1x128xf32>, vector<4x4x1x128xf32> -> vector<4x4x2x128xf32>
    %97 = vector.shape_cast %96 : vector<4x4x2x128xf32> to vector<4x8x128xf32>
    %98 = vector.shape_cast %91 : vector<4x4x128xf32> to vector<4x4x1x128xf32>
    %99 = vector.shape_cast %93 : vector<4x4x128xf32> to vector<4x4x1x128xf32>
    %100 = tpu.concatenate %98, %99 in 2 : vector<4x4x1x128xf32>, vector<4x4x1x128xf32> -> vector<4x4x2x128xf32>
    %101 = vector.shape_cast %100 : vector<4x4x2x128xf32> to vector<4x8x128xf32>
    %102 = vector.shape_cast %97 : vector<4x8x128xf32> to vector<4x1x8x128xf32>
    %103 = vector.shape_cast %101 : vector<4x8x128xf32> to vector<4x1x8x128xf32>
    %104 = tpu.concatenate %102, %103 in 1 : vector<4x1x8x128xf32>, vector<4x1x8x128xf32> -> vector<4x2x8x128xf32>
    %105 = vector.shape_cast %104 : vector<4x2x8x128xf32> to vector<8x8x128xf32>
    %c0_108 = arith.constant 0 : index
    %c0_109 = arith.constant 0 : index
    %c0_110 = arith.constant 0 : index
    %c0_111 = arith.constant 0 : index
    %106 = vector.load %arg2[%c0_108, %c0_109, %c0_110, %c0_111] : memref<1x8x8x128xbf16, #tpu.memory_space<vmem>>, vector<1x8x8x128xbf16>
    %107 = vector.shape_cast %106 : vector<1x8x8x128xbf16> to vector<8x8x128xbf16>
    %108 = arith.extf %107 : vector<8x8x128xbf16> to vector<8x8x128xf32>
    %109 = arith.addf %105, %108 : vector<8x8x128xf32>
    %110 = arith.truncf %109 : vector<8x8x128xf32> to vector<8x8x128xbf16>
    %c1_112 = arith.constant 1 : index
    %c1_113 = arith.constant 1 : index
    %c0_114 = arith.constant 0 : index
    %111 = vector.load %arg13[%c1_112, %c1_113, %c0_114] : memref<10x10x128xbf16, #tpu.memory_space<vmem>>, vector<8x8x128xbf16>
    tpu.vector_store %arg13[%c1_112, %c1_113, %c0_114], %110 {strides = array<i32>} : memref<10x10x128xbf16, #tpu.memory_space<vmem>>, vector<8x8x128xbf16>,
    %c1_115 = arith.constant 1 : index
    %c0_116 = arith.constant 0 : index
    %c0_117 = arith.constant 0 : index
    %112 = vector.load %arg13[%c1_115, %c0_116, %c0_117] : memref<10x10x128xbf16, #tpu.memory_space<vmem>>, vector<8x8x128xbf16>
    %113 = vector.shape_cast %112 : vector<8x8x128xbf16> to vector<64x128xbf16>
    %c1_118 = arith.constant 1 : index
    %c1_119 = arith.constant 1 : index
    %c0_120 = arith.constant 0 : index
    %114 = vector.load %arg13[%c1_118, %c1_119, %c0_120] : memref<10x10x128xbf16, #tpu.memory_space<vmem>>, vector<8x8x128xbf16>
    %115 = vector.shape_cast %114 : vector<8x8x128xbf16> to vector<64x128xbf16>
    %c1_121 = arith.constant 1 : index
    %c2_122 = arith.constant 2 : index
    %c0_123 = arith.constant 0 : index
    %116 = vector.load %arg13[%c1_121, %c2_122, %c0_123] : memref<10x10x128xbf16, #tpu.memory_space<vmem>>, vector<8x8x128xbf16>
    %117 = vector.shape_cast %116 : vector<8x8x128xbf16> to vector<64x128xbf16>
    %118 = tpu.concatenate %113, %115, %117 in 1 : vector<64x128xbf16>, vector<64x128xbf16>, vector<64x128xbf16> -> vector<64x384xbf16>
    %c0_124 = arith.constant 0 : index
    %c0_125 = arith.constant 0 : index
    %c0_126 = arith.constant 0 : index
    %119 = vector.load %arg5[%c0_124, %c0_125, %c0_126] : memref<1x384x128xbf16, #tpu.memory_space<vmem>>, vector<1x384x128xbf16>
    %120 = vector.shape_cast %119 : vector<1x384x128xbf16> to vector<384x128xbf16>
    %cst_127 = arith.constant dense<0.000000e+00> : vector<64x128xf32>
    %121 = tpu.matmul %118, %120, %cst_127 {dimension_numbers = #tpu.dot_dimension_numbers<[1], [0], [0], [1], [0, 0, 1, 1], [], []>} : vector<64x384xbf16>, vector<384x128xbf16>, vector<64x128xf32> -> vector<64x128xf32>
    %c1_128 = arith.constant 1 : index
    %c0_129 = arith.constant 0 : index
    %122 = vector.load %arg8[%c1_128, %c0_129] : memref<4x128xf32, #tpu.memory_space<vmem>>, vector<1x128xf32>
    %123 = vector.broadcast %122 : vector<1x128xf32> to vector<64x128xf32>
    %124 = arith.mulf %121, %123 : vector<64x128xf32>
    %c1_130 = arith.constant 1 : index
    %c0_131 = arith.constant 0 : index
    %125 = vector.load %arg9[%c1_130, %c0_131] : memref<4x128xf32, #tpu.memory_space<vmem>>, vector<1x128xf32>
    %126 = vector.broadcast %125 : vector<1x128xf32> to vector<64x128xf32>
    %127 = arith.addf %124, %126 : vector<64x128xf32>
    %cst_132 = arith.constant 0.000000e+00 : f32
    %128 = vector.broadcast %cst_132 : f32 to vector<64x128xf32>
    %129 = arith.cmpf ogt, %127, %128 : vector<64x128xf32>
    %cst_133 = arith.constant 0.00999999977 : f32
    %130 = vector.broadcast %cst_133 : f32 to vector<64x128xf32>
    %131 = arith.mulf %130, %127 : vector<64x128xf32>
    %132 = arith.select %129, %127, %131 : vector<64x128xi1>, vector<64x128xf32>
    %133 = vector.shape_cast %132 : vector<64x128xf32> to vector<8x8x128xf32>
    %134 = arith.truncf %133 : vector<8x8x128xf32> to vector<8x8x128xbf16>
    %c1_134 = arith.constant 1 : index
    %c1_135 = arith.constant 1 : index
    %c0_136 = arith.constant 0 : index
    %135 = vector.load %arg13[%c1_134, %c1_135, %c0_136] : memref<10x10x128xbf16, #tpu.memory_space<vmem>>, vector<8x8x128xbf16>
    tpu.vector_store %arg13[%c1_134, %c1_135, %c0_136], %134 {strides = array<i32>} : memref<10x10x128xbf16, #tpu.memory_space<vmem>>, vector<8x8x128xbf16>,
    %c0_137 = arith.constant 0 : index
    %c1_138 = arith.constant 1 : index
    %c0_139 = arith.constant 0 : index
    %136 = vector.load %arg13[%c0_137, %c1_138, %c0_139] : memref<10x10x128xbf16, #tpu.memory_space<vmem>>, vector<8x8x128xbf16>
    %137 = vector.shape_cast %136 : vector<8x8x128xbf16> to vector<64x128xbf16>
    %c0_140 = arith.constant 0 : index
    %c0_141 = arith.constant 0 : index
    %c0_142 = arith.constant 0 : index
    %138 = vector.load %arg6[%c0_140, %c0_141, %c0_142] : memref<3x128x128xbf16, #tpu.memory_space<vmem>>, vector<1x128x128xbf16>
    %139 = vector.shape_cast %138 : vector<1x128x128xbf16> to vector<128x128xbf16>
    %cst_143 = arith.constant dense<0.000000e+00> : vector<64x128xf32>
    %140 = tpu.matmul %137, %139, %cst_143 {dimension_numbers = #tpu.dot_dimension_numbers<[1], [0], [0], [1], [0, 0, 1, 1], [], []>} : vector<64x128xbf16>, vector<128x128xbf16>, vector<64x128xf32> -> vector<64x128xf32>
    %c1_144 = arith.constant 1 : index
    %c1_145 = arith.constant 1 : index
    %c0_146 = arith.constant 0 : index
    %141 = vector.load %arg13[%c1_144, %c1_145, %c0_146] : memref<10x10x128xbf16, #tpu.memory_space<vmem>>, vector<8x8x128xbf16>
    %142 = vector.shape_cast %141 : vector<8x8x128xbf16> to vector<64x128xbf16>
    %c1_147 = arith.constant 1 : index
    %c0_148 = arith.constant 0 : index
    %c0_149 = arith.constant 0 : index
    %143 = vector.load %arg6[%c1_147, %c0_148, %c0_149] : memref<3x128x128xbf16, #tpu.memory_space<vmem>>, vector<1x128x128xbf16>
    %144 = vector.shape_cast %143 : vector<1x128x128xbf16> to vector<128x128xbf16>
    %cst_150 = arith.constant dense<0.000000e+00> : vector<64x128xf32>
    %145 = tpu.matmul %142, %144, %cst_150 {dimension_numbers = #tpu.dot_dimension_numbers<[1], [0], [0], [1], [0, 0, 1, 1], [], []>} : vector<64x128xbf16>, vector<128x128xbf16>, vector<64x128xf32> -> vector<64x128xf32>
    %146 = arith.addf %140, %145 : vector<64x128xf32>
    %c2_151 = arith.constant 2 : index
    %c1_152 = arith.constant 1 : index
    %c0_153 = arith.constant 0 : index
    %147 = vector.load %arg13[%c2_151, %c1_152, %c0_153] : memref<10x10x128xbf16, #tpu.memory_space<vmem>>, vector<8x8x128xbf16>
    %148 = vector.shape_cast %147 : vector<8x8x128xbf16> to vector<64x128xbf16>
    %c2_154 = arith.constant 2 : index
    %c0_155 = arith.constant 0 : index
    %c0_156 = arith.constant 0 : index
    %149 = vector.load %arg6[%c2_154, %c0_155, %c0_156] : memref<3x128x128xbf16, #tpu.memory_space<vmem>>, vector<1x128x128xbf16>
    %150 = vector.shape_cast %149 : vector<1x128x128xbf16> to vector<128x128xbf16>
    %cst_157 = arith.constant dense<0.000000e+00> : vector<64x128xf32>
    %151 = tpu.matmul %148, %150, %cst_157 {dimension_numbers = #tpu.dot_dimension_numbers<[1], [0], [0], [1], [0, 0, 1, 1], [], []>} : vector<64x128xbf16>, vector<128x128xbf16>, vector<64x128xf32> -> vector<64x128xf32>
    %152 = arith.addf %146, %151 : vector<64x128xf32>
    %c2_158 = arith.constant 2 : index
    %c0_159 = arith.constant 0 : index
    %153 = vector.load %arg8[%c2_158, %c0_159] : memref<4x128xf32, #tpu.memory_space<vmem>>, vector<1x128xf32>
    %154 = vector.broadcast %153 : vector<1x128xf32> to vector<64x128xf32>
    %155 = arith.mulf %152, %154 : vector<64x128xf32>
    %c2_160 = arith.constant 2 : index
    %c0_161 = arith.constant 0 : index
    %156 = vector.load %arg9[%c2_160, %c0_161] : memref<4x128xf32, #tpu.memory_space<vmem>>, vector<1x128xf32>
    %157 = vector.broadcast %156 : vector<1x128xf32> to vector<64x128xf32>
    %158 = arith.addf %155, %157 : vector<64x128xf32>
    %cst_162 = arith.constant 0.000000e+00 : f32
    %159 = vector.broadcast %cst_162 : f32 to vector<64x128xf32>
    %160 = arith.cmpf ogt, %158, %159 : vector<64x128xf32>
    %cst_163 = arith.constant 0.00999999977 : f32
    %161 = vector.broadcast %cst_163 : f32 to vector<64x128xf32>
    %162 = arith.mulf %161, %158 : vector<64x128xf32>
    %163 = arith.select %160, %158, %162 : vector<64x128xi1>, vector<64x128xf32>
    %164 = vector.shape_cast %163 : vector<64x128xf32> to vector<8x8x128xf32>
    %165 = arith.truncf %164 : vector<8x8x128xf32> to vector<8x8x128xbf16>
    %c1_164 = arith.constant 1 : index
    %c1_165 = arith.constant 1 : index
    %c0_166 = arith.constant 0 : index
    %166 = vector.load %arg13[%c1_164, %c1_165, %c0_166] : memref<10x10x128xbf16, #tpu.memory_space<vmem>>, vector<8x8x128xbf16>
    tpu.vector_store %arg13[%c1_164, %c1_165, %c0_166], %165 {strides = array<i32>} : memref<10x10x128xbf16, #tpu.memory_space<vmem>>, vector<8x8x128xbf16>,
    %c0_167 = arith.constant 0 : index
    %c0_168 = arith.constant 0 : index
    %c0_169 = arith.constant 0 : index
    %167 = vector.load %arg13[%c0_167, %c0_168, %c0_169] : memref<10x10x128xbf16, #tpu.memory_space<vmem>>, vector<8x8x128xbf16>
    %168 = vector.shape_cast %167 : vector<8x8x128xbf16> to vector<64x128xbf16>
    %c0_170 = arith.constant 0 : index
    %c1_171 = arith.constant 1 : index
    %c0_172 = arith.constant 0 : index
    %169 = vector.load %arg13[%c0_170, %c1_171, %c0_172] : memref<10x10x128xbf16, #tpu.memory_space<vmem>>, vector<8x8x128xbf16>
    %170 = vector.shape_cast %169 : vector<8x8x128xbf16> to vector<64x128xbf16>
    %c0_173 = arith.constant 0 : index
    %c2_174 = arith.constant 2 : index
    %c0_175 = arith.constant 0 : index
    %171 = vector.load %arg13[%c0_173, %c2_174, %c0_175] : memref<10x10x128xbf16, #tpu.memory_space<vmem>>, vector<8x8x128xbf16>
    %172 = vector.shape_cast %171 : vector<8x8x128xbf16> to vector<64x128xbf16>
    %173 = tpu.concatenate %168, %170, %172 in 1 : vector<64x128xbf16>, vector<64x128xbf16>, vector<64x128xbf16> -> vector<64x384xbf16>
    %c0_176 = arith.constant 0 : index
    %c0_177 = arith.constant 0 : index
    %c0_178 = arith.constant 0 : index
    %174 = vector.load %arg7[%c0_176, %c0_177, %c0_178] : memref<3x384x128xbf16, #tpu.memory_space<vmem>>, vector<1x384x128xbf16>
    %175 = vector.shape_cast %174 : vector<1x384x128xbf16> to vector<384x128xbf16>
    %cst_179 = arith.constant dense<0.000000e+00> : vector<64x128xf32>
    %176 = tpu.matmul %173, %175, %cst_179 {dimension_numbers = #tpu.dot_dimension_numbers<[1], [0], [0], [1], [0, 0, 1, 1], [], []>} : vector<64x384xbf16>, vector<384x128xbf16>, vector<64x128xf32> -> vector<64x128xf32>
    %c1_180 = arith.constant 1 : index
    %c0_181 = arith.constant 0 : index
    %c0_182 = arith.constant 0 : index
    %177 = vector.load %arg13[%c1_180, %c0_181, %c0_182] : memref<10x10x128xbf16, #tpu.memory_space<vmem>>, vector<8x8x128xbf16>
    %178 = vector.shape_cast %177 : vector<8x8x128xbf16> to vector<64x128xbf16>
    %c1_183 = arith.constant 1 : index
    %c1_184 = arith.constant 1 : index
    %c0_185 = arith.constant 0 : index
    %179 = vector.load %arg13[%c1_183, %c1_184, %c0_185] : memref<10x10x128xbf16, #tpu.memory_space<vmem>>, vector<8x8x128xbf16>
    %180 = vector.shape_cast %179 : vector<8x8x128xbf16> to vector<64x128xbf16>
    %c1_186 = arith.constant 1 : index
    %c2_187 = arith.constant 2 : index
    %c0_188 = arith.constant 0 : index
    %181 = vector.load %arg13[%c1_186, %c2_187, %c0_188] : memref<10x10x128xbf16, #tpu.memory_space<vmem>>, vector<8x8x128xbf16>
    %182 = vector.shape_cast %181 : vector<8x8x128xbf16> to vector<64x128xbf16>
    %183 = tpu.concatenate %178, %180, %182 in 1 : vector<64x128xbf16>, vector<64x128xbf16>, vector<64x128xbf16> -> vector<64x384xbf16>
    %c1_189 = arith.constant 1 : index
    %c0_190 = arith.constant 0 : index
    %c0_191 = arith.constant 0 : index
    %184 = vector.load %arg7[%c1_189, %c0_190, %c0_191] : memref<3x384x128xbf16, #tpu.memory_space<vmem>>, vector<1x384x128xbf16>
    %185 = vector.shape_cast %184 : vector<1x384x128xbf16> to vector<384x128xbf16>
    %cst_192 = arith.constant dense<0.000000e+00> : vector<64x128xf32>
    %186 = tpu.matmul %183, %185, %cst_192 {dimension_numbers = #tpu.dot_dimension_numbers<[1], [0], [0], [1], [0, 0, 1, 1], [], []>} : vector<64x384xbf16>, vector<384x128xbf16>, vector<64x128xf32> -> vector<64x128xf32>
    %187 = arith.addf %176, %186 : vector<64x128xf32>
    %c2_193 = arith.constant 2 : index
    %c0_194 = arith.constant 0 : index
    %c0_195 = arith.constant 0 : index
    %188 = vector.load %arg13[%c2_193, %c0_194, %c0_195] : memref<10x10x128xbf16, #tpu.memory_space<vmem>>, vector<8x8x128xbf16>
    %189 = vector.shape_cast %188 : vector<8x8x128xbf16> to vector<64x128xbf16>
    %c2_196 = arith.constant 2 : index
    %c1_197 = arith.constant 1 : index
    %c0_198 = arith.constant 0 : index
    %190 = vector.load %arg13[%c2_196, %c1_197, %c0_198] : memref<10x10x128xbf16, #tpu.memory_space<vmem>>, vector<8x8x128xbf16>
    %191 = vector.shape_cast %190 : vector<8x8x128xbf16> to vector<64x128xbf16>
    %c2_199 = arith.constant 2 : index
    %c2_200 = arith.constant 2 : index
    %c0_201 = arith.constant 0 : index
    %192 = vector.load %arg13[%c2_199, %c2_200, %c0_201] : memref<10x10x128xbf16, #tpu.memory_space<vmem>>, vector<8x8x128xbf16>
    %193 = vector.shape_cast %192 : vector<8x8x128xbf16> to vector<64x128xbf16>
    %194 = tpu.concatenate %189, %191, %193 in 1 : vector<64x128xbf16>, vector<64x128xbf16>, vector<64x128xbf16> -> vector<64x384xbf16>
    %c2_202 = arith.constant 2 : index
    %c0_203 = arith.constant 0 : index
    %c0_204 = arith.constant 0 : index
    %195 = vector.load %arg7[%c2_202, %c0_203, %c0_204] : memref<3x384x128xbf16, #tpu.memory_space<vmem>>, vector<1x384x128xbf16>
    %196 = vector.shape_cast %195 : vector<1x384x128xbf16> to vector<384x128xbf16>
    %cst_205 = arith.constant dense<0.000000e+00> : vector<64x128xf32>
    %197 = tpu.matmul %194, %196, %cst_205 {dimension_numbers = #tpu.dot_dimension_numbers<[1], [0], [0], [1], [0, 0, 1, 1], [], []>} : vector<64x384xbf16>, vector<384x128xbf16>, vector<64x128xf32> -> vector<64x128xf32>
    %198 = arith.addf %187, %197 : vector<64x128xf32>
    %c3 = arith.constant 3 : index
    %c0_206 = arith.constant 0 : index
    %199 = vector.load %arg8[%c3, %c0_206] : memref<4x128xf32, #tpu.memory_space<vmem>>, vector<1x128xf32>
    %200 = vector.broadcast %199 : vector<1x128xf32> to vector<64x128xf32>
    %201 = arith.mulf %198, %200 : vector<64x128xf32>
    %c3_207 = arith.constant 3 : index
    %c0_208 = arith.constant 0 : index
    %202 = vector.load %arg9[%c3_207, %c0_208] : memref<4x128xf32, #tpu.memory_space<vmem>>, vector<1x128xf32>
    %203 = vector.broadcast %202 : vector<1x128xf32> to vector<64x128xf32>
    %204 = arith.addf %201, %203 : vector<64x128xf32>
    %cst_209 = arith.constant 0.000000e+00 : f32
    %205 = vector.broadcast %cst_209 : f32 to vector<64x128xf32>
    %206 = arith.cmpf ogt, %204, %205 : vector<64x128xf32>
    %cst_210 = arith.constant 0.00999999977 : f32
    %207 = vector.broadcast %cst_210 : f32 to vector<64x128xf32>
    %208 = arith.mulf %207, %204 : vector<64x128xf32>
    %209 = arith.select %206, %204, %208 : vector<64x128xi1>, vector<64x128xf32>
    %210 = vector.shape_cast %209 : vector<64x128xf32> to vector<8x8x128xf32>
    %c0_211 = arith.constant 0 : index
    %c0_212 = arith.constant 0 : index
    %c0_213 = arith.constant 0 : index
    %c0_214 = arith.constant 0 : index
    %211 = vector.load %arg10[%c0_211, %c0_212, %c0_213, %c0_214] : memref<1x8x8x128xf32, #tpu.memory_space<vmem>>, vector<1x8x8x128xf32>
    %212 = vector.shape_cast %211 : vector<1x8x8x128xf32> to vector<8x8x128xf32>
    %213 = vector.shape_cast %210 : vector<8x8x128xf32> to vector<1x8x8x128xf32>
    tpu.vector_store %arg10[%c0_211, %c0_212, %c0_213, %c0_214], %213 {strides = array<i32>} : memref<1x8x8x128xf32, #tpu.memory_space<vmem>>, vector<1x8x8x128xf32>,
    return
  }
  func.func @transform_0(%arg0: i32) -> (i32, i32, i32, i32) {
    %c0_i32 = arith.constant 0 : i32
    %c0_i32_0 = arith.constant 0 : i32
    %c0_i32_1 = arith.constant 0 : i32
    %c0_i32_2 = arith.constant 0 : i32
    return %arg0, %c0_i32, %c0_i32_0, %c0_i32_1 : i32, i32, i32, i32
  }
  func.func @transform_1(%arg0: i32) -> (i32, i32, i32, i32) {
    %c0_i32 = arith.constant 0 : i32
    %c0_i32_0 = arith.constant 0 : i32
    %c0_i32_1 = arith.constant 0 : i32
    %c0_i32_2 = arith.constant 0 : i32
    return %arg0, %c0_i32, %c0_i32_0, %c0_i32_1 : i32, i32, i32, i32
  }
  func.func @transform_2(%arg0: i32) -> (i32, i32, i32) {
    %c0_i32 = arith.constant 0 : i32
    %c0_i32_0 = arith.constant 0 : i32
    %c0_i32_1 = arith.constant 0 : i32
    %c0_i32_2 = arith.constant 0 : i32
    return %c0_i32, %c0_i32_0, %c0_i32_1 : i32, i32, i32
  }
  func.func @transform_3(%arg0: i32) -> (i32, i32, i32) {
    %c0_i32 = arith.constant 0 : i32
    %c0_i32_0 = arith.constant 0 : i32
    %c0_i32_1 = arith.constant 0 : i32
    %c0_i32_2 = arith.constant 0 : i32
    return %c0_i32, %c0_i32_0, %c0_i32_1 : i32, i32, i32
  }
  func.func @transform_4(%arg0: i32) -> (i32, i32, i32) {
    %c0_i32 = arith.constant 0 : i32
    %c0_i32_0 = arith.constant 0 : i32
    %c0_i32_1 = arith.constant 0 : i32
    %c0_i32_2 = arith.constant 0 : i32
    return %c0_i32, %c0_i32_0, %c0_i32_1 : i32, i32, i32
  }
  func.func @transform_5(%arg0: i32) -> (i32, i32, i32) {
    %c0_i32 = arith.constant 0 : i32
    %c0_i32_0 = arith.constant 0 : i32
    %c0_i32_1 = arith.constant 0 : i32
    %c0_i32_2 = arith.constant 0 : i32
    return %c0_i32, %c0_i32_0, %c0_i32_1 : i32, i32, i32
  }
  func.func @transform_6(%arg0: i32) -> (i32, i32, i32) {
    %c0_i32 = arith.constant 0 : i32
    %c0_i32_0 = arith.constant 0 : i32
    %c0_i32_1 = arith.constant 0 : i32
    %c0_i32_2 = arith.constant 0 : i32
    return %c0_i32, %c0_i32_0, %c0_i32_1 : i32, i32, i32
  }
  func.func @transform_7(%arg0: i32) -> (i32, i32) {
    %c0_i32 = arith.constant 0 : i32
    %c0_i32_0 = arith.constant 0 : i32
    %c0_i32_1 = arith.constant 0 : i32
    return %c0_i32, %c0_i32_0 : i32, i32
  }
  func.func @transform_8(%arg0: i32) -> (i32, i32) {
    %c0_i32 = arith.constant 0 : i32
    %c0_i32_0 = arith.constant 0 : i32
    %c0_i32_1 = arith.constant 0 : i32
    return %c0_i32, %c0_i32_0 : i32, i32
  }
  func.func @transform_9(%arg0: i32) -> (i32, i32, i32, i32) {
    %c0_i32 = arith.constant 0 : i32
    %c0_i32_0 = arith.constant 0 : i32
    %c0_i32_1 = arith.constant 0 : i32
    %c0_i32_2 = arith.constant 0 : i32
    return %arg0, %c0_i32, %c0_i32_0, %c0_i32_1 : i32, i32, i32, i32
  }
}

</mosaic_0001>

<llo_original>
// kernel: tile.14
$region0: #{tile.14}
  %s0 = inlined_call_operand.vmem [shape: f32[4,8,16], index: 0, kind: input, shape index: {}]
  %s1 = inlined_call_operand.vmem [shape: f32[4,128], index: 1, kind: output, shape index: {}]
  $region1: #{tile.14} parent=0
    #allocation0 [shape = 'u8[4096]{0}', space=vmem, size = 0x1000, scoped, tag = 'scoped mem for output reshape']
    %v2 = vld [vmem:[%s0] ss:$8 sm:$0xf]
    %vm3 = vcmask 130048
    %4 = vst.msk [vmem:[#allocation0] sm:$0xf] %vm3, %v2
    %s5 = scalar_lea.vmem %s0, 7
    %v6 = vld [vmem:[%s5] ss:$8 sm:$0xf]
    %7 = vrot.lane.b32.xlu0 %v6, 112
    %v8 = vpop.permute.xlu0 %7
    %vm9 = vcmask 1048448
    %10 = vst.msk [vmem:[#allocation0] sm:$0xf] %vm9, %v8
    %s11 = scalar_lea.vmem %s0, 6
    %v12 = vld [vmem:[%s11] ss:$8 sm:$0xf]
    %13 = vrot.lane.b32.xlu0 %v12, 96
    %v14 = vpop.permute.xlu0 %13
    %vm15 = vcmask 917248
    %16 = vst.msk [vmem:[#allocation0] sm:$0xf] %vm15, %v14
    %s17 = scalar_lea.vmem %s0, 5
    %v18 = vld [vmem:[%s17] ss:$8 sm:$0xf]
    %19 = vrot.lane.b32.xlu0 %v18, 80
    %v20 = vpop.permute.xlu0 %19
    %vm21 = vcmask 786048
    %22 = vst.msk [vmem:[#allocation0] sm:$0xf] %vm21, %v20
    %s23 = scalar_lea.vmem %s0, 4
    %v24 = vld [vmem:[%s23] ss:$8 sm:$0xf]
    %25 = vrot.lane.b32.xlu0 %v24, 64
    %v26 = vpop.permute.xlu0 %25
    %vm27 = vcmask 654848
    %28 = vst.msk [vmem:[#allocation0] sm:$0xf] %vm27, %v26
    %s29 = scalar_lea.vmem %s0, 3
    %v30 = vld [vmem:[%s29] ss:$8 sm:$0xf]
    %31 = vrot.lane.b32.xlu0 %v30, 48
    %v32 = vpop.permute.xlu0 %31
    %vm33 = vcmask 523648
    %34 = vst.msk [vmem:[#allocation0] sm:$0xf] %vm33, %v32
    %s35 = scalar_lea.vmem %s0, 2
    %v36 = vld [vmem:[%s35] ss:$8 sm:$0xf]
    %37 = vrot.lane.b32.xlu0 %v36, 32
    %v38 = vpop.permute.xlu0 %37
    %vm39 = vcmask 392448
    %40 = vst.msk [vmem:[#allocation0] sm:$0xf] %vm39, %v38
    %s41 = scalar_lea.vmem %s0, 1
    %v42 = vld [vmem:[%s41] ss:$8 sm:$0xf]
    %43 = vrot.lane.b32.xlu0 %v42, 16
    %v44 = vpop.permute.xlu0 %43
    %vm45 = vcmask 261248
    %46 = vst.msk [vmem:[#allocation0] sm:$0xf] %vm45, %v44
    %s48 = sshllo.u32 0, 4
    %v50 = vld [vmem:[#allocation0] sm:%s48]
    %s51 = sshllo.u32 0, 4
    %52 = vst [vmem:[%s1] sm:%s51] %v50

// kernel: upblock_forward.1
$region0: #{upblock_forward.1}
  #allocation0 [shape = 'u32[]', space=smem, size = 0x4, offset = 0x4, fixed_abs, tag = 'smem constant byte address 0x4 - core index']
  #allocation1 [shape = 'u32[144,128]{1,0:T(1,128)}', space=vmem, size = 0x12000, scoped, tag = 'internal scratch']
  #allocation2 [shape = 'bf16[6,6,256]{2,1,0:T(8,128)(2,1)}', space=vmem, size = 0x6000, scoped, tag = 'scratch operand']
  #allocation3 [shape = 'bf16[5,5,128]{2,1,0:T(8,128)(2,1)}', space=vmem, size = 0x2800, scoped, tag = 'scratch operand']
  #allocation4 [shape = 'bf16[10,10,128]{2,1,0:T(8,128)(2,1)}', space=vmem, size = 0xa000, scoped, tag = 'scratch operand']
  %s0 = inlined_call_operand.vmem [shape: bf16[2,4,4,256], index: 0, kind: input, shape index: {}]
  %s1 = inlined_call_operand.vmem [shape: bf16[2,8,8,128], index: 1, kind: input, shape index: {}]
  %s2 = inlined_call_operand.vmem [shape: bf16[3,768,128], index: 2, kind: input, shape index: {}]
  %s3 = inlined_call_operand.vmem [shape: bf16[2,256,512], index: 3, kind: input, shape index: {}]
  %s4 = inlined_call_operand.vmem [shape: bf16[1,384,128], index: 4, kind: input, shape index: {}]
  %s5 = inlined_call_operand.vmem [shape: bf16[3,128,128], index: 5, kind: input, shape index: {}]
  %s6 = inlined_call_operand.vmem [shape: bf16[3,384,128], index: 6, kind: input, shape index: {}]
  %s7 = inlined_call_operand.vmem [shape: f32[4,128], index: 7, kind: input, shape index: {}]
  %s8 = inlined_call_operand.vmem [shape: f32[4,128], index: 8, kind: input, shape index: {}]
  %s9 = inlined_call_operand.vmem [shape: f32[2,8,8,128], index: 9, kind: output, shape index: {}]
  %s10 = sld [smem:[#allocation0]]
  $region69: #{upblock_forward.1} parent=0
    _
  %s12 = ssub.s32 1, %s10
  %s13 = scalar_select 0, %s12, %s10
  loop: start=0, step=1, limit=4
  $region2: #{upblock_forward.1} parent=0 // loop_pre_header
    _
  $region3: #{upblock_forward.1} parent=0 // loop_header
    %s15 = sphi 0, %s19
    %p16 = scmp.ge.s32.totalorder %s15, 4
    %s25 = sphi 0, %s27
    %s28 = sphi 0, %s25
    %s29 = sphi 0, %s28
    %s45 = sphi 0, %s29
    %s51 = sphi 0, %s53
    %s54 = sphi 0, %s51
    %s55 = sphi 0, %s54
    %s71 = sphi 0, %s55
    %s75 = sphi 0, %s75
    %s77 = sphi 0, %s75
    %s78 = sphi 0, %s77
    %s92 = sphi 0, %s78
    %s96 = sphi 0, %s96
    %s98 = sphi 0, %s96
    %s99 = sphi 0, %s98
    %s113 = sphi 0, %s99
    %s117 = sphi 0, %s117
    %s119 = sphi 0, %s117
    %s120 = sphi 0, %s119
    %s134 = sphi 0, %s120
    %s138 = sphi 0, %s138
    %s140 = sphi 0, %s138
    %s141 = sphi 0, %s140
    %s155 = sphi 0, %s141
    %s159 = sphi 0, %s159
    %s161 = sphi 0, %s159
    %s162 = sphi 0, %s161
    %s176 = sphi 0, %s162
    %s180 = sphi 0, %s180
    %s182 = sphi 0, %s180
    %s183 = sphi 0, %s182
    %s197 = sphi 0, %s183
    %s201 = sphi 0, %s201
    %s203 = sphi 0, %s201
    %s204 = sphi 0, %s203
    %s218 = sphi 0, %s204
    %s224 = sphi 0, %s226
    %s227 = sphi 0, %s224
    %s228 = sphi 0, %s227
    %s244 = sphi 0, %s228
  $region4: #{upblock_forward.1} parent=0 // loop_header_branch
    %18 = sbr.rel (%p16) target = $region8
  $region5: #{upblock_forward.1} parent=0 // loop_body
    %s20 = ssub.s32 %s15, 1
    %s21 = ssub.s32 %s15, 2
    %s22 = sadd.s32 %s15, 1
    %s23 = ssub.s32 %s15, %s22
    %p24 = scmp.eq.s32.totalorder %s23, 0
    %s26 = sadd.s32 %s25, 1
    %s27 = scalar_select %p24, %s25, %s26
    %p30 = pneg %p24
    %p31 = scmp.eq.s32.totalorder %s15, 1
    %p32 = por %p30, %p31
    %p33 = scmp.ne.s32.totalorder %s25, %s28
    %p34 = scmp.eq.s32.totalorder %s15, 0
    %p35 = por %p33, %p34
    %p36 = scmp.ne.s32.totalorder %s25, %s28
    %p37 = scmp.eq.s32.totalorder %s20, 1
    %p38 = por %p36, %p37
    %p39 = scmp.ne.s32.totalorder %s28, %s29
    %p40 = scmp.eq.s32.totalorder %s20, 0
    %p41 = por %p39, %p40
    %p42 = scmp.ne.s32.totalorder %s28, %s29
    %p43 = scmp.eq.s32.totalorder %s21, 1
    %p44 = por %p42, %p43
    %p46 = scmp.ne.s32.totalorder %s29, %s45
    %p47 = scmp.eq.s32.totalorder %s21, 0
    %p48 = por %p46, %p47
    %s49 = ssub.s32 %s15, %s22
    %p50 = scmp.eq.s32.totalorder %s49, 0
    %s52 = sadd.s32 %s51, 1
    %s53 = scalar_select %p50, %s51, %s52
    %p56 = pneg %p50
    %p57 = scmp.eq.s32.totalorder %s15, 1
    %p58 = por %p56, %p57
    %p59 = scmp.ne.s32.totalorder %s51, %s54
    %p60 = scmp.eq.s32.totalorder %s15, 0
    %p61 = por %p59, %p60
    %p62 = scmp.ne.s32.totalorder %s51, %s54
    %p63 = scmp.eq.s32.totalorder %s20, 1
    %p64 = por %p62, %p63
    %p65 = scmp.ne.s32.totalorder %s54, %s55
    %p66 = scmp.eq.s32.totalorder %s20, 0
    %p67 = por %p65, %p66
    %p68 = scmp.ne.s32.totalorder %s54, %s55
    %p69 = scmp.eq.s32.totalorder %s21, 1
    %p70 = por %p68, %p69
    %p72 = scmp.ne.s32.totalorder %s55, %s71
    %p73 = scmp.eq.s32.totalorder %s21, 0
    %p74 = por %p72, %p73
    %s76 = sadd.s32 %s75, 1
    %p79 = scmp.eq.s32.totalorder %s15, 1
    %p80 = scmp.ne.s32.totalorder %s75, %s77
    %p81 = scmp.eq.s32.totalorder %s15, 0
    %p82 = por %p80, %p81
    %p83 = scmp.ne.s32.totalorder %s75, %s77
    %p84 = scmp.eq.s32.totalorder %s20, 1
    %p85 = por %p83, %p84
    %p86 = scmp.ne.s32.totalorder %s77, %s78
    %p87 = scmp.eq.s32.totalorder %s20, 0
    %p88 = por %p86, %p87
    %p89 = scmp.ne.s32.totalorder %s77, %s78
    %p90 = scmp.eq.s32.totalorder %s21, 1
    %p91 = por %p89, %p90
    %p93 = scmp.ne.s32.totalorder %s78, %s92
    %p94 = scmp.eq.s32.totalorder %s21, 0
    %p95 = por %p93, %p94
    %s97 = sadd.s32 %s96, 1
    %p100 = scmp.eq.s32.totalorder %s15, 1
    %p101 = scmp.ne.s32.totalorder %s96, %s98
    %p102 = scmp.eq.s32.totalorder %s15, 0
    %p103 = por %p101, %p102
    %p104 = scmp.ne.s32.totalorder %s96, %s98
    %p105 = scmp.eq.s32.totalorder %s20, 1
    %p106 = por %p104, %p105
    %p107 = scmp.ne.s32.totalorder %s98, %s99
    %p108 = scmp.eq.s32.totalorder %s20, 0
    %p109 = por %p107, %p108
    %p110 = scmp.ne.s32.totalorder %s98, %s99
    %p111 = scmp.eq.s32.totalorder %s21, 1
    %p112 = por %p110, %p111
    %p114 = scmp.ne.s32.totalorder %s99, %s113
    %p115 = scmp.eq.s32.totalorder %s21, 0
    %p116 = por %p114, %p115
    %s118 = sadd.s32 %s117, 1
    %p121 = scmp.eq.s32.totalorder %s15, 1
    %p122 = scmp.ne.s32.totalorder %s117, %s119
    %p123 = scmp.eq.s32.totalorder %s15, 0
    %p124 = por %p122, %p123
    %p125 = scmp.ne.s32.totalorder %s117, %s119
    %p126 = scmp.eq.s32.totalorder %s20, 1
    %p127 = por %p125, %p126
    %p128 = scmp.ne.s32.totalorder %s119, %s120
    %p129 = scmp.eq.s32.totalorder %s20, 0
    %p130 = por %p128, %p129
    %p131 = scmp.ne.s32.totalorder %s119, %s120
    %p132 = scmp.eq.s32.totalorder %s21, 1
    %p133 = por %p131, %p132
    %p135 = scmp.ne.s32.totalorder %s120, %s134
    %p136 = scmp.eq.s32.totalorder %s21, 0
    %p137 = por %p135, %p136
    %s139 = sadd.s32 %s138, 1
    %p142 = scmp.eq.s32.totalorder %s15, 1
    %p143 = scmp.ne.s32.totalorder %s138, %s140
    %p144 = scmp.eq.s32.totalorder %s15, 0
    %p145 = por %p143, %p144
    %p146 = scmp.ne.s32.totalorder %s138, %s140
    %p147 = scmp.eq.s32.totalorder %s20, 1
    %p148 = por %p146, %p147
    %p149 = scmp.ne.s32.totalorder %s140, %s141
    %p150 = scmp.eq.s32.totalorder %s20, 0
    %p151 = por %p149, %p150
    %p152 = scmp.ne.s32.totalorder %s140, %s141
    %p153 = scmp.eq.s32.totalorder %s21, 1
    %p154 = por %p152, %p153
    %p156 = scmp.ne.s32.totalorder %s141, %s155
    %p157 = scmp.eq.s32.totalorder %s21, 0
    %p158 = por %p156, %p157
    %s160 = sadd.s32 %s159, 1
    %p163 = scmp.eq.s32.totalorder %s15, 1
    %p164 = scmp.ne.s32.totalorder %s159, %s161
    %p165 = scmp.eq.s32.totalorder %s15, 0
    %p166 = por %p164, %p165
    %p167 = scmp.ne.s32.totalorder %s159, %s161
    %p168 = scmp.eq.s32.totalorder %s20, 1
    %p169 = por %p167, %p168
    %p170 = scmp.ne.s32.totalorder %s161, %s162
    %p171 = scmp.eq.s32.totalorder %s20, 0
    %p172 = por %p170, %p171
    %p173 = scmp.ne.s32.totalorder %s161, %s162
    %p174 = scmp.eq.s32.totalorder %s21, 1
    %p175 = por %p173, %p174
    %p177 = scmp.ne.s32.totalorder %s162, %s176
    %p178 = scmp.eq.s32.totalorder %s21, 0
    %p179 = por %p177, %p178
    %s181 = sadd.s32 %s180, 1
    %p184 = scmp.eq.s32.totalorder %s15, 1
    %p185 = scmp.ne.s32.totalorder %s180, %s182
    %p186 = scmp.eq.s32.totalorder %s15, 0
    %p187 = por %p185, %p186
    %p188 = scmp.ne.s32.totalorder %s180, %s182
    %p189 = scmp.eq.s32.totalorder %s20, 1
    %p190 = por %p188, %p189
    %p191 = scmp.ne.s32.totalorder %s182, %s183
    %p192 = scmp.eq.s32.totalorder %s20, 0
    %p193 = por %p191, %p192
    %p194 = scmp.ne.s32.totalorder %s182, %s183
    %p195 = scmp.eq.s32.totalorder %s21, 1
    %p196 = por %p194, %p195
    %p198 = scmp.ne.s32.totalorder %s183, %s197
    %p199 = scmp.eq.s32.totalorder %s21, 0
    %p200 = por %p198, %p199
    %s202 = sadd.s32 %s201, 1
    %p205 = scmp.eq.s32.totalorder %s15, 1
    %p206 = scmp.ne.s32.totalorder %s201, %s203
    %p207 = scmp.eq.s32.totalorder %s15, 0
    %p208 = por %p206, %p207
    %p209 = scmp.ne.s32.totalorder %s201, %s203
    %p210 = scmp.eq.s32.totalorder %s20, 1
    %p211 = por %p209, %p210
    %p212 = scmp.ne.s32.totalorder %s203, %s204
    %p213 = scmp.eq.s32.totalorder %s20, 0
    %p214 = por %p212, %p213
    %p215 = scmp.ne.s32.totalorder %s203, %s204
    %p216 = scmp.eq.s32.totalorder %s21, 1
    %p217 = por %p215, %p216
    %p219 = scmp.ne.s32.totalorder %s204, %s218
    %p220 = scmp.eq.s32.totalorder %s21, 0
    %p221 = por %p219, %p220
    %s222 = ssub.s32 %s15, %s22
    %p223 = scmp.eq.s32.totalorder %s222, 0
    %s225 = sadd.s32 %s224, 1
    %s226 = scalar_select %p223, %s224, %s225
    %p229 = pneg %p223
    %p230 = scmp.eq.s32.totalorder %s15, 1
    %p231 = por %p229, %p230
    %p232 = scmp.ne.s32.totalorder %s224, %s227
    %p233 = scmp.eq.s32.totalorder %s15, 0
    %p234 = por %p232, %p233
    %p235 = scmp.ne.s32.totalorder %s224, %s227
    %p236 = scmp.eq.s32.totalorder %s20, 1
    %p237 = por %p235, %p236
    %p238 = scmp.ne.s32.totalorder %s227, %s228
    %p239 = scmp.eq.s32.totalorder %s20, 0
    %p240 = por %p238, %p239
    %p241 = scmp.ne.s32.totalorder %s227, %s228
    %p242 = scmp.eq.s32.totalorder %s21, 1
    %p243 = por %p241, %p242
    %p245 = scmp.ne.s32.totalorder %s228, %s244
    %p246 = scmp.eq.s32.totalorder %s21, 0
    %p247 = por %p245, %p246
    %p248 = scmp.le.s32.totalorder 1, %s15
    %p249 = scmp.lt.s32.totalorder %s15, 3
    %p250 = pnand %p248, %p249
    %p251 = pneg %p250
    // Predicated region
    $region9: #{upblock_forward.1} parent=5 // pred_check
      _
    $region10: #{upblock_forward.1} parent=5 // pred_check_branch
      %253 = sbr.rel (%p250) target = $region12
    $region11: #{upblock_forward.1} parent=5 // pred_region
      %s254 = ssub.s32 %s15, 1
      // Predicated region
      $region13: #{upblock_forward.1} parent=11 // pred_check
        %p255 = pneg %p88
      $region14: #{upblock_forward.1} parent=11 // pred_check_branch
        %257 = sbr.rel (%p255) target = $region16
      $region15: #{upblock_forward.1} parent=11 // pred_region
        _
      $region16: #{upblock_forward.1} parent=11 // pred_fallthru
        _
      // Predicated region
      $region17: #{upblock_forward.1} parent=11 // pred_check
        %p258 = pneg %p109
      $region18: #{upblock_forward.1} parent=11 // pred_check_branch
        %260 = sbr.rel (%p258) target = $region20
      $region19: #{upblock_forward.1} parent=11 // pred_region
        _
      $region20: #{upblock_forward.1} parent=11 // pred_fallthru
        _
      // Predicated region
      $region21: #{upblock_forward.1} parent=11 // pred_check
        %p261 = pneg %p130
      $region22: #{upblock_forward.1} parent=11 // pred_check_branch
        %263 = sbr.rel (%p261) target = $region24
      $region23: #{upblock_forward.1} parent=11 // pred_region
        _
      $region24: #{upblock_forward.1} parent=11 // pred_fallthru
        _
      // Predicated region
      $region25: #{upblock_forward.1} parent=11 // pred_check
        %p264 = pneg %p151
      $region26: #{upblock_forward.1} parent=11 // pred_check_branch
        %266 = sbr.rel (%p264) target = $region28
      $region27: #{upblock_forward.1} parent=11 // pred_region
        _
      $region28: #{upblock_forward.1} parent=11 // pred_fallthru
        _
      // Predicated region
      $region29: #{upblock_forward.1} parent=11 // pred_check
        %p267 = pneg %p172
      $region30: #{upblock_forward.1} parent=11 // pred_check_branch
        %269 = sbr.rel (%p267) target = $region32
      $region31: #{upblock_forward.1} parent=11 // pred_region
        _
      $region32: #{upblock_forward.1} parent=11 // pred_fallthru
        _
      // Predicated region
      $region33: #{upblock_forward.1} parent=11 // pred_check
        %p270 = pneg %p193
      $region34: #{upblock_forward.1} parent=11 // pred_check_branch
        %272 = sbr.rel (%p270) target = $region36
      $region35: #{upblock_forward.1} parent=11 // pred_region
        _
      $region36: #{upblock_forward.1} parent=11 // pred_fallthru
        _
      // Predicated region
      $region37: #{upblock_forward.1} parent=11 // pred_check
        %p273 = pneg %p214
      $region38: #{upblock_forward.1} parent=11 // pred_check_branch
        %275 = sbr.rel (%p273) target = $region40
      $region39: #{upblock_forward.1} parent=11 // pred_region
        _
      $region40: #{upblock_forward.1} parent=11 // pred_fallthru
        _
    $region12: #{upblock_forward.1} parent=5 // pred_fallthru
      _
    %p276 = scmp.lt.s32.totalorder %s15, 2
    // Predicated region
    $region41: #{upblock_forward.1} parent=5 // pred_check
      %p277 = pneg %p276
    $region42: #{upblock_forward.1} parent=5 // pred_check_branch
      %279 = sbr.rel (%p277) target = $region44
    $region43: #{upblock_forward.1} parent=5 // pred_region
      // Predicated region
      $region45: #{upblock_forward.1} parent=43 // pred_check
        %p280 = pneg %p35
      $region46: #{upblock_forward.1} parent=43 // pred_check_branch
        %282 = sbr.rel (%p280) target = $region48
      $region47: #{upblock_forward.1} parent=43 // pred_region
        %p283 = scmp.lt.s32.totalorder %s15, 1
        %s284 = scalar_select %p283, %s15, 1
        %s285 = smul.addr %s284, 8
        %s286 = smul.addr %s285, 2
        %s287 = scalar_lea.vmem %s0, %s286
      $region48: #{upblock_forward.1} parent=43 // pred_fallthru
        _
      // Predicated region
      $region49: #{upblock_forward.1} parent=43 // pred_check
        %p288 = pneg %p61
      $region50: #{upblock_forward.1} parent=43 // pred_check_branch
        %290 = sbr.rel (%p288) target = $region52
      $region51: #{upblock_forward.1} parent=43 // pred_region
        %p291 = scmp.lt.s32.totalorder %s15, 1
        %s292 = scalar_select %p291, %s15, 1
        %s293 = smul.addr %s292, 8
        %s294 = smul.addr %s293, 4
        %s295 = scalar_lea.vmem %s1, %s294
      $region52: #{upblock_forward.1} parent=43 // pred_fallthru
        _
    $region44: #{upblock_forward.1} parent=5 // pred_fallthru
      _
    %p296 = scmp.le.s32.totalorder 1, %s15
    %p297 = scmp.lt.s32.totalorder %s15, 3
    %p298 = pnand %p296, %p297
    %p299 = pneg %p298
    // Predicated region
    $region53: #{upblock_forward.1} parent=5 // pred_check
      _
    $region54: #{upblock_forward.1} parent=5 // pred_check_branch
      %301 = sbr.rel (%p298) target = $region56
    $region55: #{upblock_forward.1} parent=5 // pred_region
      %s302 = ssub.s32 %s15, 1
      %p303 = scmp.lt.s32.totalorder %s20, 1
      %s304 = scalar_select %p303, %s20, 1
      %s305 = smul.addr %s304, 8
      %s306 = smul.addr %s305, 2
      %s307 = scalar_lea.vmem %s0, %s306
      %p308 = pneg %p41
      %p309 = pneg %p38
      %p310 = scmp.lt.s32.totalorder %s20, 1
      %s311 = scalar_select %p310, %s20, 1
      %s312 = smul.addr %s311, 8
      %s313 = smul.addr %s312, 4
      %s314 = scalar_lea.vmem %s1, %s313
      %p315 = pneg %p67
      %p316 = pneg %p64
      %p317 = pneg %p88
      %p318 = pneg %p85
      %p319 = pneg %p109
      %p320 = pneg %p106
      %p321 = pneg %p130
      %p322 = pneg %p127
      %p323 = pneg %p151
      %p324 = pneg %p148
      %p325 = pneg %p172
      %p326 = pneg %p169
      %p327 = pneg %p193
      %p328 = pneg %p190
      %p329 = pneg %p214
      %p330 = pneg %p211
      %p331 = pneg %p240
      %p332 = pneg %p237
      %p333 = scmp.lt.s32.totalorder %s20, 1
      %s334 = scalar_select %p333, %s20, 1
      %s335 = smul.addr %s334, 8
      %s336 = smul.addr %s335, 8
      %s337 = scalar_lea.vmem %s9, %s336
      %p338 = scmp.lt.s32.totalorder %s20, 1
      %s339 = scalar_select %p338, %s20, 1
      %s340 = smul.addr %s339, 8
      %s341 = smul.addr %s340, 2
      %s342 = scalar_lea.vmem %s0, %s341
      %p343 = scmp.lt.s32.totalorder %s20, 1
      %s344 = scalar_select %p343, %s20, 1
      %s345 = smul.addr %s344, 8
      %s346 = smul.addr %s345, 4
      %s347 = scalar_lea.vmem %s1, %s346
      %p348 = scmp.lt.s32.totalorder %s20, 1
      %s349 = scalar_select %p348, %s20, 1
      %s350 = smul.addr %s349, 8
      %s351 = smul.addr %s350, 8
      %s352 = scalar_lea.vmem %s9, %s351
      %354 = vst [vmem:[#allocation2] sm:$0x77] 0
      %s355 = scalar_lea.vmem [#allocation2], 40
      %356 = vst [vmem:[%s355] sm:$0x77] 0
      %vm357 = vcmask 1040384
      %vm358 = vsmask.f32 256
      %vm359 = vmand %vm357, %vm358
      %vm360 = vcmask 1044484
      %vm361 = vsmask.f32 4352
      %vm362 = vmand %vm360, %vm361
      %vm363 = vmor %vm362, %vm359
      %v364 = vld [vmem:[#allocation2] sm:$0x11]
      %v365 = vsel %vm363, 0, %v364
      %366 = vst [vmem:[#allocation2] sm:$0x11] %v365
      %v367 = vld [vmem:[#allocation2 + $0x8] sm:$0x11]
      %v368 = vsel %vm363, 0, %v367
      %369 = vst [vmem:[#allocation2 + $0x8] sm:$0x11] %v368
      %v370 = vld [vmem:[#allocation2 + $0x10] sm:$0x11]
      %v371 = vsel %vm363, 0, %v370
      %372 = vst [vmem:[#allocation2 + $0x10] sm:$0x11] %v371
      %v373 = vld [vmem:[#allocation2 + $0x18] sm:$0x11]
      %v374 = vsel %vm363, 0, %v373
      %375 = vst [vmem:[#allocation2 + $0x18] sm:$0x11] %v374
      %v376 = vld [vmem:[#allocation2 + $0x20] sm:$0x11]
      %v377 = vsel %vm363, 0, %v376
      %378 = vst [vmem:[#allocation2 + $0x20] sm:$0x11] %v377
      %v379 = vld [vmem:[#allocation2 + $0x28] sm:$0x11]
      %v380 = vsel %vm363, 0, %v379
      %381 = vst [vmem:[#allocation2 + $0x28] sm:$0x11] %v380
      %vm382 = vcmask 1042434
      %vm383 = vsmask.f32 7946
      %vm384 = vmand %vm382, %vm383
      %vm385 = vcmask 1046534
      %vm386 = vsmask.f32 7962
      %vm387 = vmand %vm385, %vm386
      %vm388 = vmor %vm387, %vm384
      %v389 = vld [vmem:[#allocation2] sm:$0x44]
      %v390 = vsel %vm388, 0, %v389
      %391 = vst [vmem:[#allocation2] sm:$0x44] %v390
      %v392 = vld [vmem:[#allocation2 + $0x8] sm:$0x44]
      %v393 = vsel %vm388, 0, %v392
      %394 = vst [vmem:[#allocation2 + $0x8] sm:$0x44] %v393
      %v395 = vld [vmem:[#allocation2 + $0x10] sm:$0x44]
      %v396 = vsel %vm388, 0, %v395
      %397 = vst [vmem:[#allocation2 + $0x10] sm:$0x44] %v396
      %v398 = vld [vmem:[#allocation2 + $0x18] sm:$0x44]
      %v399 = vsel %vm388, 0, %v398
      %400 = vst [vmem:[#allocation2 + $0x18] sm:$0x44] %v399
      %v401 = vld [vmem:[#allocation2 + $0x20] sm:$0x44]
      %v402 = vsel %vm388, 0, %v401
      %403 = vst [vmem:[#allocation2 + $0x20] sm:$0x44] %v402
      %v404 = vld [vmem:[#allocation2 + $0x28] sm:$0x44]
      %v405 = vsel %vm388, 0, %v404
      %406 = vst [vmem:[#allocation2 + $0x28] sm:$0x44] %v405
      %s407 = scalar_lea.vmem [#allocation3], 16
      %vm408 = vcmask 1042432
      %vm409 = vsmask.f32 2304
      %vm410 = vmand %vm408, %vm409
      %v411 = vld [vmem:[%s407] sm:$0x7]
      %v412 = vsel %vm410, 0, %v411
      %413 = vst [vmem:[%s407] sm:$0x7] %v412
      %vm414 = vmand %vm382, %vm409
      %v415 = vld [vmem:[#allocation3] sm:$0x4]
      %v416 = vsel %vm414, 0, %v415
      %417 = vst [vmem:[#allocation3] sm:$0x4] %v416
      %v418 = vld [vmem:[#allocation3 + $0x4] sm:$0x4]
      %v419 = vsel %vm414, 0, %v418
      %420 = vst [vmem:[#allocation3 + $0x4] sm:$0x4] %v419
      %v421 = vld [vmem:[#allocation3 + $0x8] sm:$0x4]
      %v422 = vsel %vm414, 0, %v421
      %423 = vst [vmem:[#allocation3 + $0x8] sm:$0x4] %v422
      %v424 = vld [vmem:[#allocation3 + $0xc] sm:$0x4]
      %v425 = vsel %vm414, 0, %v424
      %426 = vst [vmem:[#allocation3 + $0xc] sm:$0x4] %v425
      %v427 = vld [vmem:[#allocation3 + $0x10] sm:$0x4]
      %v428 = vsel %vm414, 0, %v427
      %429 = vst [vmem:[#allocation3 + $0x10] sm:$0x4] %v428
      %430 = vst [vmem:[#allocation4] sm:$0xf] 0
      %431 = vst [vmem:[#allocation4 + $0x4] sm:$0x1] 0
      %s432 = scalar_lea.vmem [#allocation4], 72
      %433 = vst [vmem:[%s432] sm:$0xf] 0
      %434 = vst [vmem:[%s432 + $0x4] sm:$0x1] 0
      %v435 = vld [vmem:[#allocation4] sm:$0x1]
      %v436 = vsel %vm359, 0, %v435
      %437 = vst [vmem:[#allocation4] sm:$0x1] %v436
      %v438 = vld [vmem:[#allocation4 + $0x8] sm:$0x1]
      %v439 = vsel %vm359, 0, %v438
      %440 = vst [vmem:[#allocation4 + $0x8] sm:$0x1] %v439
      %v441 = vld [vmem:[#allocation4 + $0x10] sm:$0x1]
      %v442 = vsel %vm359, 0, %v441
      %443 = vst [vmem:[#allocation4 + $0x10] sm:$0x1] %v442
      %v444 = vld [vmem:[#allocation4 + $0x18] sm:$0x1]
      %v445 = vsel %vm359, 0, %v444
      %446 = vst [vmem:[#allocation4 + $0x18] sm:$0x1] %v445
      %v447 = vld [vmem:[#allocation4 + $0x20] sm:$0x1]
      %v448 = vsel %vm359, 0, %v447
      %449 = vst [vmem:[#allocation4 + $0x20] sm:$0x1] %v448
      %v450 = vld [vmem:[#allocation4 + $0x28] sm:$0x1]
      %v451 = vsel %vm359, 0, %v450
      %452 = vst [vmem:[#allocation4 + $0x28] sm:$0x1] %v451
      %v453 = vld [vmem:[#allocation4 + $0x30] sm:$0x1]
      %v454 = vsel %vm359, 0, %v453
      %455 = vst [vmem:[#allocation4 + $0x30] sm:$0x1] %v454
      %v456 = vld [vmem:[#allocation4 + $0x38] sm:$0x1]
      %v457 = vsel %vm359, 0, %v456
      %458 = vst [vmem:[#allocation4 + $0x38] sm:$0x1] %v457
      %v459 = vld [vmem:[#allocation4 + $0x40] sm:$0x1]
      %v460 = vsel %vm359, 0, %v459
      %461 = vst [vmem:[#allocation4 + $0x40] sm:$0x1] %v460
      %v462 = vld [vmem:[#allocation4 + $0x48] sm:$0x1]
      %v463 = vsel %vm359, 0, %v462
      %464 = vst [vmem:[#allocation4 + $0x48] sm:$0x1] %v463
      %vm465 = vsmask.f32 7938
      %vm466 = vmand %vm357, %vm465
      %v467 = vld [vmem:[#allocation4 + $0x4] sm:$0x1]
      %v468 = vsel %vm466, 0, %v467
      %469 = vst [vmem:[#allocation4 + $0x4] sm:$0x1] %v468
      %v470 = vld [vmem:[#allocation4 + $0xc] sm:$0x1]
      %v471 = vsel %vm466, 0, %v470
      %472 = vst [vmem:[#allocation4 + $0xc] sm:$0x1] %v471
      %v473 = vld [vmem:[#allocation4 + $0x14] sm:$0x1]
      %v474 = vsel %vm466, 0, %v473
      %475 = vst [vmem:[#allocation4 + $0x14] sm:$0x1] %v474
      %v476 = vld [vmem:[#allocation4 + $0x1c] sm:$0x1]
      %v477 = vsel %vm466, 0, %v476
      %478 = vst [vmem:[#allocation4 + $0x1c] sm:$0x1] %v477
      %v479 = vld [vmem:[#allocation4 + $0x24] sm:$0x1]
      %v480 = vsel %vm466, 0, %v479
      %481 = vst [vmem:[#allocation4 + $0x24] sm:$0x1] %v480
      %v482 = vld [vmem:[#allocation4 + $0x2c] sm:$0x1]
      %v483 = vsel %vm466, 0, %v482
      %484 = vst [vmem:[#allocation4 + $0x2c] sm:$0x1] %v483
      %v485 = vld [vmem:[#allocation4 + $0x34] sm:$0x1]
      %v486 = vsel %vm466, 0, %v485
      %487 = vst [vmem:[#allocation4 + $0x34] sm:$0x1] %v486
      %v488 = vld [vmem:[#allocation4 + $0x3c] sm:$0x1]
      %v489 = vsel %vm466, 0, %v488
      %490 = vst [vmem:[#allocation4 + $0x3c] sm:$0x1] %v489
      %v491 = vld [vmem:[#allocation4 + $0x44] sm:$0x1]
      %v492 = vsel %vm466, 0, %v491
      %493 = vst [vmem:[#allocation4 + $0x44] sm:$0x1] %v492
      %v494 = vld [vmem:[#allocation4 + $0x4c] sm:$0x1]
      %v495 = vsel %vm466, 0, %v494
      %496 = vst [vmem:[#allocation4 + $0x4c] sm:$0x1] %v495
      %v497 = vld [vmem:[%s342] sm:$0xf]
      %v498 = vld [vmem:[%s342 + $0x4] sm:$0xf]
      %v499 = vld [vmem:[%s342 + $0x8] sm:$0xf]
      %v500 = vld [vmem:[%s342 + $0xc] sm:$0xf]
      %v506 = vunpack.c.l.s4 1983009808
      %v507 = vunpack.c.0.s8 %v506
      %v508 = vlaneseq
      %v509 = vshrl.u32 %v508, 7
      %v510 = vsub.s32 %v507, %v509
      %v511 = vrot.slane %v497, %v510
      %v513 = vunpack.c.l.s4 1983009808
      %v514 = vunpack.c.0.s8 %v513
      %v515 = vlaneseq
      %v516 = vshrl.u32 %v515, 7
      %v517 = vsub.s32 %v514, %v516
      %v518 = vrot.slane %v498, %v517
      %v520 = vunpack.c.l.s4 1983009808
      %v521 = vunpack.c.0.s8 %v520
      %v522 = vlaneseq
      %v523 = vshrl.u32 %v522, 7
      %v524 = vsub.s32 %v521, %v523
      %v525 = vrot.slane %v499, %v524
      %v527 = vunpack.c.l.s4 1983009808
      %v528 = vunpack.c.0.s8 %v527
      %v529 = vlaneseq
      %v530 = vshrl.u32 %v529, 7
      %v531 = vsub.s32 %v528, %v530
      %v532 = vrot.slane %v500, %v531
      %v534 = vshrl.u32 %v511, 16
      %v536 = vrot.slane %v534, 7
      %v537 = vshll.u32 %v511, 16
      %v539 = vor.u32 %v536, %v537
      %v541 = vshrl.u32 %v518, 16
      %v543 = vrot.slane %v541, 7
      %v544 = vshll.u32 %v518, 16
      %v546 = vor.u32 %v543, %v544
      %v548 = vshrl.u32 %v525, 16
      %v550 = vrot.slane %v548, 7
      %v551 = vshll.u32 %v525, 16
      %v553 = vor.u32 %v550, %v551
      %v555 = vshrl.u32 %v532, 16
      %v557 = vrot.slane %v555, 7
      %v558 = vshll.u32 %v532, 16
      %v560 = vor.u32 %v557, %v558
      %s565 = scalar_lea.vmem [#allocation2], 8
      %vm566 = vsmask.f32 2306
      %vm567 = vmand %vm408, %vm566
      %vm568 = vcmask 1046532
      %vm569 = vsmask.f32 6418
      %vm570 = vmand %vm568, %vm569
      %vm571 = vmor %vm570, %vm567
      %v572 = vld [vmem:[%s565] sm:$0x77]
      %v573 = vsel %vm571, %v539, %v572
      %574 = vst [vmem:[%s565] sm:$0x77] %v573
      %v575 = vld [vmem:[%s565 + $0x8] sm:$0x77]
      %v576 = vsel %vm571, %v546, %v575
      %577 = vst [vmem:[%s565 + $0x8] sm:$0x77] %v576
      %v578 = vld [vmem:[%s565 + $0x10] sm:$0x77]
      %v579 = vsel %vm571, %v553, %v578
      %580 = vst [vmem:[%s565 + $0x10] sm:$0x77] %v579
      %v581 = vld [vmem:[%s565 + $0x18] sm:$0x77]
      %v582 = vsel %vm571, %v560, %v581
      %583 = vst [vmem:[%s565 + $0x18] sm:$0x77] %v582
      %v584 = vld [vmem:[#allocation2] sm:$0x33]
      %v585 = vld [vmem:[#allocation2 + $0x8] sm:$0x33]
      %v586 = vld [vmem:[#allocation2 + $0x10] sm:$0x33]
      %v587 = vld [vmem:[#allocation2 + $0x18] sm:$0x33]
      %v593 = vunpack.c.l.s4 1983009808
      %v594 = vunpack.c.0.s8 %v593
      %v595 = vlaneseq
      %v596 = vshrl.u32 %v595, 7
      %v597 = vsub.s32 %v594, %v596
      %v598 = vrot.slane %v584, %v597
      %v600 = vunpack.c.l.s4 1983009808
      %v601 = vunpack.c.0.s8 %v600
      %v602 = vlaneseq
      %v603 = vshrl.u32 %v602, 7
      %v604 = vsub.s32 %v601, %v603
      %v605 = vrot.slane %v585, %v604
      %v607 = vunpack.c.l.s4 1983009808
      %v608 = vunpack.c.0.s8 %v607
      %v609 = vlaneseq
      %v610 = vshrl.u32 %v609, 7
      %v611 = vsub.s32 %v608, %v610
      %v612 = vrot.slane %v586, %v611
      %v614 = vunpack.c.l.s4 1983009808
      %v615 = vunpack.c.0.s8 %v614
      %v616 = vlaneseq
      %v617 = vshrl.u32 %v616, 7
      %v618 = vsub.s32 %v615, %v617
      %v619 = vrot.slane %v587, %v618
      %v620 = vld [vmem:[#allocation2] sm:$0x77]
      %v621 = vld [vmem:[#allocation2 + $0x8] sm:$0x77]
      %v622 = vld [vmem:[#allocation2 + $0x10] sm:$0x77]
      %v623 = vld [vmem:[#allocation2 + $0x18] sm:$0x77]
      %v629 = vunpack.c.l.s4 1983009808
      %v630 = vunpack.c.0.s8 %v629
      %v631 = vlaneseq
      %v632 = vshrl.u32 %v631, 7
      %v633 = vsub.s32 %v630, %v632
      %v634 = vrot.slane %v620, %v633
      %v635 = vcombine.high %v634, %v634
      %v637 = vunpack.c.l.s4 1983009808
      %v638 = vunpack.c.0.s8 %v637
      %v639 = vlaneseq
      %v640 = vshrl.u32 %v639, 7
      %v641 = vsub.s32 %v638, %v640
      %v642 = vrot.slane %v621, %v641
      %v643 = vcombine.high %v642, %v642
      %v645 = vunpack.c.l.s4 1983009808
      %v646 = vunpack.c.0.s8 %v645
      %v647 = vlaneseq
      %v648 = vshrl.u32 %v647, 7
      %v649 = vsub.s32 %v646, %v648
      %v650 = vrot.slane %v622, %v649
      %v651 = vcombine.high %v650, %v650
      %v653 = vunpack.c.l.s4 1983009808
      %v654 = vunpack.c.0.s8 %v653
      %v655 = vlaneseq
      %v656 = vshrl.u32 %v655, 7
      %v657 = vsub.s32 %v654, %v656
      %v658 = vrot.slane %v623, %v657
      %v659 = vcombine.high %v658, %v658
      %vm660 = vsmask.f32 1280
      %vm661 = vsmask.f32 3336
      %vm662 = vmor %vm660, %vm661
      %vm663 = vsmask.f32 5392
      %vm664 = vmor %vm662, %vm663
      %vm665 = vsmask.f32 7448
      %vm666 = vmor %vm664, %vm665
      %v668 = vshrl.u32 %v634, 16
      %v670 = vrot.slane %v668, 6
      %v671 = vshll.u32 %v634, 16
      %v673 = vrot.slane %v671, 7
      %v674 = vor.u32 %v670, %v673
      %v675 = vrot.slane %v674, 2
      %v677 = vshll.u32 %v635, 16
      %v679 = vrot.slane %v677, 7
      %v680 = vsel %vm666, %v675, %v679
      %v682 = vshrl.u32 %v642, 16
      %v684 = vrot.slane %v682, 6
      %v685 = vshll.u32 %v642, 16
      %v687 = vrot.slane %v685, 7
      %v688 = vor.u32 %v684, %v687
      %v689 = vrot.slane %v688, 2
      %v691 = vshll.u32 %v643, 16
      %v693 = vrot.slane %v691, 7
      %v694 = vsel %vm666, %v689, %v693
      %v696 = vshrl.u32 %v650, 16
      %v698 = vrot.slane %v696, 6
      %v699 = vshll.u32 %v650, 16
      %v701 = vrot.slane %v699, 7
      %v702 = vor.u32 %v698, %v701
      %v703 = vrot.slane %v702, 2
      %v705 = vshll.u32 %v651, 16
      %v707 = vrot.slane %v705, 7
      %v708 = vsel %vm666, %v703, %v707
      %v710 = vshrl.u32 %v658, 16
      %v712 = vrot.slane %v710, 6
      %v713 = vshll.u32 %v658, 16
      %v715 = vrot.slane %v713, 7
      %v716 = vor.u32 %v712, %v715
      %v717 = vrot.slane %v716, 2
      %v719 = vshll.u32 %v659, 16
      %v721 = vrot.slane %v719, 7
      %v722 = vsel %vm666, %v717, %v721
      %v723 = vld [vmem:[#allocation2] sm:$0x66]
      %v724 = vld [vmem:[#allocation2 + $0x8] sm:$0x66]
      %v725 = vld [vmem:[#allocation2 + $0x10] sm:$0x66]
      %v726 = vld [vmem:[#allocation2 + $0x18] sm:$0x66]
      %v732 = vunpack.c.l.s4 1983009808
      %v733 = vunpack.c.0.s8 %v732
      %v734 = vlaneseq
      %v735 = vshrl.u32 %v734, 7
      %v736 = vsub.s32 %v733, %v735
      %v737 = vrot.slane %v723, %v736
      %v738 = vcombine.high %v737, %v737
      %v740 = vunpack.c.l.s4 1983009808
      %v741 = vunpack.c.0.s8 %v740
      %v742 = vlaneseq
      %v743 = vshrl.u32 %v742, 7
      %v744 = vsub.s32 %v741, %v743
      %v745 = vrot.slane %v724, %v744
      %v746 = vcombine.high %v745, %v745
      %v748 = vunpack.c.l.s4 1983009808
      %v749 = vunpack.c.0.s8 %v748
      %v750 = vlaneseq
      %v751 = vshrl.u32 %v750, 7
      %v752 = vsub.s32 %v749, %v751
      %v753 = vrot.slane %v725, %v752
      %v754 = vcombine.high %v753, %v753
      %v756 = vunpack.c.l.s4 1983009808
      %v757 = vunpack.c.0.s8 %v756
      %v758 = vlaneseq
      %v759 = vshrl.u32 %v758, 7
      %v760 = vsub.s32 %v757, %v759
      %v761 = vrot.slane %v726, %v760
      %v762 = vcombine.high %v761, %v761
      %vm763 = vmor %vm357, %vm382
      %vm764 = vmor %vm763, %vm360
      %vm765 = vmor %vm764, %vm385
      %v766 = vrot.slane %v737, 7
      %v767 = vrot.slane %v766, 2
      %v768 = vrot.slane %v738, 7
      %v769 = vsel %vm765, %v767, %v768
      %v770 = vrot.slane %v745, 7
      %v771 = vrot.slane %v770, 2
      %v772 = vrot.slane %v746, 7
      %v773 = vsel %vm765, %v771, %v772
      %v774 = vrot.slane %v753, 7
      %v775 = vrot.slane %v774, 2
      %v776 = vrot.slane %v754, 7
      %v777 = vsel %vm765, %v775, %v776
      %v778 = vrot.slane %v761, 7
      %v779 = vrot.slane %v778, 2
      %v780 = vrot.slane %v762, 7
      %v781 = vsel %vm765, %v779, %v780
      %v782 = vcombine.low %v598, %v605
      %v783 = vcombine.low %v612, %v619
      %v785 = vunpack.c.l.s4 1983009808
      %v786 = vunpack.c.0.s8 %v785
      %v787 = vlaneseq
      %v788 = vshrl.u32 %v787, 7
      %v789 = vsub.s32 %v786, %v788
      %v790 = vrot.slane %v782, %v789
      %v792 = vunpack.c.l.s4 1983009808
      %v793 = vunpack.c.0.s8 %v792
      %v794 = vlaneseq
      %v795 = vshrl.u32 %v794, 7
      %v796 = vsub.s32 %v793, %v795
      %v797 = vrot.slane %v783, %v796
      %v798 = vcombine.low %v790, %v797
      %v799 = vcombine.high %v790, %v797
      %v802 = vcombine.low %v680, %v694
      %v803 = vcombine.low %v708, %v722
      %v805 = vunpack.c.l.s4 1983009808
      %v806 = vunpack.c.0.s8 %v805
      %v807 = vlaneseq
      %v808 = vshrl.u32 %v807, 7
      %v809 = vsub.s32 %v806, %v808
      %v810 = vrot.slane %v802, %v809
      %v812 = vunpack.c.l.s4 1983009808
      %v813 = vunpack.c.0.s8 %v812
      %v814 = vlaneseq
      %v815 = vshrl.u32 %v814, 7
      %v816 = vsub.s32 %v813, %v815
      %v817 = vrot.slane %v803, %v816
      %v818 = vcombine.low %v810, %v817
      %v819 = vcombine.high %v810, %v817
      %v822 = vcombine.low %v769, %v773
      %v823 = vcombine.low %v777, %v781
      %v825 = vunpack.c.l.s4 1983009808
      %v826 = vunpack.c.0.s8 %v825
      %v827 = vlaneseq
      %v828 = vshrl.u32 %v827, 7
      %v829 = vsub.s32 %v826, %v828
      %v830 = vrot.slane %v822, %v829
      %v832 = vunpack.c.l.s4 1983009808
      %v833 = vunpack.c.0.s8 %v832
      %v834 = vlaneseq
      %v835 = vshrl.u32 %v834, 7
      %v836 = vsub.s32 %v833, %v835
      %v837 = vrot.slane %v823, %v836
      %v838 = vcombine.low %v830, %v837
      %v839 = vcombine.high %v830, %v837
      %v842 = vld [vmem:[%s2] sm:$0xf]
      %v843 = vld [vmem:[%s2 + $0x4] sm:$0xf]
      %v844 = vld [vmem:[%s2 + $0x8] sm:$0xf]
      %v845 = vld [vmem:[%s2 + $0xc] sm:$0xf]
      %v846 = vld [vmem:[%s2 + $0x10] sm:$0xf]
      %v847 = vld [vmem:[%s2 + $0x14] sm:$0xf]
      %v848 = vld [vmem:[%s2 + $0x18] sm:$0xf]
      %v849 = vld [vmem:[%s2 + $0x1c] sm:$0xf]
      %v850 = vld [vmem:[%s2 + $0x20] sm:$0xf]
      %v851 = vld [vmem:[%s2 + $0x24] sm:$0xf]
      %v852 = vld [vmem:[%s2 + $0x28] sm:$0xf]
      %v853 = vld [vmem:[%s2 + $0x2c] sm:$0xf]
      %v854 = vld [vmem:[%s2 + $0x30] sm:$0xf]
      %v855 = vld [vmem:[%s2 + $0x34] sm:$0xf]
      %v856 = vld [vmem:[%s2 + $0x38] sm:$0xf]
      %v857 = vld [vmem:[%s2 + $0x3c] sm:$0xf]
      %v858 = vld [vmem:[%s2 + $0x40] sm:$0xf]
      %v859 = vld [vmem:[%s2 + $0x44] sm:$0xf]
      %v860 = vld [vmem:[%s2 + $0x48] sm:$0xf]
      %v861 = vld [vmem:[%s2 + $0x4c] sm:$0xf]
      %v862 = vld [vmem:[%s2 + $0x50] sm:$0xf]
      %v863 = vld [vmem:[%s2 + $0x54] sm:$0xf]
      %v864 = vld [vmem:[%s2 + $0x58] sm:$0xf]
      %v865 = vld [vmem:[%s2 + $0x5c] sm:$0xf]
      %v866 = vld [vmem:[%s2 + $0x60] sm:$0xf]
      %v867 = vld [vmem:[%s2 + $0x64] sm:$0xf]
      %v868 = vld [vmem:[%s2 + $0x68] sm:$0xf]
      %v869 = vld [vmem:[%s2 + $0x6c] sm:$0xf]
      %v870 = vld [vmem:[%s2 + $0x70] sm:$0xf]
      %v871 = vld [vmem:[%s2 + $0x74] sm:$0xf]
      %v872 = vld [vmem:[%s2 + $0x78] sm:$0xf]
      %v873 = vld [vmem:[%s2 + $0x7c] sm:$0xf]
      %v874 = vld [vmem:[%s2 + $0x80] sm:$0xf]
      %v875 = vld [vmem:[%s2 + $0x84] sm:$0xf]
      %v876 = vld [vmem:[%s2 + $0x88] sm:$0xf]
      %v877 = vld [vmem:[%s2 + $0x8c] sm:$0xf]
      %v878 = vld [vmem:[%s2 + $0x90] sm:$0xf]
      %v879 = vld [vmem:[%s2 + $0x94] sm:$0xf]
      %v880 = vld [vmem:[%s2 + $0x98] sm:$0xf]
      %v881 = vld [vmem:[%s2 + $0x9c] sm:$0xf]
      %v882 = vld [vmem:[%s2 + $0xa0] sm:$0xf]
      %v883 = vld [vmem:[%s2 + $0xa4] sm:$0xf]
      %v884 = vld [vmem:[%s2 + $0xa8] sm:$0xf]
      %v885 = vld [vmem:[%s2 + $0xac] sm:$0xf]
      %v886 = vld [vmem:[%s2 + $0xb0] sm:$0xf]
      %v887 = vld [vmem:[%s2 + $0xb4] sm:$0xf]
      %v888 = vld [vmem:[%s2 + $0xb8] sm:$0xf]
      %v889 = vld [vmem:[%s2 + $0xbc] sm:$0xf]
      %v890 = vld [vmem:[%s2 + $0xc0] sm:$0xf]
      %v891 = vld [vmem:[%s2 + $0xc4] sm:$0xf]
      %v892 = vld [vmem:[%s2 + $0xc8] sm:$0xf]
      %v893 = vld [vmem:[%s2 + $0xcc] sm:$0xf]
      %v894 = vld [vmem:[%s2 + $0xd0] sm:$0xf]
      %v895 = vld [vmem:[%s2 + $0xd4] sm:$0xf]
      %v896 = vld [vmem:[%s2 + $0xd8] sm:$0xf]
      %v897 = vld [vmem:[%s2 + $0xdc] sm:$0xf]
      %v898 = vld [vmem:[%s2 + $0xe0] sm:$0xf]
      %v899 = vld [vmem:[%s2 + $0xe4] sm:$0xf]
      %v900 = vld [vmem:[%s2 + $0xe8] sm:$0xf]
      %v901 = vld [vmem:[%s2 + $0xec] sm:$0xf]
      %v902 = vld [vmem:[%s2 + $0xf0] sm:$0xf]
      %v903 = vld [vmem:[%s2 + $0xf4] sm:$0xf]
      %v904 = vld [vmem:[%s2 + $0xf8] sm:$0xf]
      %v905 = vld [vmem:[%s2 + $0xfc] sm:$0xf]
      %v906 = vld [vmem:[%s2 + $0x100] sm:$0xf]
      %v907 = vld [vmem:[%s2 + $0x104] sm:$0xf]
      %v908 = vld [vmem:[%s2 + $0x108] sm:$0xf]
      %v909 = vld [vmem:[%s2 + $0x10c] sm:$0xf]
      %v910 = vld [vmem:[%s2 + $0x110] sm:$0xf]
      %v911 = vld [vmem:[%s2 + $0x114] sm:$0xf]
      %v912 = vld [vmem:[%s2 + $0x118] sm:$0xf]
      %v913 = vld [vmem:[%s2 + $0x11c] sm:$0xf]
      %v914 = vld [vmem:[%s2 + $0x120] sm:$0xf]
      %v915 = vld [vmem:[%s2 + $0x124] sm:$0xf]
      %v916 = vld [vmem:[%s2 + $0x128] sm:$0xf]
      %v917 = vld [vmem:[%s2 + $0x12c] sm:$0xf]
      %v918 = vld [vmem:[%s2 + $0x130] sm:$0xf]
      %v919 = vld [vmem:[%s2 + $0x134] sm:$0xf]
      %v920 = vld [vmem:[%s2 + $0x138] sm:$0xf]
      %v921 = vld [vmem:[%s2 + $0x13c] sm:$0xf]
      %v922 = vld [vmem:[%s2 + $0x140] sm:$0xf]
      %v923 = vld [vmem:[%s2 + $0x144] sm:$0xf]
      %v924 = vld [vmem:[%s2 + $0x148] sm:$0xf]
      %v925 = vld [vmem:[%s2 + $0x14c] sm:$0xf]
      %v926 = vld [vmem:[%s2 + $0x150] sm:$0xf]
      %v927 = vld [vmem:[%s2 + $0x154] sm:$0xf]
      %v928 = vld [vmem:[%s2 + $0x158] sm:$0xf]
      %v929 = vld [vmem:[%s2 + $0x15c] sm:$0xf]
      %v930 = vld [vmem:[%s2 + $0x160] sm:$0xf]
      %v931 = vld [vmem:[%s2 + $0x164] sm:$0xf]
      %v932 = vld [vmem:[%s2 + $0x168] sm:$0xf]
      %v933 = vld [vmem:[%s2 + $0x16c] sm:$0xf]
      %v934 = vld [vmem:[%s2 + $0x170] sm:$0xf]
      %v935 = vld [vmem:[%s2 + $0x174] sm:$0xf]
      %v936 = vld [vmem:[%s2 + $0x178] sm:$0xf]
      %v937 = vld [vmem:[%s2 + $0x17c] sm:$0xf]
      %v938 = vld [vmem:[%s565] sm:$0x33]
      %v939 = vld [vmem:[%s565 + $0x8] sm:$0x33]
      %v940 = vld [vmem:[%s565 + $0x10] sm:$0x33]
      %v941 = vld [vmem:[%s565 + $0x18] sm:$0x33]
      %v947 = vunpack.c.l.s4 1983009808
      %v948 = vunpack.c.0.s8 %v947
      %v949 = vlaneseq
      %v950 = vshrl.u32 %v949, 7
      %v951 = vsub.s32 %v948, %v950
      %v952 = vrot.slane %v938, %v951
      %v954 = vunpack.c.l.s4 1983009808
      %v955 = vunpack.c.0.s8 %v954
      %v956 = vlaneseq
      %v957 = vshrl.u32 %v956, 7
      %v958 = vsub.s32 %v955, %v957
      %v959 = vrot.slane %v939, %v958
      %v961 = vunpack.c.l.s4 1983009808
      %v962 = vunpack.c.0.s8 %v961
      %v963 = vlaneseq
      %v964 = vshrl.u32 %v963, 7
      %v965 = vsub.s32 %v962, %v964
      %v966 = vrot.slane %v940, %v965
      %v968 = vunpack.c.l.s4 1983009808
      %v969 = vunpack.c.0.s8 %v968
      %v970 = vlaneseq
      %v971 = vshrl.u32 %v970, 7
      %v972 = vsub.s32 %v969, %v971
      %v973 = vrot.slane %v941, %v972
      %v974 = vld [vmem:[%s565] sm:$0x77]
      %v975 = vld [vmem:[%s565 + $0x8] sm:$0x77]
      %v976 = vld [vmem:[%s565 + $0x10] sm:$0x77]
      %v977 = vld [vmem:[%s565 + $0x18] sm:$0x77]
      %v983 = vunpack.c.l.s4 1983009808
      %v984 = vunpack.c.0.s8 %v983
      %v985 = vlaneseq
      %v986 = vshrl.u32 %v985, 7
      %v987 = vsub.s32 %v984, %v986
      %v988 = vrot.slane %v974, %v987
      %v989 = vcombine.high %v988, %v988
      %v991 = vunpack.c.l.s4 1983009808
      %v992 = vunpack.c.0.s8 %v991
      %v993 = vlaneseq
      %v994 = vshrl.u32 %v993, 7
      %v995 = vsub.s32 %v992, %v994
      %v996 = vrot.slane %v975, %v995
      %v997 = vcombine.high %v996, %v996
      %v999 = vunpack.c.l.s4 1983009808
      %v1000 = vunpack.c.0.s8 %v999
      %v1001 = vlaneseq
      %v1002 = vshrl.u32 %v1001, 7
      %v1003 = vsub.s32 %v1000, %v1002
      %v1004 = vrot.slane %v976, %v1003
      %v1005 = vcombine.high %v1004, %v1004
      %v1007 = vunpack.c.l.s4 1983009808
      %v1008 = vunpack.c.0.s8 %v1007
      %v1009 = vlaneseq
      %v1010 = vshrl.u32 %v1009, 7
      %v1011 = vsub.s32 %v1008, %v1010
      %v1012 = vrot.slane %v977, %v1011
      %v1013 = vcombine.high %v1012, %v1012
      %v1015 = vshrl.u32 %v988, 16
      %v1017 = vrot.slane %v1015, 6
      %v1018 = vshll.u32 %v988, 16
      %v1020 = vrot.slane %v1018, 7
      %v1021 = vor.u32 %v1017, %v1020
      %v1022 = vrot.slane %v1021, 2
      %v1024 = vshll.u32 %v989, 16
      %v1026 = vrot.slane %v1024, 7
      %v1027 = vsel %vm666, %v1022, %v1026
      %v1029 = vshrl.u32 %v996, 16
      %v1031 = vrot.slane %v1029, 6
      %v1032 = vshll.u32 %v996, 16
      %v1034 = vrot.slane %v1032, 7
      %v1035 = vor.u32 %v1031, %v1034
      %v1036 = vrot.slane %v1035, 2
      %v1038 = vshll.u32 %v997, 16
      %v1040 = vrot.slane %v1038, 7
      %v1041 = vsel %vm666, %v1036, %v1040
      %v1043 = vshrl.u32 %v1004, 16
      %v1045 = vrot.slane %v1043, 6
      %v1046 = vshll.u32 %v1004, 16
      %v1048 = vrot.slane %v1046, 7
      %v1049 = vor.u32 %v1045, %v1048
      %v1050 = vrot.slane %v1049, 2
      %v1052 = vshll.u32 %v1005, 16
      %v1054 = vrot.slane %v1052, 7
      %v1055 = vsel %vm666, %v1050, %v1054
      %v1057 = vshrl.u32 %v1012, 16
      %v1059 = vrot.slane %v1057, 6
      %v1060 = vshll.u32 %v1012, 16
      %v1062 = vrot.slane %v1060, 7
      %v1063 = vor.u32 %v1059, %v1062
      %v1064 = vrot.slane %v1063, 2
      %v1066 = vshll.u32 %v1013, 16
      %v1068 = vrot.slane %v1066, 7
      %v1069 = vsel %vm666, %v1064, %v1068
      %v1070 = vld [vmem:[%s565] sm:$0x66]
      %v1071 = vld [vmem:[%s565 + $0x8] sm:$0x66]
      %v1072 = vld [vmem:[%s565 + $0x10] sm:$0x66]
      %v1073 = vld [vmem:[%s565 + $0x18] sm:$0x66]
      %v1079 = vunpack.c.l.s4 1983009808
      %v1080 = vunpack.c.0.s8 %v1079
      %v1081 = vlaneseq
      %v1082 = vshrl.u32 %v1081, 7
      %v1083 = vsub.s32 %v1080, %v1082
      %v1084 = vrot.slane %v1070, %v1083
      %v1085 = vcombine.high %v1084, %v1084
      %v1087 = vunpack.c.l.s4 1983009808
      %v1088 = vunpack.c.0.s8 %v1087
      %v1089 = vlaneseq
      %v1090 = vshrl.u32 %v1089, 7
      %v1091 = vsub.s32 %v1088, %v1090
      %v1092 = vrot.slane %v1071, %v1091
      %v1093 = vcombine.high %v1092, %v1092
      %v1095 = vunpack.c.l.s4 1983009808
      %v1096 = vunpack.c.0.s8 %v1095
      %v1097 = vlaneseq
      %v1098 = vshrl.u32 %v1097, 7
      %v1099 = vsub.s32 %v1096, %v1098
      %v1100 = vrot.slane %v1072, %v1099
      %v1101 = vcombine.high %v1100, %v1100
      %v1103 = vunpack.c.l.s4 1983009808
      %v1104 = vunpack.c.0.s8 %v1103
      %v1105 = vlaneseq
      %v1106 = vshrl.u32 %v1105, 7
      %v1107 = vsub.s32 %v1104, %v1106
      %v1108 = vrot.slane %v1073, %v1107
      %v1109 = vcombine.high %v1108, %v1108
      %v1110 = vrot.slane %v1084, 7
      %v1111 = vrot.slane %v1110, 2
      %v1112 = vrot.slane %v1085, 7
      %v1113 = vsel %vm765, %v1111, %v1112
      %v1114 = vrot.slane %v1092, 7
      %v1115 = vrot.slane %v1114, 2
      %v1116 = vrot.slane %v1093, 7
      %v1117 = vsel %vm765, %v1115, %v1116
      %v1118 = vrot.slane %v1100, 7
      %v1119 = vrot.slane %v1118, 2
      %v1120 = vrot.slane %v1101, 7
      %v1121 = vsel %vm765, %v1119, %v1120
      %v1122 = vrot.slane %v1108, 7
      %v1123 = vrot.slane %v1122, 2
      %v1124 = vrot.slane %v1109, 7
      %v1125 = vsel %vm765, %v1123, %v1124
      %v1126 = vcombine.low %v952, %v959
      %v1127 = vcombine.low %v966, %v973
      %v1129 = vunpack.c.l.s4 1983009808
      %v1130 = vunpack.c.0.s8 %v1129
      %v1131 = vlaneseq
      %v1132 = vshrl.u32 %v1131, 7
      %v1133 = vsub.s32 %v1130, %v1132
      %v1134 = vrot.slane %v1126, %v1133
      %v1136 = vunpack.c.l.s4 1983009808
      %v1137 = vunpack.c.0.s8 %v1136
      %v1138 = vlaneseq
      %v1139 = vshrl.u32 %v1138, 7
      %v1140 = vsub.s32 %v1137, %v1139
      %v1141 = vrot.slane %v1127, %v1140
      %v1142 = vcombine.low %v1134, %v1141
      %v1143 = vcombine.high %v1134, %v1141
      %v1146 = vcombine.low %v1027, %v1041
      %v1147 = vcombine.low %v1055, %v1069
      %v1149 = vunpack.c.l.s4 1983009808
      %v1150 = vunpack.c.0.s8 %v1149
      %v1151 = vlaneseq
      %v1152 = vshrl.u32 %v1151, 7
      %v1153 = vsub.s32 %v1150, %v1152
      %v1154 = vrot.slane %v1146, %v1153
      %v1156 = vunpack.c.l.s4 1983009808
      %v1157 = vunpack.c.0.s8 %v1156
      %v1158 = vlaneseq
      %v1159 = vshrl.u32 %v1158, 7
      %v1160 = vsub.s32 %v1157, %v1159
      %v1161 = vrot.slane %v1147, %v1160
      %v1162 = vcombine.low %v1154, %v1161
      %v1163 = vcombine.high %v1154, %v1161
      %v1166 = vcombine.low %v1113, %v1117
      %v1167 = vcombine.low %v1121, %v1125
      %v1169 = vunpack.c.l.s4 1983009808
      %v1170 = vunpack.c.0.s8 %v1169
      %v1171 = vlaneseq
      %v1172 = vshrl.u32 %v1171, 7
      %v1173 = vsub.s32 %v1170, %v1172
      %v1174 = vrot.slane %v1166, %v1173
      %v1176 = vunpack.c.l.s4 1983009808
      %v1177 = vunpack.c.0.s8 %v1176
      %v1178 = vlaneseq
      %v1179 = vshrl.u32 %v1178, 7
      %v1180 = vsub.s32 %v1177, %v1179
      %v1181 = vrot.slane %v1167, %v1180
      %v1182 = vcombine.low %v1174, %v1181
      %v1183 = vcombine.high %v1174, %v1181
      %s1186 = scalar_lea.vmem %s2, 384
      %v1187 = vld [vmem:[%s1186] sm:$0xf]
      %v1188 = vld [vmem:[%s1186 + $0x4] sm:$0xf]
      %v1189 = vld [vmem:[%s1186 + $0x8] sm:$0xf]
      %v1190 = vld [vmem:[%s1186 + $0xc] sm:$0xf]
      %v1191 = vld [vmem:[%s1186 + $0x10] sm:$0xf]
      %v1192 = vld [vmem:[%s1186 + $0x14] sm:$0xf]
      %v1193 = vld [vmem:[%s1186 + $0x18] sm:$0xf]
      %v1194 = vld [vmem:[%s1186 + $0x1c] sm:$0xf]
      %v1195 = vld [vmem:[%s1186 + $0x20] sm:$0xf]
      %v1196 = vld [vmem:[%s1186 + $0x24] sm:$0xf]
      %v1197 = vld [vmem:[%s1186 + $0x28] sm:$0xf]
      %v1198 = vld [vmem:[%s1186 + $0x2c] sm:$0xf]
      %v1199 = vld [vmem:[%s1186 + $0x30] sm:$0xf]
      %v1200 = vld [vmem:[%s1186 + $0x34] sm:$0xf]
      %v1201 = vld [vmem:[%s1186 + $0x38] sm:$0xf]
      %v1202 = vld [vmem:[%s1186 + $0x3c] sm:$0xf]
      %v1203 = vld [vmem:[%s1186 + $0x40] sm:$0xf]
      %v1204 = vld [vmem:[%s1186 + $0x44] sm:$0xf]
      %v1205 = vld [vmem:[%s1186 + $0x48] sm:$0xf]
      %v1206 = vld [vmem:[%s1186 + $0x4c] sm:$0xf]
      %v1207 = vld [vmem:[%s1186 + $0x50] sm:$0xf]
      %v1208 = vld [vmem:[%s1186 + $0x54] sm:$0xf]
      %v1209 = vld [vmem:[%s1186 + $0x58] sm:$0xf]
      %v1210 = vld [vmem:[%s1186 + $0x5c] sm:$0xf]
      %v1211 = vld [vmem:[%s1186 + $0x60] sm:$0xf]
      %v1212 = vld [vmem:[%s1186 + $0x64] sm:$0xf]
      %v1213 = vld [vmem:[%s1186 + $0x68] sm:$0xf]
      %v1214 = vld [vmem:[%s1186 + $0x6c] sm:$0xf]
      %v1215 = vld [vmem:[%s1186 + $0x70] sm:$0xf]
      %v1216 = vld [vmem:[%s1186 + $0x74] sm:$0xf]
      %v1217 = vld [vmem:[%s1186 + $0x78] sm:$0xf]
      %v1218 = vld [vmem:[%s1186 + $0x7c] sm:$0xf]
      %v1219 = vld [vmem:[%s1186 + $0x80] sm:$0xf]
      %v1220 = vld [vmem:[%s1186 + $0x84] sm:$0xf]
      %v1221 = vld [vmem:[%s1186 + $0x88] sm:$0xf]
      %v1222 = vld [vmem:[%s1186 + $0x8c] sm:$0xf]
      %v1223 = vld [vmem:[%s1186 + $0x90] sm:$0xf]
      %v1224 = vld [vmem:[%s1186 + $0x94] sm:$0xf]
      %v1225 = vld [vmem:[%s1186 + $0x98] sm:$0xf]
      %v1226 = vld [vmem:[%s1186 + $0x9c] sm:$0xf]
      %v1227 = vld [vmem:[%s1186 + $0xa0] sm:$0xf]
      %v1228 = vld [vmem:[%s1186 + $0xa4] sm:$0xf]
      %v1229 = vld [vmem:[%s1186 + $0xa8] sm:$0xf]
      %v1230 = vld [vmem:[%s1186 + $0xac] sm:$0xf]
      %v1231 = vld [vmem:[%s1186 + $0xb0] sm:$0xf]
      %v1232 = vld [vmem:[%s1186 + $0xb4] sm:$0xf]
      %v1233 = vld [vmem:[%s1186 + $0xb8] sm:$0xf]
      %v1234 = vld [vmem:[%s1186 + $0xbc] sm:$0xf]
      %v1235 = vld [vmem:[%s1186 + $0xc0] sm:$0xf]
      %v1236 = vld [vmem:[%s1186 + $0xc4] sm:$0xf]
      %v1237 = vld [vmem:[%s1186 + $0xc8] sm:$0xf]
      %v1238 = vld [vmem:[%s1186 + $0xcc] sm:$0xf]
      %v1239 = vld [vmem:[%s1186 + $0xd0] sm:$0xf]
      %v1240 = vld [vmem:[%s1186 + $0xd4] sm:$0xf]
      %v1241 = vld [vmem:[%s1186 + $0xd8] sm:$0xf]
      %v1242 = vld [vmem:[%s1186 + $0xdc] sm:$0xf]
      %v1243 = vld [vmem:[%s1186 + $0xe0] sm:$0xf]
      %v1244 = vld [vmem:[%s1186 + $0xe4] sm:$0xf]
      %v1245 = vld [vmem:[%s1186 + $0xe8] sm:$0xf]
      %v1246 = vld [vmem:[%s1186 + $0xec] sm:$0xf]
      %v1247 = vld [vmem:[%s1186 + $0xf0] sm:$0xf]
      %v1248 = vld [vmem:[%s1186 + $0xf4] sm:$0xf]
      %v1249 = vld [vmem:[%s1186 + $0xf8] sm:$0xf]
      %v1250 = vld [vmem:[%s1186 + $0xfc] sm:$0xf]
      %v1251 = vld [vmem:[%s1186 + $0x100] sm:$0xf]
      %v1252 = vld [vmem:[%s1186 + $0x104] sm:$0xf]
      %v1253 = vld [vmem:[%s1186 + $0x108] sm:$0xf]
      %v1254 = vld [vmem:[%s1186 + $0x10c] sm:$0xf]
      %v1255 = vld [vmem:[%s1186 + $0x110] sm:$0xf]
      %v1256 = vld [vmem:[%s1186 + $0x114] sm:$0xf]
      %v1257 = vld [vmem:[%s1186 + $0x118] sm:$0xf]
      %v1258 = vld [vmem:[%s1186 + $0x11c] sm:$0xf]
      %v1259 = vld [vmem:[%s1186 + $0x120] sm:$0xf]
      %v1260 = vld [vmem:[%s1186 + $0x124] sm:$0xf]
      %v1261 = vld [vmem:[%s1186 + $0x128] sm:$0xf]
      %v1262 = vld [vmem:[%s1186 + $0x12c] sm:$0xf]
      %v1263 = vld [vmem:[%s1186 + $0x130] sm:$0xf]
      %v1264 = vld [vmem:[%s1186 + $0x134] sm:$0xf]
      %v1265 = vld [vmem:[%s1186 + $0x138] sm:$0xf]
      %v1266 = vld [vmem:[%s1186 + $0x13c] sm:$0xf]
      %v1267 = vld [vmem:[%s1186 + $0x140] sm:$0xf]
      %v1268 = vld [vmem:[%s1186 + $0x144] sm:$0xf]
      %v1269 = vld [vmem:[%s1186 + $0x148] sm:$0xf]
      %v1270 = vld [vmem:[%s1186 + $0x14c] sm:$0xf]
      %v1271 = vld [vmem:[%s1186 + $0x150] sm:$0xf]
      %v1272 = vld [vmem:[%s1186 + $0x154] sm:$0xf]
      %v1273 = vld [vmem:[%s1186 + $0x158] sm:$0xf]
      %v1274 = vld [vmem:[%s1186 + $0x15c] sm:$0xf]
      %v1275 = vld [vmem:[%s1186 + $0x160] sm:$0xf]
      %v1276 = vld [vmem:[%s1186 + $0x164] sm:$0xf]
      %v1277 = vld [vmem:[%s1186 + $0x168] sm:$0xf]
      %v1278 = vld [vmem:[%s1186 + $0x16c] sm:$0xf]
      %v1279 = vld [vmem:[%s1186 + $0x170] sm:$0xf]
      %v1280 = vld [vmem:[%s1186 + $0x174] sm:$0xf]
      %v1281 = vld [vmem:[%s1186 + $0x178] sm:$0xf]
      %v1282 = vld [vmem:[%s1186 + $0x17c] sm:$0xf]
      %v1379 = vunpack.c.l.b16 %v1187
      %v1380 = vunpack.c.l.b16 %v1188
      %v1381 = vunpack.c.l.b16 %v1189
      %v1382 = vunpack.c.l.b16 %v1190
      %v1383 = vunpack.c.l.b16 %v1191
      %v1384 = vunpack.c.l.b16 %v1192
      %v1385 = vunpack.c.l.b16 %v1193
      %v1386 = vunpack.c.l.b16 %v1194
      %v1387 = vunpack.c.l.b16 %v1195
      %v1388 = vunpack.c.l.b16 %v1196
      %v1389 = vunpack.c.l.b16 %v1197
      %v1390 = vunpack.c.l.b16 %v1198
      %v1391 = vunpack.c.l.b16 %v1199
      %v1392 = vunpack.c.l.b16 %v1200
      %v1393 = vunpack.c.l.b16 %v1201
      %v1394 = vunpack.c.l.b16 %v1202
      %v1395 = vunpack.c.l.b16 %v1203
      %v1396 = vunpack.c.l.b16 %v1204
      %v1397 = vunpack.c.l.b16 %v1205
      %v1398 = vunpack.c.l.b16 %v1206
      %v1399 = vunpack.c.l.b16 %v1207
      %v1400 = vunpack.c.l.b16 %v1208
      %v1401 = vunpack.c.l.b16 %v1209
      %v1402 = vunpack.c.l.b16 %v1210
      %v1403 = vunpack.c.l.b16 %v1211
      %v1404 = vunpack.c.l.b16 %v1212
      %v1405 = vunpack.c.l.b16 %v1213
      %v1406 = vunpack.c.l.b16 %v1214
      %v1407 = vunpack.c.l.b16 %v1215
      %v1408 = vunpack.c.l.b16 %v1216
      %v1409 = vunpack.c.l.b16 %v1217
      %v1410 = vunpack.c.l.b16 %v1218
      %v1411 = vunpack.c.l.b16 %v1219
      %v1412 = vunpack.c.l.b16 %v1220
      %v1413 = vunpack.c.l.b16 %v1221
      %v1414 = vunpack.c.l.b16 %v1222
      %v1415 = vunpack.c.l.b16 %v1223
      %v1416 = vunpack.c.l.b16 %v1224
      %v1417 = vunpack.c.l.b16 %v1225
      %v1418 = vunpack.c.l.b16 %v1226
      %v1419 = vunpack.c.l.b16 %v1227
      %v1420 = vunpack.c.l.b16 %v1228
      %v1421 = vunpack.c.l.b16 %v1229
      %v1422 = vunpack.c.l.b16 %v1230
      %v1423 = vunpack.c.l.b16 %v1231
      %v1424 = vunpack.c.l.b16 %v1232
      %v1425 = vunpack.c.l.b16 %v1233
      %v1426 = vunpack.c.l.b16 %v1234
      %v1427 = vunpack.c.l.b16 %v1235
      %v1428 = vunpack.c.l.b16 %v1236
      %v1429 = vunpack.c.l.b16 %v1237
      %v1430 = vunpack.c.l.b16 %v1238
      %v1431 = vunpack.c.l.b16 %v1239
      %v1432 = vunpack.c.l.b16 %v1240
      %v1433 = vunpack.c.l.b16 %v1241
      %v1434 = vunpack.c.l.b16 %v1242
      %v1435 = vunpack.c.l.b16 %v1243
      %v1436 = vunpack.c.l.b16 %v1244
      %v1437 = vunpack.c.l.b16 %v1245
      %v1438 = vunpack.c.l.b16 %v1246
      %v1439 = vunpack.c.l.b16 %v1247
      %v1440 = vunpack.c.l.b16 %v1248
      %v1441 = vunpack.c.l.b16 %v1249
      %v1442 = vunpack.c.l.b16 %v1250
      %v1443 = vunpack.c.l.b16 %v1251
      %v1444 = vunpack.c.l.b16 %v1252
      %v1445 = vunpack.c.l.b16 %v1253
      %v1446 = vunpack.c.l.b16 %v1254
      %v1447 = vunpack.c.l.b16 %v1255
      %v1448 = vunpack.c.l.b16 %v1256
      %v1449 = vunpack.c.l.b16 %v1257
      %v1450 = vunpack.c.l.b16 %v1258
      %v1451 = vunpack.c.l.b16 %v1259
      %v1452 = vunpack.c.l.b16 %v1260
      %v1453 = vunpack.c.l.b16 %v1261
      %v1454 = vunpack.c.l.b16 %v1262
      %v1455 = vunpack.c.l.b16 %v1263
      %v1456 = vunpack.c.l.b16 %v1264
      %v1457 = vunpack.c.l.b16 %v1265
      %v1458 = vunpack.c.l.b16 %v1266
      %v1459 = vunpack.c.l.b16 %v1267
      %v1460 = vunpack.c.l.b16 %v1268
      %v1461 = vunpack.c.l.b16 %v1269
      %v1462 = vunpack.c.l.b16 %v1270
      %v1463 = vunpack.c.l.b16 %v1271
      %v1464 = vunpack.c.l.b16 %v1272
      %v1465 = vunpack.c.l.b16 %v1273
      %v1466 = vunpack.c.l.b16 %v1274
      %v1467 = vunpack.c.l.b16 %v1275
      %v1468 = vunpack.c.l.b16 %v1276
      %v1469 = vunpack.c.l.b16 %v1277
      %v1470 = vunpack.c.l.b16 %v1278
      %v1471 = vunpack.c.l.b16 %v1279
      %v1472 = vunpack.c.l.b16 %v1280
      %v1473 = vunpack.c.l.b16 %v1281
      %v1474 = vunpack.c.l.b16 %v1282
      %v1475 = vpack.c.b16 %v1380, %v1379
      %v1476 = vpack.c.b16 %v1382, %v1381
      %v1477 = vpack.c.b16 %v1384, %v1383
      %v1478 = vpack.c.b16 %v1386, %v1385
      %v1479 = vpack.c.b16 %v1388, %v1387
      %v1480 = vpack.c.b16 %v1390, %v1389
      %v1481 = vpack.c.b16 %v1392, %v1391
      %v1482 = vpack.c.b16 %v1394, %v1393
      %v1483 = vpack.c.b16 %v1396, %v1395
      %v1484 = vpack.c.b16 %v1398, %v1397
      %v1485 = vpack.c.b16 %v1400, %v1399
      %v1486 = vpack.c.b16 %v1402, %v1401
      %v1487 = vpack.c.b16 %v1404, %v1403
      %v1488 = vpack.c.b16 %v1406, %v1405
      %v1489 = vpack.c.b16 %v1408, %v1407
      %v1490 = vpack.c.b16 %v1410, %v1409
      %v1491 = vpack.c.b16 %v1412, %v1411
      %v1492 = vpack.c.b16 %v1414, %v1413
      %v1493 = vpack.c.b16 %v1416, %v1415
      %v1494 = vpack.c.b16 %v1418, %v1417
      %v1495 = vpack.c.b16 %v1420, %v1419
      %v1496 = vpack.c.b16 %v1422, %v1421
      %v1497 = vpack.c.b16 %v1424, %v1423
      %v1498 = vpack.c.b16 %v1426, %v1425
      %v1499 = vpack.c.b16 %v1428, %v1427
      %v1500 = vpack.c.b16 %v1430, %v1429
      %v1501 = vpack.c.b16 %v1432, %v1431
      %v1502 = vpack.c.b16 %v1434, %v1433
      %v1503 = vpack.c.b16 %v1436, %v1435
      %v1504 = vpack.c.b16 %v1438, %v1437
      %v1505 = vpack.c.b16 %v1440, %v1439
      %v1506 = vpack.c.b16 %v1442, %v1441
      %v1507 = vpack.c.b16 %v1444, %v1443
      %v1508 = vpack.c.b16 %v1446, %v1445
      %v1509 = vpack.c.b16 %v1448, %v1447
      %v1510 = vpack.c.b16 %v1450, %v1449
      %v1511 = vpack.c.b16 %v1452, %v1451
      %v1512 = vpack.c.b16 %v1454, %v1453
      %v1513 = vpack.c.b16 %v1456, %v1455
      %v1514 = vpack.c.b16 %v1458, %v1457
      %v1515 = vpack.c.b16 %v1460, %v1459
      %v1516 = vpack.c.b16 %v1462, %v1461
      %v1517 = vpack.c.b16 %v1464, %v1463
      %v1518 = vpack.c.b16 %v1466, %v1465
      %v1519 = vpack.c.b16 %v1468, %v1467
      %v1520 = vpack.c.b16 %v1470, %v1469
      %v1521 = vpack.c.b16 %v1472, %v1471
      %v1522 = vpack.c.b16 %v1474, %v1473
      %1571 = vmatprep.subr.bf16.mxu0 0
      %1572 = vmatpush1.bf16.msra.mxu0 %v1475
      %1573 = vmatprep.subr.bf16.mxu0 0
      %1574 = vmatpush1.bf16.msra.mxu0 %v1476
      %1575 = vmatprep.subr.bf16.mxu0 0
      %1576 = vmatpush1.bf16.msra.mxu0 %v1477
      %1577 = vmatprep.subr.bf16.mxu0 0
      %1578 = vmatpush1.bf16.msra.mxu0 %v1478
      %1579 = vmatprep.subr.bf16.mxu0 0
      %1580 = vmatpush1.bf16.msra.mxu0 %v1479
      %1581 = vmatprep.subr.bf16.mxu0 0
      %1582 = vmatpush1.bf16.msra.mxu0 %v1480
      %1583 = vmatprep.subr.bf16.mxu0 0
      %1584 = vmatpush1.bf16.msra.mxu0 %v1481
      %1585 = vmatprep.subr.bf16.mxu0 0
      %1586 = vmatpush1.bf16.msra.mxu0 %v1482
      %1587 = vmatprep.subr.bf16.mxu0 0
      %1588 = vmatpush1.bf16.msra.mxu0 %v1483
      %1589 = vmatprep.subr.bf16.mxu0 0
      %1590 = vmatpush1.bf16.msra.mxu0 %v1484
      %1591 = vmatprep.subr.bf16.mxu0 0
      %1592 = vmatpush1.bf16.msra.mxu0 %v1485
      %1593 = vmatprep.subr.bf16.mxu0 0
      %1594 = vmatpush1.bf16.msra.mxu0 %v1486
      %1595 = vmatprep.subr.bf16.mxu0 0
      %1596 = vmatpush1.bf16.msra.mxu0 %v1487
      %1597 = vmatprep.subr.bf16.mxu0 0
      %1598 = vmatpush1.bf16.msra.mxu0 %v1488
      %1599 = vmatprep.subr.bf16.mxu0 0
      %1600 = vmatpush1.bf16.msra.mxu0 %v1489
      %1601 = vmatprep.subr.bf16.mxu0 0
      %1602 = vmatpush1.bf16.msra.mxu0 %v1490
      %1603 = vmatprep.mubr.bf16.mxu0 %v1143
      %1604 = vmatmul.mubr.bf16.gmra.mrb[0].mxu0 %v1142
      %v1605 = vpop.f32.mrb[0].mxu0
      %v1606 = vadd.f32 0.0, %v1605
      %v1607 = vpop.f32.mrb[0].mxu0
      %v1608 = vpop.f32.mrb[0].mxu0
      %v1609 = vadd.f32 0.0, %v1608
      %v1610 = vpop.f32.mrb[0].mxu0
      %1611 = vdwg.mxu0
      %1612 = vmatprep.subr.bf16.mxu0 0
      %1613 = vmatpush1.bf16.msra.mxu0 %v1491
      %1614 = vmatprep.subr.bf16.mxu0 0
      %1615 = vmatpush1.bf16.msra.mxu0 %v1492
      %1616 = vmatprep.subr.bf16.mxu0 0
      %1617 = vmatpush1.bf16.msra.mxu0 %v1493
      %1618 = vmatprep.subr.bf16.mxu0 0
      %1619 = vmatpush1.bf16.msra.mxu0 %v1494
      %1620 = vmatprep.subr.bf16.mxu0 0
      %1621 = vmatpush1.bf16.msra.mxu0 %v1495
      %1622 = vmatprep.subr.bf16.mxu0 0
      %1623 = vmatpush1.bf16.msra.mxu0 %v1496
      %1624 = vmatprep.subr.bf16.mxu0 0
      %1625 = vmatpush1.bf16.msra.mxu0 %v1497
      %1626 = vmatprep.subr.bf16.mxu0 0
      %1627 = vmatpush1.bf16.msra.mxu0 %v1498
      %1628 = vmatprep.subr.bf16.mxu0 0
      %1629 = vmatpush1.bf16.msra.mxu0 %v1499
      %1630 = vmatprep.subr.bf16.mxu0 0
      %1631 = vmatpush1.bf16.msra.mxu0 %v1500
      %1632 = vmatprep.subr.bf16.mxu0 0
      %1633 = vmatpush1.bf16.msra.mxu0 %v1501
      %1634 = vmatprep.subr.bf16.mxu0 0
      %1635 = vmatpush1.bf16.msra.mxu0 %v1502
      %1636 = vmatprep.subr.bf16.mxu0 0
      %1637 = vmatpush1.bf16.msra.mxu0 %v1503
      %1638 = vmatprep.subr.bf16.mxu0 0
      %1639 = vmatpush1.bf16.msra.mxu0 %v1504
      %1640 = vmatprep.subr.bf16.mxu0 0
      %1641 = vmatpush1.bf16.msra.mxu0 %v1505
      %1642 = vmatprep.subr.bf16.mxu0 0
      %1643 = vmatpush1.bf16.msra.mxu0 %v1506
      %1644 = vmatprep.mubr.bf16.mxu0 %v1163
      %1645 = vmatmul.mubr.bf16.gmra.mrb[0].mxu0 %v1162
      %v1646 = vpop.f32.mrb[0].mxu0
      %v1647 = vadd.f32 %v1606, %v1646
      %v1648 = vpop.f32.mrb[0].mxu0
      %v1649 = vpop.f32.mrb[0].mxu0
      %v1650 = vadd.f32 %v1609, %v1649
      %v1651 = vpop.f32.mrb[0].mxu0
      %1652 = vdwg.mxu0
      %1653 = vmatprep.subr.bf16.mxu0 0
      %1654 = vmatpush1.bf16.msra.mxu0 %v1507
      %1655 = vmatprep.subr.bf16.mxu0 0
      %1656 = vmatpush1.bf16.msra.mxu0 %v1508
      %1657 = vmatprep.subr.bf16.mxu0 0
      %1658 = vmatpush1.bf16.msra.mxu0 %v1509
      %1659 = vmatprep.subr.bf16.mxu0 0
      %1660 = vmatpush1.bf16.msra.mxu0 %v1510
      %1661 = vmatprep.subr.bf16.mxu0 0
      %1662 = vmatpush1.bf16.msra.mxu0 %v1511
      %1663 = vmatprep.subr.bf16.mxu0 0
      %1664 = vmatpush1.bf16.msra.mxu0 %v1512
      %1665 = vmatprep.subr.bf16.mxu0 0
      %1666 = vmatpush1.bf16.msra.mxu0 %v1513
      %1667 = vmatprep.subr.bf16.mxu0 0
      %1668 = vmatpush1.bf16.msra.mxu0 %v1514
      %1669 = vmatprep.subr.bf16.mxu0 0
      %1670 = vmatpush1.bf16.msra.mxu0 %v1515
      %1671 = vmatprep.subr.bf16.mxu0 0
      %1672 = vmatpush1.bf16.msra.mxu0 %v1516
      %1673 = vmatprep.subr.bf16.mxu0 0
      %1674 = vmatpush1.bf16.msra.mxu0 %v1517
      %1675 = vmatprep.subr.bf16.mxu0 0
      %1676 = vmatpush1.bf16.msra.mxu0 %v1518
      %1677 = vmatprep.subr.bf16.mxu0 0
      %1678 = vmatpush1.bf16.msra.mxu0 %v1519
      %1679 = vmatprep.subr.bf16.mxu0 0
      %1680 = vmatpush1.bf16.msra.mxu0 %v1520
      %1681 = vmatprep.subr.bf16.mxu0 0
      %1682 = vmatpush1.bf16.msra.mxu0 %v1521
      %1683 = vmatprep.subr.bf16.mxu0 0
      %1684 = vmatpush1.bf16.msra.mxu0 %v1522
      %1685 = vmatprep.mubr.bf16.mxu0 %v1183
      %1686 = vmatmul.mubr.bf16.gmra.mrb[0].mxu0 %v1182
      %v1687 = vpop.f32.mrb[0].mxu0
      %v1688 = vadd.f32 %v1647, %v1687
      %v1689 = vpop.f32.mrb[0].mxu0
      %v1690 = vpop.f32.mrb[0].mxu0
      %v1691 = vadd.f32 %v1650, %v1690
      %v1692 = vpop.f32.mrb[0].mxu0
      %1693 = vdwg.mxu0
      %v1790 = vunpack.c.l.b16 %v842
      %v1791 = vunpack.c.l.b16 %v843
      %v1792 = vunpack.c.l.b16 %v844
      %v1793 = vunpack.c.l.b16 %v845
      %v1794 = vunpack.c.l.b16 %v846
      %v1795 = vunpack.c.l.b16 %v847
      %v1796 = vunpack.c.l.b16 %v848
      %v1797 = vunpack.c.l.b16 %v849
      %v1798 = vunpack.c.l.b16 %v850
      %v1799 = vunpack.c.l.b16 %v851
      %v1800 = vunpack.c.l.b16 %v852
      %v1801 = vunpack.c.l.b16 %v853
      %v1802 = vunpack.c.l.b16 %v854
      %v1803 = vunpack.c.l.b16 %v855
      %v1804 = vunpack.c.l.b16 %v856
      %v1805 = vunpack.c.l.b16 %v857
      %v1806 = vunpack.c.l.b16 %v858
      %v1807 = vunpack.c.l.b16 %v859
      %v1808 = vunpack.c.l.b16 %v860
      %v1809 = vunpack.c.l.b16 %v861
      %v1810 = vunpack.c.l.b16 %v862
      %v1811 = vunpack.c.l.b16 %v863
      %v1812 = vunpack.c.l.b16 %v864
      %v1813 = vunpack.c.l.b16 %v865
      %v1814 = vunpack.c.l.b16 %v866
      %v1815 = vunpack.c.l.b16 %v867
      %v1816 = vunpack.c.l.b16 %v868
      %v1817 = vunpack.c.l.b16 %v869
      %v1818 = vunpack.c.l.b16 %v870
      %v1819 = vunpack.c.l.b16 %v871
      %v1820 = vunpack.c.l.b16 %v872
      %v1821 = vunpack.c.l.b16 %v873
      %v1822 = vunpack.c.l.b16 %v874
      %v1823 = vunpack.c.l.b16 %v875
      %v1824 = vunpack.c.l.b16 %v876
      %v1825 = vunpack.c.l.b16 %v877
      %v1826 = vunpack.c.l.b16 %v878
      %v1827 = vunpack.c.l.b16 %v879
      %v1828 = vunpack.c.l.b16 %v880
      %v1829 = vunpack.c.l.b16 %v881
      %v1830 = vunpack.c.l.b16 %v882
      %v1831 = vunpack.c.l.b16 %v883
      %v1832 = vunpack.c.l.b16 %v884
      %v1833 = vunpack.c.l.b16 %v885
      %v1834 = vunpack.c.l.b16 %v886
      %v1835 = vunpack.c.l.b16 %v887
      %v1836 = vunpack.c.l.b16 %v888
      %v1837 = vunpack.c.l.b16 %v889
      %v1838 = vunpack.c.l.b16 %v890
      %v1839 = vunpack.c.l.b16 %v891
      %v1840 = vunpack.c.l.b16 %v892
      %v1841 = vunpack.c.l.b16 %v893
      %v1842 = vunpack.c.l.b16 %v894
      %v1843 = vunpack.c.l.b16 %v895
      %v1844 = vunpack.c.l.b16 %v896
      %v1845 = vunpack.c.l.b16 %v897
      %v1846 = vunpack.c.l.b16 %v898
      %v1847 = vunpack.c.l.b16 %v899
      %v1848 = vunpack.c.l.b16 %v900
      %v1849 = vunpack.c.l.b16 %v901
      %v1850 = vunpack.c.l.b16 %v902
      %v1851 = vunpack.c.l.b16 %v903
      %v1852 = vunpack.c.l.b16 %v904
      %v1853 = vunpack.c.l.b16 %v905
      %v1854 = vunpack.c.l.b16 %v906
      %v1855 = vunpack.c.l.b16 %v907
      %v1856 = vunpack.c.l.b16 %v908
      %v1857 = vunpack.c.l.b16 %v909
      %v1858 = vunpack.c.l.b16 %v910
      %v1859 = vunpack.c.l.b16 %v911
      %v1860 = vunpack.c.l.b16 %v912
      %v1861 = vunpack.c.l.b16 %v913
      %v1862 = vunpack.c.l.b16 %v914
      %v1863 = vunpack.c.l.b16 %v915
      %v1864 = vunpack.c.l.b16 %v916
      %v1865 = vunpack.c.l.b16 %v917
      %v1866 = vunpack.c.l.b16 %v918
      %v1867 = vunpack.c.l.b16 %v919
      %v1868 = vunpack.c.l.b16 %v920
      %v1869 = vunpack.c.l.b16 %v921
      %v1870 = vunpack.c.l.b16 %v922
      %v1871 = vunpack.c.l.b16 %v923
      %v1872 = vunpack.c.l.b16 %v924
      %v1873 = vunpack.c.l.b16 %v925
      %v1874 = vunpack.c.l.b16 %v926
      %v1875 = vunpack.c.l.b16 %v927
      %v1876 = vunpack.c.l.b16 %v928
      %v1877 = vunpack.c.l.b16 %v929
      %v1878 = vunpack.c.l.b16 %v930
      %v1879 = vunpack.c.l.b16 %v931
      %v1880 = vunpack.c.l.b16 %v932
      %v1881 = vunpack.c.l.b16 %v933
      %v1882 = vunpack.c.l.b16 %v934
      %v1883 = vunpack.c.l.b16 %v935
      %v1884 = vunpack.c.l.b16 %v936
      %v1885 = vunpack.c.l.b16 %v937
      %v1886 = vpack.c.b16 %v1791, %v1790
      %v1887 = vpack.c.b16 %v1793, %v1792
      %v1888 = vpack.c.b16 %v1795, %v1794
      %v1889 = vpack.c.b16 %v1797, %v1796
      %v1890 = vpack.c.b16 %v1799, %v1798
      %v1891 = vpack.c.b16 %v1801, %v1800
      %v1892 = vpack.c.b16 %v1803, %v1802
      %v1893 = vpack.c.b16 %v1805, %v1804
      %v1894 = vpack.c.b16 %v1807, %v1806
      %v1895 = vpack.c.b16 %v1809, %v1808
      %v1896 = vpack.c.b16 %v1811, %v1810
      %v1897 = vpack.c.b16 %v1813, %v1812
      %v1898 = vpack.c.b16 %v1815, %v1814
      %v1899 = vpack.c.b16 %v1817, %v1816
      %v1900 = vpack.c.b16 %v1819, %v1818
      %v1901 = vpack.c.b16 %v1821, %v1820
      %v1902 = vpack.c.b16 %v1823, %v1822
      %v1903 = vpack.c.b16 %v1825, %v1824
      %v1904 = vpack.c.b16 %v1827, %v1826
      %v1905 = vpack.c.b16 %v1829, %v1828
      %v1906 = vpack.c.b16 %v1831, %v1830
      %v1907 = vpack.c.b16 %v1833, %v1832
      %v1908 = vpack.c.b16 %v1835, %v1834
      %v1909 = vpack.c.b16 %v1837, %v1836
      %v1910 = vpack.c.b16 %v1839, %v1838
      %v1911 = vpack.c.b16 %v1841, %v1840
      %v1912 = vpack.c.b16 %v1843, %v1842
      %v1913 = vpack.c.b16 %v1845, %v1844
      %v1914 = vpack.c.b16 %v1847, %v1846
      %v1915 = vpack.c.b16 %v1849, %v1848
      %v1916 = vpack.c.b16 %v1851, %v1850
      %v1917 = vpack.c.b16 %v1853, %v1852
      %v1918 = vpack.c.b16 %v1855, %v1854
      %v1919 = vpack.c.b16 %v1857, %v1856
      %v1920 = vpack.c.b16 %v1859, %v1858
      %v1921 = vpack.c.b16 %v1861, %v1860
      %v1922 = vpack.c.b16 %v1863, %v1862
      %v1923 = vpack.c.b16 %v1865, %v1864
      %v1924 = vpack.c.b16 %v1867, %v1866
      %v1925 = vpack.c.b16 %v1869, %v1868
      %v1926 = vpack.c.b16 %v1871, %v1870
      %v1927 = vpack.c.b16 %v1873, %v1872
      %v1928 = vpack.c.b16 %v1875, %v1874
      %v1929 = vpack.c.b16 %v1877, %v1876
      %v1930 = vpack.c.b16 %v1879, %v1878
      %v1931 = vpack.c.b16 %v1881, %v1880
      %v1932 = vpack.c.b16 %v1883, %v1882
      %v1933 = vpack.c.b16 %v1885, %v1884
      %1982 = vmatprep.subr.bf16.mxu0 0
      %1983 = vmatpush1.bf16.msra.mxu0 %v1886
      %1984 = vmatprep.subr.bf16.mxu0 0
      %1985 = vmatpush1.bf16.msra.mxu0 %v1887
      %1986 = vmatprep.subr.bf16.mxu0 0
      %1987 = vmatpush1.bf16.msra.mxu0 %v1888
      %1988 = vmatprep.subr.bf16.mxu0 0
      %1989 = vmatpush1.bf16.msra.mxu0 %v1889
      %1990 = vmatprep.subr.bf16.mxu0 0
      %1991 = vmatpush1.bf16.msra.mxu0 %v1890
      %1992 = vmatprep.subr.bf16.mxu0 0
      %1993 = vmatpush1.bf16.msra.mxu0 %v1891
      %1994 = vmatprep.subr.bf16.mxu0 0
      %1995 = vmatpush1.bf16.msra.mxu0 %v1892
      %1996 = vmatprep.subr.bf16.mxu0 0
      %1997 = vmatpush1.bf16.msra.mxu0 %v1893
      %1998 = vmatprep.subr.bf16.mxu0 0
      %1999 = vmatpush1.bf16.msra.mxu0 %v1894
      %2000 = vmatprep.subr.bf16.mxu0 0
      %2001 = vmatpush1.bf16.msra.mxu0 %v1895
      %2002 = vmatprep.subr.bf16.mxu0 0
      %2003 = vmatpush1.bf16.msra.mxu0 %v1896
      %2004 = vmatprep.subr.bf16.mxu0 0
      %2005 = vmatpush1.bf16.msra.mxu0 %v1897
      %2006 = vmatprep.subr.bf16.mxu0 0
      %2007 = vmatpush1.bf16.msra.mxu0 %v1898
      %2008 = vmatprep.subr.bf16.mxu0 0
      %2009 = vmatpush1.bf16.msra.mxu0 %v1899
      %2010 = vmatprep.subr.bf16.mxu0 0
      %2011 = vmatpush1.bf16.msra.mxu0 %v1900
      %2012 = vmatprep.subr.bf16.mxu0 0
      %2013 = vmatpush1.bf16.msra.mxu0 %v1901
      %2014 = vmatprep.mubr.bf16.mxu0 %v799
      %2015 = vmatmul.mubr.bf16.gmra.mrb[0].mxu0 %v798
      %v2016 = vpop.f32.mrb[0].mxu0
      %v2017 = vadd.f32 %v1688, %v2016
      %v2018 = vpop.f32.mrb[0].mxu0
      %v2019 = vpop.f32.mrb[0].mxu0
      %v2020 = vadd.f32 %v1691, %v2019
      %v2021 = vpop.f32.mrb[0].mxu0
      %2022 = vdwg.mxu0
      %2023 = vmatprep.subr.bf16.mxu0 0
      %2024 = vmatpush1.bf16.msra.mxu0 %v1902
      %2025 = vmatprep.subr.bf16.mxu0 0
      %2026 = vmatpush1.bf16.msra.mxu0 %v1903
      %2027 = vmatprep.subr.bf16.mxu0 0
      %2028 = vmatpush1.bf16.msra.mxu0 %v1904
      %2029 = vmatprep.subr.bf16.mxu0 0
      %2030 = vmatpush1.bf16.msra.mxu0 %v1905
      %2031 = vmatprep.subr.bf16.mxu0 0
      %2032 = vmatpush1.bf16.msra.mxu0 %v1906
      %2033 = vmatprep.subr.bf16.mxu0 0
      %2034 = vmatpush1.bf16.msra.mxu0 %v1907
      %2035 = vmatprep.subr.bf16.mxu0 0
      %2036 = vmatpush1.bf16.msra.mxu0 %v1908
      %2037 = vmatprep.subr.bf16.mxu0 0
      %2038 = vmatpush1.bf16.msra.mxu0 %v1909
      %2039 = vmatprep.subr.bf16.mxu0 0
      %2040 = vmatpush1.bf16.msra.mxu0 %v1910
      %2041 = vmatprep.subr.bf16.mxu0 0
      %2042 = vmatpush1.bf16.msra.mxu0 %v1911
      %2043 = vmatprep.subr.bf16.mxu0 0
      %2044 = vmatpush1.bf16.msra.mxu0 %v1912
      %2045 = vmatprep.subr.bf16.mxu0 0
      %2046 = vmatpush1.bf16.msra.mxu0 %v1913
      %2047 = vmatprep.subr.bf16.mxu0 0
      %2048 = vmatpush1.bf16.msra.mxu0 %v1914
      %2049 = vmatprep.subr.bf16.mxu0 0
      %2050 = vmatpush1.bf16.msra.mxu0 %v1915
      %2051 = vmatprep.subr.bf16.mxu0 0
      %2052 = vmatpush1.bf16.msra.mxu0 %v1916
      %2053 = vmatprep.subr.bf16.mxu0 0
      %2054 = vmatpush1.bf16.msra.mxu0 %v1917
      %2055 = vmatprep.mubr.bf16.mxu0 %v819
      %2056 = vmatmul.mubr.bf16.gmra.mrb[0].mxu0 %v818
      %v2057 = vpop.f32.mrb[0].mxu0
      %v2058 = vadd.f32 %v2017, %v2057
      %v2059 = vpop.f32.mrb[0].mxu0
      %v2060 = vpop.f32.mrb[0].mxu0
      %v2061 = vadd.f32 %v2020, %v2060
      %v2062 = vpop.f32.mrb[0].mxu0
      %2063 = vdwg.mxu0
      %2064 = vmatprep.subr.bf16.mxu0 0
      %2065 = vmatpush1.bf16.msra.mxu0 %v1918
      %2066 = vmatprep.subr.bf16.mxu0 0
      %2067 = vmatpush1.bf16.msra.mxu0 %v1919
      %2068 = vmatprep.subr.bf16.mxu0 0
      %2069 = vmatpush1.bf16.msra.mxu0 %v1920
      %2070 = vmatprep.subr.bf16.mxu0 0
      %2071 = vmatpush1.bf16.msra.mxu0 %v1921
      %2072 = vmatprep.subr.bf16.mxu0 0
      %2073 = vmatpush1.bf16.msra.mxu0 %v1922
      %2074 = vmatprep.subr.bf16.mxu0 0
      %2075 = vmatpush1.bf16.msra.mxu0 %v1923
      %2076 = vmatprep.subr.bf16.mxu0 0
      %2077 = vmatpush1.bf16.msra.mxu0 %v1924
      %2078 = vmatprep.subr.bf16.mxu0 0
      %2079 = vmatpush1.bf16.msra.mxu0 %v1925
      %2080 = vmatprep.subr.bf16.mxu0 0
      %2081 = vmatpush1.bf16.msra.mxu0 %v1926
      %2082 = vmatprep.subr.bf16.mxu0 0
      %2083 = vmatpush1.bf16.msra.mxu0 %v1927
      %2084 = vmatprep.subr.bf16.mxu0 0
      %2085 = vmatpush1.bf16.msra.mxu0 %v1928
      %2086 = vmatprep.subr.bf16.mxu0 0
      %2087 = vmatpush1.bf16.msra.mxu0 %v1929
      %2088 = vmatprep.subr.bf16.mxu0 0
      %2089 = vmatpush1.bf16.msra.mxu0 %v1930
      %2090 = vmatprep.subr.bf16.mxu0 0
      %2091 = vmatpush1.bf16.msra.mxu0 %v1931
      %2092 = vmatprep.subr.bf16.mxu0 0
      %2093 = vmatpush1.bf16.msra.mxu0 %v1932
      %2094 = vmatprep.subr.bf16.mxu0 0
      %2095 = vmatpush1.bf16.msra.mxu0 %v1933
      %2096 = vmatprep.mubr.bf16.mxu0 %v839
      %2097 = vmatmul.mubr.bf16.gmra.mrb[0].mxu0 %v838
      %v2098 = vpop.f32.mrb[0].mxu0
      %v2099 = vadd.f32 %v2058, %v2098
      %v2100 = vpop.f32.mrb[0].mxu0
      %v2101 = vpop.f32.mrb[0].mxu0
      %v2102 = vadd.f32 %v2061, %v2101
      %v2103 = vpop.f32.mrb[0].mxu0
      %2104 = vdwg.mxu0
      %s2105 = scalar_lea.vmem [#allocation2], 16
      %v2106 = vld [vmem:[%s2105] sm:$0x33]
      %v2107 = vld [vmem:[%s2105 + $0x8] sm:$0x33]
      %v2108 = vld [vmem:[%s2105 + $0x10] sm:$0x33]
      %v2109 = vld [vmem:[%s2105 + $0x18] sm:$0x33]
      %v2115 = vunpack.c.l.s4 1983009808
      %v2116 = vunpack.c.0.s8 %v2115
      %v2117 = vlaneseq
      %v2118 = vshrl.u32 %v2117, 7
      %v2119 = vsub.s32 %v2116, %v2118
      %v2120 = vrot.slane %v2106, %v2119
      %v2122 = vunpack.c.l.s4 1983009808
      %v2123 = vunpack.c.0.s8 %v2122
      %v2124 = vlaneseq
      %v2125 = vshrl.u32 %v2124, 7
      %v2126 = vsub.s32 %v2123, %v2125
      %v2127 = vrot.slane %v2107, %v2126
      %v2129 = vunpack.c.l.s4 1983009808
      %v2130 = vunpack.c.0.s8 %v2129
      %v2131 = vlaneseq
      %v2132 = vshrl.u32 %v2131, 7
      %v2133 = vsub.s32 %v2130, %v2132
      %v2134 = vrot.slane %v2108, %v2133
      %v2136 = vunpack.c.l.s4 1983009808
      %v2137 = vunpack.c.0.s8 %v2136
      %v2138 = vlaneseq
      %v2139 = vshrl.u32 %v2138, 7
      %v2140 = vsub.s32 %v2137, %v2139
      %v2141 = vrot.slane %v2109, %v2140
      %v2142 = vld [vmem:[%s2105] sm:$0x77]
      %v2143 = vld [vmem:[%s2105 + $0x8] sm:$0x77]
      %v2144 = vld [vmem:[%s2105 + $0x10] sm:$0x77]
      %v2145 = vld [vmem:[%s2105 + $0x18] sm:$0x77]
      %v2151 = vunpack.c.l.s4 1983009808
      %v2152 = vunpack.c.0.s8 %v2151
      %v2153 = vlaneseq
      %v2154 = vshrl.u32 %v2153, 7
      %v2155 = vsub.s32 %v2152, %v2154
      %v2156 = vrot.slane %v2142, %v2155
      %v2157 = vcombine.high %v2156, %v2156
      %v2159 = vunpack.c.l.s4 1983009808
      %v2160 = vunpack.c.0.s8 %v2159
      %v2161 = vlaneseq
      %v2162 = vshrl.u32 %v2161, 7
      %v2163 = vsub.s32 %v2160, %v2162
      %v2164 = vrot.slane %v2143, %v2163
      %v2165 = vcombine.high %v2164, %v2164
      %v2167 = vunpack.c.l.s4 1983009808
      %v2168 = vunpack.c.0.s8 %v2167
      %v2169 = vlaneseq
      %v2170 = vshrl.u32 %v2169, 7
      %v2171 = vsub.s32 %v2168, %v2170
      %v2172 = vrot.slane %v2144, %v2171
      %v2173 = vcombine.high %v2172, %v2172
      %v2175 = vunpack.c.l.s4 1983009808
      %v2176 = vunpack.c.0.s8 %v2175
      %v2177 = vlaneseq
      %v2178 = vshrl.u32 %v2177, 7
      %v2179 = vsub.s32 %v2176, %v2178
      %v2180 = vrot.slane %v2145, %v2179
      %v2181 = vcombine.high %v2180, %v2180
      %v2183 = vshrl.u32 %v2156, 16
      %v2185 = vrot.slane %v2183, 6
      %v2186 = vshll.u32 %v2156, 16
      %v2188 = vrot.slane %v2186, 7
      %v2189 = vor.u32 %v2185, %v2188
      %v2190 = vrot.slane %v2189, 2
      %v2192 = vshll.u32 %v2157, 16
      %v2194 = vrot.slane %v2192, 7
      %v2195 = vsel %vm666, %v2190, %v2194
      %v2197 = vshrl.u32 %v2164, 16
      %v2199 = vrot.slane %v2197, 6
      %v2200 = vshll.u32 %v2164, 16
      %v2202 = vrot.slane %v2200, 7
      %v2203 = vor.u32 %v2199, %v2202
      %v2204 = vrot.slane %v2203, 2
      %v2206 = vshll.u32 %v2165, 16
      %v2208 = vrot.slane %v2206, 7
      %v2209 = vsel %vm666, %v2204, %v2208
      %v2211 = vshrl.u32 %v2172, 16
      %v2213 = vrot.slane %v2211, 6
      %v2214 = vshll.u32 %v2172, 16
      %v2216 = vrot.slane %v2214, 7
      %v2217 = vor.u32 %v2213, %v2216
      %v2218 = vrot.slane %v2217, 2
      %v2220 = vshll.u32 %v2173, 16
      %v2222 = vrot.slane %v2220, 7
      %v2223 = vsel %vm666, %v2218, %v2222
      %v2225 = vshrl.u32 %v2180, 16
      %v2227 = vrot.slane %v2225, 6
      %v2228 = vshll.u32 %v2180, 16
      %v2230 = vrot.slane %v2228, 7
      %v2231 = vor.u32 %v2227, %v2230
      %v2232 = vrot.slane %v2231, 2
      %v2234 = vshll.u32 %v2181, 16
      %v2236 = vrot.slane %v2234, 7
      %v2237 = vsel %vm666, %v2232, %v2236
      %v2238 = vld [vmem:[%s2105] sm:$0x66]
      %v2239 = vld [vmem:[%s2105 + $0x8] sm:$0x66]
      %v2240 = vld [vmem:[%s2105 + $0x10] sm:$0x66]
      %v2241 = vld [vmem:[%s2105 + $0x18] sm:$0x66]
      %v2247 = vunpack.c.l.s4 1983009808
      %v2248 = vunpack.c.0.s8 %v2247
      %v2249 = vlaneseq
      %v2250 = vshrl.u32 %v2249, 7
      %v2251 = vsub.s32 %v2248, %v2250
      %v2252 = vrot.slane %v2238, %v2251
      %v2253 = vcombine.high %v2252, %v2252
      %v2255 = vunpack.c.l.s4 1983009808
      %v2256 = vunpack.c.0.s8 %v2255
      %v2257 = vlaneseq
      %v2258 = vshrl.u32 %v2257, 7
      %v2259 = vsub.s32 %v2256, %v2258
      %v2260 = vrot.slane %v2239, %v2259
      %v2261 = vcombine.high %v2260, %v2260
      %v2263 = vunpack.c.l.s4 1983009808
      %v2264 = vunpack.c.0.s8 %v2263
      %v2265 = vlaneseq
      %v2266 = vshrl.u32 %v2265, 7
      %v2267 = vsub.s32 %v2264, %v2266
      %v2268 = vrot.slane %v2240, %v2267
      %v2269 = vcombine.high %v2268, %v2268
      %v2271 = vunpack.c.l.s4 1983009808
      %v2272 = vunpack.c.0.s8 %v2271
      %v2273 = vlaneseq
      %v2274 = vshrl.u32 %v2273, 7
      %v2275 = vsub.s32 %v2272, %v2274
      %v2276 = vrot.slane %v2241, %v2275
      %v2277 = vcombine.high %v2276, %v2276
      %v2278 = vrot.slane %v2252, 7
      %v2279 = vrot.slane %v2278, 2
      %v2280 = vrot.slane %v2253, 7
      %v2281 = vsel %vm765, %v2279, %v2280
      %v2282 = vrot.slane %v2260, 7
      %v2283 = vrot.slane %v2282, 2
      %v2284 = vrot.slane %v2261, 7
      %v2285 = vsel %vm765, %v2283, %v2284
      %v2286 = vrot.slane %v2268, 7
      %v2287 = vrot.slane %v2286, 2
      %v2288 = vrot.slane %v2269, 7
      %v2289 = vsel %vm765, %v2287, %v2288
      %v2290 = vrot.slane %v2276, 7
      %v2291 = vrot.slane %v2290, 2
      %v2292 = vrot.slane %v2277, 7
      %v2293 = vsel %vm765, %v2291, %v2292
      %v2294 = vcombine.low %v2120, %v2127
      %v2295 = vcombine.low %v2134, %v2141
      %v2297 = vunpack.c.l.s4 1983009808
      %v2298 = vunpack.c.0.s8 %v2297
      %v2299 = vlaneseq
      %v2300 = vshrl.u32 %v2299, 7
      %v2301 = vsub.s32 %v2298, %v2300
      %v2302 = vrot.slane %v2294, %v2301
      %v2304 = vunpack.c.l.s4 1983009808
      %v2305 = vunpack.c.0.s8 %v2304
      %v2306 = vlaneseq
      %v2307 = vshrl.u32 %v2306, 7
      %v2308 = vsub.s32 %v2305, %v2307
      %v2309 = vrot.slane %v2295, %v2308
      %v2310 = vcombine.low %v2302, %v2309
      %v2311 = vcombine.high %v2302, %v2309
      %v2314 = vcombine.low %v2195, %v2209
      %v2315 = vcombine.low %v2223, %v2237
      %v2317 = vunpack.c.l.s4 1983009808
      %v2318 = vunpack.c.0.s8 %v2317
      %v2319 = vlaneseq
      %v2320 = vshrl.u32 %v2319, 7
      %v2321 = vsub.s32 %v2318, %v2320
      %v2322 = vrot.slane %v2314, %v2321
      %v2324 = vunpack.c.l.s4 1983009808
      %v2325 = vunpack.c.0.s8 %v2324
      %v2326 = vlaneseq
      %v2327 = vshrl.u32 %v2326, 7
      %v2328 = vsub.s32 %v2325, %v2327
      %v2329 = vrot.slane %v2315, %v2328
      %v2330 = vcombine.low %v2322, %v2329
      %v2331 = vcombine.high %v2322, %v2329
      %v2334 = vcombine.low %v2281, %v2285
      %v2335 = vcombine.low %v2289, %v2293
      %v2337 = vunpack.c.l.s4 1983009808
      %v2338 = vunpack.c.0.s8 %v2337
      %v2339 = vlaneseq
      %v2340 = vshrl.u32 %v2339, 7
      %v2341 = vsub.s32 %v2338, %v2340
      %v2342 = vrot.slane %v2334, %v2341
      %v2344 = vunpack.c.l.s4 1983009808
      %v2345 = vunpack.c.0.s8 %v2344
      %v2346 = vlaneseq
      %v2347 = vshrl.u32 %v2346, 7
      %v2348 = vsub.s32 %v2345, %v2347
      %v2349 = vrot.slane %v2335, %v2348
      %v2350 = vcombine.low %v2342, %v2349
      %v2351 = vcombine.high %v2342, %v2349
      %s2354 = scalar_lea.vmem %s2, 768
      %v2355 = vld [vmem:[%s2354] sm:$0xf]
      %v2356 = vld [vmem:[%s2354 + $0x4] sm:$0xf]
      %v2357 = vld [vmem:[%s2354 + $0x8] sm:$0xf]
      %v2358 = vld [vmem:[%s2354 + $0xc] sm:$0xf]
      %v2359 = vld [vmem:[%s2354 + $0x10] sm:$0xf]
      %v2360 = vld [vmem:[%s2354 + $0x14] sm:$0xf]
      %v2361 = vld [vmem:[%s2354 + $0x18] sm:$0xf]
      %v2362 = vld [vmem:[%s2354 + $0x1c] sm:$0xf]
      %v2363 = vld [vmem:[%s2354 + $0x20] sm:$0xf]
      %v2364 = vld [vmem:[%s2354 + $0x24] sm:$0xf]
      %v2365 = vld [vmem:[%s2354 + $0x28] sm:$0xf]
      %v2366 = vld [vmem:[%s2354 + $0x2c] sm:$0xf]
      %v2367 = vld [vmem:[%s2354 + $0x30] sm:$0xf]
      %v2368 = vld [vmem:[%s2354 + $0x34] sm:$0xf]
      %v2369 = vld [vmem:[%s2354 + $0x38] sm:$0xf]
      %v2370 = vld [vmem:[%s2354 + $0x3c] sm:$0xf]
      %v2371 = vld [vmem:[%s2354 + $0x40] sm:$0xf]
      %v2372 = vld [vmem:[%s2354 + $0x44] sm:$0xf]
      %v2373 = vld [vmem:[%s2354 + $0x48] sm:$0xf]
      %v2374 = vld [vmem:[%s2354 + $0x4c] sm:$0xf]
      %v2375 = vld [vmem:[%s2354 + $0x50] sm:$0xf]
      %v2376 = vld [vmem:[%s2354 + $0x54] sm:$0xf]
      %v2377 = vld [vmem:[%s2354 + $0x58] sm:$0xf]
      %v2378 = vld [vmem:[%s2354 + $0x5c] sm:$0xf]
      %v2379 = vld [vmem:[%s2354 + $0x60] sm:$0xf]
      %v2380 = vld [vmem:[%s2354 + $0x64] sm:$0xf]
      %v2381 = vld [vmem:[%s2354 + $0x68] sm:$0xf]
      %v2382 = vld [vmem:[%s2354 + $0x6c] sm:$0xf]
      %v2383 = vld [vmem:[%s2354 + $0x70] sm:$0xf]
      %v2384 = vld [vmem:[%s2354 + $0x74] sm:$0xf]
      %v2385 = vld [vmem:[%s2354 + $0x78] sm:$0xf]
      %v2386 = vld [vmem:[%s2354 + $0x7c] sm:$0xf]
      %v2387 = vld [vmem:[%s2354 + $0x80] sm:$0xf]
      %v2388 = vld [vmem:[%s2354 + $0x84] sm:$0xf]
      %v2389 = vld [vmem:[%s2354 + $0x88] sm:$0xf]
      %v2390 = vld [vmem:[%s2354 + $0x8c] sm:$0xf]
      %v2391 = vld [vmem:[%s2354 + $0x90] sm:$0xf]
      %v2392 = vld [vmem:[%s2354 + $0x94] sm:$0xf]
      %v2393 = vld [vmem:[%s2354 + $0x98] sm:$0xf]
      %v2394 = vld [vmem:[%s2354 + $0x9c] sm:$0xf]
      %v2395 = vld [vmem:[%s2354 + $0xa0] sm:$0xf]
      %v2396 = vld [vmem:[%s2354 + $0xa4] sm:$0xf]
      %v2397 = vld [vmem:[%s2354 + $0xa8] sm:$0xf]
      %v2398 = vld [vmem:[%s2354 + $0xac] sm:$0xf]
      %v2399 = vld [vmem:[%s2354 + $0xb0] sm:$0xf]
      %v2400 = vld [vmem:[%s2354 + $0xb4] sm:$0xf]
      %v2401 = vld [vmem:[%s2354 + $0xb8] sm:$0xf]
      %v2402 = vld [vmem:[%s2354 + $0xbc] sm:$0xf]
      %v2403 = vld [vmem:[%s2354 + $0xc0] sm:$0xf]
      %v2404 = vld [vmem:[%s2354 + $0xc4] sm:$0xf]
      %v2405 = vld [vmem:[%s2354 + $0xc8] sm:$0xf]
      %v2406 = vld [vmem:[%s2354 + $0xcc] sm:$0xf]
      %v2407 = vld [vmem:[%s2354 + $0xd0] sm:$0xf]
      %v2408 = vld [vmem:[%s2354 + $0xd4] sm:$0xf]
      %v2409 = vld [vmem:[%s2354 + $0xd8] sm:$0xf]
      %v2410 = vld [vmem:[%s2354 + $0xdc] sm:$0xf]
      %v2411 = vld [vmem:[%s2354 + $0xe0] sm:$0xf]
      %v2412 = vld [vmem:[%s2354 + $0xe4] sm:$0xf]
      %v2413 = vld [vmem:[%s2354 + $0xe8] sm:$0xf]
      %v2414 = vld [vmem:[%s2354 + $0xec] sm:$0xf]
      %v2415 = vld [vmem:[%s2354 + $0xf0] sm:$0xf]
      %v2416 = vld [vmem:[%s2354 + $0xf4] sm:$0xf]
      %v2417 = vld [vmem:[%s2354 + $0xf8] sm:$0xf]
      %v2418 = vld [vmem:[%s2354 + $0xfc] sm:$0xf]
      %v2419 = vld [vmem:[%s2354 + $0x100] sm:$0xf]
      %v2420 = vld [vmem:[%s2354 + $0x104] sm:$0xf]
      %v2421 = vld [vmem:[%s2354 + $0x108] sm:$0xf]
      %v2422 = vld [vmem:[%s2354 + $0x10c] sm:$0xf]
      %v2423 = vld [vmem:[%s2354 + $0x110] sm:$0xf]
      %v2424 = vld [vmem:[%s2354 + $0x114] sm:$0xf]
      %v2425 = vld [vmem:[%s2354 + $0x118] sm:$0xf]
      %v2426 = vld [vmem:[%s2354 + $0x11c] sm:$0xf]
      %v2427 = vld [vmem:[%s2354 + $0x120] sm:$0xf]
      %v2428 = vld [vmem:[%s2354 + $0x124] sm:$0xf]
      %v2429 = vld [vmem:[%s2354 + $0x128] sm:$0xf]
      %v2430 = vld [vmem:[%s2354 + $0x12c] sm:$0xf]
      %v2431 = vld [vmem:[%s2354 + $0x130] sm:$0xf]
      %v2432 = vld [vmem:[%s2354 + $0x134] sm:$0xf]
      %v2433 = vld [vmem:[%s2354 + $0x138] sm:$0xf]
      %v2434 = vld [vmem:[%s2354 + $0x13c] sm:$0xf]
      %v2435 = vld [vmem:[%s2354 + $0x140] sm:$0xf]
      %v2436 = vld [vmem:[%s2354 + $0x144] sm:$0xf]
      %v2437 = vld [vmem:[%s2354 + $0x148] sm:$0xf]
      %v2438 = vld [vmem:[%s2354 + $0x14c] sm:$0xf]
      %v2439 = vld [vmem:[%s2354 + $0x150] sm:$0xf]
      %v2440 = vld [vmem:[%s2354 + $0x154] sm:$0xf]
      %v2441 = vld [vmem:[%s2354 + $0x158] sm:$0xf]
      %v2442 = vld [vmem:[%s2354 + $0x15c] sm:$0xf]
      %v2443 = vld [vmem:[%s2354 + $0x160] sm:$0xf]
      %v2444 = vld [vmem:[%s2354 + $0x164] sm:$0xf]
      %v2445 = vld [vmem:[%s2354 + $0x168] sm:$0xf]
      %v2446 = vld [vmem:[%s2354 + $0x16c] sm:$0xf]
      %v2447 = vld [vmem:[%s2354 + $0x170] sm:$0xf]
      %v2448 = vld [vmem:[%s2354 + $0x174] sm:$0xf]
      %v2449 = vld [vmem:[%s2354 + $0x178] sm:$0xf]
      %v2450 = vld [vmem:[%s2354 + $0x17c] sm:$0xf]
      %v2547 = vunpack.c.l.b16 %v2355
      %v2548 = vunpack.c.l.b16 %v2356
      %v2549 = vunpack.c.l.b16 %v2357
      %v2550 = vunpack.c.l.b16 %v2358
      %v2551 = vunpack.c.l.b16 %v2359
      %v2552 = vunpack.c.l.b16 %v2360
      %v2553 = vunpack.c.l.b16 %v2361
      %v2554 = vunpack.c.l.b16 %v2362
      %v2555 = vunpack.c.l.b16 %v2363
      %v2556 = vunpack.c.l.b16 %v2364
      %v2557 = vunpack.c.l.b16 %v2365
      %v2558 = vunpack.c.l.b16 %v2366
      %v2559 = vunpack.c.l.b16 %v2367
      %v2560 = vunpack.c.l.b16 %v2368
      %v2561 = vunpack.c.l.b16 %v2369
      %v2562 = vunpack.c.l.b16 %v2370
      %v2563 = vunpack.c.l.b16 %v2371
      %v2564 = vunpack.c.l.b16 %v2372
      %v2565 = vunpack.c.l.b16 %v2373
      %v2566 = vunpack.c.l.b16 %v2374
      %v2567 = vunpack.c.l.b16 %v2375
      %v2568 = vunpack.c.l.b16 %v2376
      %v2569 = vunpack.c.l.b16 %v2377
      %v2570 = vunpack.c.l.b16 %v2378
      %v2571 = vunpack.c.l.b16 %v2379
      %v2572 = vunpack.c.l.b16 %v2380
      %v2573 = vunpack.c.l.b16 %v2381
      %v2574 = vunpack.c.l.b16 %v2382
      %v2575 = vunpack.c.l.b16 %v2383
      %v2576 = vunpack.c.l.b16 %v2384
      %v2577 = vunpack.c.l.b16 %v2385
      %v2578 = vunpack.c.l.b16 %v2386
      %v2579 = vunpack.c.l.b16 %v2387
      %v2580 = vunpack.c.l.b16 %v2388
      %v2581 = vunpack.c.l.b16 %v2389
      %v2582 = vunpack.c.l.b16 %v2390
      %v2583 = vunpack.c.l.b16 %v2391
      %v2584 = vunpack.c.l.b16 %v2392
      %v2585 = vunpack.c.l.b16 %v2393
      %v2586 = vunpack.c.l.b16 %v2394
      %v2587 = vunpack.c.l.b16 %v2395
      %v2588 = vunpack.c.l.b16 %v2396
      %v2589 = vunpack.c.l.b16 %v2397
      %v2590 = vunpack.c.l.b16 %v2398
      %v2591 = vunpack.c.l.b16 %v2399
      %v2592 = vunpack.c.l.b16 %v2400
      %v2593 = vunpack.c.l.b16 %v2401
      %v2594 = vunpack.c.l.b16 %v2402
      %v2595 = vunpack.c.l.b16 %v2403
      %v2596 = vunpack.c.l.b16 %v2404
      %v2597 = vunpack.c.l.b16 %v2405
      %v2598 = vunpack.c.l.b16 %v2406
      %v2599 = vunpack.c.l.b16 %v2407
      %v2600 = vunpack.c.l.b16 %v2408
      %v2601 = vunpack.c.l.b16 %v2409
      %v2602 = vunpack.c.l.b16 %v2410
      %v2603 = vunpack.c.l.b16 %v2411
      %v2604 = vunpack.c.l.b16 %v2412
      %v2605 = vunpack.c.l.b16 %v2413
      %v2606 = vunpack.c.l.b16 %v2414
      %v2607 = vunpack.c.l.b16 %v2415
      %v2608 = vunpack.c.l.b16 %v2416
      %v2609 = vunpack.c.l.b16 %v2417
      %v2610 = vunpack.c.l.b16 %v2418
      %v2611 = vunpack.c.l.b16 %v2419
      %v2612 = vunpack.c.l.b16 %v2420
      %v2613 = vunpack.c.l.b16 %v2421
      %v2614 = vunpack.c.l.b16 %v2422
      %v2615 = vunpack.c.l.b16 %v2423
      %v2616 = vunpack.c.l.b16 %v2424
      %v2617 = vunpack.c.l.b16 %v2425
      %v2618 = vunpack.c.l.b16 %v2426
      %v2619 = vunpack.c.l.b16 %v2427
      %v2620 = vunpack.c.l.b16 %v2428
      %v2621 = vunpack.c.l.b16 %v2429
      %v2622 = vunpack.c.l.b16 %v2430
      %v2623 = vunpack.c.l.b16 %v2431
      %v2624 = vunpack.c.l.b16 %v2432
      %v2625 = vunpack.c.l.b16 %v2433
      %v2626 = vunpack.c.l.b16 %v2434
      %v2627 = vunpack.c.l.b16 %v2435
      %v2628 = vunpack.c.l.b16 %v2436
      %v2629 = vunpack.c.l.b16 %v2437
      %v2630 = vunpack.c.l.b16 %v2438
      %v2631 = vunpack.c.l.b16 %v2439
      %v2632 = vunpack.c.l.b16 %v2440
      %v2633 = vunpack.c.l.b16 %v2441
      %v2634 = vunpack.c.l.b16 %v2442
      %v2635 = vunpack.c.l.b16 %v2443
      %v2636 = vunpack.c.l.b16 %v2444
      %v2637 = vunpack.c.l.b16 %v2445
      %v2638 = vunpack.c.l.b16 %v2446
      %v2639 = vunpack.c.l.b16 %v2447
      %v2640 = vunpack.c.l.b16 %v2448
      %v2641 = vunpack.c.l.b16 %v2449
      %v2642 = vunpack.c.l.b16 %v2450
      %v2643 = vpack.c.b16 %v2548, %v2547
      %v2644 = vpack.c.b16 %v2550, %v2549
      %v2645 = vpack.c.b16 %v2552, %v2551
      %v2646 = vpack.c.b16 %v2554, %v2553
      %v2647 = vpack.c.b16 %v2556, %v2555
      %v2648 = vpack.c.b16 %v2558, %v2557
      %v2649 = vpack.c.b16 %v2560, %v2559
      %v2650 = vpack.c.b16 %v2562, %v2561
      %v2651 = vpack.c.b16 %v2564, %v2563
      %v2652 = vpack.c.b16 %v2566, %v2565
      %v2653 = vpack.c.b16 %v2568, %v2567
      %v2654 = vpack.c.b16 %v2570, %v2569
      %v2655 = vpack.c.b16 %v2572, %v2571
      %v2656 = vpack.c.b16 %v2574, %v2573
      %v2657 = vpack.c.b16 %v2576, %v2575
      %v2658 = vpack.c.b16 %v2578, %v2577
      %v2659 = vpack.c.b16 %v2580, %v2579
      %v2660 = vpack.c.b16 %v2582, %v2581
      %v2661 = vpack.c.b16 %v2584, %v2583
      %v2662 = vpack.c.b16 %v2586, %v2585
      %v2663 = vpack.c.b16 %v2588, %v2587
      %v2664 = vpack.c.b16 %v2590, %v2589
      %v2665 = vpack.c.b16 %v2592, %v2591
      %v2666 = vpack.c.b16 %v2594, %v2593
      %v2667 = vpack.c.b16 %v2596, %v2595
      %v2668 = vpack.c.b16 %v2598, %v2597
      %v2669 = vpack.c.b16 %v2600, %v2599
      %v2670 = vpack.c.b16 %v2602, %v2601
      %v2671 = vpack.c.b16 %v2604, %v2603
      %v2672 = vpack.c.b16 %v2606, %v2605
      %v2673 = vpack.c.b16 %v2608, %v2607
      %v2674 = vpack.c.b16 %v2610, %v2609
      %v2675 = vpack.c.b16 %v2612, %v2611
      %v2676 = vpack.c.b16 %v2614, %v2613
      %v2677 = vpack.c.b16 %v2616, %v2615
      %v2678 = vpack.c.b16 %v2618, %v2617
      %v2679 = vpack.c.b16 %v2620, %v2619
      %v2680 = vpack.c.b16 %v2622, %v2621
      %v2681 = vpack.c.b16 %v2624, %v2623
      %v2682 = vpack.c.b16 %v2626, %v2625
      %v2683 = vpack.c.b16 %v2628, %v2627
      %v2684 = vpack.c.b16 %v2630, %v2629
      %v2685 = vpack.c.b16 %v2632, %v2631
      %v2686 = vpack.c.b16 %v2634, %v2633
      %v2687 = vpack.c.b16 %v2636, %v2635
      %v2688 = vpack.c.b16 %v2638, %v2637
      %v2689 = vpack.c.b16 %v2640, %v2639
      %v2690 = vpack.c.b16 %v2642, %v2641
      %2739 = vmatprep.subr.bf16.mxu0 0
      %2740 = vmatpush1.bf16.msra.mxu0 %v2643
      %2741 = vmatprep.subr.bf16.mxu0 0
      %2742 = vmatpush1.bf16.msra.mxu0 %v2644
      %2743 = vmatprep.subr.bf16.mxu0 0
      %2744 = vmatpush1.bf16.msra.mxu0 %v2645
      %2745 = vmatprep.subr.bf16.mxu0 0
      %2746 = vmatpush1.bf16.msra.mxu0 %v2646
      %2747 = vmatprep.subr.bf16.mxu0 0
      %2748 = vmatpush1.bf16.msra.mxu0 %v2647
      %2749 = vmatprep.subr.bf16.mxu0 0
      %2750 = vmatpush1.bf16.msra.mxu0 %v2648
      %2751 = vmatprep.subr.bf16.mxu0 0
      %2752 = vmatpush1.bf16.msra.mxu0 %v2649
      %2753 = vmatprep.subr.bf16.mxu0 0
      %2754 = vmatpush1.bf16.msra.mxu0 %v2650
      %2755 = vmatprep.subr.bf16.mxu0 0
      %2756 = vmatpush1.bf16.msra.mxu0 %v2651
      %2757 = vmatprep.subr.bf16.mxu0 0
      %2758 = vmatpush1.bf16.msra.mxu0 %v2652
      %2759 = vmatprep.subr.bf16.mxu0 0
      %2760 = vmatpush1.bf16.msra.mxu0 %v2653
      %2761 = vmatprep.subr.bf16.mxu0 0
      %2762 = vmatpush1.bf16.msra.mxu0 %v2654
      %2763 = vmatprep.subr.bf16.mxu0 0
      %2764 = vmatpush1.bf16.msra.mxu0 %v2655
      %2765 = vmatprep.subr.bf16.mxu0 0
      %2766 = vmatpush1.bf16.msra.mxu0 %v2656
      %2767 = vmatprep.subr.bf16.mxu0 0
      %2768 = vmatpush1.bf16.msra.mxu0 %v2657
      %2769 = vmatprep.subr.bf16.mxu0 0
      %2770 = vmatpush1.bf16.msra.mxu0 %v2658
      %2771 = vmatprep.mubr.bf16.mxu0 %v2311
      %2772 = vmatmul.mubr.bf16.gmra.mrb[0].mxu0 %v2310
      %v2773 = vpop.f32.mrb[0].mxu0
      %v2774 = vadd.f32 0.0, %v2773
      %v2775 = vpop.f32.mrb[0].mxu0
      %v2776 = vpop.f32.mrb[0].mxu0
      %v2777 = vadd.f32 0.0, %v2776
      %v2778 = vpop.f32.mrb[0].mxu0
      %2779 = vdwg.mxu0
      %2780 = vmatprep.subr.bf16.mxu0 0
      %2781 = vmatpush1.bf16.msra.mxu0 %v2659
      %2782 = vmatprep.subr.bf16.mxu0 0
      %2783 = vmatpush1.bf16.msra.mxu0 %v2660
      %2784 = vmatprep.subr.bf16.mxu0 0
      %2785 = vmatpush1.bf16.msra.mxu0 %v2661
      %2786 = vmatprep.subr.bf16.mxu0 0
      %2787 = vmatpush1.bf16.msra.mxu0 %v2662
      %2788 = vmatprep.subr.bf16.mxu0 0
      %2789 = vmatpush1.bf16.msra.mxu0 %v2663
      %2790 = vmatprep.subr.bf16.mxu0 0
      %2791 = vmatpush1.bf16.msra.mxu0 %v2664
      %2792 = vmatprep.subr.bf16.mxu0 0
      %2793 = vmatpush1.bf16.msra.mxu0 %v2665
      %2794 = vmatprep.subr.bf16.mxu0 0
      %2795 = vmatpush1.bf16.msra.mxu0 %v2666
      %2796 = vmatprep.subr.bf16.mxu0 0
      %2797 = vmatpush1.bf16.msra.mxu0 %v2667
      %2798 = vmatprep.subr.bf16.mxu0 0
      %2799 = vmatpush1.bf16.msra.mxu0 %v2668
      %2800 = vmatprep.subr.bf16.mxu0 0
      %2801 = vmatpush1.bf16.msra.mxu0 %v2669
      %2802 = vmatprep.subr.bf16.mxu0 0
      %2803 = vmatpush1.bf16.msra.mxu0 %v2670
      %2804 = vmatprep.subr.bf16.mxu0 0
      %2805 = vmatpush1.bf16.msra.mxu0 %v2671
      %2806 = vmatprep.subr.bf16.mxu0 0
      %2807 = vmatpush1.bf16.msra.mxu0 %v2672
      %2808 = vmatprep.subr.bf16.mxu0 0
      %2809 = vmatpush1.bf16.msra.mxu0 %v2673
      %2810 = vmatprep.subr.bf16.mxu0 0
      %2811 = vmatpush1.bf16.msra.mxu0 %v2674
      %2812 = vmatprep.mubr.bf16.mxu0 %v2331
      %2813 = vmatmul.mubr.bf16.gmra.mrb[0].mxu0 %v2330
      %v2814 = vpop.f32.mrb[0].mxu0
      %v2815 = vadd.f32 %v2774, %v2814
      %v2816 = vpop.f32.mrb[0].mxu0
      %v2817 = vpop.f32.mrb[0].mxu0
      %v2818 = vadd.f32 %v2777, %v2817
      %v2819 = vpop.f32.mrb[0].mxu0
      %2820 = vdwg.mxu0
      %2821 = vmatprep.subr.bf16.mxu0 0
      %2822 = vmatpush1.bf16.msra.mxu0 %v2675
      %2823 = vmatprep.subr.bf16.mxu0 0
      %2824 = vmatpush1.bf16.msra.mxu0 %v2676
      %2825 = vmatprep.subr.bf16.mxu0 0
      %2826 = vmatpush1.bf16.msra.mxu0 %v2677
      %2827 = vmatprep.subr.bf16.mxu0 0
      %2828 = vmatpush1.bf16.msra.mxu0 %v2678
      %2829 = vmatprep.subr.bf16.mxu0 0
      %2830 = vmatpush1.bf16.msra.mxu0 %v2679
      %2831 = vmatprep.subr.bf16.mxu0 0
      %2832 = vmatpush1.bf16.msra.mxu0 %v2680
      %2833 = vmatprep.subr.bf16.mxu0 0
      %2834 = vmatpush1.bf16.msra.mxu0 %v2681
      %2835 = vmatprep.subr.bf16.mxu0 0
      %2836 = vmatpush1.bf16.msra.mxu0 %v2682
      %2837 = vmatprep.subr.bf16.mxu0 0
      %2838 = vmatpush1.bf16.msra.mxu0 %v2683
      %2839 = vmatprep.subr.bf16.mxu0 0
      %2840 = vmatpush1.bf16.msra.mxu0 %v2684
      %2841 = vmatprep.subr.bf16.mxu0 0
      %2842 = vmatpush1.bf16.msra.mxu0 %v2685
      %2843 = vmatprep.subr.bf16.mxu0 0
      %2844 = vmatpush1.bf16.msra.mxu0 %v2686
      %2845 = vmatprep.subr.bf16.mxu0 0
      %2846 = vmatpush1.bf16.msra.mxu0 %v2687
      %2847 = vmatprep.subr.bf16.mxu0 0
      %2848 = vmatpush1.bf16.msra.mxu0 %v2688
      %2849 = vmatprep.subr.bf16.mxu0 0
      %2850 = vmatpush1.bf16.msra.mxu0 %v2689
      %2851 = vmatprep.subr.bf16.mxu0 0
      %2852 = vmatpush1.bf16.msra.mxu0 %v2690
      %2853 = vmatprep.mubr.bf16.mxu0 %v2351
      %2854 = vmatmul.mubr.bf16.gmra.mrb[0].mxu0 %v2350
      %v2855 = vpop.f32.mrb[0].mxu0
      %v2856 = vadd.f32 %v2815, %v2855
      %v2857 = vpop.f32.mrb[0].mxu0
      %v2858 = vpop.f32.mrb[0].mxu0
      %v2859 = vadd.f32 %v2818, %v2858
      %v2860 = vpop.f32.mrb[0].mxu0
      %2861 = vdwg.mxu0
      %v2862 = vadd.f32 %v2099, %v2856
      %v2863 = vadd.f32 %v2102, %v2859
      %v2864 = vld [vmem:[%s7] sm:$0x1]
      %v2865 = vlaneseq
      %v2866 = vshrl.u32 %v2865, 7
      %v2867 = vsub.s32 0, %v2866
      %v2868 = vrot.slane %v2864, %v2867
      %v2869 = vmul.f32 %v2862, %v2868
      %v2870 = vmul.f32 %v2863, %v2868
      %v2871 = vld [vmem:[%s8] sm:$0x1]
      %v2872 = vlaneseq
      %v2873 = vshrl.u32 %v2872, 7
      %v2874 = vsub.s32 0, %v2873
      %v2875 = vrot.slane %v2871, %v2874
      %v2876 = vadd.f32 %v2869, %v2875
      %v2877 = vadd.f32 %v2870, %v2875
      %vm2878 = vcmp.gt.f32.partialorder %v2876, 0.0
      %vm2879 = vcmp.gt.f32.partialorder %v2877, 0.0
      %v2880 = vmul.f32 %v2876, 0.01
      %v2881 = vmul.f32 %v2877, 0.01
      %v2882 = vsel %vm2878, %v2876, %v2880
      %v2883 = vsel %vm2879, %v2877, %v2881
      %v2886 = vcombine.high %v2882, %v2882
      %v2887 = vcombine.high %v2883, %v2883
      %v2890 = vpack.c.bf16 %v2882, %v2882
      %v2891 = vpack.c.bf16 %v2886, %v2886
      %v2892 = vpack.c.bf16 %v2883, %v2883
      %v2893 = vpack.c.bf16 %v2887, %v2887
      %2894 = vst [vmem:[#allocation3] sm:$0x3] %v2890
      %2895 = vst [vmem:[#allocation3 + $0x4] sm:$0x3] %v2891
      %2896 = vst [vmem:[#allocation3 + $0x8] sm:$0x3] %v2892
      %2897 = vst [vmem:[#allocation3 + $0xc] sm:$0x3] %v2893
      %v2898 = vld [vmem:[#allocation3] sm:$0x3]
      %v2899 = vld [vmem:[#allocation3 + $0x4] sm:$0x3]
      %v2900 = vld [vmem:[#allocation3 + $0x8] sm:$0x3]
      %v2901 = vld [vmem:[#allocation3 + $0xc] sm:$0x3]
      %v2902 = vld [vmem:[#allocation3] sm:$0x7]
      %v2903 = vld [vmem:[#allocation3 + $0x4] sm:$0x7]
      %v2904 = vld [vmem:[#allocation3 + $0x8] sm:$0x7]
      %v2905 = vld [vmem:[#allocation3 + $0xc] sm:$0x7]
      %v2911 = vunpack.c.l.s4 1983009808
      %v2912 = vunpack.c.0.s8 %v2911
      %v2913 = vlaneseq
      %v2914 = vshrl.u32 %v2913, 7
      %v2915 = vsub.s32 %v2912, %v2914
      %v2916 = vrot.slane %v2902, %v2915
      %v2917 = vcombine.high %v2916, %v2916
      %v2919 = vunpack.c.l.s4 1983009808
      %v2920 = vunpack.c.0.s8 %v2919
      %v2921 = vlaneseq
      %v2922 = vshrl.u32 %v2921, 7
      %v2923 = vsub.s32 %v2920, %v2922
      %v2924 = vrot.slane %v2903, %v2923
      %v2925 = vcombine.high %v2924, %v2924
      %v2927 = vunpack.c.l.s4 1983009808
      %v2928 = vunpack.c.0.s8 %v2927
      %v2929 = vlaneseq
      %v2930 = vshrl.u32 %v2929, 7
      %v2931 = vsub.s32 %v2928, %v2930
      %v2932 = vrot.slane %v2904, %v2931
      %v2933 = vcombine.high %v2932, %v2932
      %v2935 = vunpack.c.l.s4 1983009808
      %v2936 = vunpack.c.0.s8 %v2935
      %v2937 = vlaneseq
      %v2938 = vshrl.u32 %v2937, 7
      %v2939 = vsub.s32 %v2936, %v2938
      %v2940 = vrot.slane %v2905, %v2939
      %v2941 = vcombine.high %v2940, %v2940
      %v2943 = vshrl.u32 %v2916, 16
      %v2945 = vrot.slane %v2943, 6
      %v2946 = vshll.u32 %v2916, 16
      %v2948 = vrot.slane %v2946, 7
      %v2949 = vor.u32 %v2945, %v2948
      %v2950 = vrot.slane %v2949, 2
      %v2952 = vshll.u32 %v2917, 16
      %v2954 = vrot.slane %v2952, 7
      %v2955 = vsel %vm666, %v2950, %v2954
      %v2957 = vshrl.u32 %v2924, 16
      %v2959 = vrot.slane %v2957, 6
      %v2960 = vshll.u32 %v2924, 16
      %v2962 = vrot.slane %v2960, 7
      %v2963 = vor.u32 %v2959, %v2962
      %v2964 = vrot.slane %v2963, 2
      %v2966 = vshll.u32 %v2925, 16
      %v2968 = vrot.slane %v2966, 7
      %v2969 = vsel %vm666, %v2964, %v2968
      %v2971 = vshrl.u32 %v2932, 16
      %v2973 = vrot.slane %v2971, 6
      %v2974 = vshll.u32 %v2932, 16
      %v2976 = vrot.slane %v2974, 7
      %v2977 = vor.u32 %v2973, %v2976
      %v2978 = vrot.slane %v2977, 2
      %v2980 = vshll.u32 %v2933, 16
      %v2982 = vrot.slane %v2980, 7
      %v2983 = vsel %vm666, %v2978, %v2982
      %v2985 = vshrl.u32 %v2940, 16
      %v2987 = vrot.slane %v2985, 6
      %v2988 = vshll.u32 %v2940, 16
      %v2990 = vrot.slane %v2988, 7
      %v2991 = vor.u32 %v2987, %v2990
      %v2992 = vrot.slane %v2991, 2
      %v2994 = vshll.u32 %v2941, 16
      %v2996 = vrot.slane %v2994, 7
      %v2997 = vsel %vm666, %v2992, %v2996
      %v3002 = vcombine.low %v2898, %v2899
      %v3003 = vcombine.low %v2900, %v2901
      %v3005 = vunpack.c.l.s4 1983009808
      %v3006 = vunpack.c.0.s8 %v3005
      %v3007 = vlaneseq
      %v3008 = vshrl.u32 %v3007, 7
      %v3009 = vsub.s32 %v3006, %v3008
      %v3010 = vrot.slane %v3002, %v3009
      %v3012 = vunpack.c.l.s4 1983009808
      %v3013 = vunpack.c.0.s8 %v3012
      %v3014 = vlaneseq
      %v3015 = vshrl.u32 %v3014, 7
      %v3016 = vsub.s32 %v3013, %v3015
      %v3017 = vrot.slane %v3003, %v3016
      %v3018 = vcombine.low %v3010, %v3017
      %v3020 = vcombine.low %v2955, %v2969
      %v3021 = vcombine.low %v2983, %v2997
      %v3023 = vunpack.c.l.s4 1983009808
      %v3024 = vunpack.c.0.s8 %v3023
      %v3025 = vlaneseq
      %v3026 = vshrl.u32 %v3025, 7
      %v3027 = vsub.s32 %v3024, %v3026
      %v3028 = vrot.slane %v3020, %v3027
      %v3030 = vunpack.c.l.s4 1983009808
      %v3031 = vunpack.c.0.s8 %v3030
      %v3032 = vlaneseq
      %v3033 = vshrl.u32 %v3032, 7
      %v3034 = vsub.s32 %v3031, %v3033
      %v3035 = vrot.slane %v3021, %v3034
      %v3036 = vcombine.low %v3028, %v3035
      %v3038 = vld [vmem:[%s3] sm:$0xff]
      %v3039 = vld [vmem:[%s3 + $0x8] sm:$0xff]
      %v3040 = vld [vmem:[%s3 + $0x10] sm:$0xff]
      %v3041 = vld [vmem:[%s3 + $0x18] sm:$0xff]
      %v3042 = vld [vmem:[%s3 + $0x20] sm:$0xff]
      %v3043 = vld [vmem:[%s3 + $0x28] sm:$0xff]
      %v3044 = vld [vmem:[%s3 + $0x30] sm:$0xff]
      %v3045 = vld [vmem:[%s3 + $0x38] sm:$0xff]
      %v3046 = vld [vmem:[%s3 + $0x40] sm:$0xff]
      %v3047 = vld [vmem:[%s3 + $0x48] sm:$0xff]
      %v3048 = vld [vmem:[%s3 + $0x50] sm:$0xff]
      %v3049 = vld [vmem:[%s3 + $0x58] sm:$0xff]
      %v3050 = vld [vmem:[%s3 + $0x60] sm:$0xff]
      %v3051 = vld [vmem:[%s3 + $0x68] sm:$0xff]
      %v3052 = vld [vmem:[%s3 + $0x70] sm:$0xff]
      %v3053 = vld [vmem:[%s3 + $0x78] sm:$0xff]
      %v3054 = vld [vmem:[%s3 + $0x80] sm:$0xff]
      %v3055 = vld [vmem:[%s3 + $0x88] sm:$0xff]
      %v3056 = vld [vmem:[%s3 + $0x90] sm:$0xff]
      %v3057 = vld [vmem:[%s3 + $0x98] sm:$0xff]
      %v3058 = vld [vmem:[%s3 + $0xa0] sm:$0xff]
      %v3059 = vld [vmem:[%s3 + $0xa8] sm:$0xff]
      %v3060 = vld [vmem:[%s3 + $0xb0] sm:$0xff]
      %v3061 = vld [vmem:[%s3 + $0xb8] sm:$0xff]
      %v3062 = vld [vmem:[%s3 + $0xc0] sm:$0xff]
      %v3063 = vld [vmem:[%s3 + $0xc8] sm:$0xff]
      %v3064 = vld [vmem:[%s3 + $0xd0] sm:$0xff]
      %v3065 = vld [vmem:[%s3 + $0xd8] sm:$0xff]
      %v3066 = vld [vmem:[%s3 + $0xe0] sm:$0xff]
      %v3067 = vld [vmem:[%s3 + $0xe8] sm:$0xff]
      %v3068 = vld [vmem:[%s3 + $0xf0] sm:$0xff]
      %v3069 = vld [vmem:[%s3 + $0xf8] sm:$0xff]
      %v3070 = vld [vmem:[%s3 + $0x100] sm:$0xff]
      %v3071 = vld [vmem:[%s3 + $0x108] sm:$0xff]
      %v3072 = vld [vmem:[%s3 + $0x110] sm:$0xff]
      %v3073 = vld [vmem:[%s3 + $0x118] sm:$0xff]
      %v3074 = vld [vmem:[%s3 + $0x120] sm:$0xff]
      %v3075 = vld [vmem:[%s3 + $0x128] sm:$0xff]
      %v3076 = vld [vmem:[%s3 + $0x130] sm:$0xff]
      %v3077 = vld [vmem:[%s3 + $0x138] sm:$0xff]
      %v3078 = vld [vmem:[%s3 + $0x140] sm:$0xff]
      %v3079 = vld [vmem:[%s3 + $0x148] sm:$0xff]
      %v3080 = vld [vmem:[%s3 + $0x150] sm:$0xff]
      %v3081 = vld [vmem:[%s3 + $0x158] sm:$0xff]
      %v3082 = vld [vmem:[%s3 + $0x160] sm:$0xff]
      %v3083 = vld [vmem:[%s3 + $0x168] sm:$0xff]
      %v3084 = vld [vmem:[%s3 + $0x170] sm:$0xff]
      %v3085 = vld [vmem:[%s3 + $0x178] sm:$0xff]
      %v3086 = vld [vmem:[%s3 + $0x180] sm:$0xff]
      %v3087 = vld [vmem:[%s3 + $0x188] sm:$0xff]
      %v3088 = vld [vmem:[%s3 + $0x190] sm:$0xff]
      %v3089 = vld [vmem:[%s3 + $0x198] sm:$0xff]
      %v3090 = vld [vmem:[%s3 + $0x1a0] sm:$0xff]
      %v3091 = vld [vmem:[%s3 + $0x1a8] sm:$0xff]
      %v3092 = vld [vmem:[%s3 + $0x1b0] sm:$0xff]
      %v3093 = vld [vmem:[%s3 + $0x1b8] sm:$0xff]
      %v3094 = vld [vmem:[%s3 + $0x1c0] sm:$0xff]
      %v3095 = vld [vmem:[%s3 + $0x1c8] sm:$0xff]
      %v3096 = vld [vmem:[%s3 + $0x1d0] sm:$0xff]
      %v3097 = vld [vmem:[%s3 + $0x1d8] sm:$0xff]
      %v3098 = vld [vmem:[%s3 + $0x1e0] sm:$0xff]
      %v3099 = vld [vmem:[%s3 + $0x1e8] sm:$0xff]
      %v3100 = vld [vmem:[%s3 + $0x1f0] sm:$0xff]
      %v3101 = vld [vmem:[%s3 + $0x1f8] sm:$0xff]
      %s3102 = scalar_lea.vmem [#allocation3], 4
      %v3103 = vld [vmem:[%s3102] sm:$0x3]
      %v3104 = vld [vmem:[%s3102 + $0x4] sm:$0x3]
      %v3105 = vld [vmem:[%s3102 + $0x8] sm:$0x3]
      %v3106 = vld [vmem:[%s3102 + $0xc] sm:$0x3]
      %v3107 = vld [vmem:[%s3102] sm:$0x7]
      %v3108 = vld [vmem:[%s3102 + $0x4] sm:$0x7]
      %v3109 = vld [vmem:[%s3102 + $0x8] sm:$0x7]
      %v3110 = vld [vmem:[%s3102 + $0xc] sm:$0x7]
      %v3116 = vunpack.c.l.s4 1983009808
      %v3117 = vunpack.c.0.s8 %v3116
      %v3118 = vlaneseq
      %v3119 = vshrl.u32 %v3118, 7
      %v3120 = vsub.s32 %v3117, %v3119
      %v3121 = vrot.slane %v3107, %v3120
      %v3122 = vcombine.high %v3121, %v3121
      %v3124 = vunpack.c.l.s4 1983009808
      %v3125 = vunpack.c.0.s8 %v3124
      %v3126 = vlaneseq
      %v3127 = vshrl.u32 %v3126, 7
      %v3128 = vsub.s32 %v3125, %v3127
      %v3129 = vrot.slane %v3108, %v3128
      %v3130 = vcombine.high %v3129, %v3129
      %v3132 = vunpack.c.l.s4 1983009808
      %v3133 = vunpack.c.0.s8 %v3132
      %v3134 = vlaneseq
      %v3135 = vshrl.u32 %v3134, 7
      %v3136 = vsub.s32 %v3133, %v3135
      %v3137 = vrot.slane %v3109, %v3136
      %v3138 = vcombine.high %v3137, %v3137
      %v3140 = vunpack.c.l.s4 1983009808
      %v3141 = vunpack.c.0.s8 %v3140
      %v3142 = vlaneseq
      %v3143 = vshrl.u32 %v3142, 7
      %v3144 = vsub.s32 %v3141, %v3143
      %v3145 = vrot.slane %v3110, %v3144
      %v3146 = vcombine.high %v3145, %v3145
      %v3148 = vshrl.u32 %v3121, 16
      %v3150 = vrot.slane %v3148, 6
      %v3151 = vshll.u32 %v3121, 16
      %v3153 = vrot.slane %v3151, 7
      %v3154 = vor.u32 %v3150, %v3153
      %v3155 = vrot.slane %v3154, 2
      %v3157 = vshll.u32 %v3122, 16
      %v3159 = vrot.slane %v3157, 7
      %v3160 = vsel %vm666, %v3155, %v3159
      %v3162 = vshrl.u32 %v3129, 16
      %v3164 = vrot.slane %v3162, 6
      %v3165 = vshll.u32 %v3129, 16
      %v3167 = vrot.slane %v3165, 7
      %v3168 = vor.u32 %v3164, %v3167
      %v3169 = vrot.slane %v3168, 2
      %v3171 = vshll.u32 %v3130, 16
      %v3173 = vrot.slane %v3171, 7
      %v3174 = vsel %vm666, %v3169, %v3173
      %v3176 = vshrl.u32 %v3137, 16
      %v3178 = vrot.slane %v3176, 6
      %v3179 = vshll.u32 %v3137, 16
      %v3181 = vrot.slane %v3179, 7
      %v3182 = vor.u32 %v3178, %v3181
      %v3183 = vrot.slane %v3182, 2
      %v3185 = vshll.u32 %v3138, 16
      %v3187 = vrot.slane %v3185, 7
      %v3188 = vsel %vm666, %v3183, %v3187
      %v3190 = vshrl.u32 %v3145, 16
      %v3192 = vrot.slane %v3190, 6
      %v3193 = vshll.u32 %v3145, 16
      %v3195 = vrot.slane %v3193, 7
      %v3196 = vor.u32 %v3192, %v3195
      %v3197 = vrot.slane %v3196, 2
      %v3199 = vshll.u32 %v3146, 16
      %v3201 = vrot.slane %v3199, 7
      %v3202 = vsel %vm666, %v3197, %v3201
      %v3207 = vcombine.low %v3103, %v3104
      %v3208 = vcombine.low %v3105, %v3106
      %v3210 = vunpack.c.l.s4 1983009808
      %v3211 = vunpack.c.0.s8 %v3210
      %v3212 = vlaneseq
      %v3213 = vshrl.u32 %v3212, 7
      %v3214 = vsub.s32 %v3211, %v3213
      %v3215 = vrot.slane %v3207, %v3214
      %v3217 = vunpack.c.l.s4 1983009808
      %v3218 = vunpack.c.0.s8 %v3217
      %v3219 = vlaneseq
      %v3220 = vshrl.u32 %v3219, 7
      %v3221 = vsub.s32 %v3218, %v3220
      %v3222 = vrot.slane %v3208, %v3221
      %v3223 = vcombine.low %v3215, %v3222
      %v3225 = vcombine.low %v3160, %v3174
      %v3226 = vcombine.low %v3188, %v3202
      %v3228 = vunpack.c.l.s4 1983009808
      %v3229 = vunpack.c.0.s8 %v3228
      %v3230 = vlaneseq
      %v3231 = vshrl.u32 %v3230, 7
      %v3232 = vsub.s32 %v3229, %v3231
      %v3233 = vrot.slane %v3225, %v3232
      %v3235 = vunpack.c.l.s4 1983009808
      %v3236 = vunpack.c.0.s8 %v3235
      %v3237 = vlaneseq
      %v3238 = vshrl.u32 %v3237, 7
      %v3239 = vsub.s32 %v3236, %v3238
      %v3240 = vrot.slane %v3226, %v3239
      %v3241 = vcombine.low %v3233, %v3240
      %s3243 = scalar_lea.vmem %s3, 512
      %v3244 = vld [vmem:[%s3243] sm:$0xff]
      %v3245 = vld [vmem:[%s3243 + $0x8] sm:$0xff]
      %v3246 = vld [vmem:[%s3243 + $0x10] sm:$0xff]
      %v3247 = vld [vmem:[%s3243 + $0x18] sm:$0xff]
      %v3248 = vld [vmem:[%s3243 + $0x20] sm:$0xff]
      %v3249 = vld [vmem:[%s3243 + $0x28] sm:$0xff]
      %v3250 = vld [vmem:[%s3243 + $0x30] sm:$0xff]
      %v3251 = vld [vmem:[%s3243 + $0x38] sm:$0xff]
      %v3252 = vld [vmem:[%s3243 + $0x40] sm:$0xff]
      %v3253 = vld [vmem:[%s3243 + $0x48] sm:$0xff]
      %v3254 = vld [vmem:[%s3243 + $0x50] sm:$0xff]
      %v3255 = vld [vmem:[%s3243 + $0x58] sm:$0xff]
      %v3256 = vld [vmem:[%s3243 + $0x60] sm:$0xff]
      %v3257 = vld [vmem:[%s3243 + $0x68] sm:$0xff]
      %v3258 = vld [vmem:[%s3243 + $0x70] sm:$0xff]
      %v3259 = vld [vmem:[%s3243 + $0x78] sm:$0xff]
      %v3260 = vld [vmem:[%s3243 + $0x80] sm:$0xff]
      %v3261 = vld [vmem:[%s3243 + $0x88] sm:$0xff]
      %v3262 = vld [vmem:[%s3243 + $0x90] sm:$0xff]
      %v3263 = vld [vmem:[%s3243 + $0x98] sm:$0xff]
      %v3264 = vld [vmem:[%s3243 + $0xa0] sm:$0xff]
      %v3265 = vld [vmem:[%s3243 + $0xa8] sm:$0xff]
      %v3266 = vld [vmem:[%s3243 + $0xb0] sm:$0xff]
      %v3267 = vld [vmem:[%s3243 + $0xb8] sm:$0xff]
      %v3268 = vld [vmem:[%s3243 + $0xc0] sm:$0xff]
      %v3269 = vld [vmem:[%s3243 + $0xc8] sm:$0xff]
      %v3270 = vld [vmem:[%s3243 + $0xd0] sm:$0xff]
      %v3271 = vld [vmem:[%s3243 + $0xd8] sm:$0xff]
      %v3272 = vld [vmem:[%s3243 + $0xe0] sm:$0xff]
      %v3273 = vld [vmem:[%s3243 + $0xe8] sm:$0xff]
      %v3274 = vld [vmem:[%s3243 + $0xf0] sm:$0xff]
      %v3275 = vld [vmem:[%s3243 + $0xf8] sm:$0xff]
      %v3276 = vld [vmem:[%s3243 + $0x100] sm:$0xff]
      %v3277 = vld [vmem:[%s3243 + $0x108] sm:$0xff]
      %v3278 = vld [vmem:[%s3243 + $0x110] sm:$0xff]
      %v3279 = vld [vmem:[%s3243 + $0x118] sm:$0xff]
      %v3280 = vld [vmem:[%s3243 + $0x120] sm:$0xff]
      %v3281 = vld [vmem:[%s3243 + $0x128] sm:$0xff]
      %v3282 = vld [vmem:[%s3243 + $0x130] sm:$0xff]
      %v3283 = vld [vmem:[%s3243 + $0x138] sm:$0xff]
      %v3284 = vld [vmem:[%s3243 + $0x140] sm:$0xff]
      %v3285 = vld [vmem:[%s3243 + $0x148] sm:$0xff]
      %v3286 = vld [vmem:[%s3243 + $0x150] sm:$0xff]
      %v3287 = vld [vmem:[%s3243 + $0x158] sm:$0xff]
      %v3288 = vld [vmem:[%s3243 + $0x160] sm:$0xff]
      %v3289 = vld [vmem:[%s3243 + $0x168] sm:$0xff]
      %v3290 = vld [vmem:[%s3243 + $0x170] sm:$0xff]
      %v3291 = vld [vmem:[%s3243 + $0x178] sm:$0xff]
      %v3292 = vld [vmem:[%s3243 + $0x180] sm:$0xff]
      %v3293 = vld [vmem:[%s3243 + $0x188] sm:$0xff]
      %v3294 = vld [vmem:[%s3243 + $0x190] sm:$0xff]
      %v3295 = vld [vmem:[%s3243 + $0x198] sm:$0xff]
      %v3296 = vld [vmem:[%s3243 + $0x1a0] sm:$0xff]
      %v3297 = vld [vmem:[%s3243 + $0x1a8] sm:$0xff]
      %v3298 = vld [vmem:[%s3243 + $0x1b0] sm:$0xff]
      %v3299 = vld [vmem:[%s3243 + $0x1b8] sm:$0xff]
      %v3300 = vld [vmem:[%s3243 + $0x1c0] sm:$0xff]
      %v3301 = vld [vmem:[%s3243 + $0x1c8] sm:$0xff]
      %v3302 = vld [vmem:[%s3243 + $0x1d0] sm:$0xff]
      %v3303 = vld [vmem:[%s3243 + $0x1d8] sm:$0xff]
      %v3304 = vld [vmem:[%s3243 + $0x1e0] sm:$0xff]
      %v3305 = vld [vmem:[%s3243 + $0x1e8] sm:$0xff]
      %v3306 = vld [vmem:[%s3243 + $0x1f0] sm:$0xff]
      %v3307 = vld [vmem:[%s3243 + $0x1f8] sm:$0xff]
      %v3372 = vunpack.c.l.b16 %v3244
      %v3373 = vunpack.c.h.b16 %v3244
      %v3374 = vunpack.c.l.b16 %v3245
      %v3375 = vunpack.c.h.b16 %v3245
      %v3376 = vunpack.c.l.b16 %v3246
      %v3377 = vunpack.c.h.b16 %v3246
      %v3378 = vunpack.c.l.b16 %v3247
      %v3379 = vunpack.c.h.b16 %v3247
      %v3380 = vunpack.c.l.b16 %v3248
      %v3381 = vunpack.c.h.b16 %v3248
      %v3382 = vunpack.c.l.b16 %v3249
      %v3383 = vunpack.c.h.b16 %v3249
      %v3384 = vunpack.c.l.b16 %v3250
      %v3385 = vunpack.c.h.b16 %v3250
      %v3386 = vunpack.c.l.b16 %v3251
      %v3387 = vunpack.c.h.b16 %v3251
      %v3388 = vunpack.c.l.b16 %v3252
      %v3389 = vunpack.c.h.b16 %v3252
      %v3390 = vunpack.c.l.b16 %v3253
      %v3391 = vunpack.c.h.b16 %v3253
      %v3392 = vunpack.c.l.b16 %v3254
      %v3393 = vunpack.c.h.b16 %v3254
      %v3394 = vunpack.c.l.b16 %v3255
      %v3395 = vunpack.c.h.b16 %v3255
      %v3396 = vunpack.c.l.b16 %v3256
      %v3397 = vunpack.c.h.b16 %v3256
      %v3398 = vunpack.c.l.b16 %v3257
      %v3399 = vunpack.c.h.b16 %v3257
      %v3400 = vunpack.c.l.b16 %v3258
      %v3401 = vunpack.c.h.b16 %v3258
      %v3402 = vunpack.c.l.b16 %v3259
      %v3403 = vunpack.c.h.b16 %v3259
      %v3404 = vunpack.c.l.b16 %v3260
      %v3405 = vunpack.c.h.b16 %v3260
      %v3406 = vunpack.c.l.b16 %v3261
      %v3407 = vunpack.c.h.b16 %v3261
      %v3408 = vunpack.c.l.b16 %v3262
      %v3409 = vunpack.c.h.b16 %v3262
      %v3410 = vunpack.c.l.b16 %v3263
      %v3411 = vunpack.c.h.b16 %v3263
      %v3412 = vunpack.c.l.b16 %v3264
      %v3413 = vunpack.c.h.b16 %v3264
      %v3414 = vunpack.c.l.b16 %v3265
      %v3415 = vunpack.c.h.b16 %v3265
      %v3416 = vunpack.c.l.b16 %v3266
      %v3417 = vunpack.c.h.b16 %v3266
      %v3418 = vunpack.c.l.b16 %v3267
      %v3419 = vunpack.c.h.b16 %v3267
      %v3420 = vunpack.c.l.b16 %v3268
      %v3421 = vunpack.c.h.b16 %v3268
      %v3422 = vunpack.c.l.b16 %v3269
      %v3423 = vunpack.c.h.b16 %v3269
      %v3424 = vunpack.c.l.b16 %v3270
      %v3425 = vunpack.c.h.b16 %v3270
      %v3426 = vunpack.c.l.b16 %v3271
      %v3427 = vunpack.c.h.b16 %v3271
      %v3428 = vunpack.c.l.b16 %v3272
      %v3429 = vunpack.c.h.b16 %v3272
      %v3430 = vunpack.c.l.b16 %v3273
      %v3431 = vunpack.c.h.b16 %v3273
      %v3432 = vunpack.c.l.b16 %v3274
      %v3433 = vunpack.c.h.b16 %v3274
      %v3434 = vunpack.c.l.b16 %v3275
      %v3435 = vunpack.c.h.b16 %v3275
      %v3436 = vunpack.c.l.b16 %v3276
      %v3437 = vunpack.c.h.b16 %v3276
      %v3438 = vunpack.c.l.b16 %v3277
      %v3439 = vunpack.c.h.b16 %v3277
      %v3440 = vunpack.c.l.b16 %v3278
      %v3441 = vunpack.c.h.b16 %v3278
      %v3442 = vunpack.c.l.b16 %v3279
      %v3443 = vunpack.c.h.b16 %v3279
      %v3444 = vunpack.c.l.b16 %v3280
      %v3445 = vunpack.c.h.b16 %v3280
      %v3446 = vunpack.c.l.b16 %v3281
      %v3447 = vunpack.c.h.b16 %v3281
      %v3448 = vunpack.c.l.b16 %v3282
      %v3449 = vunpack.c.h.b16 %v3282
      %v3450 = vunpack.c.l.b16 %v3283
      %v3451 = vunpack.c.h.b16 %v3283
      %v3452 = vunpack.c.l.b16 %v3284
      %v3453 = vunpack.c.h.b16 %v3284
      %v3454 = vunpack.c.l.b16 %v3285
      %v3455 = vunpack.c.h.b16 %v3285
      %v3456 = vunpack.c.l.b16 %v3286
      %v3457 = vunpack.c.h.b16 %v3286
      %v3458 = vunpack.c.l.b16 %v3287
      %v3459 = vunpack.c.h.b16 %v3287
      %v3460 = vunpack.c.l.b16 %v3288
      %v3461 = vunpack.c.h.b16 %v3288
      %v3462 = vunpack.c.l.b16 %v3289
      %v3463 = vunpack.c.h.b16 %v3289
      %v3464 = vunpack.c.l.b16 %v3290
      %v3465 = vunpack.c.h.b16 %v3290
      %v3466 = vunpack.c.l.b16 %v3291
      %v3467 = vunpack.c.h.b16 %v3291
      %v3468 = vunpack.c.l.b16 %v3292
      %v3469 = vunpack.c.h.b16 %v3292
      %v3470 = vunpack.c.l.b16 %v3293
      %v3471 = vunpack.c.h.b16 %v3293
      %v3472 = vunpack.c.l.b16 %v3294
      %v3473 = vunpack.c.h.b16 %v3294
      %v3474 = vunpack.c.l.b16 %v3295
      %v3475 = vunpack.c.h.b16 %v3295
      %v3476 = vunpack.c.l.b16 %v3296
      %v3477 = vunpack.c.h.b16 %v3296
      %v3478 = vunpack.c.l.b16 %v3297
      %v3479 = vunpack.c.h.b16 %v3297
      %v3480 = vunpack.c.l.b16 %v3298
      %v3481 = vunpack.c.h.b16 %v3298
      %v3482 = vunpack.c.l.b16 %v3299
      %v3483 = vunpack.c.h.b16 %v3299
      %v3484 = vunpack.c.l.b16 %v3300
      %v3485 = vunpack.c.h.b16 %v3300
      %v3486 = vunpack.c.l.b16 %v3301
      %v3487 = vunpack.c.h.b16 %v3301
      %v3488 = vunpack.c.l.b16 %v3302
      %v3489 = vunpack.c.h.b16 %v3302
      %v3490 = vunpack.c.l.b16 %v3303
      %v3491 = vunpack.c.h.b16 %v3303
      %v3492 = vunpack.c.l.b16 %v3304
      %v3493 = vunpack.c.h.b16 %v3304
      %v3494 = vunpack.c.l.b16 %v3305
      %v3495 = vunpack.c.h.b16 %v3305
      %v3496 = vunpack.c.l.b16 %v3306
      %v3497 = vunpack.c.h.b16 %v3306
      %v3498 = vunpack.c.l.b16 %v3307
      %v3499 = vunpack.c.h.b16 %v3307
      %v3500 = vpack.c.b16 %v3376, %v3372
      %v3501 = vpack.c.b16 %v3377, %v3373
      %v3502 = vpack.c.b16 %v3378, %v3374
      %v3503 = vpack.c.b16 %v3379, %v3375
      %v3504 = vpack.c.b16 %v3384, %v3380
      %v3505 = vpack.c.b16 %v3385, %v3381
      %v3506 = vpack.c.b16 %v3386, %v3382
      %v3507 = vpack.c.b16 %v3387, %v3383
      %v3508 = vpack.c.b16 %v3392, %v3388
      %v3509 = vpack.c.b16 %v3393, %v3389
      %v3510 = vpack.c.b16 %v3394, %v3390
      %v3511 = vpack.c.b16 %v3395, %v3391
      %v3512 = vpack.c.b16 %v3400, %v3396
      %v3513 = vpack.c.b16 %v3401, %v3397
      %v3514 = vpack.c.b16 %v3402, %v3398
      %v3515 = vpack.c.b16 %v3403, %v3399
      %v3516 = vpack.c.b16 %v3408, %v3404
      %v3517 = vpack.c.b16 %v3409, %v3405
      %v3518 = vpack.c.b16 %v3410, %v3406
      %v3519 = vpack.c.b16 %v3411, %v3407
      %v3520 = vpack.c.b16 %v3416, %v3412
      %v3521 = vpack.c.b16 %v3417, %v3413
      %v3522 = vpack.c.b16 %v3418, %v3414
      %v3523 = vpack.c.b16 %v3419, %v3415
      %v3524 = vpack.c.b16 %v3424, %v3420
      %v3525 = vpack.c.b16 %v3425, %v3421
      %v3526 = vpack.c.b16 %v3426, %v3422
      %v3527 = vpack.c.b16 %v3427, %v3423
      %v3528 = vpack.c.b16 %v3432, %v3428
      %v3529 = vpack.c.b16 %v3433, %v3429
      %v3530 = vpack.c.b16 %v3434, %v3430
      %v3531 = vpack.c.b16 %v3435, %v3431
      %v3532 = vpack.c.b16 %v3440, %v3436
      %v3533 = vpack.c.b16 %v3441, %v3437
      %v3534 = vpack.c.b16 %v3442, %v3438
      %v3535 = vpack.c.b16 %v3443, %v3439
      %v3536 = vpack.c.b16 %v3448, %v3444
      %v3537 = vpack.c.b16 %v3449, %v3445
      %v3538 = vpack.c.b16 %v3450, %v3446
      %v3539 = vpack.c.b16 %v3451, %v3447
      %v3540 = vpack.c.b16 %v3456, %v3452
      %v3541 = vpack.c.b16 %v3457, %v3453
      %v3542 = vpack.c.b16 %v3458, %v3454
      %v3543 = vpack.c.b16 %v3459, %v3455
      %v3544 = vpack.c.b16 %v3464, %v3460
      %v3545 = vpack.c.b16 %v3465, %v3461
      %v3546 = vpack.c.b16 %v3466, %v3462
      %v3547 = vpack.c.b16 %v3467, %v3463
      %v3548 = vpack.c.b16 %v3472, %v3468
      %v3549 = vpack.c.b16 %v3473, %v3469
      %v3550 = vpack.c.b16 %v3474, %v3470
      %v3551 = vpack.c.b16 %v3475, %v3471
      %v3552 = vpack.c.b16 %v3480, %v3476
      %v3553 = vpack.c.b16 %v3481, %v3477
      %v3554 = vpack.c.b16 %v3482, %v3478
      %v3555 = vpack.c.b16 %v3483, %v3479
      %v3556 = vpack.c.b16 %v3488, %v3484
      %v3557 = vpack.c.b16 %v3489, %v3485
      %v3558 = vpack.c.b16 %v3490, %v3486
      %v3559 = vpack.c.b16 %v3491, %v3487
      %v3560 = vpack.c.b16 %v3496, %v3492
      %v3561 = vpack.c.b16 %v3497, %v3493
      %v3562 = vpack.c.b16 %v3498, %v3494
      %v3563 = vpack.c.b16 %v3499, %v3495
      %3628 = vmatprep.subr.bf16.mxu0 %v3501
      %3629 = vmatpush1.bf16.msra.mxu0 %v3500
      %3630 = vmatprep.subr.bf16.mxu0 %v3505
      %3631 = vmatpush1.bf16.msra.mxu0 %v3504
      %3632 = vmatprep.subr.bf16.mxu0 %v3509
      %3633 = vmatpush1.bf16.msra.mxu0 %v3508
      %3634 = vmatprep.subr.bf16.mxu0 %v3513
      %3635 = vmatpush1.bf16.msra.mxu0 %v3512
      %3636 = vmatprep.subr.bf16.mxu0 %v3517
      %3637 = vmatpush1.bf16.msra.mxu0 %v3516
      %3638 = vmatprep.subr.bf16.mxu0 %v3521
      %3639 = vmatpush1.bf16.msra.mxu0 %v3520
      %3640 = vmatprep.subr.bf16.mxu0 %v3525
      %3641 = vmatpush1.bf16.msra.mxu0 %v3524
      %3642 = vmatprep.subr.bf16.mxu0 %v3529
      %3643 = vmatpush1.bf16.msra.mxu0 %v3528
      %3644 = vmatprep.subr.bf16.mxu0 %v3533
      %3645 = vmatpush1.bf16.msra.mxu0 %v3532
      %3646 = vmatprep.subr.bf16.mxu0 %v3537
      %3647 = vmatpush1.bf16.msra.mxu0 %v3536
      %3648 = vmatprep.subr.bf16.mxu0 %v3541
      %3649 = vmatpush1.bf16.msra.mxu0 %v3540
      %3650 = vmatprep.subr.bf16.mxu0 %v3545
      %3651 = vmatpush1.bf16.msra.mxu0 %v3544
      %3652 = vmatprep.subr.bf16.mxu0 %v3549
      %3653 = vmatpush1.bf16.msra.mxu0 %v3548
      %3654 = vmatprep.subr.bf16.mxu0 %v3553
      %3655 = vmatpush1.bf16.msra.mxu0 %v3552
      %3656 = vmatprep.subr.bf16.mxu0 %v3557
      %3657 = vmatpush1.bf16.msra.mxu0 %v3556
      %3658 = vmatprep.subr.bf16.mxu0 %v3561
      %3659 = vmatpush1.bf16.msra.mxu0 %v3560
      %3660 = vmatprep.mubr.bf16.mxu0 %v3241
      %3661 = vmatmul.mubr.bf16.gmra.mrb[0].mxu0 %v3223
      %v3662 = vpop.f32.mrb[0].mxu0
      %v3663 = vadd.f32 0.0, %v3662
      %v3664 = vpop.f32.mrb[0].mxu0
      %v3665 = vadd.f32 0.0, %v3664
      %v3666 = vpop.f32.mrb[0].mxu0
      %v3667 = vadd.f32 0.0, %v3666
      %v3668 = vpop.f32.mrb[0].mxu0
      %v3669 = vadd.f32 0.0, %v3668
      %3670 = vdwg.mxu0
      %3671 = vmatprep.subr.bf16.mxu0 %v3503
      %3672 = vmatpush1.bf16.msra.mxu0 %v3502
      %3673 = vmatprep.subr.bf16.mxu0 %v3507
      %3674 = vmatpush1.bf16.msra.mxu0 %v3506
      %3675 = vmatprep.subr.bf16.mxu0 %v3511
      %3676 = vmatpush1.bf16.msra.mxu0 %v3510
      %3677 = vmatprep.subr.bf16.mxu0 %v3515
      %3678 = vmatpush1.bf16.msra.mxu0 %v3514
      %3679 = vmatprep.subr.bf16.mxu0 %v3519
      %3680 = vmatpush1.bf16.msra.mxu0 %v3518
      %3681 = vmatprep.subr.bf16.mxu0 %v3523
      %3682 = vmatpush1.bf16.msra.mxu0 %v3522
      %3683 = vmatprep.subr.bf16.mxu0 %v3527
      %3684 = vmatpush1.bf16.msra.mxu0 %v3526
      %3685 = vmatprep.subr.bf16.mxu0 %v3531
      %3686 = vmatpush1.bf16.msra.mxu0 %v3530
      %3687 = vmatprep.subr.bf16.mxu0 %v3535
      %3688 = vmatpush1.bf16.msra.mxu0 %v3534
      %3689 = vmatprep.subr.bf16.mxu0 %v3539
      %3690 = vmatpush1.bf16.msra.mxu0 %v3538
      %3691 = vmatprep.subr.bf16.mxu0 %v3543
      %3692 = vmatpush1.bf16.msra.mxu0 %v3542
      %3693 = vmatprep.subr.bf16.mxu0 %v3547
      %3694 = vmatpush1.bf16.msra.mxu0 %v3546
      %3695 = vmatprep.subr.bf16.mxu0 %v3551
      %3696 = vmatpush1.bf16.msra.mxu0 %v3550
      %3697 = vmatprep.subr.bf16.mxu0 %v3555
      %3698 = vmatpush1.bf16.msra.mxu0 %v3554
      %3699 = vmatprep.subr.bf16.mxu0 %v3559
      %3700 = vmatpush1.bf16.msra.mxu0 %v3558
      %3701 = vmatprep.subr.bf16.mxu0 %v3563
      %3702 = vmatpush1.bf16.msra.mxu0 %v3562
      %3703 = vmatprep.mubr.bf16.mxu0 %v3241
      %3704 = vmatmul.mubr.bf16.gmra.mrb[0].mxu0 %v3223
      %v3705 = vpop.f32.mrb[0].mxu0
      %v3706 = vadd.f32 0.0, %v3705
      %v3707 = vpop.f32.mrb[0].mxu0
      %v3708 = vadd.f32 0.0, %v3707
      %v3709 = vpop.f32.mrb[0].mxu0
      %v3710 = vadd.f32 0.0, %v3709
      %v3711 = vpop.f32.mrb[0].mxu0
      %v3712 = vadd.f32 0.0, %v3711
      %3713 = vdwg.mxu0
      %v3778 = vunpack.c.l.b16 %v3038
      %v3779 = vunpack.c.h.b16 %v3038
      %v3780 = vunpack.c.l.b16 %v3039
      %v3781 = vunpack.c.h.b16 %v3039
      %v3782 = vunpack.c.l.b16 %v3040
      %v3783 = vunpack.c.h.b16 %v3040
      %v3784 = vunpack.c.l.b16 %v3041
      %v3785 = vunpack.c.h.b16 %v3041
      %v3786 = vunpack.c.l.b16 %v3042
      %v3787 = vunpack.c.h.b16 %v3042
      %v3788 = vunpack.c.l.b16 %v3043
      %v3789 = vunpack.c.h.b16 %v3043
      %v3790 = vunpack.c.l.b16 %v3044
      %v3791 = vunpack.c.h.b16 %v3044
      %v3792 = vunpack.c.l.b16 %v3045
      %v3793 = vunpack.c.h.b16 %v3045
      %v3794 = vunpack.c.l.b16 %v3046
      %v3795 = vunpack.c.h.b16 %v3046
      %v3796 = vunpack.c.l.b16 %v3047
      %v3797 = vunpack.c.h.b16 %v3047
      %v3798 = vunpack.c.l.b16 %v3048
      %v3799 = vunpack.c.h.b16 %v3048
      %v3800 = vunpack.c.l.b16 %v3049
      %v3801 = vunpack.c.h.b16 %v3049
      %v3802 = vunpack.c.l.b16 %v3050
      %v3803 = vunpack.c.h.b16 %v3050
      %v3804 = vunpack.c.l.b16 %v3051
      %v3805 = vunpack.c.h.b16 %v3051
      %v3806 = vunpack.c.l.b16 %v3052
      %v3807 = vunpack.c.h.b16 %v3052
      %v3808 = vunpack.c.l.b16 %v3053
      %v3809 = vunpack.c.h.b16 %v3053
      %v3810 = vunpack.c.l.b16 %v3054
      %v3811 = vunpack.c.h.b16 %v3054
      %v3812 = vunpack.c.l.b16 %v3055
      %v3813 = vunpack.c.h.b16 %v3055
      %v3814 = vunpack.c.l.b16 %v3056
      %v3815 = vunpack.c.h.b16 %v3056
      %v3816 = vunpack.c.l.b16 %v3057
      %v3817 = vunpack.c.h.b16 %v3057
      %v3818 = vunpack.c.l.b16 %v3058
      %v3819 = vunpack.c.h.b16 %v3058
      %v3820 = vunpack.c.l.b16 %v3059
      %v3821 = vunpack.c.h.b16 %v3059
      %v3822 = vunpack.c.l.b16 %v3060
      %v3823 = vunpack.c.h.b16 %v3060
      %v3824 = vunpack.c.l.b16 %v3061
      %v3825 = vunpack.c.h.b16 %v3061
      %v3826 = vunpack.c.l.b16 %v3062
      %v3827 = vunpack.c.h.b16 %v3062
      %v3828 = vunpack.c.l.b16 %v3063
      %v3829 = vunpack.c.h.b16 %v3063
      %v3830 = vunpack.c.l.b16 %v3064
      %v3831 = vunpack.c.h.b16 %v3064
      %v3832 = vunpack.c.l.b16 %v3065
      %v3833 = vunpack.c.h.b16 %v3065
      %v3834 = vunpack.c.l.b16 %v3066
      %v3835 = vunpack.c.h.b16 %v3066
      %v3836 = vunpack.c.l.b16 %v3067
      %v3837 = vunpack.c.h.b16 %v3067
      %v3838 = vunpack.c.l.b16 %v3068
      %v3839 = vunpack.c.h.b16 %v3068
      %v3840 = vunpack.c.l.b16 %v3069
      %v3841 = vunpack.c.h.b16 %v3069
      %v3842 = vunpack.c.l.b16 %v3070
      %v3843 = vunpack.c.h.b16 %v3070
      %v3844 = vunpack.c.l.b16 %v3071
      %v3845 = vunpack.c.h.b16 %v3071
      %v3846 = vunpack.c.l.b16 %v3072
      %v3847 = vunpack.c.h.b16 %v3072
      %v3848 = vunpack.c.l.b16 %v3073
      %v3849 = vunpack.c.h.b16 %v3073
      %v3850 = vunpack.c.l.b16 %v3074
      %v3851 = vunpack.c.h.b16 %v3074
      %v3852 = vunpack.c.l.b16 %v3075
      %v3853 = vunpack.c.h.b16 %v3075
      %v3854 = vunpack.c.l.b16 %v3076
      %v3855 = vunpack.c.h.b16 %v3076
      %v3856 = vunpack.c.l.b16 %v3077
      %v3857 = vunpack.c.h.b16 %v3077
      %v3858 = vunpack.c.l.b16 %v3078
      %v3859 = vunpack.c.h.b16 %v3078
      %v3860 = vunpack.c.l.b16 %v3079
      %v3861 = vunpack.c.h.b16 %v3079
      %v3862 = vunpack.c.l.b16 %v3080
      %v3863 = vunpack.c.h.b16 %v3080
      %v3864 = vunpack.c.l.b16 %v3081
      %v3865 = vunpack.c.h.b16 %v3081
      %v3866 = vunpack.c.l.b16 %v3082
      %v3867 = vunpack.c.h.b16 %v3082
      %v3868 = vunpack.c.l.b16 %v3083
      %v3869 = vunpack.c.h.b16 %v3083
      %v3870 = vunpack.c.l.b16 %v3084
      %v3871 = vunpack.c.h.b16 %v3084
      %v3872 = vunpack.c.l.b16 %v3085
      %v3873 = vunpack.c.h.b16 %v3085
      %v3874 = vunpack.c.l.b16 %v3086
      %v3875 = vunpack.c.h.b16 %v3086
      %v3876 = vunpack.c.l.b16 %v3087
      %v3877 = vunpack.c.h.b16 %v3087
      %v3878 = vunpack.c.l.b16 %v3088
      %v3879 = vunpack.c.h.b16 %v3088
      %v3880 = vunpack.c.l.b16 %v3089
      %v3881 = vunpack.c.h.b16 %v3089
      %v3882 = vunpack.c.l.b16 %v3090
      %v3883 = vunpack.c.h.b16 %v3090
      %v3884 = vunpack.c.l.b16 %v3091
      %v3885 = vunpack.c.h.b16 %v3091
      %v3886 = vunpack.c.l.b16 %v3092
      %v3887 = vunpack.c.h.b16 %v3092
      %v3888 = vunpack.c.l.b16 %v3093
      %v3889 = vunpack.c.h.b16 %v3093
      %v3890 = vunpack.c.l.b16 %v3094
      %v3891 = vunpack.c.h.b16 %v3094
      %v3892 = vunpack.c.l.b16 %v3095
      %v3893 = vunpack.c.h.b16 %v3095
      %v3894 = vunpack.c.l.b16 %v3096
      %v3895 = vunpack.c.h.b16 %v3096
      %v3896 = vunpack.c.l.b16 %v3097
      %v3897 = vunpack.c.h.b16 %v3097
      %v3898 = vunpack.c.l.b16 %v3098
      %v3899 = vunpack.c.h.b16 %v3098
      %v3900 = vunpack.c.l.b16 %v3099
      %v3901 = vunpack.c.h.b16 %v3099
      %v3902 = vunpack.c.l.b16 %v3100
      %v3903 = vunpack.c.h.b16 %v3100
      %v3904 = vunpack.c.l.b16 %v3101
      %v3905 = vunpack.c.h.b16 %v3101
      %v3906 = vpack.c.b16 %v3782, %v3778
      %v3907 = vpack.c.b16 %v3783, %v3779
      %v3908 = vpack.c.b16 %v3784, %v3780
      %v3909 = vpack.c.b16 %v3785, %v3781
      %v3910 = vpack.c.b16 %v3790, %v3786
      %v3911 = vpack.c.b16 %v3791, %v3787
      %v3912 = vpack.c.b16 %v3792, %v3788
      %v3913 = vpack.c.b16 %v3793, %v3789
      %v3914 = vpack.c.b16 %v3798, %v3794
      %v3915 = vpack.c.b16 %v3799, %v3795
      %v3916 = vpack.c.b16 %v3800, %v3796
      %v3917 = vpack.c.b16 %v3801, %v3797
      %v3918 = vpack.c.b16 %v3806, %v3802
      %v3919 = vpack.c.b16 %v3807, %v3803
      %v3920 = vpack.c.b16 %v3808, %v3804
      %v3921 = vpack.c.b16 %v3809, %v3805
      %v3922 = vpack.c.b16 %v3814, %v3810
      %v3923 = vpack.c.b16 %v3815, %v3811
      %v3924 = vpack.c.b16 %v3816, %v3812
      %v3925 = vpack.c.b16 %v3817, %v3813
      %v3926 = vpack.c.b16 %v3822, %v3818
      %v3927 = vpack.c.b16 %v3823, %v3819
      %v3928 = vpack.c.b16 %v3824, %v3820
      %v3929 = vpack.c.b16 %v3825, %v3821
      %v3930 = vpack.c.b16 %v3830, %v3826
      %v3931 = vpack.c.b16 %v3831, %v3827
      %v3932 = vpack.c.b16 %v3832, %v3828
      %v3933 = vpack.c.b16 %v3833, %v3829
      %v3934 = vpack.c.b16 %v3838, %v3834
      %v3935 = vpack.c.b16 %v3839, %v3835
      %v3936 = vpack.c.b16 %v3840, %v3836
      %v3937 = vpack.c.b16 %v3841, %v3837
      %v3938 = vpack.c.b16 %v3846, %v3842
      %v3939 = vpack.c.b16 %v3847, %v3843
      %v3940 = vpack.c.b16 %v3848, %v3844
      %v3941 = vpack.c.b16 %v3849, %v3845
      %v3942 = vpack.c.b16 %v3854, %v3850
      %v3943 = vpack.c.b16 %v3855, %v3851
      %v3944 = vpack.c.b16 %v3856, %v3852
      %v3945 = vpack.c.b16 %v3857, %v3853
      %v3946 = vpack.c.b16 %v3862, %v3858
      %v3947 = vpack.c.b16 %v3863, %v3859
      %v3948 = vpack.c.b16 %v3864, %v3860
      %v3949 = vpack.c.b16 %v3865, %v3861
      %v3950 = vpack.c.b16 %v3870, %v3866
      %v3951 = vpack.c.b16 %v3871, %v3867
      %v3952 = vpack.c.b16 %v3872, %v3868
      %v3953 = vpack.c.b16 %v3873, %v3869
      %v3954 = vpack.c.b16 %v3878, %v3874
      %v3955 = vpack.c.b16 %v3879, %v3875
      %v3956 = vpack.c.b16 %v3880, %v3876
      %v3957 = vpack.c.b16 %v3881, %v3877
      %v3958 = vpack.c.b16 %v3886, %v3882
      %v3959 = vpack.c.b16 %v3887, %v3883
      %v3960 = vpack.c.b16 %v3888, %v3884
      %v3961 = vpack.c.b16 %v3889, %v3885
      %v3962 = vpack.c.b16 %v3894, %v3890
      %v3963 = vpack.c.b16 %v3895, %v3891
      %v3964 = vpack.c.b16 %v3896, %v3892
      %v3965 = vpack.c.b16 %v3897, %v3893
      %v3966 = vpack.c.b16 %v3902, %v3898
      %v3967 = vpack.c.b16 %v3903, %v3899
      %v3968 = vpack.c.b16 %v3904, %v3900
      %v3969 = vpack.c.b16 %v3905, %v3901
      %4034 = vmatprep.subr.bf16.mxu0 %v3907
      %4035 = vmatpush1.bf16.msra.mxu0 %v3906
      %4036 = vmatprep.subr.bf16.mxu0 %v3911
      %4037 = vmatpush1.bf16.msra.mxu0 %v3910
      %4038 = vmatprep.subr.bf16.mxu0 %v3915
      %4039 = vmatpush1.bf16.msra.mxu0 %v3914
      %4040 = vmatprep.subr.bf16.mxu0 %v3919
      %4041 = vmatpush1.bf16.msra.mxu0 %v3918
      %4042 = vmatprep.subr.bf16.mxu0 %v3923
      %4043 = vmatpush1.bf16.msra.mxu0 %v3922
      %4044 = vmatprep.subr.bf16.mxu0 %v3927
      %4045 = vmatpush1.bf16.msra.mxu0 %v3926
      %4046 = vmatprep.subr.bf16.mxu0 %v3931
      %4047 = vmatpush1.bf16.msra.mxu0 %v3930
      %4048 = vmatprep.subr.bf16.mxu0 %v3935
      %4049 = vmatpush1.bf16.msra.mxu0 %v3934
      %4050 = vmatprep.subr.bf16.mxu0 %v3939
      %4051 = vmatpush1.bf16.msra.mxu0 %v3938
      %4052 = vmatprep.subr.bf16.mxu0 %v3943
      %4053 = vmatpush1.bf16.msra.mxu0 %v3942
      %4054 = vmatprep.subr.bf16.mxu0 %v3947
      %4055 = vmatpush1.bf16.msra.mxu0 %v3946
      %4056 = vmatprep.subr.bf16.mxu0 %v3951
      %4057 = vmatpush1.bf16.msra.mxu0 %v3950
      %4058 = vmatprep.subr.bf16.mxu0 %v3955
      %4059 = vmatpush1.bf16.msra.mxu0 %v3954
      %4060 = vmatprep.subr.bf16.mxu0 %v3959
      %4061 = vmatpush1.bf16.msra.mxu0 %v3958
      %4062 = vmatprep.subr.bf16.mxu0 %v3963
      %4063 = vmatpush1.bf16.msra.mxu0 %v3962
      %4064 = vmatprep.subr.bf16.mxu0 %v3967
      %4065 = vmatpush1.bf16.msra.mxu0 %v3966
      %4066 = vmatprep.mubr.bf16.mxu0 %v3036
      %4067 = vmatmul.mubr.bf16.gmra.mrb[0].mxu0 %v3018
      %v4068 = vpop.f32.mrb[0].mxu0
      %v4069 = vadd.f32 %v3663, %v4068
      %v4070 = vpop.f32.mrb[0].mxu0
      %v4071 = vadd.f32 %v3665, %v4070
      %v4072 = vpop.f32.mrb[0].mxu0
      %v4073 = vadd.f32 %v3667, %v4072
      %v4074 = vpop.f32.mrb[0].mxu0
      %v4075 = vadd.f32 %v3669, %v4074
      %4076 = vdwg.mxu0
      %4077 = vmatprep.subr.bf16.mxu0 %v3909
      %4078 = vmatpush1.bf16.msra.mxu0 %v3908
      %4079 = vmatprep.subr.bf16.mxu0 %v3913
      %4080 = vmatpush1.bf16.msra.mxu0 %v3912
      %4081 = vmatprep.subr.bf16.mxu0 %v3917
      %4082 = vmatpush1.bf16.msra.mxu0 %v3916
      %4083 = vmatprep.subr.bf16.mxu0 %v3921
      %4084 = vmatpush1.bf16.msra.mxu0 %v3920
      %4085 = vmatprep.subr.bf16.mxu0 %v3925
      %4086 = vmatpush1.bf16.msra.mxu0 %v3924
      %4087 = vmatprep.subr.bf16.mxu0 %v3929
      %4088 = vmatpush1.bf16.msra.mxu0 %v3928
      %4089 = vmatprep.subr.bf16.mxu0 %v3933
      %4090 = vmatpush1.bf16.msra.mxu0 %v3932
      %4091 = vmatprep.subr.bf16.mxu0 %v3937
      %4092 = vmatpush1.bf16.msra.mxu0 %v3936
      %4093 = vmatprep.subr.bf16.mxu0 %v3941
      %4094 = vmatpush1.bf16.msra.mxu0 %v3940
      %4095 = vmatprep.subr.bf16.mxu0 %v3945
      %4096 = vmatpush1.bf16.msra.mxu0 %v3944
      %4097 = vmatprep.subr.bf16.mxu0 %v3949
      %4098 = vmatpush1.bf16.msra.mxu0 %v3948
      %4099 = vmatprep.subr.bf16.mxu0 %v3953
      %4100 = vmatpush1.bf16.msra.mxu0 %v3952
      %4101 = vmatprep.subr.bf16.mxu0 %v3957
      %4102 = vmatpush1.bf16.msra.mxu0 %v3956
      %4103 = vmatprep.subr.bf16.mxu0 %v3961
      %4104 = vmatpush1.bf16.msra.mxu0 %v3960
      %4105 = vmatprep.subr.bf16.mxu0 %v3965
      %4106 = vmatpush1.bf16.msra.mxu0 %v3964
      %4107 = vmatprep.subr.bf16.mxu0 %v3969
      %4108 = vmatpush1.bf16.msra.mxu0 %v3968
      %4109 = vmatprep.mubr.bf16.mxu0 %v3036
      %4110 = vmatmul.mubr.bf16.gmra.mrb[0].mxu0 %v3018
      %v4111 = vpop.f32.mrb[0].mxu0
      %v4112 = vadd.f32 %v3706, %v4111
      %v4113 = vpop.f32.mrb[0].mxu0
      %v4114 = vadd.f32 %v3708, %v4113
      %v4115 = vpop.f32.mrb[0].mxu0
      %v4116 = vadd.f32 %v3710, %v4115
      %v4117 = vpop.f32.mrb[0].mxu0
      %v4118 = vadd.f32 %v3712, %v4117
      %4119 = vdwg.mxu0
      %v4122 = vcombine.high %v4069, %v4069
      %v4124 = vunpack.c.l.s4 1966171168
      %v4125 = vunpack.c.0.s8 %v4124
      %v4126 = vlaneseq
      %v4127 = vshrl.u32 %v4126, 7
      %v4128 = vsub.s32 %v4125, %v4127
      %v4129 = vrot.slane %v4069, %v4128
      %v4131 = vunpack.c.l.s4 1966171168
      %v4132 = vunpack.c.0.s8 %v4131
      %v4133 = vlaneseq
      %v4134 = vshrl.u32 %v4133, 7
      %v4135 = vsub.s32 %v4132, %v4134
      %v4136 = vrot.slane %v4122, %v4135
      %v4137 = vcombine.high %v4129, %v4129
      %v4138 = vcombine.high %v4136, %v4136
      %v4140 = vunpack.c.l.s4 1966171168
      %v4141 = vunpack.c.0.s8 %v4140
      %v4142 = vlaneseq
      %v4143 = vshrl.u32 %v4142, 7
      %v4144 = vsub.s32 %v4141, %v4143
      %v4145 = vrot.slane %v4129, %v4144
      %v4147 = vunpack.c.l.s4 1966171168
      %v4148 = vunpack.c.0.s8 %v4147
      %v4149 = vlaneseq
      %v4150 = vshrl.u32 %v4149, 7
      %v4151 = vsub.s32 %v4148, %v4150
      %v4152 = vrot.slane %v4136, %v4151
      %v4154 = vunpack.c.l.s4 1966171168
      %v4155 = vunpack.c.0.s8 %v4154
      %v4156 = vlaneseq
      %v4157 = vshrl.u32 %v4156, 7
      %v4158 = vsub.s32 %v4155, %v4157
      %v4159 = vrot.slane %v4137, %v4158
      %v4161 = vunpack.c.l.s4 1966171168
      %v4162 = vunpack.c.0.s8 %v4161
      %v4163 = vlaneseq
      %v4164 = vshrl.u32 %v4163, 7
      %v4165 = vsub.s32 %v4162, %v4164
      %v4166 = vrot.slane %v4138, %v4165
      %v4167 = vcombine.high %v4145, %v4145
      %v4168 = vcombine.high %v4152, %v4152
      %v4169 = vcombine.high %v4159, %v4159
      %v4170 = vcombine.high %v4166, %v4166
      %v4171 = vcombine.high %v4073, %v4073
      %v4173 = vunpack.c.l.s4 1966171168
      %v4174 = vunpack.c.0.s8 %v4173
      %v4175 = vlaneseq
      %v4176 = vshrl.u32 %v4175, 7
      %v4177 = vsub.s32 %v4174, %v4176
      %v4178 = vrot.slane %v4073, %v4177
      %v4180 = vunpack.c.l.s4 1966171168
      %v4181 = vunpack.c.0.s8 %v4180
      %v4182 = vlaneseq
      %v4183 = vshrl.u32 %v4182, 7
      %v4184 = vsub.s32 %v4181, %v4183
      %v4185 = vrot.slane %v4171, %v4184
      %v4186 = vcombine.high %v4178, %v4178
      %v4187 = vcombine.high %v4185, %v4185
      %v4189 = vunpack.c.l.s4 1966171168
      %v4190 = vunpack.c.0.s8 %v4189
      %v4191 = vlaneseq
      %v4192 = vshrl.u32 %v4191, 7
      %v4193 = vsub.s32 %v4190, %v4192
      %v4194 = vrot.slane %v4178, %v4193
      %v4196 = vunpack.c.l.s4 1966171168
      %v4197 = vunpack.c.0.s8 %v4196
      %v4198 = vlaneseq
      %v4199 = vshrl.u32 %v4198, 7
      %v4200 = vsub.s32 %v4197, %v4199
      %v4201 = vrot.slane %v4185, %v4200
      %v4203 = vunpack.c.l.s4 1966171168
      %v4204 = vunpack.c.0.s8 %v4203
      %v4205 = vlaneseq
      %v4206 = vshrl.u32 %v4205, 7
      %v4207 = vsub.s32 %v4204, %v4206
      %v4208 = vrot.slane %v4186, %v4207
      %v4210 = vunpack.c.l.s4 1966171168
      %v4211 = vunpack.c.0.s8 %v4210
      %v4212 = vlaneseq
      %v4213 = vshrl.u32 %v4212, 7
      %v4214 = vsub.s32 %v4211, %v4213
      %v4215 = vrot.slane %v4187, %v4214
      %v4216 = vcombine.high %v4194, %v4194
      %v4217 = vcombine.high %v4201, %v4201
      %v4218 = vcombine.high %v4208, %v4208
      %v4219 = vcombine.high %v4215, %v4215
      %v4238 = vcombine.high %v4071, %v4071
      %v4240 = vunpack.c.l.s4 1966171168
      %v4241 = vunpack.c.0.s8 %v4240
      %v4242 = vlaneseq
      %v4243 = vshrl.u32 %v4242, 7
      %v4244 = vsub.s32 %v4241, %v4243
      %v4245 = vrot.slane %v4071, %v4244
      %v4247 = vunpack.c.l.s4 1966171168
      %v4248 = vunpack.c.0.s8 %v4247
      %v4249 = vlaneseq
      %v4250 = vshrl.u32 %v4249, 7
      %v4251 = vsub.s32 %v4248, %v4250
      %v4252 = vrot.slane %v4238, %v4251
      %v4253 = vcombine.high %v4245, %v4245
      %v4254 = vcombine.high %v4252, %v4252
      %v4256 = vunpack.c.l.s4 1966171168
      %v4257 = vunpack.c.0.s8 %v4256
      %v4258 = vlaneseq
      %v4259 = vshrl.u32 %v4258, 7
      %v4260 = vsub.s32 %v4257, %v4259
      %v4261 = vrot.slane %v4245, %v4260
      %v4263 = vunpack.c.l.s4 1966171168
      %v4264 = vunpack.c.0.s8 %v4263
      %v4265 = vlaneseq
      %v4266 = vshrl.u32 %v4265, 7
      %v4267 = vsub.s32 %v4264, %v4266
      %v4268 = vrot.slane %v4252, %v4267
      %v4270 = vunpack.c.l.s4 1966171168
      %v4271 = vunpack.c.0.s8 %v4270
      %v4272 = vlaneseq
      %v4273 = vshrl.u32 %v4272, 7
      %v4274 = vsub.s32 %v4271, %v4273
      %v4275 = vrot.slane %v4253, %v4274
      %v4277 = vunpack.c.l.s4 1966171168
      %v4278 = vunpack.c.0.s8 %v4277
      %v4279 = vlaneseq
      %v4280 = vshrl.u32 %v4279, 7
      %v4281 = vsub.s32 %v4278, %v4280
      %v4282 = vrot.slane %v4254, %v4281
      %v4283 = vcombine.high %v4261, %v4261
      %v4284 = vcombine.high %v4268, %v4268
      %v4285 = vcombine.high %v4275, %v4275
      %v4286 = vcombine.high %v4282, %v4282
      %v4287 = vcombine.high %v4075, %v4075
      %v4289 = vunpack.c.l.s4 1966171168
      %v4290 = vunpack.c.0.s8 %v4289
      %v4291 = vlaneseq
      %v4292 = vshrl.u32 %v4291, 7
      %v4293 = vsub.s32 %v4290, %v4292
      %v4294 = vrot.slane %v4075, %v4293
      %v4296 = vunpack.c.l.s4 1966171168
      %v4297 = vunpack.c.0.s8 %v4296
      %v4298 = vlaneseq
      %v4299 = vshrl.u32 %v4298, 7
      %v4300 = vsub.s32 %v4297, %v4299
      %v4301 = vrot.slane %v4287, %v4300
      %v4302 = vcombine.high %v4294, %v4294
      %v4303 = vcombine.high %v4301, %v4301
      %v4305 = vunpack.c.l.s4 1966171168
      %v4306 = vunpack.c.0.s8 %v4305
      %v4307 = vlaneseq
      %v4308 = vshrl.u32 %v4307, 7
      %v4309 = vsub.s32 %v4306, %v4308
      %v4310 = vrot.slane %v4294, %v4309
      %v4312 = vunpack.c.l.s4 1966171168
      %v4313 = vunpack.c.0.s8 %v4312
      %v4314 = vlaneseq
      %v4315 = vshrl.u32 %v4314, 7
      %v4316 = vsub.s32 %v4313, %v4315
      %v4317 = vrot.slane %v4301, %v4316
      %v4319 = vunpack.c.l.s4 1966171168
      %v4320 = vunpack.c.0.s8 %v4319
      %v4321 = vlaneseq
      %v4322 = vshrl.u32 %v4321, 7
      %v4323 = vsub.s32 %v4320, %v4322
      %v4324 = vrot.slane %v4302, %v4323
      %v4326 = vunpack.c.l.s4 1966171168
      %v4327 = vunpack.c.0.s8 %v4326
      %v4328 = vlaneseq
      %v4329 = vshrl.u32 %v4328, 7
      %v4330 = vsub.s32 %v4327, %v4329
      %v4331 = vrot.slane %v4303, %v4330
      %v4332 = vcombine.high %v4310, %v4310
      %v4333 = vcombine.high %v4317, %v4317
      %v4334 = vcombine.high %v4324, %v4324
      %v4335 = vcombine.high %v4331, %v4331
      %v4336 = vlaneseq
      %v4337 = vshrl.u32 %v4336, 7
      %v4338 = vsub.s32 0, %v4337
      %v4339 = vrot.slane %v4261, %v4338
      %v4340 = vlaneseq
      %v4341 = vshrl.u32 %v4340, 7
      %v4342 = vsub.s32 0, %v4341
      %v4343 = vrot.slane %v4275, %v4342
      %v4344 = vlaneseq
      %v4345 = vshrl.u32 %v4344, 7
      %v4346 = vsub.s32 0, %v4345
      %v4347 = vrot.slane %v4283, %v4346
      %v4348 = vlaneseq
      %v4349 = vshrl.u32 %v4348, 7
      %v4350 = vsub.s32 0, %v4349
      %v4351 = vrot.slane %v4285, %v4350
      %v4352 = vlaneseq
      %v4353 = vshrl.u32 %v4352, 7
      %v4354 = vsub.s32 0, %v4353
      %v4355 = vrot.slane %v4268, %v4354
      %v4356 = vlaneseq
      %v4357 = vshrl.u32 %v4356, 7
      %v4358 = vsub.s32 0, %v4357
      %v4359 = vrot.slane %v4282, %v4358
      %v4360 = vlaneseq
      %v4361 = vshrl.u32 %v4360, 7
      %v4362 = vsub.s32 0, %v4361
      %v4363 = vrot.slane %v4284, %v4362
      %v4364 = vlaneseq
      %v4365 = vshrl.u32 %v4364, 7
      %v4366 = vsub.s32 0, %v4365
      %v4367 = vrot.slane %v4286, %v4366
      %v4368 = vlaneseq
      %v4369 = vshrl.u32 %v4368, 7
      %v4370 = vsub.s32 0, %v4369
      %v4371 = vrot.slane %v4310, %v4370
      %v4372 = vlaneseq
      %v4373 = vshrl.u32 %v4372, 7
      %v4374 = vsub.s32 0, %v4373
      %v4375 = vrot.slane %v4324, %v4374
      %v4376 = vlaneseq
      %v4377 = vshrl.u32 %v4376, 7
      %v4378 = vsub.s32 0, %v4377
      %v4379 = vrot.slane %v4332, %v4378
      %v4380 = vlaneseq
      %v4381 = vshrl.u32 %v4380, 7
      %v4382 = vsub.s32 0, %v4381
      %v4383 = vrot.slane %v4334, %v4382
      %v4384 = vlaneseq
      %v4385 = vshrl.u32 %v4384, 7
      %v4386 = vsub.s32 0, %v4385
      %v4387 = vrot.slane %v4317, %v4386
      %v4388 = vlaneseq
      %v4389 = vshrl.u32 %v4388, 7
      %v4390 = vsub.s32 0, %v4389
      %v4391 = vrot.slane %v4331, %v4390
      %v4392 = vlaneseq
      %v4393 = vshrl.u32 %v4392, 7
      %v4394 = vsub.s32 0, %v4393
      %v4395 = vrot.slane %v4333, %v4394
      %v4396 = vlaneseq
      %v4397 = vshrl.u32 %v4396, 7
      %v4398 = vsub.s32 0, %v4397
      %v4399 = vrot.slane %v4335, %v4398
      %vm4416 = vcmask 1040384
      %v4417 = vsel %vm4416, %v4145, %v4339
      %v4418 = vsel %vm4416, %v4159, %v4343
      %v4419 = vsel %vm4416, %v4167, %v4347
      %v4420 = vsel %vm4416, %v4169, %v4351
      %v4421 = vsel %vm4416, %v4152, %v4355
      %v4422 = vsel %vm4416, %v4166, %v4359
      %v4423 = vsel %vm4416, %v4168, %v4363
      %v4424 = vsel %vm4416, %v4170, %v4367
      %v4425 = vsel %vm4416, %v4194, %v4371
      %v4426 = vsel %vm4416, %v4208, %v4375
      %v4427 = vsel %vm4416, %v4216, %v4379
      %v4428 = vsel %vm4416, %v4218, %v4383
      %v4429 = vsel %vm4416, %v4201, %v4387
      %v4430 = vsel %vm4416, %v4215, %v4391
      %v4431 = vsel %vm4416, %v4217, %v4395
      %v4432 = vsel %vm4416, %v4219, %v4399
      %v4435 = vcombine.high %v4112, %v4112
      %v4437 = vunpack.c.l.s4 1966171168
      %v4438 = vunpack.c.0.s8 %v4437
      %v4439 = vlaneseq
      %v4440 = vshrl.u32 %v4439, 7
      %v4441 = vsub.s32 %v4438, %v4440
      %v4442 = vrot.slane %v4112, %v4441
      %v4444 = vunpack.c.l.s4 1966171168
      %v4445 = vunpack.c.0.s8 %v4444
      %v4446 = vlaneseq
      %v4447 = vshrl.u32 %v4446, 7
      %v4448 = vsub.s32 %v4445, %v4447
      %v4449 = vrot.slane %v4435, %v4448
      %v4450 = vcombine.high %v4442, %v4442
      %v4451 = vcombine.high %v4449, %v4449
      %v4453 = vunpack.c.l.s4 1966171168
      %v4454 = vunpack.c.0.s8 %v4453
      %v4455 = vlaneseq
      %v4456 = vshrl.u32 %v4455, 7
      %v4457 = vsub.s32 %v4454, %v4456
      %v4458 = vrot.slane %v4442, %v4457
      %v4460 = vunpack.c.l.s4 1966171168
      %v4461 = vunpack.c.0.s8 %v4460
      %v4462 = vlaneseq
      %v4463 = vshrl.u32 %v4462, 7
      %v4464 = vsub.s32 %v4461, %v4463
      %v4465 = vrot.slane %v4449, %v4464
      %v4467 = vunpack.c.l.s4 1966171168
      %v4468 = vunpack.c.0.s8 %v4467
      %v4469 = vlaneseq
      %v4470 = vshrl.u32 %v4469, 7
      %v4471 = vsub.s32 %v4468, %v4470
      %v4472 = vrot.slane %v4450, %v4471
      %v4474 = vunpack.c.l.s4 1966171168
      %v4475 = vunpack.c.0.s8 %v4474
      %v4476 = vlaneseq
      %v4477 = vshrl.u32 %v4476, 7
      %v4478 = vsub.s32 %v4475, %v4477
      %v4479 = vrot.slane %v4451, %v4478
      %v4480 = vcombine.high %v4458, %v4458
      %v4481 = vcombine.high %v4465, %v4465
      %v4482 = vcombine.high %v4472, %v4472
      %v4483 = vcombine.high %v4479, %v4479
      %v4484 = vcombine.high %v4116, %v4116
      %v4486 = vunpack.c.l.s4 1966171168
      %v4487 = vunpack.c.0.s8 %v4486
      %v4488 = vlaneseq
      %v4489 = vshrl.u32 %v4488, 7
      %v4490 = vsub.s32 %v4487, %v4489
      %v4491 = vrot.slane %v4116, %v4490
      %v4493 = vunpack.c.l.s4 1966171168
      %v4494 = vunpack.c.0.s8 %v4493
      %v4495 = vlaneseq
      %v4496 = vshrl.u32 %v4495, 7
      %v4497 = vsub.s32 %v4494, %v4496
      %v4498 = vrot.slane %v4484, %v4497
      %v4499 = vcombine.high %v4491, %v4491
      %v4500 = vcombine.high %v4498, %v4498
      %v4502 = vunpack.c.l.s4 1966171168
      %v4503 = vunpack.c.0.s8 %v4502
      %v4504 = vlaneseq
      %v4505 = vshrl.u32 %v4504, 7
      %v4506 = vsub.s32 %v4503, %v4505
      %v4507 = vrot.slane %v4491, %v4506
      %v4509 = vunpack.c.l.s4 1966171168
      %v4510 = vunpack.c.0.s8 %v4509
      %v4511 = vlaneseq
      %v4512 = vshrl.u32 %v4511, 7
      %v4513 = vsub.s32 %v4510, %v4512
      %v4514 = vrot.slane %v4498, %v4513
      %v4516 = vunpack.c.l.s4 1966171168
      %v4517 = vunpack.c.0.s8 %v4516
      %v4518 = vlaneseq
      %v4519 = vshrl.u32 %v4518, 7
      %v4520 = vsub.s32 %v4517, %v4519
      %v4521 = vrot.slane %v4499, %v4520
      %v4523 = vunpack.c.l.s4 1966171168
      %v4524 = vunpack.c.0.s8 %v4523
      %v4525 = vlaneseq
      %v4526 = vshrl.u32 %v4525, 7
      %v4527 = vsub.s32 %v4524, %v4526
      %v4528 = vrot.slane %v4500, %v4527
      %v4529 = vcombine.high %v4507, %v4507
      %v4530 = vcombine.high %v4514, %v4514
      %v4531 = vcombine.high %v4521, %v4521
      %v4532 = vcombine.high %v4528, %v4528
      %v4551 = vcombine.high %v4114, %v4114
      %v4553 = vunpack.c.l.s4 1966171168
      %v4554 = vunpack.c.0.s8 %v4553
      %v4555 = vlaneseq
      %v4556 = vshrl.u32 %v4555, 7
      %v4557 = vsub.s32 %v4554, %v4556
      %v4558 = vrot.slane %v4114, %v4557
      %v4560 = vunpack.c.l.s4 1966171168
      %v4561 = vunpack.c.0.s8 %v4560
      %v4562 = vlaneseq
      %v4563 = vshrl.u32 %v4562, 7
      %v4564 = vsub.s32 %v4561, %v4563
      %v4565 = vrot.slane %v4551, %v4564
      %v4566 = vcombine.high %v4558, %v4558
      %v4567 = vcombine.high %v4565, %v4565
      %v4569 = vunpack.c.l.s4 1966171168
      %v4570 = vunpack.c.0.s8 %v4569
      %v4571 = vlaneseq
      %v4572 = vshrl.u32 %v4571, 7
      %v4573 = vsub.s32 %v4570, %v4572
      %v4574 = vrot.slane %v4558, %v4573
      %v4576 = vunpack.c.l.s4 1966171168
      %v4577 = vunpack.c.0.s8 %v4576
      %v4578 = vlaneseq
      %v4579 = vshrl.u32 %v4578, 7
      %v4580 = vsub.s32 %v4577, %v4579
      %v4581 = vrot.slane %v4565, %v4580
      %v4583 = vunpack.c.l.s4 1966171168
      %v4584 = vunpack.c.0.s8 %v4583
      %v4585 = vlaneseq
      %v4586 = vshrl.u32 %v4585, 7
      %v4587 = vsub.s32 %v4584, %v4586
      %v4588 = vrot.slane %v4566, %v4587
      %v4590 = vunpack.c.l.s4 1966171168
      %v4591 = vunpack.c.0.s8 %v4590
      %v4592 = vlaneseq
      %v4593 = vshrl.u32 %v4592, 7
      %v4594 = vsub.s32 %v4591, %v4593
      %v4595 = vrot.slane %v4567, %v4594
      %v4596 = vcombine.high %v4574, %v4574
      %v4597 = vcombine.high %v4581, %v4581
      %v4598 = vcombine.high %v4588, %v4588
      %v4599 = vcombine.high %v4595, %v4595
      %v4600 = vcombine.high %v4118, %v4118
      %v4602 = vunpack.c.l.s4 1966171168
      %v4603 = vunpack.c.0.s8 %v4602
      %v4604 = vlaneseq
      %v4605 = vshrl.u32 %v4604, 7
      %v4606 = vsub.s32 %v4603, %v4605
      %v4607 = vrot.slane %v4118, %v4606
      %v4609 = vunpack.c.l.s4 1966171168
      %v4610 = vunpack.c.0.s8 %v4609
      %v4611 = vlaneseq
      %v4612 = vshrl.u32 %v4611, 7
      %v4613 = vsub.s32 %v4610, %v4612
      %v4614 = vrot.slane %v4600, %v4613
      %v4615 = vcombine.high %v4607, %v4607
      %v4616 = vcombine.high %v4614, %v4614
      %v4618 = vunpack.c.l.s4 1966171168
      %v4619 = vunpack.c.0.s8 %v4618
      %v4620 = vlaneseq
      %v4621 = vshrl.u32 %v4620, 7
      %v4622 = vsub.s32 %v4619, %v4621
      %v4623 = vrot.slane %v4607, %v4622
      %v4625 = vunpack.c.l.s4 1966171168
      %v4626 = vunpack.c.0.s8 %v4625
      %v4627 = vlaneseq
      %v4628 = vshrl.u32 %v4627, 7
      %v4629 = vsub.s32 %v4626, %v4628
      %v4630 = vrot.slane %v4614, %v4629
      %v4632 = vunpack.c.l.s4 1966171168
      %v4633 = vunpack.c.0.s8 %v4632
      %v4634 = vlaneseq
      %v4635 = vshrl.u32 %v4634, 7
      %v4636 = vsub.s32 %v4633, %v4635
      %v4637 = vrot.slane %v4615, %v4636
      %v4639 = vunpack.c.l.s4 1966171168
      %v4640 = vunpack.c.0.s8 %v4639
      %v4641 = vlaneseq
      %v4642 = vshrl.u32 %v4641, 7
      %v4643 = vsub.s32 %v4640, %v4642
      %v4644 = vrot.slane %v4616, %v4643
      %v4645 = vcombine.high %v4623, %v4623
      %v4646 = vcombine.high %v4630, %v4630
      %v4647 = vcombine.high %v4637, %v4637
      %v4648 = vcombine.high %v4644, %v4644
      %v4649 = vlaneseq
      %v4650 = vshrl.u32 %v4649, 7
      %v4651 = vsub.s32 0, %v4650
      %v4652 = vrot.slane %v4574, %v4651
      %v4653 = vlaneseq
      %v4654 = vshrl.u32 %v4653, 7
      %v4655 = vsub.s32 0, %v4654
      %v4656 = vrot.slane %v4588, %v4655
      %v4657 = vlaneseq
      %v4658 = vshrl.u32 %v4657, 7
      %v4659 = vsub.s32 0, %v4658
      %v4660 = vrot.slane %v4596, %v4659
      %v4661 = vlaneseq
      %v4662 = vshrl.u32 %v4661, 7
      %v4663 = vsub.s32 0, %v4662
      %v4664 = vrot.slane %v4598, %v4663
      %v4665 = vlaneseq
      %v4666 = vshrl.u32 %v4665, 7
      %v4667 = vsub.s32 0, %v4666
      %v4668 = vrot.slane %v4581, %v4667
      %v4669 = vlaneseq
      %v4670 = vshrl.u32 %v4669, 7
      %v4671 = vsub.s32 0, %v4670
      %v4672 = vrot.slane %v4595, %v4671
      %v4673 = vlaneseq
      %v4674 = vshrl.u32 %v4673, 7
      %v4675 = vsub.s32 0, %v4674
      %v4676 = vrot.slane %v4597, %v4675
      %v4677 = vlaneseq
      %v4678 = vshrl.u32 %v4677, 7
      %v4679 = vsub.s32 0, %v4678
      %v4680 = vrot.slane %v4599, %v4679
      %v4681 = vlaneseq
      %v4682 = vshrl.u32 %v4681, 7
      %v4683 = vsub.s32 0, %v4682
      %v4684 = vrot.slane %v4623, %v4683
      %v4685 = vlaneseq
      %v4686 = vshrl.u32 %v4685, 7
      %v4687 = vsub.s32 0, %v4686
      %v4688 = vrot.slane %v4637, %v4687
      %v4689 = vlaneseq
      %v4690 = vshrl.u32 %v4689, 7
      %v4691 = vsub.s32 0, %v4690
      %v4692 = vrot.slane %v4645, %v4691
      %v4693 = vlaneseq
      %v4694 = vshrl.u32 %v4693, 7
      %v4695 = vsub.s32 0, %v4694
      %v4696 = vrot.slane %v4647, %v4695
      %v4697 = vlaneseq
      %v4698 = vshrl.u32 %v4697, 7
      %v4699 = vsub.s32 0, %v4698
      %v4700 = vrot.slane %v4630, %v4699
      %v4701 = vlaneseq
      %v4702 = vshrl.u32 %v4701, 7
      %v4703 = vsub.s32 0, %v4702
      %v4704 = vrot.slane %v4644, %v4703
      %v4705 = vlaneseq
      %v4706 = vshrl.u32 %v4705, 7
      %v4707 = vsub.s32 0, %v4706
      %v4708 = vrot.slane %v4646, %v4707
      %v4709 = vlaneseq
      %v4710 = vshrl.u32 %v4709, 7
      %v4711 = vsub.s32 0, %v4710
      %v4712 = vrot.slane %v4648, %v4711
      %v4729 = vsel %vm4416, %v4458, %v4652
      %v4730 = vsel %vm4416, %v4472, %v4656
      %v4731 = vsel %vm4416, %v4480, %v4660
      %v4732 = vsel %vm4416, %v4482, %v4664
      %v4733 = vsel %vm4416, %v4465, %v4668
      %v4734 = vsel %vm4416, %v4479, %v4672
      %v4735 = vsel %vm4416, %v4481, %v4676
      %v4736 = vsel %vm4416, %v4483, %v4680
      %v4737 = vsel %vm4416, %v4507, %v4684
      %v4738 = vsel %vm4416, %v4521, %v4688
      %v4739 = vsel %vm4416, %v4529, %v4692
      %v4740 = vsel %vm4416, %v4531, %v4696
      %v4741 = vsel %vm4416, %v4514, %v4700
      %v4742 = vsel %vm4416, %v4528, %v4704
      %v4743 = vsel %vm4416, %v4530, %v4708
      %v4744 = vsel %vm4416, %v4532, %v4712
      %v4745 = vld [vmem:[%s347] sm:$0xf]
      %v4746 = vld [vmem:[%s347 + $0x4] sm:$0xf]
      %v4747 = vld [vmem:[%s347 + $0x8] sm:$0xf]
      %v4748 = vld [vmem:[%s347 + $0xc] sm:$0xf]
      %v4749 = vld [vmem:[%s347 + $0x10] sm:$0xf]
      %v4750 = vld [vmem:[%s347 + $0x14] sm:$0xf]
      %v4751 = vld [vmem:[%s347 + $0x18] sm:$0xf]
      %v4752 = vld [vmem:[%s347 + $0x1c] sm:$0xf]
      %v4753 = vunpack.c.l.bf16 %v4745
      %v4754 = vunpack.c.l.bf16 %v4746
      %v4755 = vunpack.c.l.bf16 %v4747
      %v4756 = vunpack.c.l.bf16 %v4748
      %v4757 = vunpack.c.l.bf16 %v4749
      %v4758 = vunpack.c.l.bf16 %v4750
      %v4759 = vunpack.c.l.bf16 %v4751
      %v4760 = vunpack.c.l.bf16 %v4752
      %v4769 = vcombine.high %v4753, %v4753
      %v4771 = vunpack.c.l.s4 1983009808
      %v4772 = vunpack.c.0.s8 %v4771
      %v4773 = vlaneseq
      %v4774 = vshrl.u32 %v4773, 7
      %v4775 = vsub.s32 %v4772, %v4774
      %v4776 = vrot.slane %v4753, %v4775
      %v4778 = vunpack.c.l.s4 1983009808
      %v4779 = vunpack.c.0.s8 %v4778
      %v4780 = vlaneseq
      %v4781 = vshrl.u32 %v4780, 7
      %v4782 = vsub.s32 %v4779, %v4781
      %v4783 = vrot.slane %v4769, %v4782
      %v4784 = vcombine.high %v4776, %v4776
      %v4785 = vcombine.high %v4783, %v4783
      %v4786 = vcombine.high %v4754, %v4754
      %v4788 = vunpack.c.l.s4 1983009808
      %v4789 = vunpack.c.0.s8 %v4788
      %v4790 = vlaneseq
      %v4791 = vshrl.u32 %v4790, 7
      %v4792 = vsub.s32 %v4789, %v4791
      %v4793 = vrot.slane %v4754, %v4792
      %v4795 = vunpack.c.l.s4 1983009808
      %v4796 = vunpack.c.0.s8 %v4795
      %v4797 = vlaneseq
      %v4798 = vshrl.u32 %v4797, 7
      %v4799 = vsub.s32 %v4796, %v4798
      %v4800 = vrot.slane %v4786, %v4799
      %v4801 = vcombine.high %v4793, %v4793
      %v4802 = vcombine.high %v4800, %v4800
      %v4803 = vcombine.high %v4755, %v4755
      %v4805 = vunpack.c.l.s4 1983009808
      %v4806 = vunpack.c.0.s8 %v4805
      %v4807 = vlaneseq
      %v4808 = vshrl.u32 %v4807, 7
      %v4809 = vsub.s32 %v4806, %v4808
      %v4810 = vrot.slane %v4755, %v4809
      %v4812 = vunpack.c.l.s4 1983009808
      %v4813 = vunpack.c.0.s8 %v4812
      %v4814 = vlaneseq
      %v4815 = vshrl.u32 %v4814, 7
      %v4816 = vsub.s32 %v4813, %v4815
      %v4817 = vrot.slane %v4803, %v4816
      %v4818 = vcombine.high %v4810, %v4810
      %v4819 = vcombine.high %v4817, %v4817
      %v4820 = vcombine.high %v4756, %v4756
      %v4822 = vunpack.c.l.s4 1983009808
      %v4823 = vunpack.c.0.s8 %v4822
      %v4824 = vlaneseq
      %v4825 = vshrl.u32 %v4824, 7
      %v4826 = vsub.s32 %v4823, %v4825
      %v4827 = vrot.slane %v4756, %v4826
      %v4829 = vunpack.c.l.s4 1983009808
      %v4830 = vunpack.c.0.s8 %v4829
      %v4831 = vlaneseq
      %v4832 = vshrl.u32 %v4831, 7
      %v4833 = vsub.s32 %v4830, %v4832
      %v4834 = vrot.slane %v4820, %v4833
      %v4835 = vcombine.high %v4827, %v4827
      %v4836 = vcombine.high %v4834, %v4834
      %v4837 = vcombine.high %v4757, %v4757
      %v4839 = vunpack.c.l.s4 1983009808
      %v4840 = vunpack.c.0.s8 %v4839
      %v4841 = vlaneseq
      %v4842 = vshrl.u32 %v4841, 7
      %v4843 = vsub.s32 %v4840, %v4842
      %v4844 = vrot.slane %v4757, %v4843
      %v4846 = vunpack.c.l.s4 1983009808
      %v4847 = vunpack.c.0.s8 %v4846
      %v4848 = vlaneseq
      %v4849 = vshrl.u32 %v4848, 7
      %v4850 = vsub.s32 %v4847, %v4849
      %v4851 = vrot.slane %v4837, %v4850
      %v4852 = vcombine.high %v4844, %v4844
      %v4853 = vcombine.high %v4851, %v4851
      %v4854 = vcombine.high %v4758, %v4758
      %v4856 = vunpack.c.l.s4 1983009808
      %v4857 = vunpack.c.0.s8 %v4856
      %v4858 = vlaneseq
      %v4859 = vshrl.u32 %v4858, 7
      %v4860 = vsub.s32 %v4857, %v4859
      %v4861 = vrot.slane %v4758, %v4860
      %v4863 = vunpack.c.l.s4 1983009808
      %v4864 = vunpack.c.0.s8 %v4863
      %v4865 = vlaneseq
      %v4866 = vshrl.u32 %v4865, 7
      %v4867 = vsub.s32 %v4864, %v4866
      %v4868 = vrot.slane %v4854, %v4867
      %v4869 = vcombine.high %v4861, %v4861
      %v4870 = vcombine.high %v4868, %v4868
      %v4871 = vcombine.high %v4759, %v4759
      %v4873 = vunpack.c.l.s4 1983009808
      %v4874 = vunpack.c.0.s8 %v4873
      %v4875 = vlaneseq
      %v4876 = vshrl.u32 %v4875, 7
      %v4877 = vsub.s32 %v4874, %v4876
      %v4878 = vrot.slane %v4759, %v4877
      %v4880 = vunpack.c.l.s4 1983009808
      %v4881 = vunpack.c.0.s8 %v4880
      %v4882 = vlaneseq
      %v4883 = vshrl.u32 %v4882, 7
      %v4884 = vsub.s32 %v4881, %v4883
      %v4885 = vrot.slane %v4871, %v4884
      %v4886 = vcombine.high %v4878, %v4878
      %v4887 = vcombine.high %v4885, %v4885
      %v4888 = vcombine.high %v4760, %v4760
      %v4890 = vunpack.c.l.s4 1983009808
      %v4891 = vunpack.c.0.s8 %v4890
      %v4892 = vlaneseq
      %v4893 = vshrl.u32 %v4892, 7
      %v4894 = vsub.s32 %v4891, %v4893
      %v4895 = vrot.slane %v4760, %v4894
      %v4897 = vunpack.c.l.s4 1983009808
      %v4898 = vunpack.c.0.s8 %v4897
      %v4899 = vlaneseq
      %v4900 = vshrl.u32 %v4899, 7
      %v4901 = vsub.s32 %v4898, %v4900
      %v4902 = vrot.slane %v4888, %v4901
      %v4903 = vcombine.high %v4895, %v4895
      %v4904 = vcombine.high %v4902, %v4902
      %v4937 = vadd.f32 %v4417, %v4776
      %v4938 = vadd.f32 %v4418, %v4784
      %v4939 = vadd.f32 %v4419, %v4783
      %v4940 = vadd.f32 %v4420, %v4785
      %v4941 = vadd.f32 %v4729, %v4793
      %v4942 = vadd.f32 %v4730, %v4801
      %v4943 = vadd.f32 %v4731, %v4800
      %v4944 = vadd.f32 %v4732, %v4802
      %v4945 = vadd.f32 %v4421, %v4810
      %v4946 = vadd.f32 %v4422, %v4818
      %v4947 = vadd.f32 %v4423, %v4817
      %v4948 = vadd.f32 %v4424, %v4819
      %v4949 = vadd.f32 %v4733, %v4827
      %v4950 = vadd.f32 %v4734, %v4835
      %v4951 = vadd.f32 %v4735, %v4834
      %v4952 = vadd.f32 %v4736, %v4836
      %v4953 = vadd.f32 %v4425, %v4844
      %v4954 = vadd.f32 %v4426, %v4852
      %v4955 = vadd.f32 %v4427, %v4851
      %v4956 = vadd.f32 %v4428, %v4853
      %v4957 = vadd.f32 %v4737, %v4861
      %v4958 = vadd.f32 %v4738, %v4869
      %v4959 = vadd.f32 %v4739, %v4868
      %v4960 = vadd.f32 %v4740, %v4870
      %v4961 = vadd.f32 %v4429, %v4878
      %v4962 = vadd.f32 %v4430, %v4886
      %v4963 = vadd.f32 %v4431, %v4885
      %v4964 = vadd.f32 %v4432, %v4887
      %v4965 = vadd.f32 %v4741, %v4895
      %v4966 = vadd.f32 %v4742, %v4903
      %v4967 = vadd.f32 %v4743, %v4902
      %v4968 = vadd.f32 %v4744, %v4904
      %v5001 = vcombine.low %v4937, %v4938
      %v5002 = vcombine.low %v4939, %v4940
      %v5004 = vunpack.c.l.s4 1983009808
      %v5005 = vunpack.c.0.s8 %v5004
      %v5006 = vlaneseq
      %v5007 = vshrl.u32 %v5006, 7
      %v5008 = vsub.s32 %v5005, %v5007
      %v5009 = vrot.slane %v5001, %v5008
      %v5011 = vunpack.c.l.s4 1983009808
      %v5012 = vunpack.c.0.s8 %v5011
      %v5013 = vlaneseq
      %v5014 = vshrl.u32 %v5013, 7
      %v5015 = vsub.s32 %v5012, %v5014
      %v5016 = vrot.slane %v5002, %v5015
      %v5017 = vcombine.low %v5009, %v5016
      %v5018 = vcombine.low %v4941, %v4942
      %v5019 = vcombine.low %v4943, %v4944
      %v5021 = vunpack.c.l.s4 1983009808
      %v5022 = vunpack.c.0.s8 %v5021
      %v5023 = vlaneseq
      %v5024 = vshrl.u32 %v5023, 7
      %v5025 = vsub.s32 %v5022, %v5024
      %v5026 = vrot.slane %v5018, %v5025
      %v5028 = vunpack.c.l.s4 1983009808
      %v5029 = vunpack.c.0.s8 %v5028
      %v5030 = vlaneseq
      %v5031 = vshrl.u32 %v5030, 7
      %v5032 = vsub.s32 %v5029, %v5031
      %v5033 = vrot.slane %v5019, %v5032
      %v5034 = vcombine.low %v5026, %v5033
      %v5035 = vcombine.low %v4945, %v4946
      %v5036 = vcombine.low %v4947, %v4948
      %v5038 = vunpack.c.l.s4 1983009808
      %v5039 = vunpack.c.0.s8 %v5038
      %v5040 = vlaneseq
      %v5041 = vshrl.u32 %v5040, 7
      %v5042 = vsub.s32 %v5039, %v5041
      %v5043 = vrot.slane %v5035, %v5042
      %v5045 = vunpack.c.l.s4 1983009808
      %v5046 = vunpack.c.0.s8 %v5045
      %v5047 = vlaneseq
      %v5048 = vshrl.u32 %v5047, 7
      %v5049 = vsub.s32 %v5046, %v5048
      %v5050 = vrot.slane %v5036, %v5049
      %v5051 = vcombine.low %v5043, %v5050
      %v5052 = vcombine.low %v4949, %v4950
      %v5053 = vcombine.low %v4951, %v4952
      %v5055 = vunpack.c.l.s4 1983009808
      %v5056 = vunpack.c.0.s8 %v5055
      %v5057 = vlaneseq
      %v5058 = vshrl.u32 %v5057, 7
      %v5059 = vsub.s32 %v5056, %v5058
      %v5060 = vrot.slane %v5052, %v5059
      %v5062 = vunpack.c.l.s4 1983009808
      %v5063 = vunpack.c.0.s8 %v5062
      %v5064 = vlaneseq
      %v5065 = vshrl.u32 %v5064, 7
      %v5066 = vsub.s32 %v5063, %v5065
      %v5067 = vrot.slane %v5053, %v5066
      %v5068 = vcombine.low %v5060, %v5067
      %v5069 = vcombine.low %v4953, %v4954
      %v5070 = vcombine.low %v4955, %v4956
      %v5072 = vunpack.c.l.s4 1983009808
      %v5073 = vunpack.c.0.s8 %v5072
      %v5074 = vlaneseq
      %v5075 = vshrl.u32 %v5074, 7
      %v5076 = vsub.s32 %v5073, %v5075
      %v5077 = vrot.slane %v5069, %v5076
      %v5079 = vunpack.c.l.s4 1983009808
      %v5080 = vunpack.c.0.s8 %v5079
      %v5081 = vlaneseq
      %v5082 = vshrl.u32 %v5081, 7
      %v5083 = vsub.s32 %v5080, %v5082
      %v5084 = vrot.slane %v5070, %v5083
      %v5085 = vcombine.low %v5077, %v5084
      %v5086 = vcombine.low %v4957, %v4958
      %v5087 = vcombine.low %v4959, %v4960
      %v5089 = vunpack.c.l.s4 1983009808
      %v5090 = vunpack.c.0.s8 %v5089
      %v5091 = vlaneseq
      %v5092 = vshrl.u32 %v5091, 7
      %v5093 = vsub.s32 %v5090, %v5092
      %v5094 = vrot.slane %v5086, %v5093
      %v5096 = vunpack.c.l.s4 1983009808
      %v5097 = vunpack.c.0.s8 %v5096
      %v5098 = vlaneseq
      %v5099 = vshrl.u32 %v5098, 7
      %v5100 = vsub.s32 %v5097, %v5099
      %v5101 = vrot.slane %v5087, %v5100
      %v5102 = vcombine.low %v5094, %v5101
      %v5103 = vcombine.low %v4961, %v4962
      %v5104 = vcombine.low %v4963, %v4964
      %v5106 = vunpack.c.l.s4 1983009808
      %v5107 = vunpack.c.0.s8 %v5106
      %v5108 = vlaneseq
      %v5109 = vshrl.u32 %v5108, 7
      %v5110 = vsub.s32 %v5107, %v5109
      %v5111 = vrot.slane %v5103, %v5110
      %v5113 = vunpack.c.l.s4 1983009808
      %v5114 = vunpack.c.0.s8 %v5113
      %v5115 = vlaneseq
      %v5116 = vshrl.u32 %v5115, 7
      %v5117 = vsub.s32 %v5114, %v5116
      %v5118 = vrot.slane %v5104, %v5117
      %v5119 = vcombine.low %v5111, %v5118
      %v5120 = vcombine.low %v4965, %v4966
      %v5121 = vcombine.low %v4967, %v4968
      %v5123 = vunpack.c.l.s4 1983009808
      %v5124 = vunpack.c.0.s8 %v5123
      %v5125 = vlaneseq
      %v5126 = vshrl.u32 %v5125, 7
      %v5127 = vsub.s32 %v5124, %v5126
      %v5128 = vrot.slane %v5120, %v5127
      %v5130 = vunpack.c.l.s4 1983009808
      %v5131 = vunpack.c.0.s8 %v5130
      %v5132 = vlaneseq
      %v5133 = vshrl.u32 %v5132, 7
      %v5134 = vsub.s32 %v5131, %v5133
      %v5135 = vrot.slane %v5121, %v5134
      %v5136 = vcombine.low %v5128, %v5135
      %v5145 = vpack.c.bf16 %v5017, %v5017
      %v5146 = vpack.c.bf16 %v5034, %v5034
      %v5147 = vpack.c.bf16 %v5051, %v5051
      %v5148 = vpack.c.bf16 %v5068, %v5068
      %v5149 = vpack.c.bf16 %v5085, %v5085
      %v5150 = vpack.c.bf16 %v5102, %v5102
      %v5151 = vpack.c.bf16 %v5119, %v5119
      %v5152 = vpack.c.bf16 %v5136, %v5136
      %v5161 = vunpack.c.l.b16 %v5145
      %v5162 = vunpack.c.l.b16 %v5146
      %v5163 = vunpack.c.l.b16 %v5147
      %v5164 = vunpack.c.l.b16 %v5148
      %v5165 = vunpack.c.l.b16 %v5149
      %v5166 = vunpack.c.l.b16 %v5150
      %v5167 = vunpack.c.l.b16 %v5151
      %v5168 = vunpack.c.l.b16 %v5152
      %v5169 = vpack.c.b16 %v5161, %v5161
      %v5170 = vpack.c.b16 %v5162, %v5162
      %v5171 = vpack.c.b16 %v5163, %v5163
      %v5172 = vpack.c.b16 %v5164, %v5164
      %v5173 = vpack.c.b16 %v5165, %v5165
      %v5174 = vpack.c.b16 %v5166, %v5166
      %v5175 = vpack.c.b16 %v5167, %v5167
      %v5176 = vpack.c.b16 %v5168, %v5168
      %v5178 = vshrl.u32 %v5169, 16
      %v5180 = vrot.slane %v5178, 7
      %v5181 = vshll.u32 %v5169, 16
      %v5183 = vor.u32 %v5180, %v5181
      %v5184 = vrot.slane %v5180, 4
      %v5186 = vshrl.u32 %v5170, 16
      %v5188 = vrot.slane %v5186, 7
      %v5189 = vshll.u32 %v5170, 16
      %v5191 = vor.u32 %v5188, %v5189
      %v5192 = vrot.slane %v5188, 4
      %v5194 = vshrl.u32 %v5171, 16
      %v5196 = vrot.slane %v5194, 7
      %v5197 = vshll.u32 %v5171, 16
      %v5199 = vor.u32 %v5196, %v5197
      %v5200 = vrot.slane %v5196, 4
      %v5202 = vshrl.u32 %v5172, 16
      %v5204 = vrot.slane %v5202, 7
      %v5205 = vshll.u32 %v5172, 16
      %v5207 = vor.u32 %v5204, %v5205
      %v5208 = vrot.slane %v5204, 4
      %v5210 = vshrl.u32 %v5173, 16
      %v5212 = vrot.slane %v5210, 7
      %v5213 = vshll.u32 %v5173, 16
      %v5215 = vor.u32 %v5212, %v5213
      %v5216 = vrot.slane %v5212, 4
      %v5218 = vshrl.u32 %v5174, 16
      %v5220 = vrot.slane %v5218, 7
      %v5221 = vshll.u32 %v5174, 16
      %v5223 = vor.u32 %v5220, %v5221
      %v5224 = vrot.slane %v5220, 4
      %v5226 = vshrl.u32 %v5175, 16
      %v5228 = vrot.slane %v5226, 7
      %v5229 = vshll.u32 %v5175, 16
      %v5231 = vor.u32 %v5228, %v5229
      %v5232 = vrot.slane %v5228, 4
      %v5234 = vshrl.u32 %v5176, 16
      %v5236 = vrot.slane %v5234, 7
      %v5237 = vshll.u32 %v5176, 16
      %v5239 = vor.u32 %v5236, %v5237
      %v5240 = vrot.slane %v5236, 4
      %s5257 = scalar_lea.vmem [#allocation4], 8
      %vm5258 = vcmask 1043456
      %vm5259 = vmand %vm5258, %vm465
      %v5260 = vld [vmem:[%s5257] sm:$0xf]
      %v5261 = vsel %vm5259, %v5183, %v5260
      %5262 = vst [vmem:[%s5257] sm:$0xf] %v5261
      %v5263 = vld [vmem:[%s5257 + $0x4] sm:$0x1]
      %v5264 = vsel %vm359, %v5184, %v5263
      %5265 = vst [vmem:[%s5257 + $0x4] sm:$0x1] %v5264
      %v5266 = vld [vmem:[%s5257 + $0x8] sm:$0xf]
      %v5267 = vsel %vm5259, %v5191, %v5266
      %5268 = vst [vmem:[%s5257 + $0x8] sm:$0xf] %v5267
      %v5269 = vld [vmem:[%s5257 + $0xc] sm:$0x1]
      %v5270 = vsel %vm359, %v5192, %v5269
      %5271 = vst [vmem:[%s5257 + $0xc] sm:$0x1] %v5270
      %v5272 = vld [vmem:[%s5257 + $0x10] sm:$0xf]
      %v5273 = vsel %vm5259, %v5199, %v5272
      %5274 = vst [vmem:[%s5257 + $0x10] sm:$0xf] %v5273
      %v5275 = vld [vmem:[%s5257 + $0x14] sm:$0x1]
      %v5276 = vsel %vm359, %v5200, %v5275
      %5277 = vst [vmem:[%s5257 + $0x14] sm:$0x1] %v5276
      %v5278 = vld [vmem:[%s5257 + $0x18] sm:$0xf]
      %v5279 = vsel %vm5259, %v5207, %v5278
      %5280 = vst [vmem:[%s5257 + $0x18] sm:$0xf] %v5279
      %v5281 = vld [vmem:[%s5257 + $0x1c] sm:$0x1]
      %v5282 = vsel %vm359, %v5208, %v5281
      %5283 = vst [vmem:[%s5257 + $0x1c] sm:$0x1] %v5282
      %v5284 = vld [vmem:[%s5257 + $0x20] sm:$0xf]
      %v5285 = vsel %vm5259, %v5215, %v5284
      %5286 = vst [vmem:[%s5257 + $0x20] sm:$0xf] %v5285
      %v5287 = vld [vmem:[%s5257 + $0x24] sm:$0x1]
      %v5288 = vsel %vm359, %v5216, %v5287
      %5289 = vst [vmem:[%s5257 + $0x24] sm:$0x1] %v5288
      %v5290 = vld [vmem:[%s5257 + $0x28] sm:$0xf]
      %v5291 = vsel %vm5259, %v5223, %v5290
      %5292 = vst [vmem:[%s5257 + $0x28] sm:$0xf] %v5291
      %v5293 = vld [vmem:[%s5257 + $0x2c] sm:$0x1]
      %v5294 = vsel %vm359, %v5224, %v5293
      %5295 = vst [vmem:[%s5257 + $0x2c] sm:$0x1] %v5294
      %v5296 = vld [vmem:[%s5257 + $0x30] sm:$0xf]
      %v5297 = vsel %vm5259, %v5231, %v5296
      %5298 = vst [vmem:[%s5257 + $0x30] sm:$0xf] %v5297
      %v5299 = vld [vmem:[%s5257 + $0x34] sm:$0x1]
      %v5300 = vsel %vm359, %v5232, %v5299
      %5301 = vst [vmem:[%s5257 + $0x34] sm:$0x1] %v5300
      %v5302 = vld [vmem:[%s5257 + $0x38] sm:$0xf]
      %v5303 = vsel %vm5259, %v5239, %v5302
      %5304 = vst [vmem:[%s5257 + $0x38] sm:$0xf] %v5303
      %v5305 = vld [vmem:[%s5257 + $0x3c] sm:$0x1]
      %v5306 = vsel %vm359, %v5240, %v5305
      %5307 = vst [vmem:[%s5257 + $0x3c] sm:$0x1] %v5306
      %v5308 = vld [vmem:[%s5257] sm:$0xf]
      %v5309 = vld [vmem:[%s5257 + $0x8] sm:$0xf]
      %v5310 = vld [vmem:[%s5257 + $0x10] sm:$0xf]
      %v5311 = vld [vmem:[%s5257 + $0x18] sm:$0xf]
      %v5312 = vld [vmem:[%s5257 + $0x20] sm:$0xf]
      %v5313 = vld [vmem:[%s5257 + $0x28] sm:$0xf]
      %v5314 = vld [vmem:[%s5257 + $0x30] sm:$0xf]
      %v5315 = vld [vmem:[%s5257 + $0x38] sm:$0xf]
      %v5316 = vld [vmem:[%s5257 + $0x4] sm:$0x1]
      %v5317 = vld [vmem:[%s5257 + $0xc] sm:$0x1]
      %v5318 = vld [vmem:[%s5257 + $0x14] sm:$0x1]
      %v5319 = vld [vmem:[%s5257 + $0x1c] sm:$0x1]
      %v5320 = vld [vmem:[%s5257 + $0x24] sm:$0x1]
      %v5321 = vld [vmem:[%s5257 + $0x2c] sm:$0x1]
      %v5322 = vld [vmem:[%s5257 + $0x34] sm:$0x1]
      %v5323 = vld [vmem:[%s5257 + $0x3c] sm:$0x1]
      %vm5324 = vsmask.f32 3328
      %vm5325 = vsmask.f32 7440
      %vm5326 = vmor %vm5324, %vm5325
      %v5328 = vshrl.u32 %v5308, 16
      %v5330 = vrot.slane %v5328, 4
      %v5331 = vshll.u32 %v5308, 16
      %v5333 = vrot.slane %v5331, 5
      %v5334 = vor.u32 %v5330, %v5333
      %v5335 = vrot.slane %v5334, 4
      %v5337 = vshll.u32 %v5316, 16
      %v5339 = vrot.slane %v5337, 5
      %v5340 = vsel %vm5326, %v5335, %v5339
      %v5342 = vshrl.u32 %v5309, 16
      %v5344 = vrot.slane %v5342, 4
      %v5345 = vshll.u32 %v5309, 16
      %v5347 = vrot.slane %v5345, 5
      %v5348 = vor.u32 %v5344, %v5347
      %v5349 = vrot.slane %v5348, 4
      %v5351 = vshll.u32 %v5317, 16
      %v5353 = vrot.slane %v5351, 5
      %v5354 = vsel %vm5326, %v5349, %v5353
      %v5356 = vshrl.u32 %v5310, 16
      %v5358 = vrot.slane %v5356, 4
      %v5359 = vshll.u32 %v5310, 16
      %v5361 = vrot.slane %v5359, 5
      %v5362 = vor.u32 %v5358, %v5361
      %v5363 = vrot.slane %v5362, 4
      %v5365 = vshll.u32 %v5318, 16
      %v5367 = vrot.slane %v5365, 5
      %v5368 = vsel %vm5326, %v5363, %v5367
      %v5370 = vshrl.u32 %v5311, 16
      %v5372 = vrot.slane %v5370, 4
      %v5373 = vshll.u32 %v5311, 16
      %v5375 = vrot.slane %v5373, 5
      %v5376 = vor.u32 %v5372, %v5375
      %v5377 = vrot.slane %v5376, 4
      %v5379 = vshll.u32 %v5319, 16
      %v5381 = vrot.slane %v5379, 5
      %v5382 = vsel %vm5326, %v5377, %v5381
      %v5384 = vshrl.u32 %v5312, 16
      %v5386 = vrot.slane %v5384, 4
      %v5387 = vshll.u32 %v5312, 16
      %v5389 = vrot.slane %v5387, 5
      %v5390 = vor.u32 %v5386, %v5389
      %v5391 = vrot.slane %v5390, 4
      %v5393 = vshll.u32 %v5320, 16
      %v5395 = vrot.slane %v5393, 5
      %v5396 = vsel %vm5326, %v5391, %v5395
      %v5398 = vshrl.u32 %v5313, 16
      %v5400 = vrot.slane %v5398, 4
      %v5401 = vshll.u32 %v5313, 16
      %v5403 = vrot.slane %v5401, 5
      %v5404 = vor.u32 %v5400, %v5403
      %v5405 = vrot.slane %v5404, 4
      %v5407 = vshll.u32 %v5321, 16
      %v5409 = vrot.slane %v5407, 5
      %v5410 = vsel %vm5326, %v5405, %v5409
      %v5412 = vshrl.u32 %v5314, 16
      %v5414 = vrot.slane %v5412, 4
      %v5415 = vshll.u32 %v5314, 16
      %v5417 = vrot.slane %v5415, 5
      %v5418 = vor.u32 %v5414, %v5417
      %v5419 = vrot.slane %v5418, 4
      %v5421 = vshll.u32 %v5322, 16
      %v5423 = vrot.slane %v5421, 5
      %v5424 = vsel %vm5326, %v5419, %v5423
      %v5426 = vshrl.u32 %v5315, 16
      %v5428 = vrot.slane %v5426, 4
      %v5429 = vshll.u32 %v5315, 16
      %v5431 = vrot.slane %v5429, 5
      %v5432 = vor.u32 %v5428, %v5431
      %v5433 = vrot.slane %v5432, 4
      %v5435 = vshll.u32 %v5323, 16
      %v5437 = vrot.slane %v5435, 5
      %v5438 = vsel %vm5326, %v5433, %v5437
      %v5439 = vld [vmem:[%s5257] sm:$0xe]
      %v5440 = vld [vmem:[%s5257 + $0x8] sm:$0xe]
      %v5441 = vld [vmem:[%s5257 + $0x10] sm:$0xe]
      %v5442 = vld [vmem:[%s5257 + $0x18] sm:$0xe]
      %v5443 = vld [vmem:[%s5257 + $0x20] sm:$0xe]
      %v5444 = vld [vmem:[%s5257 + $0x28] sm:$0xe]
      %v5445 = vld [vmem:[%s5257 + $0x30] sm:$0xe]
      %v5446 = vld [vmem:[%s5257 + $0x38] sm:$0xe]
      %vm5463 = vmor %vm408, %vm568
      %v5464 = vrot.slane %v5439, 5
      %v5465 = vrot.slane %v5464, 4
      %v5466 = vrot.slane %v5316, 5
      %v5467 = vsel %vm5463, %v5465, %v5466
      %v5468 = vrot.slane %v5440, 5
      %v5469 = vrot.slane %v5468, 4
      %v5470 = vrot.slane %v5317, 5
      %v5471 = vsel %vm5463, %v5469, %v5470
      %v5472 = vrot.slane %v5441, 5
      %v5473 = vrot.slane %v5472, 4
      %v5474 = vrot.slane %v5318, 5
      %v5475 = vsel %vm5463, %v5473, %v5474
      %v5476 = vrot.slane %v5442, 5
      %v5477 = vrot.slane %v5476, 4
      %v5478 = vrot.slane %v5319, 5
      %v5479 = vsel %vm5463, %v5477, %v5478
      %v5480 = vrot.slane %v5443, 5
      %v5481 = vrot.slane %v5480, 4
      %v5482 = vrot.slane %v5320, 5
      %v5483 = vsel %vm5463, %v5481, %v5482
      %v5484 = vrot.slane %v5444, 5
      %v5485 = vrot.slane %v5484, 4
      %v5486 = vrot.slane %v5321, 5
      %v5487 = vsel %vm5463, %v5485, %v5486
      %v5488 = vrot.slane %v5445, 5
      %v5489 = vrot.slane %v5488, 4
      %v5490 = vrot.slane %v5322, 5
      %v5491 = vsel %vm5463, %v5489, %v5490
      %v5492 = vrot.slane %v5446, 5
      %v5493 = vrot.slane %v5492, 4
      %v5494 = vrot.slane %v5323, 5
      %v5495 = vsel %vm5463, %v5493, %v5494
      %v5504 = vunpack.c.l.b16 %v5308
      %v5505 = vunpack.c.l.b16 %v5309
      %v5506 = vunpack.c.l.b16 %v5310
      %v5507 = vunpack.c.l.b16 %v5311
      %v5508 = vunpack.c.l.b16 %v5312
      %v5509 = vunpack.c.l.b16 %v5313
      %v5510 = vunpack.c.l.b16 %v5314
      %v5511 = vunpack.c.l.b16 %v5315
      %v5512 = vpack.c.b16 %v5505, %v5504
      %v5513 = vpack.c.b16 %v5507, %v5506
      %v5514 = vpack.c.b16 %v5509, %v5508
      %v5515 = vpack.c.b16 %v5511, %v5510
      %v5520 = vunpack.c.l.b16 %v5340
      %v5521 = vunpack.c.l.b16 %v5354
      %v5522 = vunpack.c.l.b16 %v5368
      %v5523 = vunpack.c.l.b16 %v5382
      %v5524 = vunpack.c.l.b16 %v5396
      %v5525 = vunpack.c.l.b16 %v5410
      %v5526 = vunpack.c.l.b16 %v5424
      %v5527 = vunpack.c.l.b16 %v5438
      %v5528 = vpack.c.b16 %v5521, %v5520
      %v5529 = vpack.c.b16 %v5523, %v5522
      %v5530 = vpack.c.b16 %v5525, %v5524
      %v5531 = vpack.c.b16 %v5527, %v5526
      %v5536 = vunpack.c.l.b16 %v5467
      %v5537 = vunpack.c.l.b16 %v5471
      %v5538 = vunpack.c.l.b16 %v5475
      %v5539 = vunpack.c.l.b16 %v5479
      %v5540 = vunpack.c.l.b16 %v5483
      %v5541 = vunpack.c.l.b16 %v5487
      %v5542 = vunpack.c.l.b16 %v5491
      %v5543 = vunpack.c.l.b16 %v5495
      %v5544 = vpack.c.b16 %v5537, %v5536
      %v5545 = vpack.c.b16 %v5539, %v5538
      %v5546 = vpack.c.b16 %v5541, %v5540
      %v5547 = vpack.c.b16 %v5543, %v5542
      %v5552 = vld [vmem:[%s4] sm:$0xf]
      %v5553 = vld [vmem:[%s4 + $0x4] sm:$0xf]
      %v5554 = vld [vmem:[%s4 + $0x8] sm:$0xf]
      %v5555 = vld [vmem:[%s4 + $0xc] sm:$0xf]
      %v5556 = vld [vmem:[%s4 + $0x10] sm:$0xf]
      %v5557 = vld [vmem:[%s4 + $0x14] sm:$0xf]
      %v5558 = vld [vmem:[%s4 + $0x18] sm:$0xf]
      %v5559 = vld [vmem:[%s4 + $0x1c] sm:$0xf]
      %v5560 = vld [vmem:[%s4 + $0x20] sm:$0xf]
      %v5561 = vld [vmem:[%s4 + $0x24] sm:$0xf]
      %v5562 = vld [vmem:[%s4 + $0x28] sm:$0xf]
      %v5563 = vld [vmem:[%s4 + $0x2c] sm:$0xf]
      %v5564 = vld [vmem:[%s4 + $0x30] sm:$0xf]
      %v5565 = vld [vmem:[%s4 + $0x34] sm:$0xf]
      %v5566 = vld [vmem:[%s4 + $0x38] sm:$0xf]
      %v5567 = vld [vmem:[%s4 + $0x3c] sm:$0xf]
      %v5568 = vld [vmem:[%s4 + $0x40] sm:$0xf]
      %v5569 = vld [vmem:[%s4 + $0x44] sm:$0xf]
      %v5570 = vld [vmem:[%s4 + $0x48] sm:$0xf]
      %v5571 = vld [vmem:[%s4 + $0x4c] sm:$0xf]
      %v5572 = vld [vmem:[%s4 + $0x50] sm:$0xf]
      %v5573 = vld [vmem:[%s4 + $0x54] sm:$0xf]
      %v5574 = vld [vmem:[%s4 + $0x58] sm:$0xf]
      %v5575 = vld [vmem:[%s4 + $0x5c] sm:$0xf]
      %v5576 = vld [vmem:[%s4 + $0x60] sm:$0xf]
      %v5577 = vld [vmem:[%s4 + $0x64] sm:$0xf]
      %v5578 = vld [vmem:[%s4 + $0x68] sm:$0xf]
      %v5579 = vld [vmem:[%s4 + $0x6c] sm:$0xf]
      %v5580 = vld [vmem:[%s4 + $0x70] sm:$0xf]
      %v5581 = vld [vmem:[%s4 + $0x74] sm:$0xf]
      %v5582 = vld [vmem:[%s4 + $0x78] sm:$0xf]
      %v5583 = vld [vmem:[%s4 + $0x7c] sm:$0xf]
      %v5584 = vld [vmem:[%s4 + $0x80] sm:$0xf]
      %v5585 = vld [vmem:[%s4 + $0x84] sm:$0xf]
      %v5586 = vld [vmem:[%s4 + $0x88] sm:$0xf]
      %v5587 = vld [vmem:[%s4 + $0x8c] sm:$0xf]
      %v5588 = vld [vmem:[%s4 + $0x90] sm:$0xf]
      %v5589 = vld [vmem:[%s4 + $0x94] sm:$0xf]
      %v5590 = vld [vmem:[%s4 + $0x98] sm:$0xf]
      %v5591 = vld [vmem:[%s4 + $0x9c] sm:$0xf]
      %v5592 = vld [vmem:[%s4 + $0xa0] sm:$0xf]
      %v5593 = vld [vmem:[%s4 + $0xa4] sm:$0xf]
      %v5594 = vld [vmem:[%s4 + $0xa8] sm:$0xf]
      %v5595 = vld [vmem:[%s4 + $0xac] sm:$0xf]
      %v5596 = vld [vmem:[%s4 + $0xb0] sm:$0xf]
      %v5597 = vld [vmem:[%s4 + $0xb4] sm:$0xf]
      %v5598 = vld [vmem:[%s4 + $0xb8] sm:$0xf]
      %v5599 = vld [vmem:[%s4 + $0xbc] sm:$0xf]
      %v5648 = vunpack.c.l.b16 %v5552
      %v5649 = vunpack.c.l.b16 %v5553
      %v5650 = vunpack.c.l.b16 %v5554
      %v5651 = vunpack.c.l.b16 %v5555
      %v5652 = vunpack.c.l.b16 %v5556
      %v5653 = vunpack.c.l.b16 %v5557
      %v5654 = vunpack.c.l.b16 %v5558
      %v5655 = vunpack.c.l.b16 %v5559
      %v5656 = vunpack.c.l.b16 %v5560
      %v5657 = vunpack.c.l.b16 %v5561
      %v5658 = vunpack.c.l.b16 %v5562
      %v5659 = vunpack.c.l.b16 %v5563
      %v5660 = vunpack.c.l.b16 %v5564
      %v5661 = vunpack.c.l.b16 %v5565
      %v5662 = vunpack.c.l.b16 %v5566
      %v5663 = vunpack.c.l.b16 %v5567
      %v5664 = vunpack.c.l.b16 %v5568
      %v5665 = vunpack.c.l.b16 %v5569
      %v5666 = vunpack.c.l.b16 %v5570
      %v5667 = vunpack.c.l.b16 %v5571
      %v5668 = vunpack.c.l.b16 %v5572
      %v5669 = vunpack.c.l.b16 %v5573
      %v5670 = vunpack.c.l.b16 %v5574
      %v5671 = vunpack.c.l.b16 %v5575
      %v5672 = vunpack.c.l.b16 %v5576
      %v5673 = vunpack.c.l.b16 %v5577
      %v5674 = vunpack.c.l.b16 %v5578
      %v5675 = vunpack.c.l.b16 %v5579
      %v5676 = vunpack.c.l.b16 %v5580
      %v5677 = vunpack.c.l.b16 %v5581
      %v5678 = vunpack.c.l.b16 %v5582
      %v5679 = vunpack.c.l.b16 %v5583
      %v5680 = vunpack.c.l.b16 %v5584
      %v5681 = vunpack.c.l.b16 %v5585
      %v5682 = vunpack.c.l.b16 %v5586
      %v5683 = vunpack.c.l.b16 %v5587
      %v5684 = vunpack.c.l.b16 %v5588
      %v5685 = vunpack.c.l.b16 %v5589
      %v5686 = vunpack.c.l.b16 %v5590
      %v5687 = vunpack.c.l.b16 %v5591
      %v5688 = vunpack.c.l.b16 %v5592
      %v5689 = vunpack.c.l.b16 %v5593
      %v5690 = vunpack.c.l.b16 %v5594
      %v5691 = vunpack.c.l.b16 %v5595
      %v5692 = vunpack.c.l.b16 %v5596
      %v5693 = vunpack.c.l.b16 %v5597
      %v5694 = vunpack.c.l.b16 %v5598
      %v5695 = vunpack.c.l.b16 %v5599
      %v5696 = vpack.c.b16 %v5649, %v5648
      %v5697 = vpack.c.b16 %v5651, %v5650
      %v5698 = vpack.c.b16 %v5653, %v5652
      %v5699 = vpack.c.b16 %v5655, %v5654
      %v5700 = vpack.c.b16 %v5657, %v5656
      %v5701 = vpack.c.b16 %v5659, %v5658
      %v5702 = vpack.c.b16 %v5661, %v5660
      %v5703 = vpack.c.b16 %v5663, %v5662
      %v5704 = vpack.c.b16 %v5665, %v5664
      %v5705 = vpack.c.b16 %v5667, %v5666
      %v5706 = vpack.c.b16 %v5669, %v5668
      %v5707 = vpack.c.b16 %v5671, %v5670
      %v5708 = vpack.c.b16 %v5673, %v5672
      %v5709 = vpack.c.b16 %v5675, %v5674
      %v5710 = vpack.c.b16 %v5677, %v5676
      %v5711 = vpack.c.b16 %v5679, %v5678
      %v5712 = vpack.c.b16 %v5681, %v5680
      %v5713 = vpack.c.b16 %v5683, %v5682
      %v5714 = vpack.c.b16 %v5685, %v5684
      %v5715 = vpack.c.b16 %v5687, %v5686
      %v5716 = vpack.c.b16 %v5689, %v5688
      %v5717 = vpack.c.b16 %v5691, %v5690
      %v5718 = vpack.c.b16 %v5693, %v5692
      %v5719 = vpack.c.b16 %v5695, %v5694
      %5744 = vmatprep.subr.bf16.mxu0 0
      %5745 = vmatpush1.bf16.msra.mxu0 %v5696
      %5746 = vmatprep.subr.bf16.mxu0 0
      %5747 = vmatpush1.bf16.msra.mxu0 %v5697
      %5748 = vmatprep.subr.bf16.mxu0 0
      %5749 = vmatpush1.bf16.msra.mxu0 %v5698
      %5750 = vmatprep.subr.bf16.mxu0 0
      %5751 = vmatpush1.bf16.msra.mxu0 %v5699
      %5752 = vmatprep.subr.bf16.mxu0 0
      %5753 = vmatpush1.bf16.msra.mxu0 %v5700
      %5754 = vmatprep.subr.bf16.mxu0 0
      %5755 = vmatpush1.bf16.msra.mxu0 %v5701
      %5756 = vmatprep.subr.bf16.mxu0 0
      %5757 = vmatpush1.bf16.msra.mxu0 %v5702
      %5758 = vmatprep.subr.bf16.mxu0 0
      %5759 = vmatpush1.bf16.msra.mxu0 %v5703
      %5760 = vmatprep.subr.bf16.mxu0 0
      %5761 = vmatpush1.bf16.msra.mxu0 %v5704
      %5762 = vmatprep.subr.bf16.mxu0 0
      %5763 = vmatpush1.bf16.msra.mxu0 %v5705
      %5764 = vmatprep.subr.bf16.mxu0 0
      %5765 = vmatpush1.bf16.msra.mxu0 %v5706
      %5766 = vmatprep.subr.bf16.mxu0 0
      %5767 = vmatpush1.bf16.msra.mxu0 %v5707
      %5768 = vmatprep.subr.bf16.mxu0 0
      %5769 = vmatpush1.bf16.msra.mxu0 %v5708
      %5770 = vmatprep.subr.bf16.mxu0 0
      %5771 = vmatpush1.bf16.msra.mxu0 %v5709
      %5772 = vmatprep.subr.bf16.mxu0 0
      %5773 = vmatpush1.bf16.msra.mxu0 %v5710
      %5774 = vmatprep.subr.bf16.mxu0 0
      %5775 = vmatpush1.bf16.msra.mxu0 %v5711
      %5776 = vmatprep.mubr.bf16.mxu0 %v5528
      %5777 = vmatmul.mubr.bf16.gmra.mrb[0].mxu0 %v5512
      %v5778 = vpop.f32.mrb[0].mxu0
      %v5779 = vadd.f32 0.0, %v5778
      %v5780 = vpop.f32.mrb[0].mxu0
      %v5781 = vpop.f32.mrb[0].mxu0
      %v5782 = vadd.f32 0.0, %v5781
      %v5783 = vpop.f32.mrb[0].mxu0
      %5784 = vmatprep.mubr.bf16.mxu0 %v5529
      %5785 = vmatmul.mubr.bf16.gmra.mrb[0].mxu0 %v5513
      %v5786 = vpop.f32.mrb[0].mxu0
      %v5787 = vadd.f32 0.0, %v5786
      %v5788 = vpop.f32.mrb[0].mxu0
      %v5789 = vpop.f32.mrb[0].mxu0
      %v5790 = vadd.f32 0.0, %v5789
      %v5791 = vpop.f32.mrb[0].mxu0
      %5792 = vmatprep.mubr.bf16.mxu0 %v5530
      %5793 = vmatmul.mubr.bf16.gmra.mrb[0].mxu0 %v5514
      %v5794 = vpop.f32.mrb[0].mxu0
      %v5795 = vadd.f32 0.0, %v5794
      %v5796 = vpop.f32.mrb[0].mxu0
      %v5797 = vpop.f32.mrb[0].mxu0
      %v5798 = vadd.f32 0.0, %v5797
      %v5799 = vpop.f32.mrb[0].mxu0
      %5800 = vmatprep.mubr.bf16.mxu0 %v5531
      %5801 = vmatmul.mubr.bf16.gmra.mrb[0].mxu0 %v5515
      %v5802 = vpop.f32.mrb[0].mxu0
      %v5803 = vadd.f32 0.0, %v5802
      %v5804 = vpop.f32.mrb[0].mxu0
      %v5805 = vpop.f32.mrb[0].mxu0
      %v5806 = vadd.f32 0.0, %v5805
      %v5807 = vpop.f32.mrb[0].mxu0
      %5808 = vdwg.mxu0
      %5809 = vmatprep.subr.bf16.mxu0 0
      %5810 = vmatpush1.bf16.msra.mxu0 %v5712
      %5811 = vmatprep.subr.bf16.mxu0 0
      %5812 = vmatpush1.bf16.msra.mxu0 %v5713
      %5813 = vmatprep.subr.bf16.mxu0 0
      %5814 = vmatpush1.bf16.msra.mxu0 %v5714
      %5815 = vmatprep.subr.bf16.mxu0 0
      %5816 = vmatpush1.bf16.msra.mxu0 %v5715
      %5817 = vmatprep.subr.bf16.mxu0 0
      %5818 = vmatpush1.bf16.msra.mxu0 %v5716
      %5819 = vmatprep.subr.bf16.mxu0 0
      %5820 = vmatpush1.bf16.msra.mxu0 %v5717
      %5821 = vmatprep.subr.bf16.mxu0 0
      %5822 = vmatpush1.bf16.msra.mxu0 %v5718
      %5823 = vmatprep.subr.bf16.mxu0 0
      %5824 = vmatpush1.bf16.msra.mxu0 %v5719
      %5825 = vmatprep.subr.bf16.mxu0 0
      %5826 = vmatpush1.bf16.msra.mxu0 0
      %5827 = vmatprep.subr.bf16.mxu0 0
      %5828 = vmatpush1.bf16.msra.mxu0 0
      %5829 = vmatprep.subr.bf16.mxu0 0
      %5830 = vmatpush1.bf16.msra.mxu0 0
      %5831 = vmatprep.subr.bf16.mxu0 0
      %5832 = vmatpush1.bf16.msra.mxu0 0
      %5833 = vmatprep.subr.bf16.mxu0 0
      %5834 = vmatpush1.bf16.msra.mxu0 0
      %5835 = vmatprep.subr.bf16.mxu0 0
      %5836 = vmatpush1.bf16.msra.mxu0 0
      %5837 = vmatprep.subr.bf16.mxu0 0
      %5838 = vmatpush1.bf16.msra.mxu0 0
      %5839 = vmatprep.subr.bf16.mxu0 0
      %5840 = vmatpush1.bf16.msra.mxu0 0
      %5841 = vmatprep.mubr.bf16.mxu0 0
      %5842 = vmatmul.mubr.bf16.gmra.mrb[0].mxu0 %v5544
      %v5843 = vpop.f32.mrb[0].mxu0
      %v5844 = vadd.f32 %v5779, %v5843
      %v5845 = vpop.f32.mrb[0].mxu0
      %v5846 = vpop.f32.mrb[0].mxu0
      %v5847 = vadd.f32 %v5782, %v5846
      %v5848 = vpop.f32.mrb[0].mxu0
      %5849 = vmatprep.mubr.bf16.mxu0 0
      %5850 = vmatmul.mubr.bf16.gmra.mrb[0].mxu0 %v5545
      %v5851 = vpop.f32.mrb[0].mxu0
      %v5852 = vadd.f32 %v5787, %v5851
      %v5853 = vpop.f32.mrb[0].mxu0
      %v5854 = vpop.f32.mrb[0].mxu0
      %v5855 = vadd.f32 %v5790, %v5854
      %v5856 = vpop.f32.mrb[0].mxu0
      %5857 = vmatprep.mubr.bf16.mxu0 0
      %5858 = vmatmul.mubr.bf16.gmra.mrb[0].mxu0 %v5546
      %v5859 = vpop.f32.mrb[0].mxu0
      %v5860 = vadd.f32 %v5795, %v5859
      %v5861 = vpop.f32.mrb[0].mxu0
      %v5862 = vpop.f32.mrb[0].mxu0
      %v5863 = vadd.f32 %v5798, %v5862
      %v5864 = vpop.f32.mrb[0].mxu0
      %5865 = vmatprep.mubr.bf16.mxu0 0
      %5866 = vmatmul.mubr.bf16.gmra.mrb[0].mxu0 %v5547
      %v5867 = vpop.f32.mrb[0].mxu0
      %v5868 = vadd.f32 %v5803, %v5867
      %v5869 = vpop.f32.mrb[0].mxu0
      %v5870 = vpop.f32.mrb[0].mxu0
      %v5871 = vadd.f32 %v5806, %v5870
      %v5872 = vpop.f32.mrb[0].mxu0
      %5873 = vdwg.mxu0
      %v5874 = vld [vmem:[%s7 + $0x1] sm:$0x1]
      %v5875 = vlaneseq
      %v5876 = vshrl.u32 %v5875, 7
      %v5877 = vsub.s32 0, %v5876
      %v5878 = vrot.slane %v5874, %v5877
      %v5879 = vmul.f32 %v5844, %v5878
      %v5880 = vmul.f32 %v5847, %v5878
      %v5881 = vmul.f32 %v5852, %v5878
      %v5882 = vmul.f32 %v5855, %v5878
      %v5883 = vmul.f32 %v5860, %v5878
      %v5884 = vmul.f32 %v5863, %v5878
      %v5885 = vmul.f32 %v5868, %v5878
      %v5886 = vmul.f32 %v5871, %v5878
      %v5887 = vld [vmem:[%s8 + $0x1] sm:$0x1]
      %v5888 = vlaneseq
      %v5889 = vshrl.u32 %v5888, 7
      %v5890 = vsub.s32 0, %v5889
      %v5891 = vrot.slane %v5887, %v5890
      %v5892 = vadd.f32 %v5879, %v5891
      %v5893 = vadd.f32 %v5880, %v5891
      %v5894 = vadd.f32 %v5881, %v5891
      %v5895 = vadd.f32 %v5882, %v5891
      %v5896 = vadd.f32 %v5883, %v5891
      %v5897 = vadd.f32 %v5884, %v5891
      %v5898 = vadd.f32 %v5885, %v5891
      %v5899 = vadd.f32 %v5886, %v5891
      %vm5900 = vcmp.gt.f32.partialorder %v5892, 0.0
      %vm5901 = vcmp.gt.f32.partialorder %v5893, 0.0
      %vm5902 = vcmp.gt.f32.partialorder %v5894, 0.0
      %vm5903 = vcmp.gt.f32.partialorder %v5895, 0.0
      %vm5904 = vcmp.gt.f32.partialorder %v5896, 0.0
      %vm5905 = vcmp.gt.f32.partialorder %v5897, 0.0
      %vm5906 = vcmp.gt.f32.partialorder %v5898, 0.0
      %vm5907 = vcmp.gt.f32.partialorder %v5899, 0.0
      %v5908 = vmul.f32 %v5892, 0.01
      %v5909 = vmul.f32 %v5893, 0.01
      %v5910 = vmul.f32 %v5894, 0.01
      %v5911 = vmul.f32 %v5895, 0.01
      %v5912 = vmul.f32 %v5896, 0.01
      %v5913 = vmul.f32 %v5897, 0.01
      %v5914 = vmul.f32 %v5898, 0.01
      %v5915 = vmul.f32 %v5899, 0.01
      %v5916 = vsel %vm5900, %v5892, %v5908
      %v5917 = vsel %vm5901, %v5893, %v5909
      %v5918 = vsel %vm5902, %v5894, %v5910
      %v5919 = vsel %vm5903, %v5895, %v5911
      %v5920 = vsel %vm5904, %v5896, %v5912
      %v5921 = vsel %vm5905, %v5897, %v5913
      %v5922 = vsel %vm5906, %v5898, %v5914
      %v5923 = vsel %vm5907, %v5899, %v5915
      %v5924 = vpack.c.bf16 %v5916, %v5916
      %v5925 = vpack.c.bf16 %v5917, %v5917
      %v5926 = vpack.c.bf16 %v5918, %v5918
      %v5927 = vpack.c.bf16 %v5919, %v5919
      %v5928 = vpack.c.bf16 %v5920, %v5920
      %v5929 = vpack.c.bf16 %v5921, %v5921
      %v5930 = vpack.c.bf16 %v5922, %v5922
      %v5931 = vpack.c.bf16 %v5923, %v5923
      %v5940 = vunpack.c.l.b16 %v5924
      %v5941 = vunpack.c.l.b16 %v5925
      %v5942 = vunpack.c.l.b16 %v5926
      %v5943 = vunpack.c.l.b16 %v5927
      %v5944 = vunpack.c.l.b16 %v5928
      %v5945 = vunpack.c.l.b16 %v5929
      %v5946 = vunpack.c.l.b16 %v5930
      %v5947 = vunpack.c.l.b16 %v5931
      %v5948 = vpack.c.b16 %v5940, %v5940
      %v5949 = vpack.c.b16 %v5941, %v5941
      %v5950 = vpack.c.b16 %v5942, %v5942
      %v5951 = vpack.c.b16 %v5943, %v5943
      %v5952 = vpack.c.b16 %v5944, %v5944
      %v5953 = vpack.c.b16 %v5945, %v5945
      %v5954 = vpack.c.b16 %v5946, %v5946
      %v5955 = vpack.c.b16 %v5947, %v5947
      %v5957 = vshrl.u32 %v5948, 16
      %v5959 = vrot.slane %v5957, 7
      %v5960 = vshll.u32 %v5948, 16
      %v5962 = vor.u32 %v5959, %v5960
      %v5963 = vrot.slane %v5959, 4
      %v5965 = vshrl.u32 %v5949, 16
      %v5967 = vrot.slane %v5965, 7
      %v5968 = vshll.u32 %v5949, 16
      %v5970 = vor.u32 %v5967, %v5968
      %v5971 = vrot.slane %v5967, 4
      %v5973 = vshrl.u32 %v5950, 16
      %v5975 = vrot.slane %v5973, 7
      %v5976 = vshll.u32 %v5950, 16
      %v5978 = vor.u32 %v5975, %v5976
      %v5979 = vrot.slane %v5975, 4
      %v5981 = vshrl.u32 %v5951, 16
      %v5983 = vrot.slane %v5981, 7
      %v5984 = vshll.u32 %v5951, 16
      %v5986 = vor.u32 %v5983, %v5984
      %v5987 = vrot.slane %v5983, 4
      %v5989 = vshrl.u32 %v5952, 16
      %v5991 = vrot.slane %v5989, 7
      %v5992 = vshll.u32 %v5952, 16
      %v5994 = vor.u32 %v5991, %v5992
      %v5995 = vrot.slane %v5991, 4
      %v5997 = vshrl.u32 %v5953, 16
      %v5999 = vrot.slane %v5997, 7
      %v6000 = vshll.u32 %v5953, 16
      %v6002 = vor.u32 %v5999, %v6000
      %v6003 = vrot.slane %v5999, 4
      %v6005 = vshrl.u32 %v5954, 16
      %v6007 = vrot.slane %v6005, 7
      %v6008 = vshll.u32 %v5954, 16
      %v6010 = vor.u32 %v6007, %v6008
      %v6011 = vrot.slane %v6007, 4
      %v6013 = vshrl.u32 %v5955, 16
      %v6015 = vrot.slane %v6013, 7
      %v6016 = vshll.u32 %v5955, 16
      %v6018 = vor.u32 %v6015, %v6016
      %v6019 = vrot.slane %v6015, 4
      %v6036 = vsel %vm5259, %v5962, %v5308
      %6037 = vst [vmem:[%s5257] sm:$0xf] %v6036
      %v6038 = vld [vmem:[%s5257 + $0x4] sm:$0x1]
      %v6039 = vsel %vm359, %v5963, %v6038
      %6040 = vst [vmem:[%s5257 + $0x4] sm:$0x1] %v6039
      %v6041 = vld [vmem:[%s5257 + $0x8] sm:$0xf]
      %v6042 = vsel %vm5259, %v5970, %v6041
      %6043 = vst [vmem:[%s5257 + $0x8] sm:$0xf] %v6042
      %v6044 = vld [vmem:[%s5257 + $0xc] sm:$0x1]
      %v6045 = vsel %vm359, %v5971, %v6044
      %6046 = vst [vmem:[%s5257 + $0xc] sm:$0x1] %v6045
      %v6047 = vld [vmem:[%s5257 + $0x10] sm:$0xf]
      %v6048 = vsel %vm5259, %v5978, %v6047
      %6049 = vst [vmem:[%s5257 + $0x10] sm:$0xf] %v6048
      %v6050 = vld [vmem:[%s5257 + $0x14] sm:$0x1]
      %v6051 = vsel %vm359, %v5979, %v6050
      %6052 = vst [vmem:[%s5257 + $0x14] sm:$0x1] %v6051
      %v6053 = vld [vmem:[%s5257 + $0x18] sm:$0xf]
      %v6054 = vsel %vm5259, %v5986, %v6053
      %6055 = vst [vmem:[%s5257 + $0x18] sm:$0xf] %v6054
      %v6056 = vld [vmem:[%s5257 + $0x1c] sm:$0x1]
      %v6057 = vsel %vm359, %v5987, %v6056
      %6058 = vst [vmem:[%s5257 + $0x1c] sm:$0x1] %v6057
      %v6059 = vld [vmem:[%s5257 + $0x20] sm:$0xf]
      %v6060 = vsel %vm5259, %v5994, %v6059
      %6061 = vst [vmem:[%s5257 + $0x20] sm:$0xf] %v6060
      %v6062 = vld [vmem:[%s5257 + $0x24] sm:$0x1]
      %v6063 = vsel %vm359, %v5995, %v6062
      %6064 = vst [vmem:[%s5257 + $0x24] sm:$0x1] %v6063
      %v6065 = vld [vmem:[%s5257 + $0x28] sm:$0xf]
      %v6066 = vsel %vm5259, %v6002, %v6065
      %6067 = vst [vmem:[%s5257 + $0x28] sm:$0xf] %v6066
      %v6068 = vld [vmem:[%s5257 + $0x2c] sm:$0x1]
      %v6069 = vsel %vm359, %v6003, %v6068
      %6070 = vst [vmem:[%s5257 + $0x2c] sm:$0x1] %v6069
      %v6071 = vld [vmem:[%s5257 + $0x30] sm:$0xf]
      %v6072 = vsel %vm5259, %v6010, %v6071
      %6073 = vst [vmem:[%s5257 + $0x30] sm:$0xf] %v6072
      %v6074 = vld [vmem:[%s5257 + $0x34] sm:$0x1]
      %v6075 = vsel %vm359, %v6011, %v6074
      %6076 = vst [vmem:[%s5257 + $0x34] sm:$0x1] %v6075
      %v6077 = vld [vmem:[%s5257 + $0x38] sm:$0xf]
      %v6078 = vsel %vm5259, %v6018, %v6077
      %6079 = vst [vmem:[%s5257 + $0x38] sm:$0xf] %v6078
      %v6080 = vld [vmem:[%s5257 + $0x3c] sm:$0x1]
      %v6081 = vsel %vm359, %v6019, %v6080
      %6082 = vst [vmem:[%s5257 + $0x3c] sm:$0x1] %v6081
      %v6083 = vld [vmem:[#allocation4] sm:$0xf]
      %v6084 = vld [vmem:[#allocation4 + $0x4] sm:$0x1]
      %v6085 = vld [vmem:[#allocation4 + $0x8] sm:$0xf]
      %v6086 = vld [vmem:[#allocation4 + $0xc] sm:$0x1]
      %v6087 = vld [vmem:[#allocation4 + $0x10] sm:$0xf]
      %v6088 = vld [vmem:[#allocation4 + $0x14] sm:$0x1]
      %v6089 = vld [vmem:[#allocation4 + $0x18] sm:$0xf]
      %v6090 = vld [vmem:[#allocation4 + $0x1c] sm:$0x1]
      %v6091 = vld [vmem:[#allocation4 + $0x20] sm:$0xf]
      %v6092 = vld [vmem:[#allocation4 + $0x24] sm:$0x1]
      %v6093 = vld [vmem:[#allocation4 + $0x28] sm:$0xf]
      %v6094 = vld [vmem:[#allocation4 + $0x2c] sm:$0x1]
      %v6095 = vld [vmem:[#allocation4 + $0x30] sm:$0xf]
      %v6096 = vld [vmem:[#allocation4 + $0x34] sm:$0x1]
      %v6097 = vld [vmem:[#allocation4 + $0x38] sm:$0xf]
      %v6098 = vld [vmem:[#allocation4 + $0x3c] sm:$0x1]
      %v6100 = vshrl.u32 %v6083, 16
      %v6102 = vrot.slane %v6100, 4
      %v6103 = vshll.u32 %v6083, 16
      %v6105 = vrot.slane %v6103, 5
      %v6106 = vor.u32 %v6102, %v6105
      %v6107 = vrot.slane %v6106, 4
      %v6109 = vshll.u32 %v6084, 16
      %v6111 = vrot.slane %v6109, 5
      %v6112 = vsel %vm5326, %v6107, %v6111
      %v6114 = vshrl.u32 %v6085, 16
      %v6116 = vrot.slane %v6114, 4
      %v6117 = vshll.u32 %v6085, 16
      %v6119 = vrot.slane %v6117, 5
      %v6120 = vor.u32 %v6116, %v6119
      %v6121 = vrot.slane %v6120, 4
      %v6123 = vshll.u32 %v6086, 16
      %v6125 = vrot.slane %v6123, 5
      %v6126 = vsel %vm5326, %v6121, %v6125
      %v6128 = vshrl.u32 %v6087, 16
      %v6130 = vrot.slane %v6128, 4
      %v6131 = vshll.u32 %v6087, 16
      %v6133 = vrot.slane %v6131, 5
      %v6134 = vor.u32 %v6130, %v6133
      %v6135 = vrot.slane %v6134, 4
      %v6137 = vshll.u32 %v6088, 16
      %v6139 = vrot.slane %v6137, 5
      %v6140 = vsel %vm5326, %v6135, %v6139
      %v6142 = vshrl.u32 %v6089, 16
      %v6144 = vrot.slane %v6142, 4
      %v6145 = vshll.u32 %v6089, 16
      %v6147 = vrot.slane %v6145, 5
      %v6148 = vor.u32 %v6144, %v6147
      %v6149 = vrot.slane %v6148, 4
      %v6151 = vshll.u32 %v6090, 16
      %v6153 = vrot.slane %v6151, 5
      %v6154 = vsel %vm5326, %v6149, %v6153
      %v6156 = vshrl.u32 %v6091, 16
      %v6158 = vrot.slane %v6156, 4
      %v6159 = vshll.u32 %v6091, 16
      %v6161 = vrot.slane %v6159, 5
      %v6162 = vor.u32 %v6158, %v6161
      %v6163 = vrot.slane %v6162, 4
      %v6165 = vshll.u32 %v6092, 16
      %v6167 = vrot.slane %v6165, 5
      %v6168 = vsel %vm5326, %v6163, %v6167
      %v6170 = vshrl.u32 %v6093, 16
      %v6172 = vrot.slane %v6170, 4
      %v6173 = vshll.u32 %v6093, 16
      %v6175 = vrot.slane %v6173, 5
      %v6176 = vor.u32 %v6172, %v6175
      %v6177 = vrot.slane %v6176, 4
      %v6179 = vshll.u32 %v6094, 16
      %v6181 = vrot.slane %v6179, 5
      %v6182 = vsel %vm5326, %v6177, %v6181
      %v6184 = vshrl.u32 %v6095, 16
      %v6186 = vrot.slane %v6184, 4
      %v6187 = vshll.u32 %v6095, 16
      %v6189 = vrot.slane %v6187, 5
      %v6190 = vor.u32 %v6186, %v6189
      %v6191 = vrot.slane %v6190, 4
      %v6193 = vshll.u32 %v6096, 16
      %v6195 = vrot.slane %v6193, 5
      %v6196 = vsel %vm5326, %v6191, %v6195
      %v6198 = vshrl.u32 %v6097, 16
      %v6200 = vrot.slane %v6198, 4
      %v6201 = vshll.u32 %v6097, 16
      %v6203 = vrot.slane %v6201, 5
      %v6204 = vor.u32 %v6200, %v6203
      %v6205 = vrot.slane %v6204, 4
      %v6207 = vshll.u32 %v6098, 16
      %v6209 = vrot.slane %v6207, 5
      %v6210 = vsel %vm5326, %v6205, %v6209
      %v6211 = vld [vmem:[%s5] sm:$0xf]
      %v6212 = vld [vmem:[%s5 + $0x4] sm:$0xf]
      %v6213 = vld [vmem:[%s5 + $0x8] sm:$0xf]
      %v6214 = vld [vmem:[%s5 + $0xc] sm:$0xf]
      %v6215 = vld [vmem:[%s5 + $0x10] sm:$0xf]
      %v6216 = vld [vmem:[%s5 + $0x14] sm:$0xf]
      %v6217 = vld [vmem:[%s5 + $0x18] sm:$0xf]
      %v6218 = vld [vmem:[%s5 + $0x1c] sm:$0xf]
      %v6219 = vld [vmem:[%s5 + $0x20] sm:$0xf]
      %v6220 = vld [vmem:[%s5 + $0x24] sm:$0xf]
      %v6221 = vld [vmem:[%s5 + $0x28] sm:$0xf]
      %v6222 = vld [vmem:[%s5 + $0x2c] sm:$0xf]
      %v6223 = vld [vmem:[%s5 + $0x30] sm:$0xf]
      %v6224 = vld [vmem:[%s5 + $0x34] sm:$0xf]
      %v6225 = vld [vmem:[%s5 + $0x38] sm:$0xf]
      %v6226 = vld [vmem:[%s5 + $0x3c] sm:$0xf]
      %v6227 = vld [vmem:[%s5257] sm:$0xf]
      %v6228 = vld [vmem:[%s5257 + $0x4] sm:$0x1]
      %v6229 = vld [vmem:[%s5257 + $0x8] sm:$0xf]
      %v6230 = vld [vmem:[%s5257 + $0xc] sm:$0x1]
      %v6231 = vld [vmem:[%s5257 + $0x10] sm:$0xf]
      %v6232 = vld [vmem:[%s5257 + $0x14] sm:$0x1]
      %v6233 = vld [vmem:[%s5257 + $0x18] sm:$0xf]
      %v6234 = vld [vmem:[%s5257 + $0x1c] sm:$0x1]
      %v6235 = vld [vmem:[%s5257 + $0x20] sm:$0xf]
      %v6236 = vld [vmem:[%s5257 + $0x24] sm:$0x1]
      %v6237 = vld [vmem:[%s5257 + $0x28] sm:$0xf]
      %v6238 = vld [vmem:[%s5257 + $0x2c] sm:$0x1]
      %v6239 = vld [vmem:[%s5257 + $0x30] sm:$0xf]
      %v6240 = vld [vmem:[%s5257 + $0x34] sm:$0x1]
      %v6241 = vld [vmem:[%s5257 + $0x38] sm:$0xf]
      %v6242 = vld [vmem:[%s5257 + $0x3c] sm:$0x1]
      %v6244 = vshrl.u32 %v6227, 16
      %v6246 = vrot.slane %v6244, 4
      %v6247 = vshll.u32 %v6227, 16
      %v6249 = vrot.slane %v6247, 5
      %v6250 = vor.u32 %v6246, %v6249
      %v6251 = vrot.slane %v6250, 4
      %v6253 = vshll.u32 %v6228, 16
      %v6255 = vrot.slane %v6253, 5
      %v6256 = vsel %vm5326, %v6251, %v6255
      %v6258 = vshrl.u32 %v6229, 16
      %v6260 = vrot.slane %v6258, 4
      %v6261 = vshll.u32 %v6229, 16
      %v6263 = vrot.slane %v6261, 5
      %v6264 = vor.u32 %v6260, %v6263
      %v6265 = vrot.slane %v6264, 4
      %v6267 = vshll.u32 %v6230, 16
      %v6269 = vrot.slane %v6267, 5
      %v6270 = vsel %vm5326, %v6265, %v6269
      %v6272 = vshrl.u32 %v6231, 16
      %v6274 = vrot.slane %v6272, 4
      %v6275 = vshll.u32 %v6231, 16
      %v6277 = vrot.slane %v6275, 5
      %v6278 = vor.u32 %v6274, %v6277
      %v6279 = vrot.slane %v6278, 4
      %v6281 = vshll.u32 %v6232, 16
      %v6283 = vrot.slane %v6281, 5
      %v6284 = vsel %vm5326, %v6279, %v6283
      %v6286 = vshrl.u32 %v6233, 16
      %v6288 = vrot.slane %v6286, 4
      %v6289 = vshll.u32 %v6233, 16
      %v6291 = vrot.slane %v6289, 5
      %v6292 = vor.u32 %v6288, %v6291
      %v6293 = vrot.slane %v6292, 4
      %v6295 = vshll.u32 %v6234, 16
      %v6297 = vrot.slane %v6295, 5
      %v6298 = vsel %vm5326, %v6293, %v6297
      %v6300 = vshrl.u32 %v6235, 16
      %v6302 = vrot.slane %v6300, 4
      %v6303 = vshll.u32 %v6235, 16
      %v6305 = vrot.slane %v6303, 5
      %v6306 = vor.u32 %v6302, %v6305
      %v6307 = vrot.slane %v6306, 4
      %v6309 = vshll.u32 %v6236, 16
      %v6311 = vrot.slane %v6309, 5
      %v6312 = vsel %vm5326, %v6307, %v6311
      %v6314 = vshrl.u32 %v6237, 16
      %v6316 = vrot.slane %v6314, 4
      %v6317 = vshll.u32 %v6237, 16
      %v6319 = vrot.slane %v6317, 5
      %v6320 = vor.u32 %v6316, %v6319
      %v6321 = vrot.slane %v6320, 4
      %v6323 = vshll.u32 %v6238, 16
      %v6325 = vrot.slane %v6323, 5
      %v6326 = vsel %vm5326, %v6321, %v6325
      %v6328 = vshrl.u32 %v6239, 16
      %v6330 = vrot.slane %v6328, 4
      %v6331 = vshll.u32 %v6239, 16
      %v6333 = vrot.slane %v6331, 5
      %v6334 = vor.u32 %v6330, %v6333
      %v6335 = vrot.slane %v6334, 4
      %v6337 = vshll.u32 %v6240, 16
      %v6339 = vrot.slane %v6337, 5
      %v6340 = vsel %vm5326, %v6335, %v6339
      %v6342 = vshrl.u32 %v6241, 16
      %v6344 = vrot.slane %v6342, 4
      %v6345 = vshll.u32 %v6241, 16
      %v6347 = vrot.slane %v6345, 5
      %v6348 = vor.u32 %v6344, %v6347
      %v6349 = vrot.slane %v6348, 4
      %v6351 = vshll.u32 %v6242, 16
      %v6353 = vrot.slane %v6351, 5
      %v6354 = vsel %vm5326, %v6349, %v6353
      %s6355 = scalar_lea.vmem %s5, 64
      %v6356 = vld [vmem:[%s6355] sm:$0xf]
      %v6357 = vld [vmem:[%s6355 + $0x4] sm:$0xf]
      %v6358 = vld [vmem:[%s6355 + $0x8] sm:$0xf]
      %v6359 = vld [vmem:[%s6355 + $0xc] sm:$0xf]
      %v6360 = vld [vmem:[%s6355 + $0x10] sm:$0xf]
      %v6361 = vld [vmem:[%s6355 + $0x14] sm:$0xf]
      %v6362 = vld [vmem:[%s6355 + $0x18] sm:$0xf]
      %v6363 = vld [vmem:[%s6355 + $0x1c] sm:$0xf]
      %v6364 = vld [vmem:[%s6355 + $0x20] sm:$0xf]
      %v6365 = vld [vmem:[%s6355 + $0x24] sm:$0xf]
      %v6366 = vld [vmem:[%s6355 + $0x28] sm:$0xf]
      %v6367 = vld [vmem:[%s6355 + $0x2c] sm:$0xf]
      %v6368 = vld [vmem:[%s6355 + $0x30] sm:$0xf]
      %v6369 = vld [vmem:[%s6355 + $0x34] sm:$0xf]
      %v6370 = vld [vmem:[%s6355 + $0x38] sm:$0xf]
      %v6371 = vld [vmem:[%s6355 + $0x3c] sm:$0xf]
      %v6372 = vunpack.c.l.b16 %v6256
      %v6373 = vunpack.c.l.b16 %v6270
      %v6374 = vunpack.c.l.b16 %v6284
      %v6375 = vunpack.c.l.b16 %v6298
      %v6376 = vunpack.c.l.b16 %v6312
      %v6377 = vunpack.c.l.b16 %v6326
      %v6378 = vunpack.c.l.b16 %v6340
      %v6379 = vunpack.c.l.b16 %v6354
      %v6380 = vpack.c.b16 %v6373, %v6372
      %v6381 = vpack.c.b16 %v6375, %v6374
      %v6382 = vpack.c.b16 %v6377, %v6376
      %v6383 = vpack.c.b16 %v6379, %v6378
      %v6404 = vunpack.c.l.b16 %v6356
      %v6405 = vunpack.c.l.b16 %v6357
      %v6406 = vunpack.c.l.b16 %v6358
      %v6407 = vunpack.c.l.b16 %v6359
      %v6408 = vunpack.c.l.b16 %v6360
      %v6409 = vunpack.c.l.b16 %v6361
      %v6410 = vunpack.c.l.b16 %v6362
      %v6411 = vunpack.c.l.b16 %v6363
      %v6412 = vunpack.c.l.b16 %v6364
      %v6413 = vunpack.c.l.b16 %v6365
      %v6414 = vunpack.c.l.b16 %v6366
      %v6415 = vunpack.c.l.b16 %v6367
      %v6416 = vunpack.c.l.b16 %v6368
      %v6417 = vunpack.c.l.b16 %v6369
      %v6418 = vunpack.c.l.b16 %v6370
      %v6419 = vunpack.c.l.b16 %v6371
      %v6420 = vpack.c.b16 %v6405, %v6404
      %v6421 = vpack.c.b16 %v6407, %v6406
      %v6422 = vpack.c.b16 %v6409, %v6408
      %v6423 = vpack.c.b16 %v6411, %v6410
      %v6424 = vpack.c.b16 %v6413, %v6412
      %v6425 = vpack.c.b16 %v6415, %v6414
      %v6426 = vpack.c.b16 %v6417, %v6416
      %v6427 = vpack.c.b16 %v6419, %v6418
      %6436 = vmatprep.subr.bf16.mxu0 0
      %6437 = vmatpush1.bf16.msra.mxu0 %v6420
      %6438 = vmatprep.subr.bf16.mxu0 0
      %6439 = vmatpush1.bf16.msra.mxu0 %v6421
      %6440 = vmatprep.subr.bf16.mxu0 0
      %6441 = vmatpush1.bf16.msra.mxu0 %v6422
      %6442 = vmatprep.subr.bf16.mxu0 0
      %6443 = vmatpush1.bf16.msra.mxu0 %v6423
      %6444 = vmatprep.subr.bf16.mxu0 0
      %6445 = vmatpush1.bf16.msra.mxu0 %v6424
      %6446 = vmatprep.subr.bf16.mxu0 0
      %6447 = vmatpush1.bf16.msra.mxu0 %v6425
      %6448 = vmatprep.subr.bf16.mxu0 0
      %6449 = vmatpush1.bf16.msra.mxu0 %v6426
      %6450 = vmatprep.subr.bf16.mxu0 0
      %6451 = vmatpush1.bf16.msra.mxu0 %v6427
      %6452 = vmatprep.subr.bf16.mxu0 0
      %6453 = vmatpush1.bf16.msra.mxu0 0
      %6454 = vmatprep.subr.bf16.mxu0 0
      %6455 = vmatpush1.bf16.msra.mxu0 0
      %6456 = vmatprep.subr.bf16.mxu0 0
      %6457 = vmatpush1.bf16.msra.mxu0 0
      %6458 = vmatprep.subr.bf16.mxu0 0
      %6459 = vmatpush1.bf16.msra.mxu0 0
      %6460 = vmatprep.subr.bf16.mxu0 0
      %6461 = vmatpush1.bf16.msra.mxu0 0
      %6462 = vmatprep.subr.bf16.mxu0 0
      %6463 = vmatpush1.bf16.msra.mxu0 0
      %6464 = vmatprep.subr.bf16.mxu0 0
      %6465 = vmatpush1.bf16.msra.mxu0 0
      %6466 = vmatprep.subr.bf16.mxu0 0
      %6467 = vmatpush1.bf16.msra.mxu0 0
      %6468 = vmatprep.mubr.bf16.mxu0 0
      %6469 = vmatmul.mubr.bf16.gmra.mrb[0].mxu0 %v6380
      %v6470 = vpop.f32.mrb[0].mxu0
      %v6471 = vadd.f32 0.0, %v6470
      %v6472 = vpop.f32.mrb[0].mxu0
      %v6473 = vpop.f32.mrb[0].mxu0
      %v6474 = vadd.f32 0.0, %v6473
      %v6475 = vpop.f32.mrb[0].mxu0
      %6476 = vmatprep.mubr.bf16.mxu0 0
      %6477 = vmatmul.mubr.bf16.gmra.mrb[0].mxu0 %v6381
      %v6478 = vpop.f32.mrb[0].mxu0
      %v6479 = vadd.f32 0.0, %v6478
      %v6480 = vpop.f32.mrb[0].mxu0
      %v6481 = vpop.f32.mrb[0].mxu0
      %v6482 = vadd.f32 0.0, %v6481
      %v6483 = vpop.f32.mrb[0].mxu0
      %6484 = vmatprep.mubr.bf16.mxu0 0
      %6485 = vmatmul.mubr.bf16.gmra.mrb[0].mxu0 %v6382
      %v6486 = vpop.f32.mrb[0].mxu0
      %v6487 = vadd.f32 0.0, %v6486
      %v6488 = vpop.f32.mrb[0].mxu0
      %v6489 = vpop.f32.mrb[0].mxu0
      %v6490 = vadd.f32 0.0, %v6489
      %v6491 = vpop.f32.mrb[0].mxu0
      %6492 = vmatprep.mubr.bf16.mxu0 0
      %6493 = vmatmul.mubr.bf16.gmra.mrb[0].mxu0 %v6383
      %v6494 = vpop.f32.mrb[0].mxu0
      %v6495 = vadd.f32 0.0, %v6494
      %v6496 = vpop.f32.mrb[0].mxu0
      %v6497 = vpop.f32.mrb[0].mxu0
      %v6498 = vadd.f32 0.0, %v6497
      %v6499 = vpop.f32.mrb[0].mxu0
      %6500 = vdwg.mxu0
      %v6501 = vunpack.c.l.b16 %v6112
      %v6502 = vunpack.c.l.b16 %v6126
      %v6503 = vunpack.c.l.b16 %v6140
      %v6504 = vunpack.c.l.b16 %v6154
      %v6505 = vunpack.c.l.b16 %v6168
      %v6506 = vunpack.c.l.b16 %v6182
      %v6507 = vunpack.c.l.b16 %v6196
      %v6508 = vunpack.c.l.b16 %v6210
      %v6509 = vpack.c.b16 %v6502, %v6501
      %v6510 = vpack.c.b16 %v6504, %v6503
      %v6511 = vpack.c.b16 %v6506, %v6505
      %v6512 = vpack.c.b16 %v6508, %v6507
      %v6533 = vunpack.c.l.b16 %v6211
      %v6534 = vunpack.c.l.b16 %v6212
      %v6535 = vunpack.c.l.b16 %v6213
      %v6536 = vunpack.c.l.b16 %v6214
      %v6537 = vunpack.c.l.b16 %v6215
      %v6538 = vunpack.c.l.b16 %v6216
      %v6539 = vunpack.c.l.b16 %v6217
      %v6540 = vunpack.c.l.b16 %v6218
      %v6541 = vunpack.c.l.b16 %v6219
      %v6542 = vunpack.c.l.b16 %v6220
      %v6543 = vunpack.c.l.b16 %v6221
      %v6544 = vunpack.c.l.b16 %v6222
      %v6545 = vunpack.c.l.b16 %v6223
      %v6546 = vunpack.c.l.b16 %v6224
      %v6547 = vunpack.c.l.b16 %v6225
      %v6548 = vunpack.c.l.b16 %v6226
      %v6549 = vpack.c.b16 %v6534, %v6533
      %v6550 = vpack.c.b16 %v6536, %v6535
      %v6551 = vpack.c.b16 %v6538, %v6537
      %v6552 = vpack.c.b16 %v6540, %v6539
      %v6553 = vpack.c.b16 %v6542, %v6541
      %v6554 = vpack.c.b16 %v6544, %v6543
      %v6555 = vpack.c.b16 %v6546, %v6545
      %v6556 = vpack.c.b16 %v6548, %v6547
      %6565 = vmatprep.subr.bf16.mxu0 0
      %6566 = vmatpush1.bf16.msra.mxu0 %v6549
      %6567 = vmatprep.subr.bf16.mxu0 0
      %6568 = vmatpush1.bf16.msra.mxu0 %v6550
      %6569 = vmatprep.subr.bf16.mxu0 0
      %6570 = vmatpush1.bf16.msra.mxu0 %v6551
      %6571 = vmatprep.subr.bf16.mxu0 0
      %6572 = vmatpush1.bf16.msra.mxu0 %v6552
      %6573 = vmatprep.subr.bf16.mxu0 0
      %6574 = vmatpush1.bf16.msra.mxu0 %v6553
      %6575 = vmatprep.subr.bf16.mxu0 0
      %6576 = vmatpush1.bf16.msra.mxu0 %v6554
      %6577 = vmatprep.subr.bf16.mxu0 0
      %6578 = vmatpush1.bf16.msra.mxu0 %v6555
      %6579 = vmatprep.subr.bf16.mxu0 0
      %6580 = vmatpush1.bf16.msra.mxu0 %v6556
      %6581 = vmatprep.subr.bf16.mxu0 0
      %6582 = vmatpush1.bf16.msra.mxu0 0
      %6583 = vmatprep.subr.bf16.mxu0 0
      %6584 = vmatpush1.bf16.msra.mxu0 0
      %6585 = vmatprep.subr.bf16.mxu0 0
      %6586 = vmatpush1.bf16.msra.mxu0 0
      %6587 = vmatprep.subr.bf16.mxu0 0
      %6588 = vmatpush1.bf16.msra.mxu0 0
      %6589 = vmatprep.subr.bf16.mxu0 0
      %6590 = vmatpush1.bf16.msra.mxu0 0
      %6591 = vmatprep.subr.bf16.mxu0 0
      %6592 = vmatpush1.bf16.msra.mxu0 0
      %6593 = vmatprep.subr.bf16.mxu0 0
      %6594 = vmatpush1.bf16.msra.mxu0 0
      %6595 = vmatprep.subr.bf16.mxu0 0
      %6596 = vmatpush1.bf16.msra.mxu0 0
      %6597 = vmatprep.mubr.bf16.mxu0 0
      %6598 = vmatmul.mubr.bf16.gmra.mrb[0].mxu0 %v6509
      %v6599 = vpop.f32.mrb[0].mxu0
      %v6600 = vadd.f32 %v6471, %v6599
      %v6601 = vpop.f32.mrb[0].mxu0
      %v6602 = vpop.f32.mrb[0].mxu0
      %v6603 = vadd.f32 %v6474, %v6602
      %v6604 = vpop.f32.mrb[0].mxu0
      %6605 = vmatprep.mubr.bf16.mxu0 0
      %6606 = vmatmul.mubr.bf16.gmra.mrb[0].mxu0 %v6510
      %v6607 = vpop.f32.mrb[0].mxu0
      %v6608 = vadd.f32 %v6479, %v6607
      %v6609 = vpop.f32.mrb[0].mxu0
      %v6610 = vpop.f32.mrb[0].mxu0
      %v6611 = vadd.f32 %v6482, %v6610
      %v6612 = vpop.f32.mrb[0].mxu0
      %6613 = vmatprep.mubr.bf16.mxu0 0
      %6614 = vmatmul.mubr.bf16.gmra.mrb[0].mxu0 %v6511
      %v6615 = vpop.f32.mrb[0].mxu0
      %v6616 = vadd.f32 %v6487, %v6615
      %v6617 = vpop.f32.mrb[0].mxu0
      %v6618 = vpop.f32.mrb[0].mxu0
      %v6619 = vadd.f32 %v6490, %v6618
      %v6620 = vpop.f32.mrb[0].mxu0
      %6621 = vmatprep.mubr.bf16.mxu0 0
      %6622 = vmatmul.mubr.bf16.gmra.mrb[0].mxu0 %v6512
      %v6623 = vpop.f32.mrb[0].mxu0
      %v6624 = vadd.f32 %v6495, %v6623
      %v6625 = vpop.f32.mrb[0].mxu0
      %v6626 = vpop.f32.mrb[0].mxu0
      %v6627 = vadd.f32 %v6498, %v6626
      %v6628 = vpop.f32.mrb[0].mxu0
      %6629 = vdwg.mxu0
      %s6630 = scalar_lea.vmem [#allocation4], 16
      %v6631 = vld [vmem:[%s6630] sm:$0xf]
      %v6632 = vld [vmem:[%s6630 + $0x4] sm:$0x1]
      %v6633 = vld [vmem:[%s6630 + $0x8] sm:$0xf]
      %v6634 = vld [vmem:[%s6630 + $0xc] sm:$0x1]
      %v6635 = vld [vmem:[%s6630 + $0x10] sm:$0xf]
      %v6636 = vld [vmem:[%s6630 + $0x14] sm:$0x1]
      %v6637 = vld [vmem:[%s6630 + $0x18] sm:$0xf]
      %v6638 = vld [vmem:[%s6630 + $0x1c] sm:$0x1]
      %v6639 = vld [vmem:[%s6630 + $0x20] sm:$0xf]
      %v6640 = vld [vmem:[%s6630 + $0x24] sm:$0x1]
      %v6641 = vld [vmem:[%s6630 + $0x28] sm:$0xf]
      %v6642 = vld [vmem:[%s6630 + $0x2c] sm:$0x1]
      %v6643 = vld [vmem:[%s6630 + $0x30] sm:$0xf]
      %v6644 = vld [vmem:[%s6630 + $0x34] sm:$0x1]
      %v6645 = vld [vmem:[%s6630 + $0x38] sm:$0xf]
      %v6646 = vld [vmem:[%s6630 + $0x3c] sm:$0x1]
      %v6648 = vshrl.u32 %v6631, 16
      %v6650 = vrot.slane %v6648, 4
      %v6651 = vshll.u32 %v6631, 16
      %v6653 = vrot.slane %v6651, 5
      %v6654 = vor.u32 %v6650, %v6653
      %v6655 = vrot.slane %v6654, 4
      %v6657 = vshll.u32 %v6632, 16
      %v6659 = vrot.slane %v6657, 5
      %v6660 = vsel %vm5326, %v6655, %v6659
      %v6662 = vshrl.u32 %v6633, 16
      %v6664 = vrot.slane %v6662, 4
      %v6665 = vshll.u32 %v6633, 16
      %v6667 = vrot.slane %v6665, 5
      %v6668 = vor.u32 %v6664, %v6667
      %v6669 = vrot.slane %v6668, 4
      %v6671 = vshll.u32 %v6634, 16
      %v6673 = vrot.slane %v6671, 5
      %v6674 = vsel %vm5326, %v6669, %v6673
      %v6676 = vshrl.u32 %v6635, 16
      %v6678 = vrot.slane %v6676, 4
      %v6679 = vshll.u32 %v6635, 16
      %v6681 = vrot.slane %v6679, 5
      %v6682 = vor.u32 %v6678, %v6681
      %v6683 = vrot.slane %v6682, 4
      %v6685 = vshll.u32 %v6636, 16
      %v6687 = vrot.slane %v6685, 5
      %v6688 = vsel %vm5326, %v6683, %v6687
      %v6690 = vshrl.u32 %v6637, 16
      %v6692 = vrot.slane %v6690, 4
      %v6693 = vshll.u32 %v6637, 16
      %v6695 = vrot.slane %v6693, 5
      %v6696 = vor.u32 %v6692, %v6695
      %v6697 = vrot.slane %v6696, 4
      %v6699 = vshll.u32 %v6638, 16
      %v6701 = vrot.slane %v6699, 5
      %v6702 = vsel %vm5326, %v6697, %v6701
      %v6704 = vshrl.u32 %v6639, 16
      %v6706 = vrot.slane %v6704, 4
      %v6707 = vshll.u32 %v6639, 16
      %v6709 = vrot.slane %v6707, 5
      %v6710 = vor.u32 %v6706, %v6709
      %v6711 = vrot.slane %v6710, 4
      %v6713 = vshll.u32 %v6640, 16
      %v6715 = vrot.slane %v6713, 5
      %v6716 = vsel %vm5326, %v6711, %v6715
      %v6718 = vshrl.u32 %v6641, 16
      %v6720 = vrot.slane %v6718, 4
      %v6721 = vshll.u32 %v6641, 16
      %v6723 = vrot.slane %v6721, 5
      %v6724 = vor.u32 %v6720, %v6723
      %v6725 = vrot.slane %v6724, 4
      %v6727 = vshll.u32 %v6642, 16
      %v6729 = vrot.slane %v6727, 5
      %v6730 = vsel %vm5326, %v6725, %v6729
      %v6732 = vshrl.u32 %v6643, 16
      %v6734 = vrot.slane %v6732, 4
      %v6735 = vshll.u32 %v6643, 16
      %v6737 = vrot.slane %v6735, 5
      %v6738 = vor.u32 %v6734, %v6737
      %v6739 = vrot.slane %v6738, 4
      %v6741 = vshll.u32 %v6644, 16
      %v6743 = vrot.slane %v6741, 5
      %v6744 = vsel %vm5326, %v6739, %v6743
      %v6746 = vshrl.u32 %v6645, 16
      %v6748 = vrot.slane %v6746, 4
      %v6749 = vshll.u32 %v6645, 16
      %v6751 = vrot.slane %v6749, 5
      %v6752 = vor.u32 %v6748, %v6751
      %v6753 = vrot.slane %v6752, 4
      %v6755 = vshll.u32 %v6646, 16
      %v6757 = vrot.slane %v6755, 5
      %v6758 = vsel %vm5326, %v6753, %v6757
      %s6759 = scalar_lea.vmem %s5, 128
      %v6760 = vld [vmem:[%s6759] sm:$0xf]
      %v6761 = vld [vmem:[%s6759 + $0x4] sm:$0xf]
      %v6762 = vld [vmem:[%s6759 + $0x8] sm:$0xf]
      %v6763 = vld [vmem:[%s6759 + $0xc] sm:$0xf]
      %v6764 = vld [vmem:[%s6759 + $0x10] sm:$0xf]
      %v6765 = vld [vmem:[%s6759 + $0x14] sm:$0xf]
      %v6766 = vld [vmem:[%s6759 + $0x18] sm:$0xf]
      %v6767 = vld [vmem:[%s6759 + $0x1c] sm:$0xf]
      %v6768 = vld [vmem:[%s6759 + $0x20] sm:$0xf]
      %v6769 = vld [vmem:[%s6759 + $0x24] sm:$0xf]
      %v6770 = vld [vmem:[%s6759 + $0x28] sm:$0xf]
      %v6771 = vld [vmem:[%s6759 + $0x2c] sm:$0xf]
      %v6772 = vld [vmem:[%s6759 + $0x30] sm:$0xf]
      %v6773 = vld [vmem:[%s6759 + $0x34] sm:$0xf]
      %v6774 = vld [vmem:[%s6759 + $0x38] sm:$0xf]
      %v6775 = vld [vmem:[%s6759 + $0x3c] sm:$0xf]
      %v6776 = vunpack.c.l.b16 %v6660
      %v6777 = vunpack.c.l.b16 %v6674
      %v6778 = vunpack.c.l.b16 %v6688
      %v6779 = vunpack.c.l.b16 %v6702
      %v6780 = vunpack.c.l.b16 %v6716
      %v6781 = vunpack.c.l.b16 %v6730
      %v6782 = vunpack.c.l.b16 %v6744
      %v6783 = vunpack.c.l.b16 %v6758
      %v6784 = vpack.c.b16 %v6777, %v6776
      %v6785 = vpack.c.b16 %v6779, %v6778
      %v6786 = vpack.c.b16 %v6781, %v6780
      %v6787 = vpack.c.b16 %v6783, %v6782
      %v6808 = vunpack.c.l.b16 %v6760
      %v6809 = vunpack.c.l.b16 %v6761
      %v6810 = vunpack.c.l.b16 %v6762
      %v6811 = vunpack.c.l.b16 %v6763
      %v6812 = vunpack.c.l.b16 %v6764
      %v6813 = vunpack.c.l.b16 %v6765
      %v6814 = vunpack.c.l.b16 %v6766
      %v6815 = vunpack.c.l.b16 %v6767
      %v6816 = vunpack.c.l.b16 %v6768
      %v6817 = vunpack.c.l.b16 %v6769
      %v6818 = vunpack.c.l.b16 %v6770
      %v6819 = vunpack.c.l.b16 %v6771
      %v6820 = vunpack.c.l.b16 %v6772
      %v6821 = vunpack.c.l.b16 %v6773
      %v6822 = vunpack.c.l.b16 %v6774
      %v6823 = vunpack.c.l.b16 %v6775
      %v6824 = vpack.c.b16 %v6809, %v6808
      %v6825 = vpack.c.b16 %v6811, %v6810
      %v6826 = vpack.c.b16 %v6813, %v6812
      %v6827 = vpack.c.b16 %v6815, %v6814
      %v6828 = vpack.c.b16 %v6817, %v6816
      %v6829 = vpack.c.b16 %v6819, %v6818
      %v6830 = vpack.c.b16 %v6821, %v6820
      %v6831 = vpack.c.b16 %v6823, %v6822
      %6840 = vmatprep.subr.bf16.mxu0 0
      %6841 = vmatpush1.bf16.msra.mxu0 %v6824
      %6842 = vmatprep.subr.bf16.mxu0 0
      %6843 = vmatpush1.bf16.msra.mxu0 %v6825
      %6844 = vmatprep.subr.bf16.mxu0 0
      %6845 = vmatpush1.bf16.msra.mxu0 %v6826
      %6846 = vmatprep.subr.bf16.mxu0 0
      %6847 = vmatpush1.bf16.msra.mxu0 %v6827
      %6848 = vmatprep.subr.bf16.mxu0 0
      %6849 = vmatpush1.bf16.msra.mxu0 %v6828
      %6850 = vmatprep.subr.bf16.mxu0 0
      %6851 = vmatpush1.bf16.msra.mxu0 %v6829
      %6852 = vmatprep.subr.bf16.mxu0 0
      %6853 = vmatpush1.bf16.msra.mxu0 %v6830
      %6854 = vmatprep.subr.bf16.mxu0 0
      %6855 = vmatpush1.bf16.msra.mxu0 %v6831
      %6856 = vmatprep.subr.bf16.mxu0 0
      %6857 = vmatpush1.bf16.msra.mxu0 0
      %6858 = vmatprep.subr.bf16.mxu0 0
      %6859 = vmatpush1.bf16.msra.mxu0 0
      %6860 = vmatprep.subr.bf16.mxu0 0
      %6861 = vmatpush1.bf16.msra.mxu0 0
      %6862 = vmatprep.subr.bf16.mxu0 0
      %6863 = vmatpush1.bf16.msra.mxu0 0
      %6864 = vmatprep.subr.bf16.mxu0 0
      %6865 = vmatpush1.bf16.msra.mxu0 0
      %6866 = vmatprep.subr.bf16.mxu0 0
      %6867 = vmatpush1.bf16.msra.mxu0 0
      %6868 = vmatprep.subr.bf16.mxu0 0
      %6869 = vmatpush1.bf16.msra.mxu0 0
      %6870 = vmatprep.subr.bf16.mxu0 0
      %6871 = vmatpush1.bf16.msra.mxu0 0
      %6872 = vmatprep.mubr.bf16.mxu0 0
      %6873 = vmatmul.mubr.bf16.gmra.mrb[0].mxu0 %v6784
      %v6874 = vpop.f32.mrb[0].mxu0
      %v6875 = vadd.f32 0.0, %v6874
      %v6876 = vpop.f32.mrb[0].mxu0
      %v6877 = vpop.f32.mrb[0].mxu0
      %v6878 = vadd.f32 0.0, %v6877
      %v6879 = vpop.f32.mrb[0].mxu0
      %6880 = vmatprep.mubr.bf16.mxu0 0
      %6881 = vmatmul.mubr.bf16.gmra.mrb[0].mxu0 %v6785
      %v6882 = vpop.f32.mrb[0].mxu0
      %v6883 = vadd.f32 0.0, %v6882
      %v6884 = vpop.f32.mrb[0].mxu0
      %v6885 = vpop.f32.mrb[0].mxu0
      %v6886 = vadd.f32 0.0, %v6885
      %v6887 = vpop.f32.mrb[0].mxu0
      %6888 = vmatprep.mubr.bf16.mxu0 0
      %6889 = vmatmul.mubr.bf16.gmra.mrb[0].mxu0 %v6786
      %v6890 = vpop.f32.mrb[0].mxu0
      %v6891 = vadd.f32 0.0, %v6890
      %v6892 = vpop.f32.mrb[0].mxu0
      %v6893 = vpop.f32.mrb[0].mxu0
      %v6894 = vadd.f32 0.0, %v6893
      %v6895 = vpop.f32.mrb[0].mxu0
      %6896 = vmatprep.mubr.bf16.mxu0 0
      %6897 = vmatmul.mubr.bf16.gmra.mrb[0].mxu0 %v6787
      %v6898 = vpop.f32.mrb[0].mxu0
      %v6899 = vadd.f32 0.0, %v6898
      %v6900 = vpop.f32.mrb[0].mxu0
      %v6901 = vpop.f32.mrb[0].mxu0
      %v6902 = vadd.f32 0.0, %v6901
      %v6903 = vpop.f32.mrb[0].mxu0
      %6904 = vdwg.mxu0
      %v6905 = vadd.f32 %v6600, %v6875
      %v6906 = vadd.f32 %v6603, %v6878
      %v6907 = vadd.f32 %v6608, %v6883
      %v6908 = vadd.f32 %v6611, %v6886
      %v6909 = vadd.f32 %v6616, %v6891
      %v6910 = vadd.f32 %v6619, %v6894
      %v6911 = vadd.f32 %v6624, %v6899
      %v6912 = vadd.f32 %v6627, %v6902
      %v6913 = vld [vmem:[%s7 + $0x2] sm:$0x1]
      %v6914 = vlaneseq
      %v6915 = vshrl.u32 %v6914, 7
      %v6916 = vsub.s32 0, %v6915
      %v6917 = vrot.slane %v6913, %v6916
      %v6918 = vmul.f32 %v6905, %v6917
      %v6919 = vmul.f32 %v6906, %v6917
      %v6920 = vmul.f32 %v6907, %v6917
      %v6921 = vmul.f32 %v6908, %v6917
      %v6922 = vmul.f32 %v6909, %v6917
      %v6923 = vmul.f32 %v6910, %v6917
      %v6924 = vmul.f32 %v6911, %v6917
      %v6925 = vmul.f32 %v6912, %v6917
      %v6926 = vld [vmem:[%s8 + $0x2] sm:$0x1]
      %v6927 = vlaneseq
      %v6928 = vshrl.u32 %v6927, 7
      %v6929 = vsub.s32 0, %v6928
      %v6930 = vrot.slane %v6926, %v6929
      %v6931 = vadd.f32 %v6918, %v6930
      %v6932 = vadd.f32 %v6919, %v6930
      %v6933 = vadd.f32 %v6920, %v6930
      %v6934 = vadd.f32 %v6921, %v6930
      %v6935 = vadd.f32 %v6922, %v6930
      %v6936 = vadd.f32 %v6923, %v6930
      %v6937 = vadd.f32 %v6924, %v6930
      %v6938 = vadd.f32 %v6925, %v6930
      %vm6939 = vcmp.gt.f32.partialorder %v6931, 0.0
      %vm6940 = vcmp.gt.f32.partialorder %v6932, 0.0
      %vm6941 = vcmp.gt.f32.partialorder %v6933, 0.0
      %vm6942 = vcmp.gt.f32.partialorder %v6934, 0.0
      %vm6943 = vcmp.gt.f32.partialorder %v6935, 0.0
      %vm6944 = vcmp.gt.f32.partialorder %v6936, 0.0
      %vm6945 = vcmp.gt.f32.partialorder %v6937, 0.0
      %vm6946 = vcmp.gt.f32.partialorder %v6938, 0.0
      %v6947 = vmul.f32 %v6931, 0.01
      %v6948 = vmul.f32 %v6932, 0.01
      %v6949 = vmul.f32 %v6933, 0.01
      %v6950 = vmul.f32 %v6934, 0.01
      %v6951 = vmul.f32 %v6935, 0.01
      %v6952 = vmul.f32 %v6936, 0.01
      %v6953 = vmul.f32 %v6937, 0.01
      %v6954 = vmul.f32 %v6938, 0.01
      %v6955 = vsel %vm6939, %v6931, %v6947
      %v6956 = vsel %vm6940, %v6932, %v6948
      %v6957 = vsel %vm6941, %v6933, %v6949
      %v6958 = vsel %vm6942, %v6934, %v6950
      %v6959 = vsel %vm6943, %v6935, %v6951
      %v6960 = vsel %vm6944, %v6936, %v6952
      %v6961 = vsel %vm6945, %v6937, %v6953
      %v6962 = vsel %vm6946, %v6938, %v6954
      %v6963 = vpack.c.bf16 %v6955, %v6955
      %v6964 = vpack.c.bf16 %v6956, %v6956
      %v6965 = vpack.c.bf16 %v6957, %v6957
      %v6966 = vpack.c.bf16 %v6958, %v6958
      %v6967 = vpack.c.bf16 %v6959, %v6959
      %v6968 = vpack.c.bf16 %v6960, %v6960
      %v6969 = vpack.c.bf16 %v6961, %v6961
      %v6970 = vpack.c.bf16 %v6962, %v6962
      %v6979 = vunpack.c.l.b16 %v6963
      %v6980 = vunpack.c.l.b16 %v6964
      %v6981 = vunpack.c.l.b16 %v6965
      %v6982 = vunpack.c.l.b16 %v6966
      %v6983 = vunpack.c.l.b16 %v6967
      %v6984 = vunpack.c.l.b16 %v6968
      %v6985 = vunpack.c.l.b16 %v6969
      %v6986 = vunpack.c.l.b16 %v6970
      %v6987 = vpack.c.b16 %v6979, %v6979
      %v6988 = vpack.c.b16 %v6980, %v6980
      %v6989 = vpack.c.b16 %v6981, %v6981
      %v6990 = vpack.c.b16 %v6982, %v6982
      %v6991 = vpack.c.b16 %v6983, %v6983
      %v6992 = vpack.c.b16 %v6984, %v6984
      %v6993 = vpack.c.b16 %v6985, %v6985
      %v6994 = vpack.c.b16 %v6986, %v6986
      %v6996 = vshrl.u32 %v6987, 16
      %v6998 = vrot.slane %v6996, 7
      %v6999 = vshll.u32 %v6987, 16
      %v7001 = vor.u32 %v6998, %v6999
      %v7002 = vrot.slane %v6998, 4
      %v7004 = vshrl.u32 %v6988, 16
      %v7006 = vrot.slane %v7004, 7
      %v7007 = vshll.u32 %v6988, 16
      %v7009 = vor.u32 %v7006, %v7007
      %v7010 = vrot.slane %v7006, 4
      %v7012 = vshrl.u32 %v6989, 16
      %v7014 = vrot.slane %v7012, 7
      %v7015 = vshll.u32 %v6989, 16
      %v7017 = vor.u32 %v7014, %v7015
      %v7018 = vrot.slane %v7014, 4
      %v7020 = vshrl.u32 %v6990, 16
      %v7022 = vrot.slane %v7020, 7
      %v7023 = vshll.u32 %v6990, 16
      %v7025 = vor.u32 %v7022, %v7023
      %v7026 = vrot.slane %v7022, 4
      %v7028 = vshrl.u32 %v6991, 16
      %v7030 = vrot.slane %v7028, 7
      %v7031 = vshll.u32 %v6991, 16
      %v7033 = vor.u32 %v7030, %v7031
      %v7034 = vrot.slane %v7030, 4
      %v7036 = vshrl.u32 %v6992, 16
      %v7038 = vrot.slane %v7036, 7
      %v7039 = vshll.u32 %v6992, 16
      %v7041 = vor.u32 %v7038, %v7039
      %v7042 = vrot.slane %v7038, 4
      %v7044 = vshrl.u32 %v6993, 16
      %v7046 = vrot.slane %v7044, 7
      %v7047 = vshll.u32 %v6993, 16
      %v7049 = vor.u32 %v7046, %v7047
      %v7050 = vrot.slane %v7046, 4
      %v7052 = vshrl.u32 %v6994, 16
      %v7054 = vrot.slane %v7052, 7
      %v7055 = vshll.u32 %v6994, 16
      %v7057 = vor.u32 %v7054, %v7055
      %v7058 = vrot.slane %v7054, 4
      %v7075 = vsel %vm5259, %v7001, %v6227
      %7076 = vst [vmem:[%s5257] sm:$0xf] %v7075
      %v7077 = vld [vmem:[%s5257 + $0x4] sm:$0x1]
      %v7078 = vsel %vm359, %v7002, %v7077
      %7079 = vst [vmem:[%s5257 + $0x4] sm:$0x1] %v7078
      %v7080 = vld [vmem:[%s5257 + $0x8] sm:$0xf]
      %v7081 = vsel %vm5259, %v7009, %v7080
      %7082 = vst [vmem:[%s5257 + $0x8] sm:$0xf] %v7081
      %v7083 = vld [vmem:[%s5257 + $0xc] sm:$0x1]
      %v7084 = vsel %vm359, %v7010, %v7083
      %7085 = vst [vmem:[%s5257 + $0xc] sm:$0x1] %v7084
      %v7086 = vld [vmem:[%s5257 + $0x10] sm:$0xf]
      %v7087 = vsel %vm5259, %v7017, %v7086
      %7088 = vst [vmem:[%s5257 + $0x10] sm:$0xf] %v7087
      %v7089 = vld [vmem:[%s5257 + $0x14] sm:$0x1]
      %v7090 = vsel %vm359, %v7018, %v7089
      %7091 = vst [vmem:[%s5257 + $0x14] sm:$0x1] %v7090
      %v7092 = vld [vmem:[%s5257 + $0x18] sm:$0xf]
      %v7093 = vsel %vm5259, %v7025, %v7092
      %7094 = vst [vmem:[%s5257 + $0x18] sm:$0xf] %v7093
      %v7095 = vld [vmem:[%s5257 + $0x1c] sm:$0x1]
      %v7096 = vsel %vm359, %v7026, %v7095
      %7097 = vst [vmem:[%s5257 + $0x1c] sm:$0x1] %v7096
      %v7098 = vld [vmem:[%s5257 + $0x20] sm:$0xf]
      %v7099 = vsel %vm5259, %v7033, %v7098
      %7100 = vst [vmem:[%s5257 + $0x20] sm:$0xf] %v7099
      %v7101 = vld [vmem:[%s5257 + $0x24] sm:$0x1]
      %v7102 = vsel %vm359, %v7034, %v7101
      %7103 = vst [vmem:[%s5257 + $0x24] sm:$0x1] %v7102
      %v7104 = vld [vmem:[%s5257 + $0x28] sm:$0xf]
      %v7105 = vsel %vm5259, %v7041, %v7104
      %7106 = vst [vmem:[%s5257 + $0x28] sm:$0xf] %v7105
      %v7107 = vld [vmem:[%s5257 + $0x2c] sm:$0x1]
      %v7108 = vsel %vm359, %v7042, %v7107
      %7109 = vst [vmem:[%s5257 + $0x2c] sm:$0x1] %v7108
      %v7110 = vld [vmem:[%s5257 + $0x30] sm:$0xf]
      %v7111 = vsel %vm5259, %v7049, %v7110
      %7112 = vst [vmem:[%s5257 + $0x30] sm:$0xf] %v7111
      %v7113 = vld [vmem:[%s5257 + $0x34] sm:$0x1]
      %v7114 = vsel %vm359, %v7050, %v7113
      %7115 = vst [vmem:[%s5257 + $0x34] sm:$0x1] %v7114
      %v7116 = vld [vmem:[%s5257 + $0x38] sm:$0xf]
      %v7117 = vsel %vm5259, %v7057, %v7116
      %7118 = vst [vmem:[%s5257 + $0x38] sm:$0xf] %v7117
      %v7119 = vld [vmem:[%s5257 + $0x3c] sm:$0x1]
      %v7120 = vsel %vm359, %v7058, %v7119
      %7121 = vst [vmem:[%s5257 + $0x3c] sm:$0x1] %v7120
      %v7122 = vld [vmem:[#allocation4] sm:$0xf]
      %v7123 = vld [vmem:[#allocation4 + $0x8] sm:$0xf]
      %v7124 = vld [vmem:[#allocation4 + $0x10] sm:$0xf]
      %v7125 = vld [vmem:[#allocation4 + $0x18] sm:$0xf]
      %v7126 = vld [vmem:[#allocation4 + $0x20] sm:$0xf]
      %v7127 = vld [vmem:[#allocation4 + $0x28] sm:$0xf]
      %v7128 = vld [vmem:[#allocation4 + $0x30] sm:$0xf]
      %v7129 = vld [vmem:[#allocation4 + $0x38] sm:$0xf]
      %v7130 = vld [vmem:[#allocation4 + $0x4] sm:$0x1]
      %v7131 = vld [vmem:[#allocation4 + $0xc] sm:$0x1]
      %v7132 = vld [vmem:[#allocation4 + $0x14] sm:$0x1]
      %v7133 = vld [vmem:[#allocation4 + $0x1c] sm:$0x1]
      %v7134 = vld [vmem:[#allocation4 + $0x24] sm:$0x1]
      %v7135 = vld [vmem:[#allocation4 + $0x2c] sm:$0x1]
      %v7136 = vld [vmem:[#allocation4 + $0x34] sm:$0x1]
      %v7137 = vld [vmem:[#allocation4 + $0x3c] sm:$0x1]
      %v7139 = vshrl.u32 %v7122, 16
      %v7141 = vrot.slane %v7139, 4
      %v7142 = vshll.u32 %v7122, 16
      %v7144 = vrot.slane %v7142, 5
      %v7145 = vor.u32 %v7141, %v7144
      %v7146 = vrot.slane %v7145, 4
      %v7148 = vshll.u32 %v7130, 16
      %v7150 = vrot.slane %v7148, 5
      %v7151 = vsel %vm5326, %v7146, %v7150
      %v7153 = vshrl.u32 %v7123, 16
      %v7155 = vrot.slane %v7153, 4
      %v7156 = vshll.u32 %v7123, 16
      %v7158 = vrot.slane %v7156, 5
      %v7159 = vor.u32 %v7155, %v7158
      %v7160 = vrot.slane %v7159, 4
      %v7162 = vshll.u32 %v7131, 16
      %v7164 = vrot.slane %v7162, 5
      %v7165 = vsel %vm5326, %v7160, %v7164
      %v7167 = vshrl.u32 %v7124, 16
      %v7169 = vrot.slane %v7167, 4
      %v7170 = vshll.u32 %v7124, 16
      %v7172 = vrot.slane %v7170, 5
      %v7173 = vor.u32 %v7169, %v7172
      %v7174 = vrot.slane %v7173, 4
      %v7176 = vshll.u32 %v7132, 16
      %v7178 = vrot.slane %v7176, 5
      %v7179 = vsel %vm5326, %v7174, %v7178
      %v7181 = vshrl.u32 %v7125, 16
      %v7183 = vrot.slane %v7181, 4
      %v7184 = vshll.u32 %v7125, 16
      %v7186 = vrot.slane %v7184, 5
      %v7187 = vor.u32 %v7183, %v7186
      %v7188 = vrot.slane %v7187, 4
      %v7190 = vshll.u32 %v7133, 16
      %v7192 = vrot.slane %v7190, 5
      %v7193 = vsel %vm5326, %v7188, %v7192
      %v7195 = vshrl.u32 %v7126, 16
      %v7197 = vrot.slane %v7195, 4
      %v7198 = vshll.u32 %v7126, 16
      %v7200 = vrot.slane %v7198, 5
      %v7201 = vor.u32 %v7197, %v7200
      %v7202 = vrot.slane %v7201, 4
      %v7204 = vshll.u32 %v7134, 16
      %v7206 = vrot.slane %v7204, 5
      %v7207 = vsel %vm5326, %v7202, %v7206
      %v7209 = vshrl.u32 %v7127, 16
      %v7211 = vrot.slane %v7209, 4
      %v7212 = vshll.u32 %v7127, 16
      %v7214 = vrot.slane %v7212, 5
      %v7215 = vor.u32 %v7211, %v7214
      %v7216 = vrot.slane %v7215, 4
      %v7218 = vshll.u32 %v7135, 16
      %v7220 = vrot.slane %v7218, 5
      %v7221 = vsel %vm5326, %v7216, %v7220
      %v7223 = vshrl.u32 %v7128, 16
      %v7225 = vrot.slane %v7223, 4
      %v7226 = vshll.u32 %v7128, 16
      %v7228 = vrot.slane %v7226, 5
      %v7229 = vor.u32 %v7225, %v7228
      %v7230 = vrot.slane %v7229, 4
      %v7232 = vshll.u32 %v7136, 16
      %v7234 = vrot.slane %v7232, 5
      %v7235 = vsel %vm5326, %v7230, %v7234
      %v7237 = vshrl.u32 %v7129, 16
      %v7239 = vrot.slane %v7237, 4
      %v7240 = vshll.u32 %v7129, 16
      %v7242 = vrot.slane %v7240, 5
      %v7243 = vor.u32 %v7239, %v7242
      %v7244 = vrot.slane %v7243, 4
      %v7246 = vshll.u32 %v7137, 16
      %v7248 = vrot.slane %v7246, 5
      %v7249 = vsel %vm5326, %v7244, %v7248
      %v7250 = vld [vmem:[#allocation4] sm:$0xe]
      %v7251 = vld [vmem:[#allocation4 + $0x8] sm:$0xe]
      %v7252 = vld [vmem:[#allocation4 + $0x10] sm:$0xe]
      %v7253 = vld [vmem:[#allocation4 + $0x18] sm:$0xe]
      %v7254 = vld [vmem:[#allocation4 + $0x20] sm:$0xe]
      %v7255 = vld [vmem:[#allocation4 + $0x28] sm:$0xe]
      %v7256 = vld [vmem:[#allocation4 + $0x30] sm:$0xe]
      %v7257 = vld [vmem:[#allocation4 + $0x38] sm:$0xe]
      %v7274 = vrot.slane %v7250, 5
      %v7275 = vrot.slane %v7274, 4
      %v7276 = vrot.slane %v7130, 5
      %v7277 = vsel %vm5463, %v7275, %v7276
      %v7278 = vrot.slane %v7251, 5
      %v7279 = vrot.slane %v7278, 4
      %v7280 = vrot.slane %v7131, 5
      %v7281 = vsel %vm5463, %v7279, %v7280
      %v7282 = vrot.slane %v7252, 5
      %v7283 = vrot.slane %v7282, 4
      %v7284 = vrot.slane %v7132, 5
      %v7285 = vsel %vm5463, %v7283, %v7284
      %v7286 = vrot.slane %v7253, 5
      %v7287 = vrot.slane %v7286, 4
      %v7288 = vrot.slane %v7133, 5
      %v7289 = vsel %vm5463, %v7287, %v7288
      %v7290 = vrot.slane %v7254, 5
      %v7291 = vrot.slane %v7290, 4
      %v7292 = vrot.slane %v7134, 5
      %v7293 = vsel %vm5463, %v7291, %v7292
      %v7294 = vrot.slane %v7255, 5
      %v7295 = vrot.slane %v7294, 4
      %v7296 = vrot.slane %v7135, 5
      %v7297 = vsel %vm5463, %v7295, %v7296
      %v7298 = vrot.slane %v7256, 5
      %v7299 = vrot.slane %v7298, 4
      %v7300 = vrot.slane %v7136, 5
      %v7301 = vsel %vm5463, %v7299, %v7300
      %v7302 = vrot.slane %v7257, 5
      %v7303 = vrot.slane %v7302, 4
      %v7304 = vrot.slane %v7137, 5
      %v7305 = vsel %vm5463, %v7303, %v7304
      %v7314 = vunpack.c.l.b16 %v7122
      %v7315 = vunpack.c.l.b16 %v7123
      %v7316 = vunpack.c.l.b16 %v7124
      %v7317 = vunpack.c.l.b16 %v7125
      %v7318 = vunpack.c.l.b16 %v7126
      %v7319 = vunpack.c.l.b16 %v7127
      %v7320 = vunpack.c.l.b16 %v7128
      %v7321 = vunpack.c.l.b16 %v7129
      %v7322 = vpack.c.b16 %v7315, %v7314
      %v7323 = vpack.c.b16 %v7317, %v7316
      %v7324 = vpack.c.b16 %v7319, %v7318
      %v7325 = vpack.c.b16 %v7321, %v7320
      %v7330 = vunpack.c.l.b16 %v7151
      %v7331 = vunpack.c.l.b16 %v7165
      %v7332 = vunpack.c.l.b16 %v7179
      %v7333 = vunpack.c.l.b16 %v7193
      %v7334 = vunpack.c.l.b16 %v7207
      %v7335 = vunpack.c.l.b16 %v7221
      %v7336 = vunpack.c.l.b16 %v7235
      %v7337 = vunpack.c.l.b16 %v7249
      %v7338 = vpack.c.b16 %v7331, %v7330
      %v7339 = vpack.c.b16 %v7333, %v7332
      %v7340 = vpack.c.b16 %v7335, %v7334
      %v7341 = vpack.c.b16 %v7337, %v7336
      %v7346 = vunpack.c.l.b16 %v7277
      %v7347 = vunpack.c.l.b16 %v7281
      %v7348 = vunpack.c.l.b16 %v7285
      %v7349 = vunpack.c.l.b16 %v7289
      %v7350 = vunpack.c.l.b16 %v7293
      %v7351 = vunpack.c.l.b16 %v7297
      %v7352 = vunpack.c.l.b16 %v7301
      %v7353 = vunpack.c.l.b16 %v7305
      %v7354 = vpack.c.b16 %v7347, %v7346
      %v7355 = vpack.c.b16 %v7349, %v7348
      %v7356 = vpack.c.b16 %v7351, %v7350
      %v7357 = vpack.c.b16 %v7353, %v7352
      %v7362 = vld [vmem:[%s6] sm:$0xf]
      %v7363 = vld [vmem:[%s6 + $0x4] sm:$0xf]
      %v7364 = vld [vmem:[%s6 + $0x8] sm:$0xf]
      %v7365 = vld [vmem:[%s6 + $0xc] sm:$0xf]
      %v7366 = vld [vmem:[%s6 + $0x10] sm:$0xf]
      %v7367 = vld [vmem:[%s6 + $0x14] sm:$0xf]
      %v7368 = vld [vmem:[%s6 + $0x18] sm:$0xf]
      %v7369 = vld [vmem:[%s6 + $0x1c] sm:$0xf]
      %v7370 = vld [vmem:[%s6 + $0x20] sm:$0xf]
      %v7371 = vld [vmem:[%s6 + $0x24] sm:$0xf]
      %v7372 = vld [vmem:[%s6 + $0x28] sm:$0xf]
      %v7373 = vld [vmem:[%s6 + $0x2c] sm:$0xf]
      %v7374 = vld [vmem:[%s6 + $0x30] sm:$0xf]
      %v7375 = vld [vmem:[%s6 + $0x34] sm:$0xf]
      %v7376 = vld [vmem:[%s6 + $0x38] sm:$0xf]
      %v7377 = vld [vmem:[%s6 + $0x3c] sm:$0xf]
      %v7378 = vld [vmem:[%s6 + $0x40] sm:$0xf]
      %v7379 = vld [vmem:[%s6 + $0x44] sm:$0xf]
      %v7380 = vld [vmem:[%s6 + $0x48] sm:$0xf]
      %v7381 = vld [vmem:[%s6 + $0x4c] sm:$0xf]
      %v7382 = vld [vmem:[%s6 + $0x50] sm:$0xf]
      %v7383 = vld [vmem:[%s6 + $0x54] sm:$0xf]
      %v7384 = vld [vmem:[%s6 + $0x58] sm:$0xf]
      %v7385 = vld [vmem:[%s6 + $0x5c] sm:$0xf]
      %v7386 = vld [vmem:[%s6 + $0x60] sm:$0xf]
      %v7387 = vld [vmem:[%s6 + $0x64] sm:$0xf]
      %v7388 = vld [vmem:[%s6 + $0x68] sm:$0xf]
      %v7389 = vld [vmem:[%s6 + $0x6c] sm:$0xf]
      %v7390 = vld [vmem:[%s6 + $0x70] sm:$0xf]
      %v7391 = vld [vmem:[%s6 + $0x74] sm:$0xf]
      %v7392 = vld [vmem:[%s6 + $0x78] sm:$0xf]
      %v7393 = vld [vmem:[%s6 + $0x7c] sm:$0xf]
      %v7394 = vld [vmem:[%s6 + $0x80] sm:$0xf]
      %v7395 = vld [vmem:[%s6 + $0x84] sm:$0xf]
      %v7396 = vld [vmem:[%s6 + $0x88] sm:$0xf]
      %v7397 = vld [vmem:[%s6 + $0x8c] sm:$0xf]
      %v7398 = vld [vmem:[%s6 + $0x90] sm:$0xf]
      %v7399 = vld [vmem:[%s6 + $0x94] sm:$0xf]
      %v7400 = vld [vmem:[%s6 + $0x98] sm:$0xf]
      %v7401 = vld [vmem:[%s6 + $0x9c] sm:$0xf]
      %v7402 = vld [vmem:[%s6 + $0xa0] sm:$0xf]
      %v7403 = vld [vmem:[%s6 + $0xa4] sm:$0xf]
      %v7404 = vld [vmem:[%s6 + $0xa8] sm:$0xf]
      %v7405 = vld [vmem:[%s6 + $0xac] sm:$0xf]
      %v7406 = vld [vmem:[%s6 + $0xb0] sm:$0xf]
      %v7407 = vld [vmem:[%s6 + $0xb4] sm:$0xf]
      %v7408 = vld [vmem:[%s6 + $0xb8] sm:$0xf]
      %v7409 = vld [vmem:[%s6 + $0xbc] sm:$0xf]
      %v7410 = vld [vmem:[%s5257] sm:$0xf]
      %v7411 = vld [vmem:[%s5257 + $0x8] sm:$0xf]
      %v7412 = vld [vmem:[%s5257 + $0x10] sm:$0xf]
      %v7413 = vld [vmem:[%s5257 + $0x18] sm:$0xf]
      %v7414 = vld [vmem:[%s5257 + $0x20] sm:$0xf]
      %v7415 = vld [vmem:[%s5257 + $0x28] sm:$0xf]
      %v7416 = vld [vmem:[%s5257 + $0x30] sm:$0xf]
      %v7417 = vld [vmem:[%s5257 + $0x38] sm:$0xf]
      %v7418 = vld [vmem:[%s5257 + $0x4] sm:$0x1]
      %v7419 = vld [vmem:[%s5257 + $0xc] sm:$0x1]
      %v7420 = vld [vmem:[%s5257 + $0x14] sm:$0x1]
      %v7421 = vld [vmem:[%s5257 + $0x1c] sm:$0x1]
      %v7422 = vld [vmem:[%s5257 + $0x24] sm:$0x1]
      %v7423 = vld [vmem:[%s5257 + $0x2c] sm:$0x1]
      %v7424 = vld [vmem:[%s5257 + $0x34] sm:$0x1]
      %v7425 = vld [vmem:[%s5257 + $0x3c] sm:$0x1]
      %v7427 = vshrl.u32 %v7410, 16
      %v7429 = vrot.slane %v7427, 4
      %v7430 = vshll.u32 %v7410, 16
      %v7432 = vrot.slane %v7430, 5
      %v7433 = vor.u32 %v7429, %v7432
      %v7434 = vrot.slane %v7433, 4
      %v7436 = vshll.u32 %v7418, 16
      %v7438 = vrot.slane %v7436, 5
      %v7439 = vsel %vm5326, %v7434, %v7438
      %v7441 = vshrl.u32 %v7411, 16
      %v7443 = vrot.slane %v7441, 4
      %v7444 = vshll.u32 %v7411, 16
      %v7446 = vrot.slane %v7444, 5
      %v7447 = vor.u32 %v7443, %v7446
      %v7448 = vrot.slane %v7447, 4
      %v7450 = vshll.u32 %v7419, 16
      %v7452 = vrot.slane %v7450, 5
      %v7453 = vsel %vm5326, %v7448, %v7452
      %v7455 = vshrl.u32 %v7412, 16
      %v7457 = vrot.slane %v7455, 4
      %v7458 = vshll.u32 %v7412, 16
      %v7460 = vrot.slane %v7458, 5
      %v7461 = vor.u32 %v7457, %v7460
      %v7462 = vrot.slane %v7461, 4
      %v7464 = vshll.u32 %v7420, 16
      %v7466 = vrot.slane %v7464, 5
      %v7467 = vsel %vm5326, %v7462, %v7466
      %v7469 = vshrl.u32 %v7413, 16
      %v7471 = vrot.slane %v7469, 4
      %v7472 = vshll.u32 %v7413, 16
      %v7474 = vrot.slane %v7472, 5
      %v7475 = vor.u32 %v7471, %v7474
      %v7476 = vrot.slane %v7475, 4
      %v7478 = vshll.u32 %v7421, 16
      %v7480 = vrot.slane %v7478, 5
      %v7481 = vsel %vm5326, %v7476, %v7480
      %v7483 = vshrl.u32 %v7414, 16
      %v7485 = vrot.slane %v7483, 4
      %v7486 = vshll.u32 %v7414, 16
      %v7488 = vrot.slane %v7486, 5
      %v7489 = vor.u32 %v7485, %v7488
      %v7490 = vrot.slane %v7489, 4
      %v7492 = vshll.u32 %v7422, 16
      %v7494 = vrot.slane %v7492, 5
      %v7495 = vsel %vm5326, %v7490, %v7494
      %v7497 = vshrl.u32 %v7415, 16
      %v7499 = vrot.slane %v7497, 4
      %v7500 = vshll.u32 %v7415, 16
      %v7502 = vrot.slane %v7500, 5
      %v7503 = vor.u32 %v7499, %v7502
      %v7504 = vrot.slane %v7503, 4
      %v7506 = vshll.u32 %v7423, 16
      %v7508 = vrot.slane %v7506, 5
      %v7509 = vsel %vm5326, %v7504, %v7508
      %v7511 = vshrl.u32 %v7416, 16
      %v7513 = vrot.slane %v7511, 4
      %v7514 = vshll.u32 %v7416, 16
      %v7516 = vrot.slane %v7514, 5
      %v7517 = vor.u32 %v7513, %v7516
      %v7518 = vrot.slane %v7517, 4
      %v7520 = vshll.u32 %v7424, 16
      %v7522 = vrot.slane %v7520, 5
      %v7523 = vsel %vm5326, %v7518, %v7522
      %v7525 = vshrl.u32 %v7417, 16
      %v7527 = vrot.slane %v7525, 4
      %v7528 = vshll.u32 %v7417, 16
      %v7530 = vrot.slane %v7528, 5
      %v7531 = vor.u32 %v7527, %v7530
      %v7532 = vrot.slane %v7531, 4
      %v7534 = vshll.u32 %v7425, 16
      %v7536 = vrot.slane %v7534, 5
      %v7537 = vsel %vm5326, %v7532, %v7536
      %v7538 = vld [vmem:[%s5257] sm:$0xe]
      %v7539 = vld [vmem:[%s5257 + $0x8] sm:$0xe]
      %v7540 = vld [vmem:[%s5257 + $0x10] sm:$0xe]
      %v7541 = vld [vmem:[%s5257 + $0x18] sm:$0xe]
      %v7542 = vld [vmem:[%s5257 + $0x20] sm:$0xe]
      %v7543 = vld [vmem:[%s5257 + $0x28] sm:$0xe]
      %v7544 = vld [vmem:[%s5257 + $0x30] sm:$0xe]
      %v7545 = vld [vmem:[%s5257 + $0x38] sm:$0xe]
      %v7562 = vrot.slane %v7538, 5
      %v7563 = vrot.slane %v7562, 4
      %v7564 = vrot.slane %v7418, 5
      %v7565 = vsel %vm5463, %v7563, %v7564
      %v7566 = vrot.slane %v7539, 5
      %v7567 = vrot.slane %v7566, 4
      %v7568 = vrot.slane %v7419, 5
      %v7569 = vsel %vm5463, %v7567, %v7568
      %v7570 = vrot.slane %v7540, 5
      %v7571 = vrot.slane %v7570, 4
      %v7572 = vrot.slane %v7420, 5
      %v7573 = vsel %vm5463, %v7571, %v7572
      %v7574 = vrot.slane %v7541, 5
      %v7575 = vrot.slane %v7574, 4
      %v7576 = vrot.slane %v7421, 5
      %v7577 = vsel %vm5463, %v7575, %v7576
      %v7578 = vrot.slane %v7542, 5
      %v7579 = vrot.slane %v7578, 4
      %v7580 = vrot.slane %v7422, 5
      %v7581 = vsel %vm5463, %v7579, %v7580
      %v7582 = vrot.slane %v7543, 5
      %v7583 = vrot.slane %v7582, 4
      %v7584 = vrot.slane %v7423, 5
      %v7585 = vsel %vm5463, %v7583, %v7584
      %v7586 = vrot.slane %v7544, 5
      %v7587 = vrot.slane %v7586, 4
      %v7588 = vrot.slane %v7424, 5
      %v7589 = vsel %vm5463, %v7587, %v7588
      %v7590 = vrot.slane %v7545, 5
      %v7591 = vrot.slane %v7590, 4
      %v7592 = vrot.slane %v7425, 5
      %v7593 = vsel %vm5463, %v7591, %v7592
      %v7602 = vunpack.c.l.b16 %v7410
      %v7603 = vunpack.c.l.b16 %v7411
      %v7604 = vunpack.c.l.b16 %v7412
      %v7605 = vunpack.c.l.b16 %v7413
      %v7606 = vunpack.c.l.b16 %v7414
      %v7607 = vunpack.c.l.b16 %v7415
      %v7608 = vunpack.c.l.b16 %v7416
      %v7609 = vunpack.c.l.b16 %v7417
      %v7610 = vpack.c.b16 %v7603, %v7602
      %v7611 = vpack.c.b16 %v7605, %v7604
      %v7612 = vpack.c.b16 %v7607, %v7606
      %v7613 = vpack.c.b16 %v7609, %v7608
      %v7618 = vunpack.c.l.b16 %v7439
      %v7619 = vunpack.c.l.b16 %v7453
      %v7620 = vunpack.c.l.b16 %v7467
      %v7621 = vunpack.c.l.b16 %v7481
      %v7622 = vunpack.c.l.b16 %v7495
      %v7623 = vunpack.c.l.b16 %v7509
      %v7624 = vunpack.c.l.b16 %v7523
      %v7625 = vunpack.c.l.b16 %v7537
      %v7626 = vpack.c.b16 %v7619, %v7618
      %v7627 = vpack.c.b16 %v7621, %v7620
      %v7628 = vpack.c.b16 %v7623, %v7622
      %v7629 = vpack.c.b16 %v7625, %v7624
      %v7634 = vunpack.c.l.b16 %v7565
      %v7635 = vunpack.c.l.b16 %v7569
      %v7636 = vunpack.c.l.b16 %v7573
      %v7637 = vunpack.c.l.b16 %v7577
      %v7638 = vunpack.c.l.b16 %v7581
      %v7639 = vunpack.c.l.b16 %v7585
      %v7640 = vunpack.c.l.b16 %v7589
      %v7641 = vunpack.c.l.b16 %v7593
      %v7642 = vpack.c.b16 %v7635, %v7634
      %v7643 = vpack.c.b16 %v7637, %v7636
      %v7644 = vpack.c.b16 %v7639, %v7638
      %v7645 = vpack.c.b16 %v7641, %v7640
      %s7650 = scalar_lea.vmem %s6, 192
      %v7651 = vld [vmem:[%s7650] sm:$0xf]
      %v7652 = vld [vmem:[%s7650 + $0x4] sm:$0xf]
      %v7653 = vld [vmem:[%s7650 + $0x8] sm:$0xf]
      %v7654 = vld [vmem:[%s7650 + $0xc] sm:$0xf]
      %v7655 = vld [vmem:[%s7650 + $0x10] sm:$0xf]
      %v7656 = vld [vmem:[%s7650 + $0x14] sm:$0xf]
      %v7657 = vld [vmem:[%s7650 + $0x18] sm:$0xf]
      %v7658 = vld [vmem:[%s7650 + $0x1c] sm:$0xf]
      %v7659 = vld [vmem:[%s7650 + $0x20] sm:$0xf]
      %v7660 = vld [vmem:[%s7650 + $0x24] sm:$0xf]
      %v7661 = vld [vmem:[%s7650 + $0x28] sm:$0xf]
      %v7662 = vld [vmem:[%s7650 + $0x2c] sm:$0xf]
      %v7663 = vld [vmem:[%s7650 + $0x30] sm:$0xf]
      %v7664 = vld [vmem:[%s7650 + $0x34] sm:$0xf]
      %v7665 = vld [vmem:[%s7650 + $0x38] sm:$0xf]
      %v7666 = vld [vmem:[%s7650 + $0x3c] sm:$0xf]
      %v7667 = vld [vmem:[%s7650 + $0x40] sm:$0xf]
      %v7668 = vld [vmem:[%s7650 + $0x44] sm:$0xf]
      %v7669 = vld [vmem:[%s7650 + $0x48] sm:$0xf]
      %v7670 = vld [vmem:[%s7650 + $0x4c] sm:$0xf]
      %v7671 = vld [vmem:[%s7650 + $0x50] sm:$0xf]
      %v7672 = vld [vmem:[%s7650 + $0x54] sm:$0xf]
      %v7673 = vld [vmem:[%s7650 + $0x58] sm:$0xf]
      %v7674 = vld [vmem:[%s7650 + $0x5c] sm:$0xf]
      %v7675 = vld [vmem:[%s7650 + $0x60] sm:$0xf]
      %v7676 = vld [vmem:[%s7650 + $0x64] sm:$0xf]
      %v7677 = vld [vmem:[%s7650 + $0x68] sm:$0xf]
      %v7678 = vld [vmem:[%s7650 + $0x6c] sm:$0xf]
      %v7679 = vld [vmem:[%s7650 + $0x70] sm:$0xf]
      %v7680 = vld [vmem:[%s7650 + $0x74] sm:$0xf]
      %v7681 = vld [vmem:[%s7650 + $0x78] sm:$0xf]
      %v7682 = vld [vmem:[%s7650 + $0x7c] sm:$0xf]
      %v7683 = vld [vmem:[%s7650 + $0x80] sm:$0xf]
      %v7684 = vld [vmem:[%s7650 + $0x84] sm:$0xf]
      %v7685 = vld [vmem:[%s7650 + $0x88] sm:$0xf]
      %v7686 = vld [vmem:[%s7650 + $0x8c] sm:$0xf]
      %v7687 = vld [vmem:[%s7650 + $0x90] sm:$0xf]
      %v7688 = vld [vmem:[%s7650 + $0x94] sm:$0xf]
      %v7689 = vld [vmem:[%s7650 + $0x98] sm:$0xf]
      %v7690 = vld [vmem:[%s7650 + $0x9c] sm:$0xf]
      %v7691 = vld [vmem:[%s7650 + $0xa0] sm:$0xf]
      %v7692 = vld [vmem:[%s7650 + $0xa4] sm:$0xf]
      %v7693 = vld [vmem:[%s7650 + $0xa8] sm:$0xf]
      %v7694 = vld [vmem:[%s7650 + $0xac] sm:$0xf]
      %v7695 = vld [vmem:[%s7650 + $0xb0] sm:$0xf]
      %v7696 = vld [vmem:[%s7650 + $0xb4] sm:$0xf]
      %v7697 = vld [vmem:[%s7650 + $0xb8] sm:$0xf]
      %v7698 = vld [vmem:[%s7650 + $0xbc] sm:$0xf]
      %v7747 = vunpack.c.l.b16 %v7651
      %v7748 = vunpack.c.l.b16 %v7652
      %v7749 = vunpack.c.l.b16 %v7653
      %v7750 = vunpack.c.l.b16 %v7654
      %v7751 = vunpack.c.l.b16 %v7655
      %v7752 = vunpack.c.l.b16 %v7656
      %v7753 = vunpack.c.l.b16 %v7657
      %v7754 = vunpack.c.l.b16 %v7658
      %v7755 = vunpack.c.l.b16 %v7659
      %v7756 = vunpack.c.l.b16 %v7660
      %v7757 = vunpack.c.l.b16 %v7661
      %v7758 = vunpack.c.l.b16 %v7662
      %v7759 = vunpack.c.l.b16 %v7663
      %v7760 = vunpack.c.l.b16 %v7664
      %v7761 = vunpack.c.l.b16 %v7665
      %v7762 = vunpack.c.l.b16 %v7666
      %v7763 = vunpack.c.l.b16 %v7667
      %v7764 = vunpack.c.l.b16 %v7668
      %v7765 = vunpack.c.l.b16 %v7669
      %v7766 = vunpack.c.l.b16 %v7670
      %v7767 = vunpack.c.l.b16 %v7671
      %v7768 = vunpack.c.l.b16 %v7672
      %v7769 = vunpack.c.l.b16 %v7673
      %v7770 = vunpack.c.l.b16 %v7674
      %v7771 = vunpack.c.l.b16 %v7675
      %v7772 = vunpack.c.l.b16 %v7676
      %v7773 = vunpack.c.l.b16 %v7677
      %v7774 = vunpack.c.l.b16 %v7678
      %v7775 = vunpack.c.l.b16 %v7679
      %v7776 = vunpack.c.l.b16 %v7680
      %v7777 = vunpack.c.l.b16 %v7681
      %v7778 = vunpack.c.l.b16 %v7682
      %v7779 = vunpack.c.l.b16 %v7683
      %v7780 = vunpack.c.l.b16 %v7684
      %v7781 = vunpack.c.l.b16 %v7685
      %v7782 = vunpack.c.l.b16 %v7686
      %v7783 = vunpack.c.l.b16 %v7687
      %v7784 = vunpack.c.l.b16 %v7688
      %v7785 = vunpack.c.l.b16 %v7689
      %v7786 = vunpack.c.l.b16 %v7690
      %v7787 = vunpack.c.l.b16 %v7691
      %v7788 = vunpack.c.l.b16 %v7692
      %v7789 = vunpack.c.l.b16 %v7693
      %v7790 = vunpack.c.l.b16 %v7694
      %v7791 = vunpack.c.l.b16 %v7695
      %v7792 = vunpack.c.l.b16 %v7696
      %v7793 = vunpack.c.l.b16 %v7697
      %v7794 = vunpack.c.l.b16 %v7698
      %v7795 = vpack.c.b16 %v7748, %v7747
      %v7796 = vpack.c.b16 %v7750, %v7749
      %v7797 = vpack.c.b16 %v7752, %v7751
      %v7798 = vpack.c.b16 %v7754, %v7753
      %v7799 = vpack.c.b16 %v7756, %v7755
      %v7800 = vpack.c.b16 %v7758, %v7757
      %v7801 = vpack.c.b16 %v7760, %v7759
      %v7802 = vpack.c.b16 %v7762, %v7761
      %v7803 = vpack.c.b16 %v7764, %v7763
      %v7804 = vpack.c.b16 %v7766, %v7765
      %v7805 = vpack.c.b16 %v7768, %v7767
      %v7806 = vpack.c.b16 %v7770, %v7769
      %v7807 = vpack.c.b16 %v7772, %v7771
      %v7808 = vpack.c.b16 %v7774, %v7773
      %v7809 = vpack.c.b16 %v7776, %v7775
      %v7810 = vpack.c.b16 %v7778, %v7777
      %v7811 = vpack.c.b16 %v7780, %v7779
      %v7812 = vpack.c.b16 %v7782, %v7781
      %v7813 = vpack.c.b16 %v7784, %v7783
      %v7814 = vpack.c.b16 %v7786, %v7785
      %v7815 = vpack.c.b16 %v7788, %v7787
      %v7816 = vpack.c.b16 %v7790, %v7789
      %v7817 = vpack.c.b16 %v7792, %v7791
      %v7818 = vpack.c.b16 %v7794, %v7793
      %7843 = vmatprep.subr.bf16.mxu0 0
      %7844 = vmatpush1.bf16.msra.mxu0 %v7795
      %7845 = vmatprep.subr.bf16.mxu0 0
      %7846 = vmatpush1.bf16.msra.mxu0 %v7796
      %7847 = vmatprep.subr.bf16.mxu0 0
      %7848 = vmatpush1.bf16.msra.mxu0 %v7797
      %7849 = vmatprep.subr.bf16.mxu0 0
      %7850 = vmatpush1.bf16.msra.mxu0 %v7798
      %7851 = vmatprep.subr.bf16.mxu0 0
      %7852 = vmatpush1.bf16.msra.mxu0 %v7799
      %7853 = vmatprep.subr.bf16.mxu0 0
      %7854 = vmatpush1.bf16.msra.mxu0 %v7800
      %7855 = vmatprep.subr.bf16.mxu0 0
      %7856 = vmatpush1.bf16.msra.mxu0 %v7801
      %7857 = vmatprep.subr.bf16.mxu0 0
      %7858 = vmatpush1.bf16.msra.mxu0 %v7802
      %7859 = vmatprep.subr.bf16.mxu0 0
      %7860 = vmatpush1.bf16.msra.mxu0 %v7803
      %7861 = vmatprep.subr.bf16.mxu0 0
      %7862 = vmatpush1.bf16.msra.mxu0 %v7804
      %7863 = vmatprep.subr.bf16.mxu0 0
      %7864 = vmatpush1.bf16.msra.mxu0 %v7805
      %7865 = vmatprep.subr.bf16.mxu0 0
      %7866 = vmatpush1.bf16.msra.mxu0 %v7806
      %7867 = vmatprep.subr.bf16.mxu0 0
      %7868 = vmatpush1.bf16.msra.mxu0 %v7807
      %7869 = vmatprep.subr.bf16.mxu0 0
      %7870 = vmatpush1.bf16.msra.mxu0 %v7808
      %7871 = vmatprep.subr.bf16.mxu0 0
      %7872 = vmatpush1.bf16.msra.mxu0 %v7809
      %7873 = vmatprep.subr.bf16.mxu0 0
      %7874 = vmatpush1.bf16.msra.mxu0 %v7810
      %7875 = vmatprep.mubr.bf16.mxu0 %v7626
      %7876 = vmatmul.mubr.bf16.gmra.mrb[0].mxu0 %v7610
      %v7877 = vpop.f32.mrb[0].mxu0
      %v7878 = vadd.f32 0.0, %v7877
      %v7879 = vpop.f32.mrb[0].mxu0
      %v7880 = vpop.f32.mrb[0].mxu0
      %v7881 = vadd.f32 0.0, %v7880
      %v7882 = vpop.f32.mrb[0].mxu0
      %7883 = vmatprep.mubr.bf16.mxu0 %v7627
      %7884 = vmatmul.mubr.bf16.gmra.mrb[0].mxu0 %v7611
      %v7885 = vpop.f32.mrb[0].mxu0
      %v7886 = vadd.f32 0.0, %v7885
      %v7887 = vpop.f32.mrb[0].mxu0
      %v7888 = vpop.f32.mrb[0].mxu0
      %v7889 = vadd.f32 0.0, %v7888
      %v7890 = vpop.f32.mrb[0].mxu0
      %7891 = vmatprep.mubr.bf16.mxu0 %v7628
      %7892 = vmatmul.mubr.bf16.gmra.mrb[0].mxu0 %v7612
      %v7893 = vpop.f32.mrb[0].mxu0
      %v7894 = vadd.f32 0.0, %v7893
      %v7895 = vpop.f32.mrb[0].mxu0
      %v7896 = vpop.f32.mrb[0].mxu0
      %v7897 = vadd.f32 0.0, %v7896
      %v7898 = vpop.f32.mrb[0].mxu0
      %7899 = vmatprep.mubr.bf16.mxu0 %v7629
      %7900 = vmatmul.mubr.bf16.gmra.mrb[0].mxu0 %v7613
      %v7901 = vpop.f32.mrb[0].mxu0
      %v7902 = vadd.f32 0.0, %v7901
      %v7903 = vpop.f32.mrb[0].mxu0
      %v7904 = vpop.f32.mrb[0].mxu0
      %v7905 = vadd.f32 0.0, %v7904
      %v7906 = vpop.f32.mrb[0].mxu0
      %7907 = vdwg.mxu0
      %7908 = vmatprep.subr.bf16.mxu0 0
      %7909 = vmatpush1.bf16.msra.mxu0 %v7811
      %7910 = vmatprep.subr.bf16.mxu0 0
      %7911 = vmatpush1.bf16.msra.mxu0 %v7812
      %7912 = vmatprep.subr.bf16.mxu0 0
      %7913 = vmatpush1.bf16.msra.mxu0 %v7813
      %7914 = vmatprep.subr.bf16.mxu0 0
      %7915 = vmatpush1.bf16.msra.mxu0 %v7814
      %7916 = vmatprep.subr.bf16.mxu0 0
      %7917 = vmatpush1.bf16.msra.mxu0 %v7815
      %7918 = vmatprep.subr.bf16.mxu0 0
      %7919 = vmatpush1.bf16.msra.mxu0 %v7816
      %7920 = vmatprep.subr.bf16.mxu0 0
      %7921 = vmatpush1.bf16.msra.mxu0 %v7817
      %7922 = vmatprep.subr.bf16.mxu0 0
      %7923 = vmatpush1.bf16.msra.mxu0 %v7818
      %7924 = vmatprep.subr.bf16.mxu0 0
      %7925 = vmatpush1.bf16.msra.mxu0 0
      %7926 = vmatprep.subr.bf16.mxu0 0
      %7927 = vmatpush1.bf16.msra.mxu0 0
      %7928 = vmatprep.subr.bf16.mxu0 0
      %7929 = vmatpush1.bf16.msra.mxu0 0
      %7930 = vmatprep.subr.bf16.mxu0 0
      %7931 = vmatpush1.bf16.msra.mxu0 0
      %7932 = vmatprep.subr.bf16.mxu0 0
      %7933 = vmatpush1.bf16.msra.mxu0 0
      %7934 = vmatprep.subr.bf16.mxu0 0
      %7935 = vmatpush1.bf16.msra.mxu0 0
      %7936 = vmatprep.subr.bf16.mxu0 0
      %7937 = vmatpush1.bf16.msra.mxu0 0
      %7938 = vmatprep.subr.bf16.mxu0 0
      %7939 = vmatpush1.bf16.msra.mxu0 0
      %7940 = vmatprep.mubr.bf16.mxu0 0
      %7941 = vmatmul.mubr.bf16.gmra.mrb[0].mxu0 %v7642
      %v7942 = vpop.f32.mrb[0].mxu0
      %v7943 = vadd.f32 %v7878, %v7942
      %v7944 = vpop.f32.mrb[0].mxu0
      %v7945 = vpop.f32.mrb[0].mxu0
      %v7946 = vadd.f32 %v7881, %v7945
      %v7947 = vpop.f32.mrb[0].mxu0
      %7948 = vmatprep.mubr.bf16.mxu0 0
      %7949 = vmatmul.mubr.bf16.gmra.mrb[0].mxu0 %v7643
      %v7950 = vpop.f32.mrb[0].mxu0
      %v7951 = vadd.f32 %v7886, %v7950
      %v7952 = vpop.f32.mrb[0].mxu0
      %v7953 = vpop.f32.mrb[0].mxu0
      %v7954 = vadd.f32 %v7889, %v7953
      %v7955 = vpop.f32.mrb[0].mxu0
      %7956 = vmatprep.mubr.bf16.mxu0 0
      %7957 = vmatmul.mubr.bf16.gmra.mrb[0].mxu0 %v7644
      %v7958 = vpop.f32.mrb[0].mxu0
      %v7959 = vadd.f32 %v7894, %v7958
      %v7960 = vpop.f32.mrb[0].mxu0
      %v7961 = vpop.f32.mrb[0].mxu0
      %v7962 = vadd.f32 %v7897, %v7961
      %v7963 = vpop.f32.mrb[0].mxu0
      %7964 = vmatprep.mubr.bf16.mxu0 0
      %7965 = vmatmul.mubr.bf16.gmra.mrb[0].mxu0 %v7645
      %v7966 = vpop.f32.mrb[0].mxu0
      %v7967 = vadd.f32 %v7902, %v7966
      %v7968 = vpop.f32.mrb[0].mxu0
      %v7969 = vpop.f32.mrb[0].mxu0
      %v7970 = vadd.f32 %v7905, %v7969
      %v7971 = vpop.f32.mrb[0].mxu0
      %7972 = vdwg.mxu0
      %v8021 = vunpack.c.l.b16 %v7362
      %v8022 = vunpack.c.l.b16 %v7363
      %v8023 = vunpack.c.l.b16 %v7364
      %v8024 = vunpack.c.l.b16 %v7365
      %v8025 = vunpack.c.l.b16 %v7366
      %v8026 = vunpack.c.l.b16 %v7367
      %v8027 = vunpack.c.l.b16 %v7368
      %v8028 = vunpack.c.l.b16 %v7369
      %v8029 = vunpack.c.l.b16 %v7370
      %v8030 = vunpack.c.l.b16 %v7371
      %v8031 = vunpack.c.l.b16 %v7372
      %v8032 = vunpack.c.l.b16 %v7373
      %v8033 = vunpack.c.l.b16 %v7374
      %v8034 = vunpack.c.l.b16 %v7375
      %v8035 = vunpack.c.l.b16 %v7376
      %v8036 = vunpack.c.l.b16 %v7377
      %v8037 = vunpack.c.l.b16 %v7378
      %v8038 = vunpack.c.l.b16 %v7379
      %v8039 = vunpack.c.l.b16 %v7380
      %v8040 = vunpack.c.l.b16 %v7381
      %v8041 = vunpack.c.l.b16 %v7382
      %v8042 = vunpack.c.l.b16 %v7383
      %v8043 = vunpack.c.l.b16 %v7384
      %v8044 = vunpack.c.l.b16 %v7385
      %v8045 = vunpack.c.l.b16 %v7386
      %v8046 = vunpack.c.l.b16 %v7387
      %v8047 = vunpack.c.l.b16 %v7388
      %v8048 = vunpack.c.l.b16 %v7389
      %v8049 = vunpack.c.l.b16 %v7390
      %v8050 = vunpack.c.l.b16 %v7391
      %v8051 = vunpack.c.l.b16 %v7392
      %v8052 = vunpack.c.l.b16 %v7393
      %v8053 = vunpack.c.l.b16 %v7394
      %v8054 = vunpack.c.l.b16 %v7395
      %v8055 = vunpack.c.l.b16 %v7396
      %v8056 = vunpack.c.l.b16 %v7397
      %v8057 = vunpack.c.l.b16 %v7398
      %v8058 = vunpack.c.l.b16 %v7399
      %v8059 = vunpack.c.l.b16 %v7400
      %v8060 = vunpack.c.l.b16 %v7401
      %v8061 = vunpack.c.l.b16 %v7402
      %v8062 = vunpack.c.l.b16 %v7403
      %v8063 = vunpack.c.l.b16 %v7404
      %v8064 = vunpack.c.l.b16 %v7405
      %v8065 = vunpack.c.l.b16 %v7406
      %v8066 = vunpack.c.l.b16 %v7407
      %v8067 = vunpack.c.l.b16 %v7408
      %v8068 = vunpack.c.l.b16 %v7409
      %v8069 = vpack.c.b16 %v8022, %v8021
      %v8070 = vpack.c.b16 %v8024, %v8023
      %v8071 = vpack.c.b16 %v8026, %v8025
      %v8072 = vpack.c.b16 %v8028, %v8027
      %v8073 = vpack.c.b16 %v8030, %v8029
      %v8074 = vpack.c.b16 %v8032, %v8031
      %v8075 = vpack.c.b16 %v8034, %v8033
      %v8076 = vpack.c.b16 %v8036, %v8035
      %v8077 = vpack.c.b16 %v8038, %v8037
      %v8078 = vpack.c.b16 %v8040, %v8039
      %v8079 = vpack.c.b16 %v8042, %v8041
      %v8080 = vpack.c.b16 %v8044, %v8043
      %v8081 = vpack.c.b16 %v8046, %v8045
      %v8082 = vpack.c.b16 %v8048, %v8047
      %v8083 = vpack.c.b16 %v8050, %v8049
      %v8084 = vpack.c.b16 %v8052, %v8051
      %v8085 = vpack.c.b16 %v8054, %v8053
      %v8086 = vpack.c.b16 %v8056, %v8055
      %v8087 = vpack.c.b16 %v8058, %v8057
      %v8088 = vpack.c.b16 %v8060, %v8059
      %v8089 = vpack.c.b16 %v8062, %v8061
      %v8090 = vpack.c.b16 %v8064, %v8063
      %v8091 = vpack.c.b16 %v8066, %v8065
      %v8092 = vpack.c.b16 %v8068, %v8067
      %8117 = vmatprep.subr.bf16.mxu0 0
      %8118 = vmatpush1.bf16.msra.mxu0 %v8069
      %8119 = vmatprep.subr.bf16.mxu0 0
      %8120 = vmatpush1.bf16.msra.mxu0 %v8070
      %8121 = vmatprep.subr.bf16.mxu0 0
      %8122 = vmatpush1.bf16.msra.mxu0 %v8071
      %8123 = vmatprep.subr.bf16.mxu0 0
      %8124 = vmatpush1.bf16.msra.mxu0 %v8072
      %8125 = vmatprep.subr.bf16.mxu0 0
      %8126 = vmatpush1.bf16.msra.mxu0 %v8073
      %8127 = vmatprep.subr.bf16.mxu0 0
      %8128 = vmatpush1.bf16.msra.mxu0 %v8074
      %8129 = vmatprep.subr.bf16.mxu0 0
      %8130 = vmatpush1.bf16.msra.mxu0 %v8075
      %8131 = vmatprep.subr.bf16.mxu0 0
      %8132 = vmatpush1.bf16.msra.mxu0 %v8076
      %8133 = vmatprep.subr.bf16.mxu0 0
      %8134 = vmatpush1.bf16.msra.mxu0 %v8077
      %8135 = vmatprep.subr.bf16.mxu0 0
      %8136 = vmatpush1.bf16.msra.mxu0 %v8078
      %8137 = vmatprep.subr.bf16.mxu0 0
      %8138 = vmatpush1.bf16.msra.mxu0 %v8079
      %8139 = vmatprep.subr.bf16.mxu0 0
      %8140 = vmatpush1.bf16.msra.mxu0 %v8080
      %8141 = vmatprep.subr.bf16.mxu0 0
      %8142 = vmatpush1.bf16.msra.mxu0 %v8081
      %8143 = vmatprep.subr.bf16.mxu0 0
      %8144 = vmatpush1.bf16.msra.mxu0 %v8082
      %8145 = vmatprep.subr.bf16.mxu0 0
      %8146 = vmatpush1.bf16.msra.mxu0 %v8083
      %8147 = vmatprep.subr.bf16.mxu0 0
      %8148 = vmatpush1.bf16.msra.mxu0 %v8084
      %8149 = vmatprep.mubr.bf16.mxu0 %v7338
      %8150 = vmatmul.mubr.bf16.gmra.mrb[0].mxu0 %v7322
      %v8151 = vpop.f32.mrb[0].mxu0
      %v8152 = vadd.f32 %v7943, %v8151
      %v8153 = vpop.f32.mrb[0].mxu0
      %v8154 = vpop.f32.mrb[0].mxu0
      %v8155 = vadd.f32 %v7946, %v8154
      %v8156 = vpop.f32.mrb[0].mxu0
      %8157 = vmatprep.mubr.bf16.mxu0 %v7339
      %8158 = vmatmul.mubr.bf16.gmra.mrb[0].mxu0 %v7323
      %v8159 = vpop.f32.mrb[0].mxu0
      %v8160 = vadd.f32 %v7951, %v8159
      %v8161 = vpop.f32.mrb[0].mxu0
      %v8162 = vpop.f32.mrb[0].mxu0
      %v8163 = vadd.f32 %v7954, %v8162
      %v8164 = vpop.f32.mrb[0].mxu0
      %8165 = vmatprep.mubr.bf16.mxu0 %v7340
      %8166 = vmatmul.mubr.bf16.gmra.mrb[0].mxu0 %v7324
      %v8167 = vpop.f32.mrb[0].mxu0
      %v8168 = vadd.f32 %v7959, %v8167
      %v8169 = vpop.f32.mrb[0].mxu0
      %v8170 = vpop.f32.mrb[0].mxu0
      %v8171 = vadd.f32 %v7962, %v8170
      %v8172 = vpop.f32.mrb[0].mxu0
      %8173 = vmatprep.mubr.bf16.mxu0 %v7341
      %8174 = vmatmul.mubr.bf16.gmra.mrb[0].mxu0 %v7325
      %v8175 = vpop.f32.mrb[0].mxu0
      %v8176 = vadd.f32 %v7967, %v8175
      %v8177 = vpop.f32.mrb[0].mxu0
      %v8178 = vpop.f32.mrb[0].mxu0
      %v8179 = vadd.f32 %v7970, %v8178
      %v8180 = vpop.f32.mrb[0].mxu0
      %8181 = vdwg.mxu0
      %8182 = vmatprep.subr.bf16.mxu0 0
      %8183 = vmatpush1.bf16.msra.mxu0 %v8085
      %8184 = vmatprep.subr.bf16.mxu0 0
      %8185 = vmatpush1.bf16.msra.mxu0 %v8086
      %8186 = vmatprep.subr.bf16.mxu0 0
      %8187 = vmatpush1.bf16.msra.mxu0 %v8087
      %8188 = vmatprep.subr.bf16.mxu0 0
      %8189 = vmatpush1.bf16.msra.mxu0 %v8088
      %8190 = vmatprep.subr.bf16.mxu0 0
      %8191 = vmatpush1.bf16.msra.mxu0 %v8089
      %8192 = vmatprep.subr.bf16.mxu0 0
      %8193 = vmatpush1.bf16.msra.mxu0 %v8090
      %8194 = vmatprep.subr.bf16.mxu0 0
      %8195 = vmatpush1.bf16.msra.mxu0 %v8091
      %8196 = vmatprep.subr.bf16.mxu0 0
      %8197 = vmatpush1.bf16.msra.mxu0 %v8092
      %8198 = vmatprep.subr.bf16.mxu0 0
      %8199 = vmatpush1.bf16.msra.mxu0 0
      %8200 = vmatprep.subr.bf16.mxu0 0
      %8201 = vmatpush1.bf16.msra.mxu0 0
      %8202 = vmatprep.subr.bf16.mxu0 0
      %8203 = vmatpush1.bf16.msra.mxu0 0
      %8204 = vmatprep.subr.bf16.mxu0 0
      %8205 = vmatpush1.bf16.msra.mxu0 0
      %8206 = vmatprep.subr.bf16.mxu0 0
      %8207 = vmatpush1.bf16.msra.mxu0 0
      %8208 = vmatprep.subr.bf16.mxu0 0
      %8209 = vmatpush1.bf16.msra.mxu0 0
      %8210 = vmatprep.subr.bf16.mxu0 0
      %8211 = vmatpush1.bf16.msra.mxu0 0
      %8212 = vmatprep.subr.bf16.mxu0 0
      %8213 = vmatpush1.bf16.msra.mxu0 0
      %8214 = vmatprep.mubr.bf16.mxu0 0
      %8215 = vmatmul.mubr.bf16.gmra.mrb[0].mxu0 %v7354
      %v8216 = vpop.f32.mrb[0].mxu0
      %v8217 = vadd.f32 %v8152, %v8216
      %v8218 = vpop.f32.mrb[0].mxu0
      %v8219 = vpop.f32.mrb[0].mxu0
      %v8220 = vadd.f32 %v8155, %v8219
      %v8221 = vpop.f32.mrb[0].mxu0
      %8222 = vmatprep.mubr.bf16.mxu0 0
      %8223 = vmatmul.mubr.bf16.gmra.mrb[0].mxu0 %v7355
      %v8224 = vpop.f32.mrb[0].mxu0
      %v8225 = vadd.f32 %v8160, %v8224
      %v8226 = vpop.f32.mrb[0].mxu0
      %v8227 = vpop.f32.mrb[0].mxu0
      %v8228 = vadd.f32 %v8163, %v8227
      %v8229 = vpop.f32.mrb[0].mxu0
      %8230 = vmatprep.mubr.bf16.mxu0 0
      %8231 = vmatmul.mubr.bf16.gmra.mrb[0].mxu0 %v7356
      %v8232 = vpop.f32.mrb[0].mxu0
      %v8233 = vadd.f32 %v8168, %v8232
      %v8234 = vpop.f32.mrb[0].mxu0
      %v8235 = vpop.f32.mrb[0].mxu0
      %v8236 = vadd.f32 %v8171, %v8235
      %v8237 = vpop.f32.mrb[0].mxu0
      %8238 = vmatprep.mubr.bf16.mxu0 0
      %8239 = vmatmul.mubr.bf16.gmra.mrb[0].mxu0 %v7357
      %v8240 = vpop.f32.mrb[0].mxu0
      %v8241 = vadd.f32 %v8176, %v8240
      %v8242 = vpop.f32.mrb[0].mxu0
      %v8243 = vpop.f32.mrb[0].mxu0
      %v8244 = vadd.f32 %v8179, %v8243
      %v8245 = vpop.f32.mrb[0].mxu0
      %8246 = vdwg.mxu0
      %v8247 = vld [vmem:[%s6630] sm:$0xf]
      %v8248 = vld [vmem:[%s6630 + $0x8] sm:$0xf]
      %v8249 = vld [vmem:[%s6630 + $0x10] sm:$0xf]
      %v8250 = vld [vmem:[%s6630 + $0x18] sm:$0xf]
      %v8251 = vld [vmem:[%s6630 + $0x20] sm:$0xf]
      %v8252 = vld [vmem:[%s6630 + $0x28] sm:$0xf]
      %v8253 = vld [vmem:[%s6630 + $0x30] sm:$0xf]
      %v8254 = vld [vmem:[%s6630 + $0x38] sm:$0xf]
      %v8255 = vld [vmem:[%s6630 + $0x4] sm:$0x1]
      %v8256 = vld [vmem:[%s6630 + $0xc] sm:$0x1]
      %v8257 = vld [vmem:[%s6630 + $0x14] sm:$0x1]
      %v8258 = vld [vmem:[%s6630 + $0x1c] sm:$0x1]
      %v8259 = vld [vmem:[%s6630 + $0x24] sm:$0x1]
      %v8260 = vld [vmem:[%s6630 + $0x2c] sm:$0x1]
      %v8261 = vld [vmem:[%s6630 + $0x34] sm:$0x1]
      %v8262 = vld [vmem:[%s6630 + $0x3c] sm:$0x1]
      %v8264 = vshrl.u32 %v8247, 16
      %v8266 = vrot.slane %v8264, 4
      %v8267 = vshll.u32 %v8247, 16
      %v8269 = vrot.slane %v8267, 5
      %v8270 = vor.u32 %v8266, %v8269
      %v8271 = vrot.slane %v8270, 4
      %v8273 = vshll.u32 %v8255, 16
      %v8275 = vrot.slane %v8273, 5
      %v8276 = vsel %vm5326, %v8271, %v8275
      %v8278 = vshrl.u32 %v8248, 16
      %v8280 = vrot.slane %v8278, 4
      %v8281 = vshll.u32 %v8248, 16
      %v8283 = vrot.slane %v8281, 5
      %v8284 = vor.u32 %v8280, %v8283
      %v8285 = vrot.slane %v8284, 4
      %v8287 = vshll.u32 %v8256, 16
      %v8289 = vrot.slane %v8287, 5
      %v8290 = vsel %vm5326, %v8285, %v8289
      %v8292 = vshrl.u32 %v8249, 16
      %v8294 = vrot.slane %v8292, 4
      %v8295 = vshll.u32 %v8249, 16
      %v8297 = vrot.slane %v8295, 5
      %v8298 = vor.u32 %v8294, %v8297
      %v8299 = vrot.slane %v8298, 4
      %v8301 = vshll.u32 %v8257, 16
      %v8303 = vrot.slane %v8301, 5
      %v8304 = vsel %vm5326, %v8299, %v8303
      %v8306 = vshrl.u32 %v8250, 16
      %v8308 = vrot.slane %v8306, 4
      %v8309 = vshll.u32 %v8250, 16
      %v8311 = vrot.slane %v8309, 5
      %v8312 = vor.u32 %v8308, %v8311
      %v8313 = vrot.slane %v8312, 4
      %v8315 = vshll.u32 %v8258, 16
      %v8317 = vrot.slane %v8315, 5
      %v8318 = vsel %vm5326, %v8313, %v8317
      %v8320 = vshrl.u32 %v8251, 16
      %v8322 = vrot.slane %v8320, 4
      %v8323 = vshll.u32 %v8251, 16
      %v8325 = vrot.slane %v8323, 5
      %v8326 = vor.u32 %v8322, %v8325
      %v8327 = vrot.slane %v8326, 4
      %v8329 = vshll.u32 %v8259, 16
      %v8331 = vrot.slane %v8329, 5
      %v8332 = vsel %vm5326, %v8327, %v8331
      %v8334 = vshrl.u32 %v8252, 16
      %v8336 = vrot.slane %v8334, 4
      %v8337 = vshll.u32 %v8252, 16
      %v8339 = vrot.slane %v8337, 5
      %v8340 = vor.u32 %v8336, %v8339
      %v8341 = vrot.slane %v8340, 4
      %v8343 = vshll.u32 %v8260, 16
      %v8345 = vrot.slane %v8343, 5
      %v8346 = vsel %vm5326, %v8341, %v8345
      %v8348 = vshrl.u32 %v8253, 16
      %v8350 = vrot.slane %v8348, 4
      %v8351 = vshll.u32 %v8253, 16
      %v8353 = vrot.slane %v8351, 5
      %v8354 = vor.u32 %v8350, %v8353
      %v8355 = vrot.slane %v8354, 4
      %v8357 = vshll.u32 %v8261, 16
      %v8359 = vrot.slane %v8357, 5
      %v8360 = vsel %vm5326, %v8355, %v8359
      %v8362 = vshrl.u32 %v8254, 16
      %v8364 = vrot.slane %v8362, 4
      %v8365 = vshll.u32 %v8254, 16
      %v8367 = vrot.slane %v8365, 5
      %v8368 = vor.u32 %v8364, %v8367
      %v8369 = vrot.slane %v8368, 4
      %v8371 = vshll.u32 %v8262, 16
      %v8373 = vrot.slane %v8371, 5
      %v8374 = vsel %vm5326, %v8369, %v8373
      %v8375 = vld [vmem:[%s6630] sm:$0xe]
      %v8376 = vld [vmem:[%s6630 + $0x8] sm:$0xe]
      %v8377 = vld [vmem:[%s6630 + $0x10] sm:$0xe]
      %v8378 = vld [vmem:[%s6630 + $0x18] sm:$0xe]
      %v8379 = vld [vmem:[%s6630 + $0x20] sm:$0xe]
      %v8380 = vld [vmem:[%s6630 + $0x28] sm:$0xe]
      %v8381 = vld [vmem:[%s6630 + $0x30] sm:$0xe]
      %v8382 = vld [vmem:[%s6630 + $0x38] sm:$0xe]
      %v8399 = vrot.slane %v8375, 5
      %v8400 = vrot.slane %v8399, 4
      %v8401 = vrot.slane %v8255, 5
      %v8402 = vsel %vm5463, %v8400, %v8401
      %v8403 = vrot.slane %v8376, 5
      %v8404 = vrot.slane %v8403, 4
      %v8405 = vrot.slane %v8256, 5
      %v8406 = vsel %vm5463, %v8404, %v8405
      %v8407 = vrot.slane %v8377, 5
      %v8408 = vrot.slane %v8407, 4
      %v8409 = vrot.slane %v8257, 5
      %v8410 = vsel %vm5463, %v8408, %v8409
      %v8411 = vrot.slane %v8378, 5
      %v8412 = vrot.slane %v8411, 4
      %v8413 = vrot.slane %v8258, 5
      %v8414 = vsel %vm5463, %v8412, %v8413
      %v8415 = vrot.slane %v8379, 5
      %v8416 = vrot.slane %v8415, 4
      %v8417 = vrot.slane %v8259, 5
      %v8418 = vsel %vm5463, %v8416, %v8417
      %v8419 = vrot.slane %v8380, 5
      %v8420 = vrot.slane %v8419, 4
      %v8421 = vrot.slane %v8260, 5
      %v8422 = vsel %vm5463, %v8420, %v8421
      %v8423 = vrot.slane %v8381, 5
      %v8424 = vrot.slane %v8423, 4
      %v8425 = vrot.slane %v8261, 5
      %v8426 = vsel %vm5463, %v8424, %v8425
      %v8427 = vrot.slane %v8382, 5
      %v8428 = vrot.slane %v8427, 4
      %v8429 = vrot.slane %v8262, 5
      %v8430 = vsel %vm5463, %v8428, %v8429
      %v8439 = vunpack.c.l.b16 %v8247
      %v8440 = vunpack.c.l.b16 %v8248
      %v8441 = vunpack.c.l.b16 %v8249
      %v8442 = vunpack.c.l.b16 %v8250
      %v8443 = vunpack.c.l.b16 %v8251
      %v8444 = vunpack.c.l.b16 %v8252
      %v8445 = vunpack.c.l.b16 %v8253
      %v8446 = vunpack.c.l.b16 %v8254
      %v8447 = vpack.c.b16 %v8440, %v8439
      %v8448 = vpack.c.b16 %v8442, %v8441
      %v8449 = vpack.c.b16 %v8444, %v8443
      %v8450 = vpack.c.b16 %v8446, %v8445
      %v8455 = vunpack.c.l.b16 %v8276
      %v8456 = vunpack.c.l.b16 %v8290
      %v8457 = vunpack.c.l.b16 %v8304
      %v8458 = vunpack.c.l.b16 %v8318
      %v8459 = vunpack.c.l.b16 %v8332
      %v8460 = vunpack.c.l.b16 %v8346
      %v8461 = vunpack.c.l.b16 %v8360
      %v8462 = vunpack.c.l.b16 %v8374
      %v8463 = vpack.c.b16 %v8456, %v8455
      %v8464 = vpack.c.b16 %v8458, %v8457
      %v8465 = vpack.c.b16 %v8460, %v8459
      %v8466 = vpack.c.b16 %v8462, %v8461
      %v8471 = vunpack.c.l.b16 %v8402
      %v8472 = vunpack.c.l.b16 %v8406
      %v8473 = vunpack.c.l.b16 %v8410
      %v8474 = vunpack.c.l.b16 %v8414
      %v8475 = vunpack.c.l.b16 %v8418
      %v8476 = vunpack.c.l.b16 %v8422
      %v8477 = vunpack.c.l.b16 %v8426
      %v8478 = vunpack.c.l.b16 %v8430
      %v8479 = vpack.c.b16 %v8472, %v8471
      %v8480 = vpack.c.b16 %v8474, %v8473
      %v8481 = vpack.c.b16 %v8476, %v8475
      %v8482 = vpack.c.b16 %v8478, %v8477
      %s8487 = scalar_lea.vmem %s6, 384
      %v8488 = vld [vmem:[%s8487] sm:$0xf]
      %v8489 = vld [vmem:[%s8487 + $0x4] sm:$0xf]
      %v8490 = vld [vmem:[%s8487 + $0x8] sm:$0xf]
      %v8491 = vld [vmem:[%s8487 + $0xc] sm:$0xf]
      %v8492 = vld [vmem:[%s8487 + $0x10] sm:$0xf]
      %v8493 = vld [vmem:[%s8487 + $0x14] sm:$0xf]
      %v8494 = vld [vmem:[%s8487 + $0x18] sm:$0xf]
      %v8495 = vld [vmem:[%s8487 + $0x1c] sm:$0xf]
      %v8496 = vld [vmem:[%s8487 + $0x20] sm:$0xf]
      %v8497 = vld [vmem:[%s8487 + $0x24] sm:$0xf]
      %v8498 = vld [vmem:[%s8487 + $0x28] sm:$0xf]
      %v8499 = vld [vmem:[%s8487 + $0x2c] sm:$0xf]
      %v8500 = vld [vmem:[%s8487 + $0x30] sm:$0xf]
      %v8501 = vld [vmem:[%s8487 + $0x34] sm:$0xf]
      %v8502 = vld [vmem:[%s8487 + $0x38] sm:$0xf]
      %v8503 = vld [vmem:[%s8487 + $0x3c] sm:$0xf]
      %v8504 = vld [vmem:[%s8487 + $0x40] sm:$0xf]
      %v8505 = vld [vmem:[%s8487 + $0x44] sm:$0xf]
      %v8506 = vld [vmem:[%s8487 + $0x48] sm:$0xf]
      %v8507 = vld [vmem:[%s8487 + $0x4c] sm:$0xf]
      %v8508 = vld [vmem:[%s8487 + $0x50] sm:$0xf]
      %v8509 = vld [vmem:[%s8487 + $0x54] sm:$0xf]
      %v8510 = vld [vmem:[%s8487 + $0x58] sm:$0xf]
      %v8511 = vld [vmem:[%s8487 + $0x5c] sm:$0xf]
      %v8512 = vld [vmem:[%s8487 + $0x60] sm:$0xf]
      %v8513 = vld [vmem:[%s8487 + $0x64] sm:$0xf]
      %v8514 = vld [vmem:[%s8487 + $0x68] sm:$0xf]
      %v8515 = vld [vmem:[%s8487 + $0x6c] sm:$0xf]
      %v8516 = vld [vmem:[%s8487 + $0x70] sm:$0xf]
      %v8517 = vld [vmem:[%s8487 + $0x74] sm:$0xf]
      %v8518 = vld [vmem:[%s8487 + $0x78] sm:$0xf]
      %v8519 = vld [vmem:[%s8487 + $0x7c] sm:$0xf]
      %v8520 = vld [vmem:[%s8487 + $0x80] sm:$0xf]
      %v8521 = vld [vmem:[%s8487 + $0x84] sm:$0xf]
      %v8522 = vld [vmem:[%s8487 + $0x88] sm:$0xf]
      %v8523 = vld [vmem:[%s8487 + $0x8c] sm:$0xf]
      %v8524 = vld [vmem:[%s8487 + $0x90] sm:$0xf]
      %v8525 = vld [vmem:[%s8487 + $0x94] sm:$0xf]
      %v8526 = vld [vmem:[%s8487 + $0x98] sm:$0xf]
      %v8527 = vld [vmem:[%s8487 + $0x9c] sm:$0xf]
      %v8528 = vld [vmem:[%s8487 + $0xa0] sm:$0xf]
      %v8529 = vld [vmem:[%s8487 + $0xa4] sm:$0xf]
      %v8530 = vld [vmem:[%s8487 + $0xa8] sm:$0xf]
      %v8531 = vld [vmem:[%s8487 + $0xac] sm:$0xf]
      %v8532 = vld [vmem:[%s8487 + $0xb0] sm:$0xf]
      %v8533 = vld [vmem:[%s8487 + $0xb4] sm:$0xf]
      %v8534 = vld [vmem:[%s8487 + $0xb8] sm:$0xf]
      %v8535 = vld [vmem:[%s8487 + $0xbc] sm:$0xf]
      %v8584 = vunpack.c.l.b16 %v8488
      %v8585 = vunpack.c.l.b16 %v8489
      %v8586 = vunpack.c.l.b16 %v8490
      %v8587 = vunpack.c.l.b16 %v8491
      %v8588 = vunpack.c.l.b16 %v8492
      %v8589 = vunpack.c.l.b16 %v8493
      %v8590 = vunpack.c.l.b16 %v8494
      %v8591 = vunpack.c.l.b16 %v8495
      %v8592 = vunpack.c.l.b16 %v8496
      %v8593 = vunpack.c.l.b16 %v8497
      %v8594 = vunpack.c.l.b16 %v8498
      %v8595 = vunpack.c.l.b16 %v8499
      %v8596 = vunpack.c.l.b16 %v8500
      %v8597 = vunpack.c.l.b16 %v8501
      %v8598 = vunpack.c.l.b16 %v8502
      %v8599 = vunpack.c.l.b16 %v8503
      %v8600 = vunpack.c.l.b16 %v8504
      %v8601 = vunpack.c.l.b16 %v8505
      %v8602 = vunpack.c.l.b16 %v8506
      %v8603 = vunpack.c.l.b16 %v8507
      %v8604 = vunpack.c.l.b16 %v8508
      %v8605 = vunpack.c.l.b16 %v8509
      %v8606 = vunpack.c.l.b16 %v8510
      %v8607 = vunpack.c.l.b16 %v8511
      %v8608 = vunpack.c.l.b16 %v8512
      %v8609 = vunpack.c.l.b16 %v8513
      %v8610 = vunpack.c.l.b16 %v8514
      %v8611 = vunpack.c.l.b16 %v8515
      %v8612 = vunpack.c.l.b16 %v8516
      %v8613 = vunpack.c.l.b16 %v8517
      %v8614 = vunpack.c.l.b16 %v8518
      %v8615 = vunpack.c.l.b16 %v8519
      %v8616 = vunpack.c.l.b16 %v8520
      %v8617 = vunpack.c.l.b16 %v8521
      %v8618 = vunpack.c.l.b16 %v8522
      %v8619 = vunpack.c.l.b16 %v8523
      %v8620 = vunpack.c.l.b16 %v8524
      %v8621 = vunpack.c.l.b16 %v8525
      %v8622 = vunpack.c.l.b16 %v8526
      %v8623 = vunpack.c.l.b16 %v8527
      %v8624 = vunpack.c.l.b16 %v8528
      %v8625 = vunpack.c.l.b16 %v8529
      %v8626 = vunpack.c.l.b16 %v8530
      %v8627 = vunpack.c.l.b16 %v8531
      %v8628 = vunpack.c.l.b16 %v8532
      %v8629 = vunpack.c.l.b16 %v8533
      %v8630 = vunpack.c.l.b16 %v8534
      %v8631 = vunpack.c.l.b16 %v8535
      %v8632 = vpack.c.b16 %v8585, %v8584
      %v8633 = vpack.c.b16 %v8587, %v8586
      %v8634 = vpack.c.b16 %v8589, %v8588
      %v8635 = vpack.c.b16 %v8591, %v8590
      %v8636 = vpack.c.b16 %v8593, %v8592
      %v8637 = vpack.c.b16 %v8595, %v8594
      %v8638 = vpack.c.b16 %v8597, %v8596
      %v8639 = vpack.c.b16 %v8599, %v8598
      %v8640 = vpack.c.b16 %v8601, %v8600
      %v8641 = vpack.c.b16 %v8603, %v8602
      %v8642 = vpack.c.b16 %v8605, %v8604
      %v8643 = vpack.c.b16 %v8607, %v8606
      %v8644 = vpack.c.b16 %v8609, %v8608
      %v8645 = vpack.c.b16 %v8611, %v8610
      %v8646 = vpack.c.b16 %v8613, %v8612
      %v8647 = vpack.c.b16 %v8615, %v8614
      %v8648 = vpack.c.b16 %v8617, %v8616
      %v8649 = vpack.c.b16 %v8619, %v8618
      %v8650 = vpack.c.b16 %v8621, %v8620
      %v8651 = vpack.c.b16 %v8623, %v8622
      %v8652 = vpack.c.b16 %v8625, %v8624
      %v8653 = vpack.c.b16 %v8627, %v8626
      %v8654 = vpack.c.b16 %v8629, %v8628
      %v8655 = vpack.c.b16 %v8631, %v8630
      %8680 = vmatprep.subr.bf16.mxu0 0
      %8681 = vmatpush1.bf16.msra.mxu0 %v8632
      %8682 = vmatprep.subr.bf16.mxu0 0
      %8683 = vmatpush1.bf16.msra.mxu0 %v8633
      %8684 = vmatprep.subr.bf16.mxu0 0
      %8685 = vmatpush1.bf16.msra.mxu0 %v8634
      %8686 = vmatprep.subr.bf16.mxu0 0
      %8687 = vmatpush1.bf16.msra.mxu0 %v8635
      %8688 = vmatprep.subr.bf16.mxu0 0
      %8689 = vmatpush1.bf16.msra.mxu0 %v8636
      %8690 = vmatprep.subr.bf16.mxu0 0
      %8691 = vmatpush1.bf16.msra.mxu0 %v8637
      %8692 = vmatprep.subr.bf16.mxu0 0
      %8693 = vmatpush1.bf16.msra.mxu0 %v8638
      %8694 = vmatprep.subr.bf16.mxu0 0
      %8695 = vmatpush1.bf16.msra.mxu0 %v8639
      %8696 = vmatprep.subr.bf16.mxu0 0
      %8697 = vmatpush1.bf16.msra.mxu0 %v8640
      %8698 = vmatprep.subr.bf16.mxu0 0
      %8699 = vmatpush1.bf16.msra.mxu0 %v8641
      %8700 = vmatprep.subr.bf16.mxu0 0
      %8701 = vmatpush1.bf16.msra.mxu0 %v8642
      %8702 = vmatprep.subr.bf16.mxu0 0
      %8703 = vmatpush1.bf16.msra.mxu0 %v8643
      %8704 = vmatprep.subr.bf16.mxu0 0
      %8705 = vmatpush1.bf16.msra.mxu0 %v8644
      %8706 = vmatprep.subr.bf16.mxu0 0
      %8707 = vmatpush1.bf16.msra.mxu0 %v8645
      %8708 = vmatprep.subr.bf16.mxu0 0
      %8709 = vmatpush1.bf16.msra.mxu0 %v8646
      %8710 = vmatprep.subr.bf16.mxu0 0
      %8711 = vmatpush1.bf16.msra.mxu0 %v8647
      %8712 = vmatprep.mubr.bf16.mxu0 %v8463
      %8713 = vmatmul.mubr.bf16.gmra.mrb[0].mxu0 %v8447
      %v8714 = vpop.f32.mrb[0].mxu0
      %v8715 = vadd.f32 0.0, %v8714
      %v8716 = vpop.f32.mrb[0].mxu0
      %v8717 = vpop.f32.mrb[0].mxu0
      %v8718 = vadd.f32 0.0, %v8717
      %v8719 = vpop.f32.mrb[0].mxu0
      %8720 = vmatprep.mubr.bf16.mxu0 %v8464
      %8721 = vmatmul.mubr.bf16.gmra.mrb[0].mxu0 %v8448
      %v8722 = vpop.f32.mrb[0].mxu0
      %v8723 = vadd.f32 0.0, %v8722
      %v8724 = vpop.f32.mrb[0].mxu0
      %v8725 = vpop.f32.mrb[0].mxu0
      %v8726 = vadd.f32 0.0, %v8725
      %v8727 = vpop.f32.mrb[0].mxu0
      %8728 = vmatprep.mubr.bf16.mxu0 %v8465
      %8729 = vmatmul.mubr.bf16.gmra.mrb[0].mxu0 %v8449
      %v8730 = vpop.f32.mrb[0].mxu0
      %v8731 = vadd.f32 0.0, %v8730
      %v8732 = vpop.f32.mrb[0].mxu0
      %v8733 = vpop.f32.mrb[0].mxu0
      %v8734 = vadd.f32 0.0, %v8733
      %v8735 = vpop.f32.mrb[0].mxu0
      %8736 = vmatprep.mubr.bf16.mxu0 %v8466
      %8737 = vmatmul.mubr.bf16.gmra.mrb[0].mxu0 %v8450
      %v8738 = vpop.f32.mrb[0].mxu0
      %v8739 = vadd.f32 0.0, %v8738
      %v8740 = vpop.f32.mrb[0].mxu0
      %v8741 = vpop.f32.mrb[0].mxu0
      %v8742 = vadd.f32 0.0, %v8741
      %v8743 = vpop.f32.mrb[0].mxu0
      %8744 = vdwg.mxu0
      %8745 = vmatprep.subr.bf16.mxu0 0
      %8746 = vmatpush1.bf16.msra.mxu0 %v8648
      %8747 = vmatprep.subr.bf16.mxu0 0
      %8748 = vmatpush1.bf16.msra.mxu0 %v8649
      %8749 = vmatprep.subr.bf16.mxu0 0
      %8750 = vmatpush1.bf16.msra.mxu0 %v8650
      %8751 = vmatprep.subr.bf16.mxu0 0
      %8752 = vmatpush1.bf16.msra.mxu0 %v8651
      %8753 = vmatprep.subr.bf16.mxu0 0
      %8754 = vmatpush1.bf16.msra.mxu0 %v8652
      %8755 = vmatprep.subr.bf16.mxu0 0
      %8756 = vmatpush1.bf16.msra.mxu0 %v8653
      %8757 = vmatprep.subr.bf16.mxu0 0
      %8758 = vmatpush1.bf16.msra.mxu0 %v8654
      %8759 = vmatprep.subr.bf16.mxu0 0
      %8760 = vmatpush1.bf16.msra.mxu0 %v8655
      %8761 = vmatprep.subr.bf16.mxu0 0
      %8762 = vmatpush1.bf16.msra.mxu0 0
      %8763 = vmatprep.subr.bf16.mxu0 0
      %8764 = vmatpush1.bf16.msra.mxu0 0
      %8765 = vmatprep.subr.bf16.mxu0 0
      %8766 = vmatpush1.bf16.msra.mxu0 0
      %8767 = vmatprep.subr.bf16.mxu0 0
      %8768 = vmatpush1.bf16.msra.mxu0 0
      %8769 = vmatprep.subr.bf16.mxu0 0
      %8770 = vmatpush1.bf16.msra.mxu0 0
      %8771 = vmatprep.subr.bf16.mxu0 0
      %8772 = vmatpush1.bf16.msra.mxu0 0
      %8773 = vmatprep.subr.bf16.mxu0 0
      %8774 = vmatpush1.bf16.msra.mxu0 0
      %8775 = vmatprep.subr.bf16.mxu0 0
      %8776 = vmatpush1.bf16.msra.mxu0 0
      %8777 = vmatprep.mubr.bf16.mxu0 0
      %8778 = vmatmul.mubr.bf16.gmra.mrb[0].mxu0 %v8479
      %v8779 = vpop.f32.mrb[0].mxu0
      %v8780 = vadd.f32 %v8715, %v8779
      %v8781 = vpop.f32.mrb[0].mxu0
      %v8782 = vpop.f32.mrb[0].mxu0
      %v8783 = vadd.f32 %v8718, %v8782
      %v8784 = vpop.f32.mrb[0].mxu0
      %8785 = vmatprep.mubr.bf16.mxu0 0
      %8786 = vmatmul.mubr.bf16.gmra.mrb[0].mxu0 %v8480
      %v8787 = vpop.f32.mrb[0].mxu0
      %v8788 = vadd.f32 %v8723, %v8787
      %v8789 = vpop.f32.mrb[0].mxu0
      %v8790 = vpop.f32.mrb[0].mxu0
      %v8791 = vadd.f32 %v8726, %v8790
      %v8792 = vpop.f32.mrb[0].mxu0
      %8793 = vmatprep.mubr.bf16.mxu0 0
      %8794 = vmatmul.mubr.bf16.gmra.mrb[0].mxu0 %v8481
      %v8795 = vpop.f32.mrb[0].mxu0
      %v8796 = vadd.f32 %v8731, %v8795
      %v8797 = vpop.f32.mrb[0].mxu0
      %v8798 = vpop.f32.mrb[0].mxu0
      %v8799 = vadd.f32 %v8734, %v8798
      %v8800 = vpop.f32.mrb[0].mxu0
      %8801 = vmatprep.mubr.bf16.mxu0 0
      %8802 = vmatmul.mubr.bf16.gmra.mrb[0].mxu0 %v8482
      %v8803 = vpop.f32.mrb[0].mxu0
      %v8804 = vadd.f32 %v8739, %v8803
      %v8805 = vpop.f32.mrb[0].mxu0
      %v8806 = vpop.f32.mrb[0].mxu0
      %v8807 = vadd.f32 %v8742, %v8806
      %v8808 = vpop.f32.mrb[0].mxu0
      %8809 = vdwg.mxu0
      %v8810 = vadd.f32 %v8217, %v8780
      %v8811 = vadd.f32 %v8220, %v8783
      %v8812 = vadd.f32 %v8225, %v8788
      %v8813 = vadd.f32 %v8228, %v8791
      %v8814 = vadd.f32 %v8233, %v8796
      %v8815 = vadd.f32 %v8236, %v8799
      %v8816 = vadd.f32 %v8241, %v8804
      %v8817 = vadd.f32 %v8244, %v8807
      %v8818 = vld [vmem:[%s7 + $0x3] sm:$0x1]
      %v8819 = vlaneseq
      %v8820 = vshrl.u32 %v8819, 7
      %v8821 = vsub.s32 0, %v8820
      %v8822 = vrot.slane %v8818, %v8821
      %v8823 = vmul.f32 %v8810, %v8822
      %v8824 = vmul.f32 %v8811, %v8822
      %v8825 = vmul.f32 %v8812, %v8822
      %v8826 = vmul.f32 %v8813, %v8822
      %v8827 = vmul.f32 %v8814, %v8822
      %v8828 = vmul.f32 %v8815, %v8822
      %v8829 = vmul.f32 %v8816, %v8822
      %v8830 = vmul.f32 %v8817, %v8822
      %v8831 = vld [vmem:[%s8 + $0x3] sm:$0x1]
      %v8832 = vlaneseq
      %v8833 = vshrl.u32 %v8832, 7
      %v8834 = vsub.s32 0, %v8833
      %v8835 = vrot.slane %v8831, %v8834
      %v8836 = vadd.f32 %v8823, %v8835
      %v8837 = vadd.f32 %v8824, %v8835
      %v8838 = vadd.f32 %v8825, %v8835
      %v8839 = vadd.f32 %v8826, %v8835
      %v8840 = vadd.f32 %v8827, %v8835
      %v8841 = vadd.f32 %v8828, %v8835
      %v8842 = vadd.f32 %v8829, %v8835
      %v8843 = vadd.f32 %v8830, %v8835
      %vm8844 = vcmp.gt.f32.partialorder %v8836, 0.0
      %vm8845 = vcmp.gt.f32.partialorder %v8837, 0.0
      %vm8846 = vcmp.gt.f32.partialorder %v8838, 0.0
      %vm8847 = vcmp.gt.f32.partialorder %v8839, 0.0
      %vm8848 = vcmp.gt.f32.partialorder %v8840, 0.0
      %vm8849 = vcmp.gt.f32.partialorder %v8841, 0.0
      %vm8850 = vcmp.gt.f32.partialorder %v8842, 0.0
      %vm8851 = vcmp.gt.f32.partialorder %v8843, 0.0
      %v8852 = vmul.f32 %v8836, 0.01
      %v8853 = vmul.f32 %v8837, 0.01
      %v8854 = vmul.f32 %v8838, 0.01
      %v8855 = vmul.f32 %v8839, 0.01
      %v8856 = vmul.f32 %v8840, 0.01
      %v8857 = vmul.f32 %v8841, 0.01
      %v8858 = vmul.f32 %v8842, 0.01
      %v8859 = vmul.f32 %v8843, 0.01
      %v8860 = vsel %vm8844, %v8836, %v8852
      %v8861 = vsel %vm8845, %v8837, %v8853
      %v8862 = vsel %vm8846, %v8838, %v8854
      %v8863 = vsel %vm8847, %v8839, %v8855
      %v8864 = vsel %vm8848, %v8840, %v8856
      %v8865 = vsel %vm8849, %v8841, %v8857
      %v8866 = vsel %vm8850, %v8842, %v8858
      %v8867 = vsel %vm8851, %v8843, %v8859
      %8868 = vst [vmem:[%s352] sm:$0xff] %v8860
      %8869 = vst [vmem:[%s352 + $0x8] sm:$0xff] %v8861
      %8870 = vst [vmem:[%s352 + $0x10] sm:$0xff] %v8862
      %8871 = vst [vmem:[%s352 + $0x18] sm:$0xff] %v8863
      %8872 = vst [vmem:[%s352 + $0x20] sm:$0xff] %v8864
      %8873 = vst [vmem:[%s352 + $0x28] sm:$0xff] %v8865
      %8874 = vst [vmem:[%s352 + $0x30] sm:$0xff] %v8866
      %8875 = vst [vmem:[%s352 + $0x38] sm:$0xff] %v8867
      %p8876 = scmp.lt.s32.totalorder %s20, 1
      %s8877 = scalar_select %p8876, %s20, 1
      %s8878 = smul.addr %s8877, 8
      %s8879 = smul.addr %s8878, 8
      %s8880 = scalar_lea.vmem %s9, %s8879
      // Predicated region
      $region57: #{upblock_forward.1} parent=55 // pred_check
        %p8881 = pneg %p237
      $region58: #{upblock_forward.1} parent=55 // pred_check_branch
        %8883 = sbr.rel (%p8881) target = $region60
      $region59: #{upblock_forward.1} parent=55 // pred_region
        _
      $region60: #{upblock_forward.1} parent=55 // pred_fallthru
        _
    $region56: #{upblock_forward.1} parent=5 // pred_fallthru
      _
    %p8884 = scmp.le.s32.totalorder 2, %s15
    // Predicated region
    $region61: #{upblock_forward.1} parent=5 // pred_check
      %p8885 = pneg %p8884
    $region62: #{upblock_forward.1} parent=5 // pred_check_branch
      %8887 = sbr.rel (%p8885) target = $region64
    $region63: #{upblock_forward.1} parent=5 // pred_region
      %s8888 = ssub.s32 %s15, 2
      // Predicated region
      $region65: #{upblock_forward.1} parent=63 // pred_check
        %p8889 = pneg %p243
      $region66: #{upblock_forward.1} parent=63 // pred_check_branch
        %8891 = sbr.rel (%p8889) target = $region68
      $region67: #{upblock_forward.1} parent=63 // pred_region
        %p8892 = scmp.lt.s32.totalorder %s21, 1
        %s8893 = scalar_select %p8892, %s21, 1
        %s8894 = smul.addr %s8893, 8
        %s8895 = smul.addr %s8894, 8
        %s8896 = scalar_lea.vmem %s9, %s8895
      $region68: #{upblock_forward.1} parent=63 // pred_fallthru
        _
    $region64: #{upblock_forward.1} parent=5 // pred_fallthru
      _
  $region6: #{upblock_forward.1} parent=0 // loop_footer
    %s19 = sadd.s32 1, %s15
  $region7: #{upblock_forward.1} parent=0 // loop_footer_branch
    %14 = sbr.rel target = $region3
  $region8: #{upblock_forward.1} parent=0 // loop_exit
    _

</llo_original>
